<compile_context>
chip_gen: v7x
topology: tpu7x:2x2x1
jax: 0.10.0
libtpu: 0.0.40
codegen_flags: <defaults>
</compile_context>

<pallas_src>
import numpy as np
import jax
import jax.numpy as jnp
from jax.experimental import pallas as pl
from jax.experimental.pallas import tpu as pltpu

B_TILE = 128            # batch rows per grid step (MXU M dim)
OUT_PAD = 128           # fc2 output padded to a full lane group (lane-dense store)
WEIGHT_DTYPE = jnp.bfloat16


# --------------------------------------------------------------------------- #
# Kernel
# --------------------------------------------------------------------------- #
def _cnn_kernel(x_ref,
                w1_ref, b1_ref, w2_ref, b2_ref, w3_ref, b3_ref, w4_ref, b4_ref,
                wf1_ref, bf1_ref, wf2_ref, bf2_ref,
                out_ref):
    def dense(h, w_ref, b_ref, relu=True):
        y = jnp.dot(h.astype(WEIGHT_DTYPE), w_ref[...],
                    preferred_element_type=jnp.float32) + b_ref[...]
        return jnp.maximum(y, 0.0) if relu else y

    h = x_ref[...]                              # (B_TILE, ws)            f32
    h = dense(h, w1_ref, b1_ref)                # (B_TILE, (ws-1)*8)
    h = dense(h, w2_ref, b2_ref)                # (B_TILE, (ws-2)*16)
    h = dense(h, w3_ref, b3_ref)                # (B_TILE, (ws-3)*32)
    h = dense(h, w4_ref, b4_ref)                # (B_TILE, (ws-4)*64) == flatten
    h = dense(h, wf1_ref, bf1_ref)              # (B_TILE, 1024)
    out = dense(h, wf2_ref, bf2_ref, relu=False)  # (B_TILE, OUT_PAD)
    out_ref[...] = out.astype(out_ref.dtype)


# --------------------------------------------------------------------------- #
# Parameters (PyTorch layouts) and host-side repacking into kernel layout
# --------------------------------------------------------------------------- #
def init_torch_params(key, ws):
    """Synthetic params in PyTorch layouts (Conv1d: (Cout,Cin,K); Linear: (out,in))."""
    ks = jax.random.split(key, 12)

    def u(k, shape, fan_in):
        lim = 1.0 / float(np.sqrt(fan_in))
        return jax.random.uniform(k, shape, jnp.float32, -lim, lim)

    w1 = u(ks[0], (8, 1, 2), 1 * 2);      b1 = u(ks[1], (8,), 1 * 2)
    w2 = u(ks[2], (16, 8, 2), 8 * 2);     b2 = u(ks[3], (16,), 8 * 2)
    w3 = u(ks[4], (32, 16, 2), 16 * 2);   b3 = u(ks[5], (32,), 16 * 2)
    w4 = u(ks[6], (64, 32, 2), 32 * 2);   b4 = u(ks[7], (64,), 32 * 2)
    feat = 64 * (ws - 4)
    wf1 = u(ks[8], (1024, feat), feat);   bf1 = u(ks[9], (1024,), feat)
    wf2 = u(ks[10], (1, 1024), 1024);     bf2 = u(ks[11], (1,), 1024)
    return (w1, b1, w2, b2, w3, b3, w4, b4, wf1, bf1, wf2, bf2)


def _banded_conv_matrix(w_oik, b_o, l_in):
    """Fold a stride-1 'valid' Conv1d into a banded dense matrix acting on the
    (L, C)-major flattened activation: in_flat[l*Cin + ci] = in[ci, l]."""
    c_out, c_in, k = w_oik.shape
    l_out = l_in - k + 1
    W = np.zeros((l_in, c_in, l_out, c_out), np.float32)
    for lo in range(l_out):
        for t in range(k):
            # out[co, lo] += sum_ci w[co, ci, t] * in[ci, lo + t]
            W[lo + t, :, lo, :] = w_oik[:, :, t].T            # (Cin, Cout)
    W = W.reshape(l_in * c_in, l_out * c_out)
    b = np.tile(np.asarray(b_o, np.float32), l_out)           # b[lo*Cout+co]=b[co]
    return W, b


def prepare_kernel_params(torch_params, ws):
    (w1, b1, w2, b2, w3, b3, w4, b4, wf1, bf1, wf2, bf2) = [
        np.asarray(p, np.float32) for p in torch_params]

    kp = []
    l_in = ws
    for w, b in ((w1, b1), (w2, b2), (w3, b3), (w4, b4)):
        W, bb = _banded_conv_matrix(w, b, l_in)
        kp.append(jnp.asarray(W, WEIGHT_DTYPE))
        kp.append(jnp.asarray(bb[None, :], jnp.float32))
        l_in -= 1

    feat = 64 * (ws - 4)
    # PyTorch Flatten is channel-major (c*(ws-4)+l); kernel features are
    # (L, C)-major (l*64+c).  Permute fc1 rows on the host to match.
    wk1 = wf1.T.reshape(64, ws - 4, 1024).transpose(1, 0, 2).reshape(feat, 1024)
    kp.append(jnp.asarray(wk1, WEIGHT_DTYPE))
    kp.append(jnp.asarray(bf1[None, :], jnp.float32))

    # fc2 padded to 128 output lanes (only column 0 is meaningful).
    wk2 = np.zeros((1024, OUT_PAD), np.float32)
    wk2[:, 0] = wf2[0]
    bk2 = np.zeros((1, OUT_PAD), np.float32)
    bk2[0, 0] = bf2[0]
    kp.append(jnp.asarray(wk2, WEIGHT_DTYPE))
    kp.append(jnp.asarray(bk2, jnp.float32))
    return tuple(kp)


# --------------------------------------------------------------------------- #
# Forward wrapper
# --------------------------------------------------------------------------- #
@jax.jit
def cnn_forward(x_ncw, kparams):
    """x_ncw: (B, 1, ws) float32 — same layout as the PyTorch module."""
    B, _, ws = x_ncw.shape
    x = x_ncw.reshape(B, ws)                      # Cin == 1, squeeze channel

    pad = (-B) % B_TILE
    if pad:
        x = jnp.concatenate([x, jnp.zeros((pad, ws), x.dtype)], axis=0)
    bp = B + pad
    nb = bp // B_TILE

    x_spec = pl.BlockSpec((B_TILE, ws), lambda i: (i, 0))
    w_specs = [pl.BlockSpec(p.shape, lambda i: (0, 0)) for p in kparams]
    out_spec = pl.BlockSpec((B_TILE, OUT_PAD), lambda i: (i, 0))

    feat = [ws, (ws - 1) * 8, (ws - 2) * 16, (ws - 3) * 32, (ws - 4) * 64,
            1024, OUT_PAD]
    flops = 2 * bp * sum(feat[i] * feat[i + 1] for i in range(len(feat) - 1))
    bytes_accessed = (sum(int(np.prod(p.shape)) * p.dtype.itemsize for p in kparams)
                      + bp * ws * 4 + bp * OUT_PAD * 4)

    out = pl.pallas_call(
        _cnn_kernel,
        out_shape=jax.ShapeDtypeStruct((bp, OUT_PAD), jnp.float32),
        grid_spec=pltpu.PrefetchScalarGridSpec(
            num_scalar_prefetch=0,
            grid=(nb,),
            in_specs=[x_spec] + w_specs,
            out_specs=out_spec,
        ),
        compiler_params=pltpu.CompilerParams(
            dimension_semantics=("parallel",),
            vmem_limit_bytes=32 * 1024 * 1024,
        ),
        cost_estimate=pl.CostEstimate(
            flops=int(flops), transcendentals=0,
            bytes_accessed=int(bytes_accessed)),
    )(x, *kparams)

    return out[:B, 0:1]                            # (B, 1)


# --------------------------------------------------------------------------- #
# Pure-JAX reference (PyTorch semantics, f32) for a sanity check
# --------------------------------------------------------------------------- #
def reference_forward(x_ncw, torch_params):
    (w1, b1, w2, b2, w3, b3, w4, b4, wf1, bf1, wf2, bf2) = torch_params
    h = x_ncw.astype(jnp.float32)                  # (B, Cin, L)
    for w, b in ((w1, b1), (w2, b2), (w3, b3), (w4, b4)):
        y = (jnp.einsum('oc,bcl->bol', w[:, :, 0], h[:, :, :-1])
             + jnp.einsum('oc,bcl->bol', w[:, :, 1], h[:, :, 1:])
             + b[None, :, None])
        h = jax.nn.relu(y)
    h = h.reshape(h.shape[0], -1)                  # channel-major flatten
    h = jax.nn.relu(h @ wf1.T + bf1[None, :])
    return h @ wf2.T + bf2[None, :]


if __name__ == "__main__":
    WS = 20        # window_size -> first Linear has 64 * (20 - 4) = 1024 inputs
    B = 256        # two grid steps of B_TILE = 128

    key = jax.random.PRNGKey(0)
    k_x, k_p = jax.random.split(key)
    x = jax.random.normal(k_x, (B, 1, WS), dtype=jnp.float32)   # NCW like PyTorch

    torch_params = init_torch_params(k_p, WS)
    kernel_params = prepare_kernel_params(torch_params, WS)

    out = cnn_forward(x, kernel_params)
    out = jax.block_until_ready(out)
    assert out.shape == (B, 1) and out.dtype == jnp.float32

    ref = jax.block_until_ready(reference_forward(x, torch_params))
    np.testing.assert_allclose(np.asarray(out), np.asarray(ref),
                               rtol=1e-1, atol=5e-2)   # bf16-weight drift
    print("KERNEL_OK")
</pallas_src>

<mosaic_0001>
module attributes {stable_mosaic.version = 11 : i64} {
  func.func @_cnn_kernel(%arg0: i32, %arg1: memref<128x20xf32, #tpu.memory_space<vmem>>, %arg2: memref<20x152xbf16, #tpu.memory_space<vmem>>, %arg3: memref<1x152xf32, #tpu.memory_space<vmem>>, %arg4: memref<152x288xbf16, #tpu.memory_space<vmem>>, %arg5: memref<1x288xf32, #tpu.memory_space<vmem>>, %arg6: memref<288x544xbf16, #tpu.memory_space<vmem>>, %arg7: memref<1x544xf32, #tpu.memory_space<vmem>>, %arg8: memref<544x1024xbf16, #tpu.memory_space<vmem>>, %arg9: memref<1x1024xf32, #tpu.memory_space<vmem>>, %arg10: memref<1024x1024xbf16, #tpu.memory_space<vmem>>, %arg11: memref<1x1024xf32, #tpu.memory_space<vmem>>, %arg12: memref<1024x128xbf16, #tpu.memory_space<vmem>>, %arg13: memref<1x128xf32, #tpu.memory_space<vmem>>, %arg14: memref<128x128xf32, #tpu.memory_space<vmem>>) attributes {dimension_semantics = [#tpu.dimension_semantics<parallel>], iteration_bounds = array<i64: 2>, scalar_prefetch = 0 : i64, scratch_operands = 0 : i64, tpu.core_type = #tpu.core_type<tc>, window_params = [{transform_indices = @transform_0, window_bounds = array<i64: 128, 20>}, {pipeline_mode = #tpu.pipeline_mode<synchronous>, transform_indices = @transform_1, window_bounds = array<i64: 20, 152>}, {pipeline_mode = #tpu.pipeline_mode<synchronous>, transform_indices = @transform_2, window_bounds = array<i64: 1, 152>}, {pipeline_mode = #tpu.pipeline_mode<synchronous>, transform_indices = @transform_3, window_bounds = array<i64: 152, 288>}, {pipeline_mode = #tpu.pipeline_mode<synchronous>, transform_indices = @transform_4, window_bounds = array<i64: 1, 288>}, {pipeline_mode = #tpu.pipeline_mode<synchronous>, transform_indices = @transform_5, window_bounds = array<i64: 288, 544>}, {pipeline_mode = #tpu.pipeline_mode<synchronous>, transform_indices = @transform_6, window_bounds = array<i64: 1, 544>}, {pipeline_mode = #tpu.pipeline_mode<synchronous>, transform_indices = @transform_7, window_bounds = array<i64: 544, 1024>}, {pipeline_mode = #tpu.pipeline_mode<synchronous>, transform_indices = @transform_8, window_bounds = array<i64: 1, 1024>}, {pipeline_mode = #tpu.pipeline_mode<synchronous>, transform_indices = @transform_9, window_bounds = array<i64: 1024, 1024>}, {pipeline_mode = #tpu.pipeline_mode<synchronous>, transform_indices = @transform_10, window_bounds = array<i64: 1, 1024>}, {pipeline_mode = #tpu.pipeline_mode<synchronous>, transform_indices = @transform_11, window_bounds = array<i64: 1024, 128>}, {pipeline_mode = #tpu.pipeline_mode<synchronous>, transform_indices = @transform_12, window_bounds = array<i64: 1, 128>}, {transform_indices = @transform_13, window_bounds = array<i64: 128, 128>}]} {
    %c0 = arith.constant 0 : index
    %c0_0 = arith.constant 0 : index
    %0 = vector.load %arg1[%c0, %c0_0] : memref<128x20xf32, #tpu.memory_space<vmem>>, vector<128x20xf32>
    %1 = arith.truncf %0 : vector<128x20xf32> to vector<128x20xbf16>
    %c0_1 = arith.constant 0 : index
    %c0_2 = arith.constant 0 : index
    %2 = vector.load %arg2[%c0_1, %c0_2] : memref<20x152xbf16, #tpu.memory_space<vmem>>, vector<20x152xbf16>
    %cst = arith.constant dense<0.000000e+00> : vector<128x152xf32>
    %3 = tpu.matmul %1, %2, %cst {dimension_numbers = #tpu.dot_dimension_numbers<[1], [0], [0], [1], [0, 0, 1, 1], [], []>} : vector<128x20xbf16>, vector<20x152xbf16>, vector<128x152xf32> -> vector<128x152xf32>
    %c0_3 = arith.constant 0 : index
    %c0_4 = arith.constant 0 : index
    %4 = vector.load %arg3[%c0_3, %c0_4] : memref<1x152xf32, #tpu.memory_space<vmem>>, vector<1x152xf32>
    %5 = vector.broadcast %4 : vector<1x152xf32> to vector<128x152xf32>
    %6 = arith.addf %3, %5 : vector<128x152xf32>
    %cst_5 = arith.constant 0.000000e+00 : f32
    %7 = vector.broadcast %cst_5 : f32 to vector<128x152xf32>
    %8 = arith.maximumf %6, %7 : vector<128x152xf32>
    %9 = arith.truncf %8 : vector<128x152xf32> to vector<128x152xbf16>
    %c0_6 = arith.constant 0 : index
    %c0_7 = arith.constant 0 : index
    %10 = vector.load %arg4[%c0_6, %c0_7] : memref<152x288xbf16, #tpu.memory_space<vmem>>, vector<152x288xbf16>
    %cst_8 = arith.constant dense<0.000000e+00> : vector<128x288xf32>
    %11 = tpu.matmul %9, %10, %cst_8 {dimension_numbers = #tpu.dot_dimension_numbers<[1], [0], [0], [1], [0, 0, 1, 1], [], []>} : vector<128x152xbf16>, vector<152x288xbf16>, vector<128x288xf32> -> vector<128x288xf32>
    %c0_9 = arith.constant 0 : index
    %c0_10 = arith.constant 0 : index
    %12 = vector.load %arg5[%c0_9, %c0_10] : memref<1x288xf32, #tpu.memory_space<vmem>>, vector<1x288xf32>
    %13 = vector.broadcast %12 : vector<1x288xf32> to vector<128x288xf32>
    %14 = arith.addf %11, %13 : vector<128x288xf32>
    %cst_11 = arith.constant 0.000000e+00 : f32
    %15 = vector.broadcast %cst_11 : f32 to vector<128x288xf32>
    %16 = arith.maximumf %14, %15 : vector<128x288xf32>
    %17 = arith.truncf %16 : vector<128x288xf32> to vector<128x288xbf16>
    %c0_12 = arith.constant 0 : index
    %c0_13 = arith.constant 0 : index
    %18 = vector.load %arg6[%c0_12, %c0_13] : memref<288x544xbf16, #tpu.memory_space<vmem>>, vector<288x544xbf16>
    %cst_14 = arith.constant dense<0.000000e+00> : vector<128x544xf32>
    %19 = tpu.matmul %17, %18, %cst_14 {dimension_numbers = #tpu.dot_dimension_numbers<[1], [0], [0], [1], [0, 0, 1, 1], [], []>} : vector<128x288xbf16>, vector<288x544xbf16>, vector<128x544xf32> -> vector<128x544xf32>
    %c0_15 = arith.constant 0 : index
    %c0_16 = arith.constant 0 : index
    %20 = vector.load %arg7[%c0_15, %c0_16] : memref<1x544xf32, #tpu.memory_space<vmem>>, vector<1x544xf32>
    %21 = vector.broadcast %20 : vector<1x544xf32> to vector<128x544xf32>
    %22 = arith.addf %19, %21 : vector<128x544xf32>
    %cst_17 = arith.constant 0.000000e+00 : f32
    %23 = vector.broadcast %cst_17 : f32 to vector<128x544xf32>
    %24 = arith.maximumf %22, %23 : vector<128x544xf32>
    %25 = arith.truncf %24 : vector<128x544xf32> to vector<128x544xbf16>
    %c0_18 = arith.constant 0 : index
    %c0_19 = arith.constant 0 : index
    %26 = vector.load %arg8[%c0_18, %c0_19] : memref<544x1024xbf16, #tpu.memory_space<vmem>>, vector<544x1024xbf16>
    %cst_20 = arith.constant dense<0.000000e+00> : vector<128x1024xf32>
    %27 = tpu.matmul %25, %26, %cst_20 {dimension_numbers = #tpu.dot_dimension_numbers<[1], [0], [0], [1], [0, 0, 1, 1], [], []>} : vector<128x544xbf16>, vector<544x1024xbf16>, vector<128x1024xf32> -> vector<128x1024xf32>
    %c0_21 = arith.constant 0 : index
    %c0_22 = arith.constant 0 : index
    %28 = vector.load %arg9[%c0_21, %c0_22] : memref<1x1024xf32, #tpu.memory_space<vmem>>, vector<1x1024xf32>
    %29 = vector.broadcast %28 : vector<1x1024xf32> to vector<128x1024xf32>
    %30 = arith.addf %27, %29 : vector<128x1024xf32>
    %cst_23 = arith.constant 0.000000e+00 : f32
    %31 = vector.broadcast %cst_23 : f32 to vector<128x1024xf32>
    %32 = arith.maximumf %30, %31 : vector<128x1024xf32>
    %33 = arith.truncf %32 : vector<128x1024xf32> to vector<128x1024xbf16>
    %c0_24 = arith.constant 0 : index
    %c0_25 = arith.constant 0 : index
    %34 = vector.load %arg10[%c0_24, %c0_25] : memref<1024x1024xbf16, #tpu.memory_space<vmem>>, vector<1024x1024xbf16>
    %cst_26 = arith.constant dense<0.000000e+00> : vector<128x1024xf32>
    %35 = tpu.matmul %33, %34, %cst_26 {dimension_numbers = #tpu.dot_dimension_numbers<[1], [0], [0], [1], [0, 0, 1, 1], [], []>} : vector<128x1024xbf16>, vector<1024x1024xbf16>, vector<128x1024xf32> -> vector<128x1024xf32>
    %c0_27 = arith.constant 0 : index
    %c0_28 = arith.constant 0 : index
    %36 = vector.load %arg11[%c0_27, %c0_28] : memref<1x1024xf32, #tpu.memory_space<vmem>>, vector<1x1024xf32>
    %37 = vector.broadcast %36 : vector<1x1024xf32> to vector<128x1024xf32>
    %38 = arith.addf %35, %37 : vector<128x1024xf32>
    %cst_29 = arith.constant 0.000000e+00 : f32
    %39 = vector.broadcast %cst_29 : f32 to vector<128x1024xf32>
    %40 = arith.maximumf %38, %39 : vector<128x1024xf32>
    %41 = arith.truncf %40 : vector<128x1024xf32> to vector<128x1024xbf16>
    %c0_30 = arith.constant 0 : index
    %c0_31 = arith.constant 0 : index
    %42 = vector.load %arg12[%c0_30, %c0_31] : memref<1024x128xbf16, #tpu.memory_space<vmem>>, vector<1024x128xbf16>
    %cst_32 = arith.constant dense<0.000000e+00> : vector<128x128xf32>
    %43 = tpu.matmul %41, %42, %cst_32 {dimension_numbers = #tpu.dot_dimension_numbers<[1], [0], [0], [1], [0, 0, 1, 1], [], []>} : vector<128x1024xbf16>, vector<1024x128xbf16>, vector<128x128xf32> -> vector<128x128xf32>
    %c0_33 = arith.constant 0 : index
    %c0_34 = arith.constant 0 : index
    %44 = vector.load %arg13[%c0_33, %c0_34] : memref<1x128xf32, #tpu.memory_space<vmem>>, vector<1x128xf32>
    %45 = vector.broadcast %44 : vector<1x128xf32> to vector<128x128xf32>
    %46 = arith.addf %43, %45 : vector<128x128xf32>
    %c0_35 = arith.constant 0 : index
    %c0_36 = arith.constant 0 : index
    %47 = vector.load %arg14[%c0_35, %c0_36] : memref<128x128xf32, #tpu.memory_space<vmem>>, vector<128x128xf32>
    tpu.vector_store %arg14[%c0_35, %c0_36], %46 {strides = array<i32>} : memref<128x128xf32, #tpu.memory_space<vmem>>, vector<128x128xf32>,
    return
  }
  func.func @transform_0(%arg0: i32) -> (i32, i32) {
    %c0_i32 = arith.constant 0 : i32
    %c0_i32_0 = arith.constant 0 : i32
    return %arg0, %c0_i32 : i32, i32
  }
  func.func @transform_1(%arg0: i32) -> (i32, i32) {
    %c0_i32 = arith.constant 0 : i32
    %c0_i32_0 = arith.constant 0 : i32
    %c0_i32_1 = arith.constant 0 : i32
    return %c0_i32, %c0_i32_0 : i32, i32
  }
  func.func @transform_2(%arg0: i32) -> (i32, i32) {
    %c0_i32 = arith.constant 0 : i32
    %c0_i32_0 = arith.constant 0 : i32
    %c0_i32_1 = arith.constant 0 : i32
    return %c0_i32, %c0_i32_0 : i32, i32
  }
  func.func @transform_3(%arg0: i32) -> (i32, i32) {
    %c0_i32 = arith.constant 0 : i32
    %c0_i32_0 = arith.constant 0 : i32
    %c0_i32_1 = arith.constant 0 : i32
    return %c0_i32, %c0_i32_0 : i32, i32
  }
  func.func @transform_4(%arg0: i32) -> (i32, i32) {
    %c0_i32 = arith.constant 0 : i32
    %c0_i32_0 = arith.constant 0 : i32
    %c0_i32_1 = arith.constant 0 : i32
    return %c0_i32, %c0_i32_0 : i32, i32
  }
  func.func @transform_5(%arg0: i32) -> (i32, i32) {
    %c0_i32 = arith.constant 0 : i32
    %c0_i32_0 = arith.constant 0 : i32
    %c0_i32_1 = arith.constant 0 : i32
    return %c0_i32, %c0_i32_0 : i32, i32
  }
  func.func @transform_6(%arg0: i32) -> (i32, i32) {
    %c0_i32 = arith.constant 0 : i32
    %c0_i32_0 = arith.constant 0 : i32
    %c0_i32_1 = arith.constant 0 : i32
    return %c0_i32, %c0_i32_0 : i32, i32
  }
  func.func @transform_7(%arg0: i32) -> (i32, i32) {
    %c0_i32 = arith.constant 0 : i32
    %c0_i32_0 = arith.constant 0 : i32
    %c0_i32_1 = arith.constant 0 : i32
    return %c0_i32, %c0_i32_0 : i32, i32
  }
  func.func @transform_8(%arg0: i32) -> (i32, i32) {
    %c0_i32 = arith.constant 0 : i32
    %c0_i32_0 = arith.constant 0 : i32
    %c0_i32_1 = arith.constant 0 : i32
    return %c0_i32, %c0_i32_0 : i32, i32
  }
  func.func @transform_9(%arg0: i32) -> (i32, i32) {
    %c0_i32 = arith.constant 0 : i32
    %c0_i32_0 = arith.constant 0 : i32
    %c0_i32_1 = arith.constant 0 : i32
    return %c0_i32, %c0_i32_0 : i32, i32
  }
  func.func @transform_10(%arg0: i32) -> (i32, i32) {
    %c0_i32 = arith.constant 0 : i32
    %c0_i32_0 = arith.constant 0 : i32
    %c0_i32_1 = arith.constant 0 : i32
    return %c0_i32, %c0_i32_0 : i32, i32
  }
  func.func @transform_11(%arg0: i32) -> (i32, i32) {
    %c0_i32 = arith.constant 0 : i32
    %c0_i32_0 = arith.constant 0 : i32
    %c0_i32_1 = arith.constant 0 : i32
    return %c0_i32, %c0_i32_0 : i32, i32
  }
  func.func @transform_12(%arg0: i32) -> (i32, i32) {
    %c0_i32 = arith.constant 0 : i32
    %c0_i32_0 = arith.constant 0 : i32
    %c0_i32_1 = arith.constant 0 : i32
    return %c0_i32, %c0_i32_0 : i32, i32
  }
  func.func @transform_13(%arg0: i32) -> (i32, i32) {
    %c0_i32 = arith.constant 0 : i32
    %c0_i32_0 = arith.constant 0 : i32
    return %arg0, %c0_i32 : i32, i32
  }
}

</mosaic_0001>

<llo_original>
// kernel: cnn_forward.1
$region0: #{cnn_forward.1}
  #allocation0 [shape = 'u32[]', space=smem, size = 0x4, offset = 0x4, fixed_abs, tag = 'smem constant byte address 0x4 - core index']
  #allocation1 [shape = 'u32[144,128]{1,0:T(1,128)}', space=vmem, size = 0x12000, scoped, tag = 'internal scratch']
  %s0 = inlined_call_operand.vmem [shape: f32[256,20], index: 0, kind: input, shape index: {}]
  %s1 = inlined_call_operand.hbm [shape: bf16[20,152], index: 1, kind: input, shape index: {}]
  %s2 = inlined_call_operand.hbm [shape: f32[1,152], index: 2, kind: input, shape index: {}]
  %s3 = inlined_call_operand.hbm [shape: bf16[152,288], index: 3, kind: input, shape index: {}]
  %s4 = inlined_call_operand.hbm [shape: f32[1,288], index: 4, kind: input, shape index: {}]
  %s5 = inlined_call_operand.hbm [shape: bf16[288,544], index: 5, kind: input, shape index: {}]
  %s6 = inlined_call_operand.hbm [shape: f32[1,544], index: 6, kind: input, shape index: {}]
  %s7 = inlined_call_operand.hbm [shape: bf16[544,1024], index: 7, kind: input, shape index: {}]
  %s8 = inlined_call_operand.hbm [shape: f32[1,1024], index: 8, kind: input, shape index: {}]
  %s9 = inlined_call_operand.hbm [shape: bf16[1024,1024], index: 9, kind: input, shape index: {}]
  %s10 = inlined_call_operand.hbm [shape: f32[1,1024], index: 10, kind: input, shape index: {}]
  %s11 = inlined_call_operand.hbm [shape: bf16[1024,128], index: 11, kind: input, shape index: {}]
  %s12 = inlined_call_operand.hbm [shape: f32[1,128], index: 12, kind: input, shape index: {}]
  %s13 = inlined_call_operand.vmem [shape: f32[256,128], index: 13, kind: output, shape index: {}]
  %s14 = sld [smem:[#allocation0]]
  $region133: #{cnn_forward.1} parent=0
    _
  %s16 = ssub.s32 1, %s14
  %s17 = scalar_select 0, %s16, %s14
  $region1: #{cnn_forward.1} parent=0
    #allocation2 [shape = 'u8[12288]{0}', space=vmem, size = 0x3000, scoped, tag = 'input window, operand 1, single buffered']
    #allocation3 [shape = 's32[2]{0}', space=sflag, size = 0x8, scoped, tag = 'scoped memory for cnn_forward.1']
    #allocation4 [shape = 'u8[1024]{0}', space=vmem, size = 0x400, scoped, tag = 'input window, operand 2, single buffered']
    #allocation5 [shape = 's32[1]{0}', space=sflag, size = 0x4, scoped, tag = 'scoped memory for cnn_forward.1']
    #allocation6 [shape = 'u8[116736]{0}', space=vmem, size = 0x1c800, scoped, tag = 'input window, operand 3, single buffered']
    #allocation7 [shape = 'u8[1536]{0}', space=vmem, size = 0x800, scoped, tag = 'input window, operand 4, single buffered']
    #allocation8 [shape = 's32[1]{0}', space=sflag, size = 0x4, scoped, tag = 'scoped memory for cnn_forward.1']
    #allocation9 [shape = 'u8[368640]{0}', space=vmem, size = 0x5a000, scoped, tag = 'input window, operand 5, single buffered']
    #allocation10 [shape = 'u8[2560]{0}', space=vmem, size = 0xc00, scoped, tag = 'input window, operand 6, single buffered']
    #allocation11 [shape = 's32[1]{0}', space=sflag, size = 0x4, scoped, tag = 'scoped memory for cnn_forward.1']
    #allocation12 [shape = 'u8[1114112]{0}', space=vmem, size = 0x110000, scoped, tag = 'input window, operand 7, single buffered']
    #allocation13 [shape = 'u8[4096]{0}', space=vmem, size = 0x1000, scoped, tag = 'input window, operand 8, single buffered']
    #allocation14 [shape = 's32[1]{0}', space=sflag, size = 0x4, scoped, tag = 'scoped memory for cnn_forward.1']
    #allocation15 [shape = 'u8[2097152]{0}', space=vmem, size = 0x200000, scoped, tag = 'input window, operand 9, single buffered']
    #allocation16 [shape = 'u8[4096]{0}', space=vmem, size = 0x1000, scoped, tag = 'input window, operand 10, single buffered']
    #allocation17 [shape = 's32[1]{0}', space=sflag, size = 0x4, scoped, tag = 'scoped memory for cnn_forward.1']
    #allocation18 [shape = 'u8[262144]{0}', space=vmem, size = 0x40000, scoped, tag = 'input window, operand 11, single buffered']
    #allocation19 [shape = 'u8[512]{0}', space=vmem, size = 0x400, scoped, tag = 'input window, operand 12, single buffered']
    #allocation20 [shape = 's32[1]{0}', space=sflag, size = 0x4, scoped, tag = 'scoped memory for cnn_forward.1']
    %18 = vsyncpa [#allocation3], 0
    %19 = vsyncpa [#allocation5], 0
    %20 = vsyncpa [#allocation8], 0
    %21 = vsyncpa [#allocation11], 0
    %22 = vsyncpa [#allocation14], 0
    %23 = vsyncpa [#allocation17], 0
    %24 = vsyncpa [#allocation20], 0
    loop: start=0, step=1, limit=4
    $region2: #{cnn_forward.1} parent=1 // loop_pre_header
      _
    $region3: #{cnn_forward.1} parent=1 // loop_header
      %s26 = sphi 0, %s30
      %p27 = scmp.ge.s32.totalorder %s26, 4
      %s36 = sphi 0, %s38
      %s39 = sphi 0, %s36
      %s40 = sphi 0, %s39
      %s56 = sphi 0, %s40
      %s60 = sphi 0, %s60
      %s62 = sphi 0, %s60
      %s63 = sphi 0, %s62
      %s77 = sphi 0, %s63
      %s81 = sphi 0, %s81
      %s83 = sphi 0, %s81
      %s84 = sphi 0, %s83
      %s98 = sphi 0, %s84
      %s102 = sphi 0, %s102
      %s104 = sphi 0, %s102
      %s105 = sphi 0, %s104
      %s119 = sphi 0, %s105
      %s123 = sphi 0, %s123
      %s125 = sphi 0, %s123
      %s126 = sphi 0, %s125
      %s140 = sphi 0, %s126
      %s144 = sphi 0, %s144
      %s146 = sphi 0, %s144
      %s147 = sphi 0, %s146
      %s161 = sphi 0, %s147
      %s165 = sphi 0, %s165
      %s167 = sphi 0, %s165
      %s168 = sphi 0, %s167
      %s182 = sphi 0, %s168
      %s186 = sphi 0, %s186
      %s188 = sphi 0, %s186
      %s189 = sphi 0, %s188
      %s203 = sphi 0, %s189
      %s207 = sphi 0, %s207
      %s209 = sphi 0, %s207
      %s210 = sphi 0, %s209
      %s224 = sphi 0, %s210
      %s228 = sphi 0, %s228
      %s230 = sphi 0, %s228
      %s231 = sphi 0, %s230
      %s245 = sphi 0, %s231
      %s249 = sphi 0, %s249
      %s251 = sphi 0, %s249
      %s252 = sphi 0, %s251
      %s266 = sphi 0, %s252
      %s270 = sphi 0, %s270
      %s272 = sphi 0, %s270
      %s273 = sphi 0, %s272
      %s287 = sphi 0, %s273
      %s291 = sphi 0, %s291
      %s293 = sphi 0, %s291
      %s294 = sphi 0, %s293
      %s308 = sphi 0, %s294
      %s314 = sphi 0, %s316
      %s317 = sphi 0, %s314
      %s318 = sphi 0, %s317
      %s334 = sphi 0, %s318
    $region4: #{cnn_forward.1} parent=1 // loop_header_branch
      %29 = sbr.rel (%p27) target = $region8
    $region5: #{cnn_forward.1} parent=1 // loop_body
      %s31 = ssub.s32 %s26, 1
      %s32 = ssub.s32 %s26, 2
      %s33 = sadd.s32 %s26, 1
      %s34 = ssub.s32 %s26, %s33
      %p35 = scmp.eq.s32.totalorder %s34, 0
      %s37 = sadd.s32 %s36, 1
      %s38 = scalar_select %p35, %s36, %s37
      %p41 = pneg %p35
      %p42 = scmp.eq.s32.totalorder %s26, 1
      %p43 = por %p41, %p42
      %p44 = scmp.ne.s32.totalorder %s36, %s39
      %p45 = scmp.eq.s32.totalorder %s26, 0
      %p46 = por %p44, %p45
      %p47 = scmp.ne.s32.totalorder %s36, %s39
      %p48 = scmp.eq.s32.totalorder %s31, 1
      %p49 = por %p47, %p48
      %p50 = scmp.ne.s32.totalorder %s39, %s40
      %p51 = scmp.eq.s32.totalorder %s31, 0
      %p52 = por %p50, %p51
      %p53 = scmp.ne.s32.totalorder %s39, %s40
      %p54 = scmp.eq.s32.totalorder %s32, 1
      %p55 = por %p53, %p54
      %p57 = scmp.ne.s32.totalorder %s40, %s56
      %p58 = scmp.eq.s32.totalorder %s32, 0
      %p59 = por %p57, %p58
      %s61 = sadd.s32 %s60, 1
      %p64 = scmp.eq.s32.totalorder %s26, 1
      %p65 = scmp.ne.s32.totalorder %s60, %s62
      %p66 = scmp.eq.s32.totalorder %s26, 0
      %p67 = por %p65, %p66
      %p68 = scmp.ne.s32.totalorder %s60, %s62
      %p69 = scmp.eq.s32.totalorder %s31, 1
      %p70 = por %p68, %p69
      %p71 = scmp.ne.s32.totalorder %s62, %s63
      %p72 = scmp.eq.s32.totalorder %s31, 0
      %p73 = por %p71, %p72
      %p74 = scmp.ne.s32.totalorder %s62, %s63
      %p75 = scmp.eq.s32.totalorder %s32, 1
      %p76 = por %p74, %p75
      %p78 = scmp.ne.s32.totalorder %s63, %s77
      %p79 = scmp.eq.s32.totalorder %s32, 0
      %p80 = por %p78, %p79
      %s82 = sadd.s32 %s81, 1
      %p85 = scmp.eq.s32.totalorder %s26, 1
      %p86 = scmp.ne.s32.totalorder %s81, %s83
      %p87 = scmp.eq.s32.totalorder %s26, 0
      %p88 = por %p86, %p87
      %p89 = scmp.ne.s32.totalorder %s81, %s83
      %p90 = scmp.eq.s32.totalorder %s31, 1
      %p91 = por %p89, %p90
      %p92 = scmp.ne.s32.totalorder %s83, %s84
      %p93 = scmp.eq.s32.totalorder %s31, 0
      %p94 = por %p92, %p93
      %p95 = scmp.ne.s32.totalorder %s83, %s84
      %p96 = scmp.eq.s32.totalorder %s32, 1
      %p97 = por %p95, %p96
      %p99 = scmp.ne.s32.totalorder %s84, %s98
      %p100 = scmp.eq.s32.totalorder %s32, 0
      %p101 = por %p99, %p100
      %s103 = sadd.s32 %s102, 1
      %p106 = scmp.eq.s32.totalorder %s26, 1
      %p107 = scmp.ne.s32.totalorder %s102, %s104
      %p108 = scmp.eq.s32.totalorder %s26, 0
      %p109 = por %p107, %p108
      %p110 = scmp.ne.s32.totalorder %s102, %s104
      %p111 = scmp.eq.s32.totalorder %s31, 1
      %p112 = por %p110, %p111
      %p113 = scmp.ne.s32.totalorder %s104, %s105
      %p114 = scmp.eq.s32.totalorder %s31, 0
      %p115 = por %p113, %p114
      %p116 = scmp.ne.s32.totalorder %s104, %s105
      %p117 = scmp.eq.s32.totalorder %s32, 1
      %p118 = por %p116, %p117
      %p120 = scmp.ne.s32.totalorder %s105, %s119
      %p121 = scmp.eq.s32.totalorder %s32, 0
      %p122 = por %p120, %p121
      %s124 = sadd.s32 %s123, 1
      %p127 = scmp.eq.s32.totalorder %s26, 1
      %p128 = scmp.ne.s32.totalorder %s123, %s125
      %p129 = scmp.eq.s32.totalorder %s26, 0
      %p130 = por %p128, %p129
      %p131 = scmp.ne.s32.totalorder %s123, %s125
      %p132 = scmp.eq.s32.totalorder %s31, 1
      %p133 = por %p131, %p132
      %p134 = scmp.ne.s32.totalorder %s125, %s126
      %p135 = scmp.eq.s32.totalorder %s31, 0
      %p136 = por %p134, %p135
      %p137 = scmp.ne.s32.totalorder %s125, %s126
      %p138 = scmp.eq.s32.totalorder %s32, 1
      %p139 = por %p137, %p138
      %p141 = scmp.ne.s32.totalorder %s126, %s140
      %p142 = scmp.eq.s32.totalorder %s32, 0
      %p143 = por %p141, %p142
      %s145 = sadd.s32 %s144, 1
      %p148 = scmp.eq.s32.totalorder %s26, 1
      %p149 = scmp.ne.s32.totalorder %s144, %s146
      %p150 = scmp.eq.s32.totalorder %s26, 0
      %p151 = por %p149, %p150
      %p152 = scmp.ne.s32.totalorder %s144, %s146
      %p153 = scmp.eq.s32.totalorder %s31, 1
      %p154 = por %p152, %p153
      %p155 = scmp.ne.s32.totalorder %s146, %s147
      %p156 = scmp.eq.s32.totalorder %s31, 0
      %p157 = por %p155, %p156
      %p158 = scmp.ne.s32.totalorder %s146, %s147
      %p159 = scmp.eq.s32.totalorder %s32, 1
      %p160 = por %p158, %p159
      %p162 = scmp.ne.s32.totalorder %s147, %s161
      %p163 = scmp.eq.s32.totalorder %s32, 0
      %p164 = por %p162, %p163
      %s166 = sadd.s32 %s165, 1
      %p169 = scmp.eq.s32.totalorder %s26, 1
      %p170 = scmp.ne.s32.totalorder %s165, %s167
      %p171 = scmp.eq.s32.totalorder %s26, 0
      %p172 = por %p170, %p171
      %p173 = scmp.ne.s32.totalorder %s165, %s167
      %p174 = scmp.eq.s32.totalorder %s31, 1
      %p175 = por %p173, %p174
      %p176 = scmp.ne.s32.totalorder %s167, %s168
      %p177 = scmp.eq.s32.totalorder %s31, 0
      %p178 = por %p176, %p177
      %p179 = scmp.ne.s32.totalorder %s167, %s168
      %p180 = scmp.eq.s32.totalorder %s32, 1
      %p181 = por %p179, %p180
      %p183 = scmp.ne.s32.totalorder %s168, %s182
      %p184 = scmp.eq.s32.totalorder %s32, 0
      %p185 = por %p183, %p184
      %s187 = sadd.s32 %s186, 1
      %p190 = scmp.eq.s32.totalorder %s26, 1
      %p191 = scmp.ne.s32.totalorder %s186, %s188
      %p192 = scmp.eq.s32.totalorder %s26, 0
      %p193 = por %p191, %p192
      %p194 = scmp.ne.s32.totalorder %s186, %s188
      %p195 = scmp.eq.s32.totalorder %s31, 1
      %p196 = por %p194, %p195
      %p197 = scmp.ne.s32.totalorder %s188, %s189
      %p198 = scmp.eq.s32.totalorder %s31, 0
      %p199 = por %p197, %p198
      %p200 = scmp.ne.s32.totalorder %s188, %s189
      %p201 = scmp.eq.s32.totalorder %s32, 1
      %p202 = por %p200, %p201
      %p204 = scmp.ne.s32.totalorder %s189, %s203
      %p205 = scmp.eq.s32.totalorder %s32, 0
      %p206 = por %p204, %p205
      %s208 = sadd.s32 %s207, 1
      %p211 = scmp.eq.s32.totalorder %s26, 1
      %p212 = scmp.ne.s32.totalorder %s207, %s209
      %p213 = scmp.eq.s32.totalorder %s26, 0
      %p214 = por %p212, %p213
      %p215 = scmp.ne.s32.totalorder %s207, %s209
      %p216 = scmp.eq.s32.totalorder %s31, 1
      %p217 = por %p215, %p216
      %p218 = scmp.ne.s32.totalorder %s209, %s210
      %p219 = scmp.eq.s32.totalorder %s31, 0
      %p220 = por %p218, %p219
      %p221 = scmp.ne.s32.totalorder %s209, %s210
      %p222 = scmp.eq.s32.totalorder %s32, 1
      %p223 = por %p221, %p222
      %p225 = scmp.ne.s32.totalorder %s210, %s224
      %p226 = scmp.eq.s32.totalorder %s32, 0
      %p227 = por %p225, %p226
      %s229 = sadd.s32 %s228, 1
      %p232 = scmp.eq.s32.totalorder %s26, 1
      %p233 = scmp.ne.s32.totalorder %s228, %s230
      %p234 = scmp.eq.s32.totalorder %s26, 0
      %p235 = por %p233, %p234
      %p236 = scmp.ne.s32.totalorder %s228, %s230
      %p237 = scmp.eq.s32.totalorder %s31, 1
      %p238 = por %p236, %p237
      %p239 = scmp.ne.s32.totalorder %s230, %s231
      %p240 = scmp.eq.s32.totalorder %s31, 0
      %p241 = por %p239, %p240
      %p242 = scmp.ne.s32.totalorder %s230, %s231
      %p243 = scmp.eq.s32.totalorder %s32, 1
      %p244 = por %p242, %p243
      %p246 = scmp.ne.s32.totalorder %s231, %s245
      %p247 = scmp.eq.s32.totalorder %s32, 0
      %p248 = por %p246, %p247
      %s250 = sadd.s32 %s249, 1
      %p253 = scmp.eq.s32.totalorder %s26, 1
      %p254 = scmp.ne.s32.totalorder %s249, %s251
      %p255 = scmp.eq.s32.totalorder %s26, 0
      %p256 = por %p254, %p255
      %p257 = scmp.ne.s32.totalorder %s249, %s251
      %p258 = scmp.eq.s32.totalorder %s31, 1
      %p259 = por %p257, %p258
      %p260 = scmp.ne.s32.totalorder %s251, %s252
      %p261 = scmp.eq.s32.totalorder %s31, 0
      %p262 = por %p260, %p261
      %p263 = scmp.ne.s32.totalorder %s251, %s252
      %p264 = scmp.eq.s32.totalorder %s32, 1
      %p265 = por %p263, %p264
      %p267 = scmp.ne.s32.totalorder %s252, %s266
      %p268 = scmp.eq.s32.totalorder %s32, 0
      %p269 = por %p267, %p268
      %s271 = sadd.s32 %s270, 1
      %p274 = scmp.eq.s32.totalorder %s26, 1
      %p275 = scmp.ne.s32.totalorder %s270, %s272
      %p276 = scmp.eq.s32.totalorder %s26, 0
      %p277 = por %p275, %p276
      %p278 = scmp.ne.s32.totalorder %s270, %s272
      %p279 = scmp.eq.s32.totalorder %s31, 1
      %p280 = por %p278, %p279
      %p281 = scmp.ne.s32.totalorder %s272, %s273
      %p282 = scmp.eq.s32.totalorder %s31, 0
      %p283 = por %p281, %p282
      %p284 = scmp.ne.s32.totalorder %s272, %s273
      %p285 = scmp.eq.s32.totalorder %s32, 1
      %p286 = por %p284, %p285
      %p288 = scmp.ne.s32.totalorder %s273, %s287
      %p289 = scmp.eq.s32.totalorder %s32, 0
      %p290 = por %p288, %p289
      %s292 = sadd.s32 %s291, 1
      %p295 = scmp.eq.s32.totalorder %s26, 1
      %p296 = scmp.ne.s32.totalorder %s291, %s293
      %p297 = scmp.eq.s32.totalorder %s26, 0
      %p298 = por %p296, %p297
      %p299 = scmp.ne.s32.totalorder %s291, %s293
      %p300 = scmp.eq.s32.totalorder %s31, 1
      %p301 = por %p299, %p300
      %p302 = scmp.ne.s32.totalorder %s293, %s294
      %p303 = scmp.eq.s32.totalorder %s31, 0
      %p304 = por %p302, %p303
      %p305 = scmp.ne.s32.totalorder %s293, %s294
      %p306 = scmp.eq.s32.totalorder %s32, 1
      %p307 = por %p305, %p306
      %p309 = scmp.ne.s32.totalorder %s294, %s308
      %p310 = scmp.eq.s32.totalorder %s32, 0
      %p311 = por %p309, %p310
      %s312 = ssub.s32 %s26, %s33
      %p313 = scmp.eq.s32.totalorder %s312, 0
      %s315 = sadd.s32 %s314, 1
      %s316 = scalar_select %p313, %s314, %s315
      %p319 = pneg %p313
      %p320 = scmp.eq.s32.totalorder %s26, 1
      %p321 = por %p319, %p320
      %p322 = scmp.ne.s32.totalorder %s314, %s317
      %p323 = scmp.eq.s32.totalorder %s26, 0
      %p324 = por %p322, %p323
      %p325 = scmp.ne.s32.totalorder %s314, %s317
      %p326 = scmp.eq.s32.totalorder %s31, 1
      %p327 = por %p325, %p326
      %p328 = scmp.ne.s32.totalorder %s317, %s318
      %p329 = scmp.eq.s32.totalorder %s31, 0
      %p330 = por %p328, %p329
      %p331 = scmp.ne.s32.totalorder %s317, %s318
      %p332 = scmp.eq.s32.totalorder %s32, 1
      %p333 = por %p331, %p332
      %p335 = scmp.ne.s32.totalorder %s318, %s334
      %p336 = scmp.eq.s32.totalorder %s32, 0
      %p337 = por %p335, %p336
      %p338 = scmp.le.s32.totalorder 1, %s26
      %p339 = scmp.lt.s32.totalorder %s26, 3
      %p340 = pnand %p338, %p339
      %p341 = pneg %p340
      // Predicated region
      $region9: #{cnn_forward.1} parent=5 // pred_check
        _
      $region10: #{cnn_forward.1} parent=5 // pred_check_branch
        %343 = sbr.rel (%p340) target = $region12
      $region11: #{cnn_forward.1} parent=5 // pred_region
        %s344 = ssub.s32 %s26, 1
        // Predicated region
        $region13: #{cnn_forward.1} parent=11 // pred_check
          %p345 = pneg %p73
        $region14: #{cnn_forward.1} parent=11 // pred_check_branch
          %347 = sbr.rel (%p345) target = $region16
        $region15: #{cnn_forward.1} parent=11 // pred_region
          %s349 = ssub.s32 384, 384
          %350 = vsyncadd [#allocation3], %s349
          %s351 = sshll.u32 [#allocation2], 4
          %s352 = int_to_ptr.vmem [resolvable:$true] %s351
          %357 = dma.hbm_to_vmem [thread:$0]  %s1, 384, %s352, [#allocation3], 128, 128, 8
        $region16: #{cnn_forward.1} parent=11 // pred_fallthru
          _
        // Predicated region
        $region17: #{cnn_forward.1} parent=11 // pred_check
          %p358 = pneg %p94
        $region18: #{cnn_forward.1} parent=11 // pred_check_branch
          %360 = sbr.rel (%p358) target = $region20
        $region19: #{cnn_forward.1} parent=11 // pred_region
          %s362 = ssub.s32 32, 32
          %363 = vsyncadd [#allocation5], %s362
          %s365 = sshll.u32 [#allocation4], 4
          %s366 = int_to_ptr.vmem [resolvable:$true] %s365
          %368 = dma.hbm_to_vmem [thread:$0]  %s2, 32, %s366, [#allocation5]
        $region20: #{cnn_forward.1} parent=11 // pred_fallthru
          _
        // Predicated region
        $region21: #{cnn_forward.1} parent=11 // pred_check
          %p369 = pneg %p115
        $region22: #{cnn_forward.1} parent=11 // pred_check_branch
          %371 = sbr.rel (%p369) target = $region24
        $region23: #{cnn_forward.1} parent=11 // pred_region
          %s373 = ssub.s32 3648, 3648
          %374 = vsyncadd [#allocation5], %s373
          %s375 = sshll.u32 [#allocation6], 4
          %s376 = int_to_ptr.vmem [resolvable:$true] %s375
          %381 = dma.hbm_to_vmem [thread:$0]  %s3, 3648, %s376, [#allocation5], 192, 192, 12
        $region24: #{cnn_forward.1} parent=11 // pred_fallthru
          _
        // Predicated region
        $region25: #{cnn_forward.1} parent=11 // pred_check
          %p382 = pneg %p136
        $region26: #{cnn_forward.1} parent=11 // pred_check_branch
          %384 = sbr.rel (%p382) target = $region28
        $region27: #{cnn_forward.1} parent=11 // pred_region
          %s386 = ssub.s32 48, 48
          %387 = vsyncadd [#allocation8], %s386
          %s389 = sshll.u32 [#allocation7], 4
          %s390 = int_to_ptr.vmem [resolvable:$true] %s389
          %392 = dma.hbm_to_vmem [thread:$0]  %s4, 48, %s390, [#allocation8]
        $region28: #{cnn_forward.1} parent=11 // pred_fallthru
          _
        // Predicated region
        $region29: #{cnn_forward.1} parent=11 // pred_check
          %p393 = pneg %p157
        $region30: #{cnn_forward.1} parent=11 // pred_check_branch
          %395 = sbr.rel (%p393) target = $region32
        $region31: #{cnn_forward.1} parent=11 // pred_region
          %s397 = ssub.s32 11520, 11520
          %398 = vsyncadd [#allocation8], %s397
          %s399 = sshll.u32 [#allocation9], 4
          %s400 = int_to_ptr.vmem [resolvable:$true] %s399
          %405 = dma.hbm_to_vmem [thread:$0]  %s5, 11520, %s400, [#allocation8], 320, 320, 20
        $region32: #{cnn_forward.1} parent=11 // pred_fallthru
          _
        // Predicated region
        $region33: #{cnn_forward.1} parent=11 // pred_check
          %p406 = pneg %p178
        $region34: #{cnn_forward.1} parent=11 // pred_check_branch
          %408 = sbr.rel (%p406) target = $region36
        $region35: #{cnn_forward.1} parent=11 // pred_region
          %s410 = ssub.s32 80, 80
          %411 = vsyncadd [#allocation11], %s410
          %s413 = sshll.u32 [#allocation10], 4
          %s414 = int_to_ptr.vmem [resolvable:$true] %s413
          %416 = dma.hbm_to_vmem [thread:$0]  %s6, 80, %s414, [#allocation11]
        $region36: #{cnn_forward.1} parent=11 // pred_fallthru
          _
        // Predicated region
        $region37: #{cnn_forward.1} parent=11 // pred_check
          %p417 = pneg %p199
        $region38: #{cnn_forward.1} parent=11 // pred_check_branch
          %419 = sbr.rel (%p417) target = $region40
        $region39: #{cnn_forward.1} parent=11 // pred_region
          %s421 = ssub.s32 34816, 34816
          %422 = vsyncadd [#allocation11], %s421
          %s423 = sshll.u32 [#allocation12], 4
          %s424 = int_to_ptr.vmem [resolvable:$true] %s423
          %429 = dma.hbm_to_vmem [thread:$0]  %s7, 34816, %s424, [#allocation11], 512, 512, 32
        $region40: #{cnn_forward.1} parent=11 // pred_fallthru
          _
        // Predicated region
        $region41: #{cnn_forward.1} parent=11 // pred_check
          %p430 = pneg %p220
        $region42: #{cnn_forward.1} parent=11 // pred_check_branch
          %432 = sbr.rel (%p430) target = $region44
        $region43: #{cnn_forward.1} parent=11 // pred_region
          %s434 = ssub.s32 128, 128
          %435 = vsyncadd [#allocation14], %s434
          %s437 = sshll.u32 [#allocation13], 4
          %s438 = int_to_ptr.vmem [resolvable:$true] %s437
          %440 = dma.hbm_to_vmem [thread:$0]  %s8, 128, %s438, [#allocation14]
        $region44: #{cnn_forward.1} parent=11 // pred_fallthru
          _
        // Predicated region
        $region45: #{cnn_forward.1} parent=11 // pred_check
          %p441 = pneg %p241
        $region46: #{cnn_forward.1} parent=11 // pred_check_branch
          %443 = sbr.rel (%p441) target = $region48
        $region47: #{cnn_forward.1} parent=11 // pred_region
          %s445 = ssub.s32 65536, 65536
          %446 = vsyncadd [#allocation14], %s445
          %s447 = sshll.u32 [#allocation15], 4
          %s448 = int_to_ptr.vmem [resolvable:$true] %s447
          %453 = dma.hbm_to_vmem [thread:$0]  %s9, 65536, %s448, [#allocation14], 512, 512, 32
        $region48: #{cnn_forward.1} parent=11 // pred_fallthru
          _
        // Predicated region
        $region49: #{cnn_forward.1} parent=11 // pred_check
          %p454 = pneg %p262
        $region50: #{cnn_forward.1} parent=11 // pred_check_branch
          %456 = sbr.rel (%p454) target = $region52
        $region51: #{cnn_forward.1} parent=11 // pred_region
          %s458 = ssub.s32 128, 128
          %459 = vsyncadd [#allocation17], %s458
          %s461 = sshll.u32 [#allocation16], 4
          %s462 = int_to_ptr.vmem [resolvable:$true] %s461
          %464 = dma.hbm_to_vmem [thread:$0]  %s10, 128, %s462, [#allocation17]
        $region52: #{cnn_forward.1} parent=11 // pred_fallthru
          _
        // Predicated region
        $region53: #{cnn_forward.1} parent=11 // pred_check
          %p465 = pneg %p283
        $region54: #{cnn_forward.1} parent=11 // pred_check_branch
          %467 = sbr.rel (%p465) target = $region56
        $region55: #{cnn_forward.1} parent=11 // pred_region
          %s469 = ssub.s32 8192, 8192
          %470 = vsyncadd [#allocation17], %s469
          %s471 = sshll.u32 [#allocation18], 4
          %s472 = int_to_ptr.vmem [resolvable:$true] %s471
          %477 = dma.hbm_to_vmem [thread:$0]  %s11, 8192, %s472, [#allocation17], 64, 64, 4
        $region56: #{cnn_forward.1} parent=11 // pred_fallthru
          _
        // Predicated region
        $region57: #{cnn_forward.1} parent=11 // pred_check
          %p478 = pneg %p304
        $region58: #{cnn_forward.1} parent=11 // pred_check_branch
          %480 = sbr.rel (%p478) target = $region60
        $region59: #{cnn_forward.1} parent=11 // pred_region
          %s482 = ssub.s32 16, 16
          %483 = vsyncadd [#allocation20], %s482
          %s485 = sshll.u32 [#allocation19], 4
          %s486 = int_to_ptr.vmem [resolvable:$true] %s485
          %488 = dma.hbm_to_vmem [thread:$0]  %s12, 16, %s486, [#allocation20]
        $region60: #{cnn_forward.1} parent=11 // pred_fallthru
          _
      $region12: #{cnn_forward.1} parent=5 // pred_fallthru
        _
      %p489 = scmp.lt.s32.totalorder %s26, 2
      // Predicated region
      $region61: #{cnn_forward.1} parent=5 // pred_check
        %p490 = pneg %p489
      $region62: #{cnn_forward.1} parent=5 // pred_check_branch
        %492 = sbr.rel (%p490) target = $region64
      $region63: #{cnn_forward.1} parent=5 // pred_region
        // Predicated region
        $region65: #{cnn_forward.1} parent=63 // pred_check
          %p493 = pneg %p46
        $region66: #{cnn_forward.1} parent=63 // pred_check_branch
          %495 = sbr.rel (%p493) target = $region68
        $region67: #{cnn_forward.1} parent=63 // pred_region
          %s496 = smul.u32 16, %s26
          %p497 = scmp.lt.s32.totalorder %s496, 31
          %s498 = scalar_select %p497, %s496, 31
          %s499 = smul.addr %s498, 8
          %s500 = scalar_lea.vmem %s0, %s499
          %s501 = smul.u32 16, %s26
        $region68: #{cnn_forward.1} parent=63 // pred_fallthru
          _
      $region64: #{cnn_forward.1} parent=5 // pred_fallthru
        _
      %p502 = scmp.le.s32.totalorder 1, %s26
      %p503 = scmp.lt.s32.totalorder %s26, 3
      %p504 = pnand %p502, %p503
      %p505 = pneg %p504
      // Predicated region
      $region69: #{cnn_forward.1} parent=5 // pred_check
        _
      $region70: #{cnn_forward.1} parent=5 // pred_check_branch
        %507 = sbr.rel (%p504) target = $region72
      $region71: #{cnn_forward.1} parent=5 // pred_region
        %s508 = ssub.s32 %s26, 1
        // Predicated region
        $region73: #{cnn_forward.1} parent=71 // pred_check
          %p509 = pneg %p73
        $region74: #{cnn_forward.1} parent=71 // pred_check_branch
          %511 = sbr.rel (%p509) target = $region76
        $region75: #{cnn_forward.1} parent=71 // pred_region
          %512 = dma.done [#allocation3], 384
        $region76: #{cnn_forward.1} parent=71 // pred_fallthru
          _
        // Predicated region
        $region77: #{cnn_forward.1} parent=71 // pred_check
          %p513 = pneg %p94
        $region78: #{cnn_forward.1} parent=71 // pred_check_branch
          %515 = sbr.rel (%p513) target = $region80
        $region79: #{cnn_forward.1} parent=71 // pred_region
          %516 = dma.done [#allocation5], 32
        $region80: #{cnn_forward.1} parent=71 // pred_fallthru
          _
        // Predicated region
        $region81: #{cnn_forward.1} parent=71 // pred_check
          %p517 = pneg %p115
        $region82: #{cnn_forward.1} parent=71 // pred_check_branch
          %519 = sbr.rel (%p517) target = $region84
        $region83: #{cnn_forward.1} parent=71 // pred_region
          %520 = dma.done [#allocation5], 3648
        $region84: #{cnn_forward.1} parent=71 // pred_fallthru
          _
        // Predicated region
        $region85: #{cnn_forward.1} parent=71 // pred_check
          %p521 = pneg %p136
        $region86: #{cnn_forward.1} parent=71 // pred_check_branch
          %523 = sbr.rel (%p521) target = $region88
        $region87: #{cnn_forward.1} parent=71 // pred_region
          %524 = dma.done [#allocation8], 48
        $region88: #{cnn_forward.1} parent=71 // pred_fallthru
          _
        // Predicated region
        $region89: #{cnn_forward.1} parent=71 // pred_check
          %p525 = pneg %p157
        $region90: #{cnn_forward.1} parent=71 // pred_check_branch
          %527 = sbr.rel (%p525) target = $region92
        $region91: #{cnn_forward.1} parent=71 // pred_region
          %528 = dma.done [#allocation8], 11520
        $region92: #{cnn_forward.1} parent=71 // pred_fallthru
          _
        // Predicated region
        $region93: #{cnn_forward.1} parent=71 // pred_check
          %p529 = pneg %p178
        $region94: #{cnn_forward.1} parent=71 // pred_check_branch
          %531 = sbr.rel (%p529) target = $region96
        $region95: #{cnn_forward.1} parent=71 // pred_region
          %532 = dma.done [#allocation11], 80
        $region96: #{cnn_forward.1} parent=71 // pred_fallthru
          _
        // Predicated region
        $region97: #{cnn_forward.1} parent=71 // pred_check
          %p533 = pneg %p199
        $region98: #{cnn_forward.1} parent=71 // pred_check_branch
          %535 = sbr.rel (%p533) target = $region100
        $region99: #{cnn_forward.1} parent=71 // pred_region
          %536 = dma.done [#allocation11], 34816
        $region100: #{cnn_forward.1} parent=71 // pred_fallthru
          _
        // Predicated region
        $region101: #{cnn_forward.1} parent=71 // pred_check
          %p537 = pneg %p220
        $region102: #{cnn_forward.1} parent=71 // pred_check_branch
          %539 = sbr.rel (%p537) target = $region104
        $region103: #{cnn_forward.1} parent=71 // pred_region
          %540 = dma.done [#allocation14], 128
        $region104: #{cnn_forward.1} parent=71 // pred_fallthru
          _
        // Predicated region
        $region105: #{cnn_forward.1} parent=71 // pred_check
          %p541 = pneg %p241
        $region106: #{cnn_forward.1} parent=71 // pred_check_branch
          %543 = sbr.rel (%p541) target = $region108
        $region107: #{cnn_forward.1} parent=71 // pred_region
          %544 = dma.done [#allocation14], 65536
        $region108: #{cnn_forward.1} parent=71 // pred_fallthru
          _
        // Predicated region
        $region109: #{cnn_forward.1} parent=71 // pred_check
          %p545 = pneg %p262
        $region110: #{cnn_forward.1} parent=71 // pred_check_branch
          %547 = sbr.rel (%p545) target = $region112
        $region111: #{cnn_forward.1} parent=71 // pred_region
          %548 = dma.done [#allocation17], 128
        $region112: #{cnn_forward.1} parent=71 // pred_fallthru
          _
        // Predicated region
        $region113: #{cnn_forward.1} parent=71 // pred_check
          %p549 = pneg %p283
        $region114: #{cnn_forward.1} parent=71 // pred_check_branch
          %551 = sbr.rel (%p549) target = $region116
        $region115: #{cnn_forward.1} parent=71 // pred_region
          %552 = dma.done [#allocation17], 8192
        $region116: #{cnn_forward.1} parent=71 // pred_fallthru
          _
        // Predicated region
        $region117: #{cnn_forward.1} parent=71 // pred_check
          %p553 = pneg %p304
        $region118: #{cnn_forward.1} parent=71 // pred_check_branch
          %555 = sbr.rel (%p553) target = $region120
        $region119: #{cnn_forward.1} parent=71 // pred_region
          %556 = dma.done [#allocation20], 16
        $region120: #{cnn_forward.1} parent=71 // pred_fallthru
          _
        %s557 = smul.u32 16, %s31
        %p558 = scmp.lt.s32.totalorder %s557, 31
        %s559 = scalar_select %p558, %s557, 31
        %s560 = smul.addr %s559, 8
        %s561 = scalar_lea.vmem %s0, %s560
        %p562 = pneg %p52
        %p563 = pneg %p49
        %p564 = pneg %p73
        %p565 = pneg %p70
        %p566 = pneg %p94
        %p567 = pneg %p91
        %p568 = pneg %p115
        %p569 = pneg %p112
        %p570 = pneg %p136
        %p571 = pneg %p133
        %p572 = pneg %p157
        %p573 = pneg %p154
        %p574 = pneg %p178
        %p575 = pneg %p175
        %p576 = pneg %p199
        %p577 = pneg %p196
        %p578 = pneg %p220
        %p579 = pneg %p217
        %p580 = pneg %p241
        %p581 = pneg %p238
        %p582 = pneg %p262
        %p583 = pneg %p259
        %p584 = pneg %p283
        %p585 = pneg %p280
        %p586 = pneg %p304
        %p587 = pneg %p301
        %p588 = pneg %p330
        %p589 = pneg %p327
        %s590 = smul.u32 16, %s31
        %p591 = scmp.lt.s32.totalorder %s590, 31
        %s592 = scalar_select %p591, %s590, 31
        %s593 = smul.addr %s592, 8
        %s594 = scalar_lea.vmem %s13, %s593
        %s595 = smul.u32 16, %s31
        %p596 = scmp.lt.s32.totalorder %s595, 31
        %s597 = scalar_select %p596, %s595, 31
        %s598 = smul.addr %s597, 8
        %s599 = scalar_lea.vmem %s0, %s598
        %s600 = smul.u32 16, %s31
        %s601 = smul.u32 16, %s31
        %p602 = scmp.lt.s32.totalorder %s601, 31
        %s603 = scalar_select %p602, %s601, 31
        %s604 = smul.addr %s603, 8
        %s605 = scalar_lea.vmem %s13, %s604
        %s606 = smul.u32 16, %s31
        %v608 = vld [vmem:[%s599] sm:$0xff]
        %v609 = vld [vmem:[%s599 + $0x8] sm:$0xff]
        %v610 = vld [vmem:[%s599 + $0x10] sm:$0xff]
        %v611 = vld [vmem:[%s599 + $0x18] sm:$0xff]
        %v612 = vld [vmem:[%s599 + $0x20] sm:$0xff]
        %v613 = vld [vmem:[%s599 + $0x28] sm:$0xff]
        %v614 = vld [vmem:[%s599 + $0x30] sm:$0xff]
        %v615 = vld [vmem:[%s599 + $0x38] sm:$0xff]
        %v616 = vld [vmem:[%s599 + $0x40] sm:$0xff]
        %v617 = vld [vmem:[%s599 + $0x48] sm:$0xff]
        %v618 = vld [vmem:[%s599 + $0x50] sm:$0xff]
        %v619 = vld [vmem:[%s599 + $0x58] sm:$0xff]
        %v620 = vld [vmem:[%s599 + $0x60] sm:$0xff]
        %v621 = vld [vmem:[%s599 + $0x68] sm:$0xff]
        %v622 = vld [vmem:[%s599 + $0x70] sm:$0xff]
        %v623 = vld [vmem:[%s599 + $0x78] sm:$0xff]
        %v624 = vpack.c.bf16 %v609, %v608
        %v625 = vpack.c.bf16 %v611, %v610
        %v626 = vpack.c.bf16 %v613, %v612
        %v627 = vpack.c.bf16 %v615, %v614
        %v628 = vpack.c.bf16 %v617, %v616
        %v629 = vpack.c.bf16 %v619, %v618
        %v630 = vpack.c.bf16 %v621, %v620
        %v631 = vpack.c.bf16 %v623, %v622
        %v632 = vld [vmem:[#allocation2] sm:$0xff]
        %v633 = vld [vmem:[#allocation2 + $0x8] sm:$0xff]
        %v634 = vld [vmem:[#allocation2 + $0x10] sm:$0x33]
        %v635 = vld [vmem:[#allocation4] sm:$0x3]
        %v637 = vlaneseq
        %v638 = vshrl.u32 %v637, 7
        %v639 = vsub.s32 0, %v638
        %v640 = vrot.slane %v635, %v639
        %v641 = vlaneseq
        %v642 = vshrl.u32 %v641, 7
        %v643 = vsub.s32 1, %v642
        %v644 = vrot.slane %v635, %v643
        %v650 = vunpack.c.l.b16 %v632
        %v651 = vunpack.c.h.b16 %v632
        %v652 = vunpack.c.l.b16 %v633
        %v653 = vunpack.c.h.b16 %v633
        %v654 = vunpack.c.l.b16 %v634
        %v655 = vunpack.c.h.b16 %v634
        %v656 = vpack.c.b16 %v652, %v650
        %v657 = vpack.c.b16 %v653, %v651
        %v658 = vpack.c.b16 %v654, %v654
        %v659 = vpack.c.b16 %v655, %v655
        %vm662 = vcmask 162816
        %v664 = vsel %vm662, %v624, 0
        %v667 = vsel %vm662, %v625, 0
        %v670 = vsel %vm662, %v626, 0
        %v673 = vsel %vm662, %v627, 0
        %v676 = vsel %vm662, %v628, 0
        %v679 = vsel %vm662, %v629, 0
        %v682 = vsel %vm662, %v630, 0
        %v685 = vsel %vm662, %v631, 0
        %vm687 = vcmask 1041408
        %v689 = vsel %vm687, %v658, 0
        %v692 = vsel %vm687, %v659, 0
        %694 = vmatprep.subr.bf16.mxu0 %v657
        %695 = vmatpush1.bf16.msra.mxu0 %v656
        %696 = vmatprep.subr.bf16.mxu0 %v692
        %697 = vmatpush1.bf16.msra.mxu0 %v689
        %698 = vmatprep.subr.bf16.mxu0 0
        %699 = vmatpush1.bf16.msra.mxu0 0
        %700 = vmatprep.subr.bf16.mxu0 0
        %701 = vmatpush1.bf16.msra.mxu0 0
        %702 = vmatprep.subr.bf16.mxu0 0
        %703 = vmatpush1.bf16.msra.mxu0 0
        %704 = vmatprep.subr.bf16.mxu0 0
        %705 = vmatpush1.bf16.msra.mxu0 0
        %706 = vmatprep.subr.bf16.mxu0 0
        %707 = vmatpush1.bf16.msra.mxu0 0
        %708 = vmatprep.subr.bf16.mxu0 0
        %709 = vmatpush1.bf16.msra.mxu0 0
        %710 = vmatprep.subr.bf16.mxu0 0
        %711 = vmatpush1.bf16.msra.mxu0 0
        %712 = vmatprep.subr.bf16.mxu0 0
        %713 = vmatpush1.bf16.msra.mxu0 0
        %714 = vmatprep.subr.bf16.mxu0 0
        %715 = vmatpush1.bf16.msra.mxu0 0
        %716 = vmatprep.subr.bf16.mxu0 0
        %717 = vmatpush1.bf16.msra.mxu0 0
        %718 = vmatprep.subr.bf16.mxu0 0
        %719 = vmatpush1.bf16.msra.mxu0 0
        %720 = vmatprep.subr.bf16.mxu0 0
        %721 = vmatpush1.bf16.msra.mxu0 0
        %722 = vmatprep.subr.bf16.mxu0 0
        %723 = vmatpush1.bf16.msra.mxu0 0
        %724 = vmatprep.subr.bf16.mxu0 0
        %725 = vmatpush1.bf16.msra.mxu0 0
        %726 = vmatprep.mubr.bf16.mxu0 0
        %727 = vmatmul.mubr.bf16.gmra.mrb[0].mxu0 %v664
        %v728 = vpop.f32.mrb[0].mxu0
        %v729 = vadd.f32 %v640, %v728
        %v730 = vpop.f32.mrb[0].mxu0
        %v731 = vadd.f32 %v644, %v730
        %v732 = vpop.f32.mrb[0].mxu0
        %v733 = vadd.f32 %v640, %v732
        %v734 = vpop.f32.mrb[0].mxu0
        %v735 = vadd.f32 %v644, %v734
        %736 = vmatprep.mubr.bf16.mxu0 0
        %737 = vmatmul.mubr.bf16.gmra.mrb[0].mxu0 %v667
        %v738 = vpop.f32.mrb[0].mxu0
        %v739 = vadd.f32 %v640, %v738
        %v740 = vpop.f32.mrb[0].mxu0
        %v741 = vadd.f32 %v644, %v740
        %v742 = vpop.f32.mrb[0].mxu0
        %v743 = vadd.f32 %v640, %v742
        %v744 = vpop.f32.mrb[0].mxu0
        %v745 = vadd.f32 %v644, %v744
        %746 = vmatprep.mubr.bf16.mxu0 0
        %747 = vmatmul.mubr.bf16.gmra.mrb[0].mxu0 %v670
        %v748 = vpop.f32.mrb[0].mxu0
        %v749 = vadd.f32 %v640, %v748
        %v750 = vpop.f32.mrb[0].mxu0
        %v751 = vadd.f32 %v644, %v750
        %v752 = vpop.f32.mrb[0].mxu0
        %v753 = vadd.f32 %v640, %v752
        %v754 = vpop.f32.mrb[0].mxu0
        %v755 = vadd.f32 %v644, %v754
        %756 = vmatprep.mubr.bf16.mxu0 0
        %757 = vmatmul.mubr.bf16.gmra.mrb[0].mxu0 %v673
        %v758 = vpop.f32.mrb[0].mxu0
        %v759 = vadd.f32 %v640, %v758
        %v760 = vpop.f32.mrb[0].mxu0
        %v761 = vadd.f32 %v644, %v760
        %v762 = vpop.f32.mrb[0].mxu0
        %v763 = vadd.f32 %v640, %v762
        %v764 = vpop.f32.mrb[0].mxu0
        %v765 = vadd.f32 %v644, %v764
        %766 = vmatprep.mubr.bf16.mxu0 0
        %767 = vmatmul.mubr.bf16.gmra.mrb[0].mxu0 %v676
        %v768 = vpop.f32.mrb[0].mxu0
        %v769 = vadd.f32 %v640, %v768
        %v770 = vpop.f32.mrb[0].mxu0
        %v771 = vadd.f32 %v644, %v770
        %v772 = vpop.f32.mrb[0].mxu0
        %v773 = vadd.f32 %v640, %v772
        %v774 = vpop.f32.mrb[0].mxu0
        %v775 = vadd.f32 %v644, %v774
        %776 = vmatprep.mubr.bf16.mxu0 0
        %777 = vmatmul.mubr.bf16.gmra.mrb[0].mxu0 %v679
        %v778 = vpop.f32.mrb[0].mxu0
        %v779 = vadd.f32 %v640, %v778
        %v780 = vpop.f32.mrb[0].mxu0
        %v781 = vadd.f32 %v644, %v780
        %v782 = vpop.f32.mrb[0].mxu0
        %v783 = vadd.f32 %v640, %v782
        %v784 = vpop.f32.mrb[0].mxu0
        %v785 = vadd.f32 %v644, %v784
        %786 = vmatprep.mubr.bf16.mxu0 0
        %787 = vmatmul.mubr.bf16.gmra.mrb[0].mxu0 %v682
        %v788 = vpop.f32.mrb[0].mxu0
        %v789 = vadd.f32 %v640, %v788
        %v790 = vpop.f32.mrb[0].mxu0
        %v791 = vadd.f32 %v644, %v790
        %v792 = vpop.f32.mrb[0].mxu0
        %v793 = vadd.f32 %v640, %v792
        %v794 = vpop.f32.mrb[0].mxu0
        %v795 = vadd.f32 %v644, %v794
        %796 = vmatprep.mubr.bf16.mxu0 0
        %797 = vmatmul.mubr.bf16.gmra.mrb[0].mxu0 %v685
        %v798 = vpop.f32.mrb[0].mxu0
        %v799 = vadd.f32 %v640, %v798
        %v800 = vpop.f32.mrb[0].mxu0
        %v801 = vadd.f32 %v644, %v800
        %v802 = vpop.f32.mrb[0].mxu0
        %v803 = vadd.f32 %v640, %v802
        %v804 = vpop.f32.mrb[0].mxu0
        %v805 = vadd.f32 %v644, %v804
        %806 = vdwg.mxu0
        %v807 = vmax.f32 %v729, 0.0
        %v808 = vmax.f32 %v731, 0.0
        %v809 = vmax.f32 %v733, 0.0
        %v810 = vmax.f32 %v735, 0.0
        %v811 = vmax.f32 %v739, 0.0
        %v812 = vmax.f32 %v741, 0.0
        %v813 = vmax.f32 %v743, 0.0
        %v814 = vmax.f32 %v745, 0.0
        %v815 = vmax.f32 %v749, 0.0
        %v816 = vmax.f32 %v751, 0.0
        %v817 = vmax.f32 %v753, 0.0
        %v818 = vmax.f32 %v755, 0.0
        %v819 = vmax.f32 %v759, 0.0
        %v820 = vmax.f32 %v761, 0.0
        %v821 = vmax.f32 %v763, 0.0
        %v822 = vmax.f32 %v765, 0.0
        %v823 = vmax.f32 %v769, 0.0
        %v824 = vmax.f32 %v771, 0.0
        %v825 = vmax.f32 %v773, 0.0
        %v826 = vmax.f32 %v775, 0.0
        %v827 = vmax.f32 %v779, 0.0
        %v828 = vmax.f32 %v781, 0.0
        %v829 = vmax.f32 %v783, 0.0
        %v830 = vmax.f32 %v785, 0.0
        %v831 = vmax.f32 %v789, 0.0
        %v832 = vmax.f32 %v791, 0.0
        %v833 = vmax.f32 %v793, 0.0
        %v834 = vmax.f32 %v795, 0.0
        %v835 = vmax.f32 %v799, 0.0
        %v836 = vmax.f32 %v801, 0.0
        %v837 = vmax.f32 %v803, 0.0
        %v838 = vmax.f32 %v805, 0.0
        %v839 = vpack.c.bf16 %v809, %v807
        %v840 = vpack.c.bf16 %v810, %v808
        %v841 = vpack.c.bf16 %v813, %v811
        %v842 = vpack.c.bf16 %v814, %v812
        %v843 = vpack.c.bf16 %v817, %v815
        %v844 = vpack.c.bf16 %v818, %v816
        %v845 = vpack.c.bf16 %v821, %v819
        %v846 = vpack.c.bf16 %v822, %v820
        %v847 = vpack.c.bf16 %v825, %v823
        %v848 = vpack.c.bf16 %v826, %v824
        %v849 = vpack.c.bf16 %v829, %v827
        %v850 = vpack.c.bf16 %v830, %v828
        %v851 = vpack.c.bf16 %v833, %v831
        %v852 = vpack.c.bf16 %v834, %v832
        %v853 = vpack.c.bf16 %v837, %v835
        %v854 = vpack.c.bf16 %v838, %v836
        %v855 = vld [vmem:[#allocation6] sm:$0xff]
        %v856 = vld [vmem:[#allocation6 + $0x8] sm:$0xf]
        %v857 = vld [vmem:[#allocation6 + $0xc] sm:$0xff]
        %v858 = vld [vmem:[#allocation6 + $0x14] sm:$0xf]
        %v859 = vld [vmem:[#allocation6 + $0x18] sm:$0xff]
        %v860 = vld [vmem:[#allocation6 + $0x20] sm:$0xf]
        %v861 = vld [vmem:[#allocation6 + $0x24] sm:$0xff]
        %v862 = vld [vmem:[#allocation6 + $0x2c] sm:$0xf]
        %v863 = vld [vmem:[#allocation6 + $0x30] sm:$0xff]
        %v864 = vld [vmem:[#allocation6 + $0x38] sm:$0xf]
        %v865 = vld [vmem:[#allocation6 + $0x3c] sm:$0xff]
        %v866 = vld [vmem:[#allocation6 + $0x44] sm:$0xf]
        %v867 = vld [vmem:[#allocation6 + $0x48] sm:$0xff]
        %v868 = vld [vmem:[#allocation6 + $0x50] sm:$0xf]
        %v869 = vld [vmem:[#allocation6 + $0x54] sm:$0xff]
        %v870 = vld [vmem:[#allocation6 + $0x5c] sm:$0xf]
        %v871 = vld [vmem:[#allocation6 + $0x60] sm:$0xff]
        %v872 = vld [vmem:[#allocation6 + $0x68] sm:$0xf]
        %v873 = vld [vmem:[#allocation6 + $0x6c] sm:$0xff]
        %v874 = vld [vmem:[#allocation6 + $0x74] sm:$0xf]
        %v875 = vld [vmem:[#allocation6 + $0x78] sm:$0xff]
        %v876 = vld [vmem:[#allocation6 + $0x80] sm:$0xf]
        %v877 = vld [vmem:[#allocation6 + $0x84] sm:$0xff]
        %v878 = vld [vmem:[#allocation6 + $0x8c] sm:$0xf]
        %v879 = vld [vmem:[#allocation6 + $0x90] sm:$0xff]
        %v880 = vld [vmem:[#allocation6 + $0x98] sm:$0xf]
        %v881 = vld [vmem:[#allocation6 + $0x9c] sm:$0xff]
        %v882 = vld [vmem:[#allocation6 + $0xa4] sm:$0xf]
        %v883 = vld [vmem:[#allocation6 + $0xa8] sm:$0xff]
        %v884 = vld [vmem:[#allocation6 + $0xb0] sm:$0xf]
        %v885 = vld [vmem:[#allocation6 + $0xb4] sm:$0xff]
        %v886 = vld [vmem:[#allocation6 + $0xbc] sm:$0xf]
        %v887 = vld [vmem:[#allocation6 + $0xc0] sm:$0xff]
        %v888 = vld [vmem:[#allocation6 + $0xc8] sm:$0xf]
        %v889 = vld [vmem:[#allocation6 + $0xcc] sm:$0xff]
        %v890 = vld [vmem:[#allocation6 + $0xd4] sm:$0xf]
        %v891 = vld [vmem:[#allocation6 + $0xd8] sm:$0xff]
        %v892 = vld [vmem:[#allocation6 + $0xe0] sm:$0xf]
        %v893 = vld [vmem:[#allocation7] sm:$0x7]
        %v895 = vlaneseq
        %v896 = vshrl.u32 %v895, 7
        %v897 = vsub.s32 0, %v896
        %v898 = vrot.slane %v893, %v897
        %v899 = vlaneseq
        %v900 = vshrl.u32 %v899, 7
        %v901 = vsub.s32 1, %v900
        %v902 = vrot.slane %v893, %v901
        %v903 = vlaneseq
        %v904 = vshrl.u32 %v903, 7
        %v905 = vsub.s32 2, %v904
        %v906 = vrot.slane %v893, %v905
        %v948 = vunpack.c.l.b16 %v855
        %v949 = vunpack.c.h.b16 %v855
        %v950 = vunpack.c.l.b16 %v856
        %v951 = vunpack.c.l.b16 %v857
        %v952 = vunpack.c.h.b16 %v857
        %v953 = vunpack.c.l.b16 %v858
        %v954 = vunpack.c.l.b16 %v859
        %v955 = vunpack.c.h.b16 %v859
        %v956 = vunpack.c.l.b16 %v860
        %v957 = vunpack.c.l.b16 %v861
        %v958 = vunpack.c.h.b16 %v861
        %v959 = vunpack.c.l.b16 %v862
        %v960 = vunpack.c.l.b16 %v863
        %v961 = vunpack.c.h.b16 %v863
        %v962 = vunpack.c.l.b16 %v864
        %v963 = vunpack.c.l.b16 %v865
        %v964 = vunpack.c.h.b16 %v865
        %v965 = vunpack.c.l.b16 %v866
        %v966 = vunpack.c.l.b16 %v867
        %v967 = vunpack.c.h.b16 %v867
        %v968 = vunpack.c.l.b16 %v868
        %v969 = vunpack.c.l.b16 %v869
        %v970 = vunpack.c.h.b16 %v869
        %v971 = vunpack.c.l.b16 %v870
        %v972 = vunpack.c.l.b16 %v871
        %v973 = vunpack.c.h.b16 %v871
        %v974 = vunpack.c.l.b16 %v872
        %v975 = vunpack.c.l.b16 %v873
        %v976 = vunpack.c.h.b16 %v873
        %v977 = vunpack.c.l.b16 %v874
        %v978 = vunpack.c.l.b16 %v875
        %v979 = vunpack.c.h.b16 %v875
        %v980 = vunpack.c.l.b16 %v876
        %v981 = vunpack.c.l.b16 %v877
        %v982 = vunpack.c.h.b16 %v877
        %v983 = vunpack.c.l.b16 %v878
        %v984 = vunpack.c.l.b16 %v879
        %v985 = vunpack.c.h.b16 %v879
        %v986 = vunpack.c.l.b16 %v880
        %v987 = vunpack.c.l.b16 %v881
        %v988 = vunpack.c.h.b16 %v881
        %v989 = vunpack.c.l.b16 %v882
        %v990 = vunpack.c.l.b16 %v883
        %v991 = vunpack.c.h.b16 %v883
        %v992 = vunpack.c.l.b16 %v884
        %v993 = vunpack.c.l.b16 %v885
        %v994 = vunpack.c.h.b16 %v885
        %v995 = vunpack.c.l.b16 %v886
        %v996 = vunpack.c.l.b16 %v887
        %v997 = vunpack.c.h.b16 %v887
        %v998 = vunpack.c.l.b16 %v888
        %v999 = vunpack.c.l.b16 %v889
        %v1000 = vunpack.c.h.b16 %v889
        %v1001 = vunpack.c.l.b16 %v890
        %v1002 = vunpack.c.l.b16 %v891
        %v1003 = vunpack.c.h.b16 %v891
        %v1004 = vunpack.c.l.b16 %v892
        %v1005 = vpack.c.b16 %v951, %v948
        %v1006 = vpack.c.b16 %v952, %v949
        %v1007 = vpack.c.b16 %v953, %v950
        %v1008 = vpack.c.b16 %v957, %v954
        %v1009 = vpack.c.b16 %v958, %v955
        %v1010 = vpack.c.b16 %v959, %v956
        %v1011 = vpack.c.b16 %v963, %v960
        %v1012 = vpack.c.b16 %v964, %v961
        %v1013 = vpack.c.b16 %v965, %v962
        %v1014 = vpack.c.b16 %v969, %v966
        %v1015 = vpack.c.b16 %v970, %v967
        %v1016 = vpack.c.b16 %v971, %v968
        %v1017 = vpack.c.b16 %v975, %v972
        %v1018 = vpack.c.b16 %v976, %v973
        %v1019 = vpack.c.b16 %v977, %v974
        %v1020 = vpack.c.b16 %v981, %v978
        %v1021 = vpack.c.b16 %v982, %v979
        %v1022 = vpack.c.b16 %v983, %v980
        %v1023 = vpack.c.b16 %v987, %v984
        %v1024 = vpack.c.b16 %v988, %v985
        %v1025 = vpack.c.b16 %v989, %v986
        %v1026 = vpack.c.b16 %v993, %v990
        %v1027 = vpack.c.b16 %v994, %v991
        %v1028 = vpack.c.b16 %v995, %v992
        %v1029 = vpack.c.b16 %v999, %v996
        %v1030 = vpack.c.b16 %v1000, %v997
        %v1031 = vpack.c.b16 %v1001, %v998
        %v1032 = vpack.c.b16 %v1002, %v1002
        %v1033 = vpack.c.b16 %v1003, %v1003
        %v1034 = vpack.c.b16 %v1004, %v1004
        %vm1062 = vcmask 195584
        %v1064 = vsel %vm1062, %v840, 0
        %v1067 = vsel %vm1062, %v842, 0
        %v1070 = vsel %vm1062, %v844, 0
        %v1073 = vsel %vm1062, %v846, 0
        %v1076 = vsel %vm1062, %v848, 0
        %v1079 = vsel %vm1062, %v850, 0
        %v1082 = vsel %vm1062, %v852, 0
        %v1085 = vsel %vm1062, %v854, 0
        %vm1087 = vcmask 1043456
        %v1089 = vsel %vm1087, %v1032, 0
        %v1092 = vsel %vm1087, %v1033, 0
        %v1095 = vsel %vm1087, %v1034, 0
        %1097 = vmatprep.subr.bf16.mxu0 %v1006
        %1098 = vmatpush1.bf16.msra.mxu0 %v1005
        %1099 = vmatprep.subr.bf16.mxu0 %v1009
        %1100 = vmatpush1.bf16.msra.mxu0 %v1008
        %1101 = vmatprep.subr.bf16.mxu0 %v1012
        %1102 = vmatpush1.bf16.msra.mxu0 %v1011
        %1103 = vmatprep.subr.bf16.mxu0 %v1015
        %1104 = vmatpush1.bf16.msra.mxu0 %v1014
        %1105 = vmatprep.subr.bf16.mxu0 %v1018
        %1106 = vmatpush1.bf16.msra.mxu0 %v1017
        %1107 = vmatprep.subr.bf16.mxu0 %v1021
        %1108 = vmatpush1.bf16.msra.mxu0 %v1020
        %1109 = vmatprep.subr.bf16.mxu0 %v1024
        %1110 = vmatpush1.bf16.msra.mxu0 %v1023
        %1111 = vmatprep.subr.bf16.mxu0 %v1027
        %1112 = vmatpush1.bf16.msra.mxu0 %v1026
        %1113 = vmatprep.subr.bf16.mxu0 %v1030
        %1114 = vmatpush1.bf16.msra.mxu0 %v1029
        %1115 = vmatprep.subr.bf16.mxu0 %v1092
        %1116 = vmatpush1.bf16.msra.mxu0 %v1089
        %1117 = vmatprep.subr.bf16.mxu0 0
        %1118 = vmatpush1.bf16.msra.mxu0 0
        %1119 = vmatprep.subr.bf16.mxu0 0
        %1120 = vmatpush1.bf16.msra.mxu0 0
        %1121 = vmatprep.subr.bf16.mxu0 0
        %1122 = vmatpush1.bf16.msra.mxu0 0
        %1123 = vmatprep.subr.bf16.mxu0 0
        %1124 = vmatpush1.bf16.msra.mxu0 0
        %1125 = vmatprep.subr.bf16.mxu0 0
        %1126 = vmatpush1.bf16.msra.mxu0 0
        %1127 = vmatprep.subr.bf16.mxu0 0
        %1128 = vmatpush1.bf16.msra.mxu0 0
        %1129 = vmatprep.mubr.bf16.mxu0 %v1064
        %1130 = vmatmul.mubr.bf16.gmra.mrb[0].mxu0 %v839
        %v1131 = vpop.f32.mrb[0].mxu0
        %v1132 = vadd.f32 %v898, %v1131
        %v1133 = vpop.f32.mrb[0].mxu0
        %v1134 = vadd.f32 %v902, %v1133
        %v1135 = vpop.f32.mrb[0].mxu0
        %v1136 = vadd.f32 %v898, %v1135
        %v1137 = vpop.f32.mrb[0].mxu0
        %v1138 = vadd.f32 %v902, %v1137
        %1139 = vmatprep.mubr.bf16.mxu0 %v1067
        %1140 = vmatmul.mubr.bf16.gmra.mrb[0].mxu0 %v841
        %v1141 = vpop.f32.mrb[0].mxu0
        %v1142 = vadd.f32 %v898, %v1141
        %v1143 = vpop.f32.mrb[0].mxu0
        %v1144 = vadd.f32 %v902, %v1143
        %v1145 = vpop.f32.mrb[0].mxu0
        %v1146 = vadd.f32 %v898, %v1145
        %v1147 = vpop.f32.mrb[0].mxu0
        %v1148 = vadd.f32 %v902, %v1147
        %1149 = vmatprep.mubr.bf16.mxu0 %v1070
        %1150 = vmatmul.mubr.bf16.gmra.mrb[0].mxu0 %v843
        %v1151 = vpop.f32.mrb[0].mxu0
        %v1152 = vadd.f32 %v898, %v1151
        %v1153 = vpop.f32.mrb[0].mxu0
        %v1154 = vadd.f32 %v902, %v1153
        %v1155 = vpop.f32.mrb[0].mxu0
        %v1156 = vadd.f32 %v898, %v1155
        %v1157 = vpop.f32.mrb[0].mxu0
        %v1158 = vadd.f32 %v902, %v1157
        %1159 = vmatprep.mubr.bf16.mxu0 %v1073
        %1160 = vmatmul.mubr.bf16.gmra.mrb[0].mxu0 %v845
        %v1161 = vpop.f32.mrb[0].mxu0
        %v1162 = vadd.f32 %v898, %v1161
        %v1163 = vpop.f32.mrb[0].mxu0
        %v1164 = vadd.f32 %v902, %v1163
        %v1165 = vpop.f32.mrb[0].mxu0
        %v1166 = vadd.f32 %v898, %v1165
        %v1167 = vpop.f32.mrb[0].mxu0
        %v1168 = vadd.f32 %v902, %v1167
        %1169 = vmatprep.mubr.bf16.mxu0 %v1076
        %1170 = vmatmul.mubr.bf16.gmra.mrb[0].mxu0 %v847
        %v1171 = vpop.f32.mrb[0].mxu0
        %v1172 = vadd.f32 %v898, %v1171
        %v1173 = vpop.f32.mrb[0].mxu0
        %v1174 = vadd.f32 %v902, %v1173
        %v1175 = vpop.f32.mrb[0].mxu0
        %v1176 = vadd.f32 %v898, %v1175
        %v1177 = vpop.f32.mrb[0].mxu0
        %v1178 = vadd.f32 %v902, %v1177
        %1179 = vmatprep.mubr.bf16.mxu0 %v1079
        %1180 = vmatmul.mubr.bf16.gmra.mrb[0].mxu0 %v849
        %v1181 = vpop.f32.mrb[0].mxu0
        %v1182 = vadd.f32 %v898, %v1181
        %v1183 = vpop.f32.mrb[0].mxu0
        %v1184 = vadd.f32 %v902, %v1183
        %v1185 = vpop.f32.mrb[0].mxu0
        %v1186 = vadd.f32 %v898, %v1185
        %v1187 = vpop.f32.mrb[0].mxu0
        %v1188 = vadd.f32 %v902, %v1187
        %1189 = vmatprep.mubr.bf16.mxu0 %v1082
        %1190 = vmatmul.mubr.bf16.gmra.mrb[0].mxu0 %v851
        %v1191 = vpop.f32.mrb[0].mxu0
        %v1192 = vadd.f32 %v898, %v1191
        %v1193 = vpop.f32.mrb[0].mxu0
        %v1194 = vadd.f32 %v902, %v1193
        %v1195 = vpop.f32.mrb[0].mxu0
        %v1196 = vadd.f32 %v898, %v1195
        %v1197 = vpop.f32.mrb[0].mxu0
        %v1198 = vadd.f32 %v902, %v1197
        %1199 = vmatprep.mubr.bf16.mxu0 %v1085
        %1200 = vmatmul.mubr.bf16.gmra.mrb[0].mxu0 %v853
        %v1201 = vpop.f32.mrb[0].mxu0
        %v1202 = vadd.f32 %v898, %v1201
        %v1203 = vpop.f32.mrb[0].mxu0
        %v1204 = vadd.f32 %v902, %v1203
        %v1205 = vpop.f32.mrb[0].mxu0
        %v1206 = vadd.f32 %v898, %v1205
        %v1207 = vpop.f32.mrb[0].mxu0
        %v1208 = vadd.f32 %v902, %v1207
        %1209 = vdwg.mxu0
        %1210 = vmatprep.subr.bf16.mxu0 0
        %1211 = vmatpush1.bf16.msra.mxu0 %v1007
        %1212 = vmatprep.subr.bf16.mxu0 0
        %1213 = vmatpush1.bf16.msra.mxu0 %v1010
        %1214 = vmatprep.subr.bf16.mxu0 0
        %1215 = vmatpush1.bf16.msra.mxu0 %v1013
        %1216 = vmatprep.subr.bf16.mxu0 0
        %1217 = vmatpush1.bf16.msra.mxu0 %v1016
        %1218 = vmatprep.subr.bf16.mxu0 0
        %1219 = vmatpush1.bf16.msra.mxu0 %v1019
        %1220 = vmatprep.subr.bf16.mxu0 0
        %1221 = vmatpush1.bf16.msra.mxu0 %v1022
        %1222 = vmatprep.subr.bf16.mxu0 0
        %1223 = vmatpush1.bf16.msra.mxu0 %v1025
        %1224 = vmatprep.subr.bf16.mxu0 0
        %1225 = vmatpush1.bf16.msra.mxu0 %v1028
        %1226 = vmatprep.subr.bf16.mxu0 0
        %1227 = vmatpush1.bf16.msra.mxu0 %v1031
        %1228 = vmatprep.subr.bf16.mxu0 0
        %1229 = vmatpush1.bf16.msra.mxu0 %v1095
        %1230 = vmatprep.subr.bf16.mxu0 0
        %1231 = vmatpush1.bf16.msra.mxu0 0
        %1232 = vmatprep.subr.bf16.mxu0 0
        %1233 = vmatpush1.bf16.msra.mxu0 0
        %1234 = vmatprep.subr.bf16.mxu0 0
        %1235 = vmatpush1.bf16.msra.mxu0 0
        %1236 = vmatprep.subr.bf16.mxu0 0
        %1237 = vmatpush1.bf16.msra.mxu0 0
        %1238 = vmatprep.subr.bf16.mxu0 0
        %1239 = vmatpush1.bf16.msra.mxu0 0
        %1240 = vmatprep.subr.bf16.mxu0 0
        %1241 = vmatpush1.bf16.msra.mxu0 0
        %1242 = vmatprep.mubr.bf16.mxu0 %v1064
        %1243 = vmatmul.mubr.bf16.gmra.mrb[0].mxu0 %v839
        %v1244 = vpop.f32.mrb[0].mxu0
        %v1245 = vadd.f32 %v906, %v1244
        %v1246 = vpop.f32.mrb[0].mxu0
        %v1247 = vpop.f32.mrb[0].mxu0
        %v1248 = vadd.f32 %v906, %v1247
        %v1249 = vpop.f32.mrb[0].mxu0
        %1250 = vmatprep.mubr.bf16.mxu0 %v1067
        %1251 = vmatmul.mubr.bf16.gmra.mrb[0].mxu0 %v841
        %v1252 = vpop.f32.mrb[0].mxu0
        %v1253 = vadd.f32 %v906, %v1252
        %v1254 = vpop.f32.mrb[0].mxu0
        %v1255 = vpop.f32.mrb[0].mxu0
        %v1256 = vadd.f32 %v906, %v1255
        %v1257 = vpop.f32.mrb[0].mxu0
        %1258 = vmatprep.mubr.bf16.mxu0 %v1070
        %1259 = vmatmul.mubr.bf16.gmra.mrb[0].mxu0 %v843
        %v1260 = vpop.f32.mrb[0].mxu0
        %v1261 = vadd.f32 %v906, %v1260
        %v1262 = vpop.f32.mrb[0].mxu0
        %v1263 = vpop.f32.mrb[0].mxu0
        %v1264 = vadd.f32 %v906, %v1263
        %v1265 = vpop.f32.mrb[0].mxu0
        %1266 = vmatprep.mubr.bf16.mxu0 %v1073
        %1267 = vmatmul.mubr.bf16.gmra.mrb[0].mxu0 %v845
        %v1268 = vpop.f32.mrb[0].mxu0
        %v1269 = vadd.f32 %v906, %v1268
        %v1270 = vpop.f32.mrb[0].mxu0
        %v1271 = vpop.f32.mrb[0].mxu0
        %v1272 = vadd.f32 %v906, %v1271
        %v1273 = vpop.f32.mrb[0].mxu0
        %1274 = vmatprep.mubr.bf16.mxu0 %v1076
        %1275 = vmatmul.mubr.bf16.gmra.mrb[0].mxu0 %v847
        %v1276 = vpop.f32.mrb[0].mxu0
        %v1277 = vadd.f32 %v906, %v1276
        %v1278 = vpop.f32.mrb[0].mxu0
        %v1279 = vpop.f32.mrb[0].mxu0
        %v1280 = vadd.f32 %v906, %v1279
        %v1281 = vpop.f32.mrb[0].mxu0
        %1282 = vmatprep.mubr.bf16.mxu0 %v1079
        %1283 = vmatmul.mubr.bf16.gmra.mrb[0].mxu0 %v849
        %v1284 = vpop.f32.mrb[0].mxu0
        %v1285 = vadd.f32 %v906, %v1284
        %v1286 = vpop.f32.mrb[0].mxu0
        %v1287 = vpop.f32.mrb[0].mxu0
        %v1288 = vadd.f32 %v906, %v1287
        %v1289 = vpop.f32.mrb[0].mxu0
        %1290 = vmatprep.mubr.bf16.mxu0 %v1082
        %1291 = vmatmul.mubr.bf16.gmra.mrb[0].mxu0 %v851
        %v1292 = vpop.f32.mrb[0].mxu0
        %v1293 = vadd.f32 %v906, %v1292
        %v1294 = vpop.f32.mrb[0].mxu0
        %v1295 = vpop.f32.mrb[0].mxu0
        %v1296 = vadd.f32 %v906, %v1295
        %v1297 = vpop.f32.mrb[0].mxu0
        %1298 = vmatprep.mubr.bf16.mxu0 %v1085
        %1299 = vmatmul.mubr.bf16.gmra.mrb[0].mxu0 %v853
        %v1300 = vpop.f32.mrb[0].mxu0
        %v1301 = vadd.f32 %v906, %v1300
        %v1302 = vpop.f32.mrb[0].mxu0
        %v1303 = vpop.f32.mrb[0].mxu0
        %v1304 = vadd.f32 %v906, %v1303
        %v1305 = vpop.f32.mrb[0].mxu0
        %1306 = vdwg.mxu0
        %v1307 = vmax.f32 %v1132, 0.0
        %v1308 = vmax.f32 %v1134, 0.0
        %v1309 = vmax.f32 %v1245, 0.0
        %v1310 = vmax.f32 %v1136, 0.0
        %v1311 = vmax.f32 %v1138, 0.0
        %v1312 = vmax.f32 %v1248, 0.0
        %v1313 = vmax.f32 %v1142, 0.0
        %v1314 = vmax.f32 %v1144, 0.0
        %v1315 = vmax.f32 %v1253, 0.0
        %v1316 = vmax.f32 %v1146, 0.0
        %v1317 = vmax.f32 %v1148, 0.0
        %v1318 = vmax.f32 %v1256, 0.0
        %v1319 = vmax.f32 %v1152, 0.0
        %v1320 = vmax.f32 %v1154, 0.0
        %v1321 = vmax.f32 %v1261, 0.0
        %v1322 = vmax.f32 %v1156, 0.0
        %v1323 = vmax.f32 %v1158, 0.0
        %v1324 = vmax.f32 %v1264, 0.0
        %v1325 = vmax.f32 %v1162, 0.0
        %v1326 = vmax.f32 %v1164, 0.0
        %v1327 = vmax.f32 %v1269, 0.0
        %v1328 = vmax.f32 %v1166, 0.0
        %v1329 = vmax.f32 %v1168, 0.0
        %v1330 = vmax.f32 %v1272, 0.0
        %v1331 = vmax.f32 %v1172, 0.0
        %v1332 = vmax.f32 %v1174, 0.0
        %v1333 = vmax.f32 %v1277, 0.0
        %v1334 = vmax.f32 %v1176, 0.0
        %v1335 = vmax.f32 %v1178, 0.0
        %v1336 = vmax.f32 %v1280, 0.0
        %v1337 = vmax.f32 %v1182, 0.0
        %v1338 = vmax.f32 %v1184, 0.0
        %v1339 = vmax.f32 %v1285, 0.0
        %v1340 = vmax.f32 %v1186, 0.0
        %v1341 = vmax.f32 %v1188, 0.0
        %v1342 = vmax.f32 %v1288, 0.0
        %v1343 = vmax.f32 %v1192, 0.0
        %v1344 = vmax.f32 %v1194, 0.0
        %v1345 = vmax.f32 %v1293, 0.0
        %v1346 = vmax.f32 %v1196, 0.0
        %v1347 = vmax.f32 %v1198, 0.0
        %v1348 = vmax.f32 %v1296, 0.0
        %v1349 = vmax.f32 %v1202, 0.0
        %v1350 = vmax.f32 %v1204, 0.0
        %v1351 = vmax.f32 %v1301, 0.0
        %v1352 = vmax.f32 %v1206, 0.0
        %v1353 = vmax.f32 %v1208, 0.0
        %v1354 = vmax.f32 %v1304, 0.0
        %v1355 = vpack.c.bf16 %v1310, %v1307
        %v1356 = vpack.c.bf16 %v1311, %v1308
        %v1357 = vpack.c.bf16 %v1312, %v1309
        %v1358 = vpack.c.bf16 %v1316, %v1313
        %v1359 = vpack.c.bf16 %v1317, %v1314
        %v1360 = vpack.c.bf16 %v1318, %v1315
        %v1361 = vpack.c.bf16 %v1322, %v1319
        %v1362 = vpack.c.bf16 %v1323, %v1320
        %v1363 = vpack.c.bf16 %v1324, %v1321
        %v1364 = vpack.c.bf16 %v1328, %v1325
        %v1365 = vpack.c.bf16 %v1329, %v1326
        %v1366 = vpack.c.bf16 %v1330, %v1327
        %v1367 = vpack.c.bf16 %v1334, %v1331
        %v1368 = vpack.c.bf16 %v1335, %v1332
        %v1369 = vpack.c.bf16 %v1336, %v1333
        %v1370 = vpack.c.bf16 %v1340, %v1337
        %v1371 = vpack.c.bf16 %v1341, %v1338
        %v1372 = vpack.c.bf16 %v1342, %v1339
        %v1373 = vpack.c.bf16 %v1346, %v1343
        %v1374 = vpack.c.bf16 %v1347, %v1344
        %v1375 = vpack.c.bf16 %v1348, %v1345
        %v1376 = vpack.c.bf16 %v1352, %v1349
        %v1377 = vpack.c.bf16 %v1353, %v1350
        %v1378 = vpack.c.bf16 %v1354, %v1351
        %v1379 = vld [vmem:[#allocation9] sm:$0xff]
        %v1380 = vld [vmem:[#allocation9 + $0x8] sm:$0xff]
        %v1381 = vld [vmem:[#allocation9 + $0x10] sm:$0xf]
        %v1382 = vld [vmem:[#allocation9 + $0x14] sm:$0xff]
        %v1383 = vld [vmem:[#allocation9 + $0x1c] sm:$0xff]
        %v1384 = vld [vmem:[#allocation9 + $0x24] sm:$0xf]
        %v1385 = vld [vmem:[#allocation9 + $0x28] sm:$0xff]
        %v1386 = vld [vmem:[#allocation9 + $0x30] sm:$0xff]
        %v1387 = vld [vmem:[#allocation9 + $0x38] sm:$0xf]
        %v1388 = vld [vmem:[#allocation9 + $0x3c] sm:$0xff]
        %v1389 = vld [vmem:[#allocation9 + $0x44] sm:$0xff]
        %v1390 = vld [vmem:[#allocation9 + $0x4c] sm:$0xf]
        %v1391 = vld [vmem:[#allocation9 + $0x50] sm:$0xff]
        %v1392 = vld [vmem:[#allocation9 + $0x58] sm:$0xff]
        %v1393 = vld [vmem:[#allocation9 + $0x60] sm:$0xf]
        %v1394 = vld [vmem:[#allocation9 + $0x64] sm:$0xff]
        %v1395 = vld [vmem:[#allocation9 + $0x6c] sm:$0xff]
        %v1396 = vld [vmem:[#allocation9 + $0x74] sm:$0xf]
        %v1397 = vld [vmem:[#allocation9 + $0x78] sm:$0xff]
        %v1398 = vld [vmem:[#allocation9 + $0x80] sm:$0xff]
        %v1399 = vld [vmem:[#allocation9 + $0x88] sm:$0xf]
        %v1400 = vld [vmem:[#allocation9 + $0x8c] sm:$0xff]
        %v1401 = vld [vmem:[#allocation9 + $0x94] sm:$0xff]
        %v1402 = vld [vmem:[#allocation9 + $0x9c] sm:$0xf]
        %v1403 = vld [vmem:[#allocation9 + $0xa0] sm:$0xff]
        %v1404 = vld [vmem:[#allocation9 + $0xa8] sm:$0xff]
        %v1405 = vld [vmem:[#allocation9 + $0xb0] sm:$0xf]
        %v1406 = vld [vmem:[#allocation9 + $0xb4] sm:$0xff]
        %v1407 = vld [vmem:[#allocation9 + $0xbc] sm:$0xff]
        %v1408 = vld [vmem:[#allocation9 + $0xc4] sm:$0xf]
        %v1409 = vld [vmem:[#allocation9 + $0xc8] sm:$0xff]
        %v1410 = vld [vmem:[#allocation9 + $0xd0] sm:$0xff]
        %v1411 = vld [vmem:[#allocation9 + $0xd8] sm:$0xf]
        %v1412 = vld [vmem:[#allocation9 + $0xdc] sm:$0xff]
        %v1413 = vld [vmem:[#allocation9 + $0xe4] sm:$0xff]
        %v1414 = vld [vmem:[#allocation9 + $0xec] sm:$0xf]
        %v1415 = vld [vmem:[#allocation9 + $0xf0] sm:$0xff]
        %v1416 = vld [vmem:[#allocation9 + $0xf8] sm:$0xff]
        %v1417 = vld [vmem:[#allocation9 + $0x100] sm:$0xf]
        %v1418 = vld [vmem:[#allocation9 + $0x104] sm:$0xff]
        %v1419 = vld [vmem:[#allocation9 + $0x10c] sm:$0xff]
        %v1420 = vld [vmem:[#allocation9 + $0x114] sm:$0xf]
        %v1421 = vld [vmem:[#allocation9 + $0x118] sm:$0xff]
        %v1422 = vld [vmem:[#allocation9 + $0x120] sm:$0xff]
        %v1423 = vld [vmem:[#allocation9 + $0x128] sm:$0xf]
        %v1424 = vld [vmem:[#allocation9 + $0x12c] sm:$0xff]
        %v1425 = vld [vmem:[#allocation9 + $0x134] sm:$0xff]
        %v1426 = vld [vmem:[#allocation9 + $0x13c] sm:$0xf]
        %v1427 = vld [vmem:[#allocation9 + $0x140] sm:$0xff]
        %v1428 = vld [vmem:[#allocation9 + $0x148] sm:$0xff]
        %v1429 = vld [vmem:[#allocation9 + $0x150] sm:$0xf]
        %v1430 = vld [vmem:[#allocation9 + $0x154] sm:$0xff]
        %v1431 = vld [vmem:[#allocation9 + $0x15c] sm:$0xff]
        %v1432 = vld [vmem:[#allocation9 + $0x164] sm:$0xf]
        %v1433 = vld [vmem:[#allocation9 + $0x168] sm:$0xff]
        %v1434 = vld [vmem:[#allocation9 + $0x170] sm:$0xff]
        %v1435 = vld [vmem:[#allocation9 + $0x178] sm:$0xf]
        %v1436 = vld [vmem:[#allocation9 + $0x17c] sm:$0xff]
        %v1437 = vld [vmem:[#allocation9 + $0x184] sm:$0xff]
        %v1438 = vld [vmem:[#allocation9 + $0x18c] sm:$0xf]
        %v1439 = vld [vmem:[#allocation9 + $0x190] sm:$0xff]
        %v1440 = vld [vmem:[#allocation9 + $0x198] sm:$0xff]
        %v1441 = vld [vmem:[#allocation9 + $0x1a0] sm:$0xf]
        %v1442 = vld [vmem:[#allocation9 + $0x1a4] sm:$0xff]
        %v1443 = vld [vmem:[#allocation9 + $0x1ac] sm:$0xff]
        %v1444 = vld [vmem:[#allocation9 + $0x1b4] sm:$0xf]
        %v1445 = vld [vmem:[#allocation9 + $0x1b8] sm:$0xff]
        %v1446 = vld [vmem:[#allocation9 + $0x1c0] sm:$0xff]
        %v1447 = vld [vmem:[#allocation9 + $0x1c8] sm:$0xf]
        %v1448 = vld [vmem:[#allocation9 + $0x1cc] sm:$0xff]
        %v1449 = vld [vmem:[#allocation9 + $0x1d4] sm:$0xff]
        %v1450 = vld [vmem:[#allocation9 + $0x1dc] sm:$0xf]
        %v1451 = vld [vmem:[#allocation9 + $0x1e0] sm:$0xff]
        %v1452 = vld [vmem:[#allocation9 + $0x1e8] sm:$0xff]
        %v1453 = vld [vmem:[#allocation9 + $0x1f0] sm:$0xf]
        %v1454 = vld [vmem:[#allocation9 + $0x1f4] sm:$0xff]
        %v1455 = vld [vmem:[#allocation9 + $0x1fc] sm:$0xff]
        %v1456 = vld [vmem:[#allocation9 + $0x204] sm:$0xf]
        %v1457 = vld [vmem:[#allocation9 + $0x208] sm:$0xff]
        %v1458 = vld [vmem:[#allocation9 + $0x210] sm:$0xff]
        %v1459 = vld [vmem:[#allocation9 + $0x218] sm:$0xf]
        %v1460 = vld [vmem:[#allocation9 + $0x21c] sm:$0xff]
        %v1461 = vld [vmem:[#allocation9 + $0x224] sm:$0xff]
        %v1462 = vld [vmem:[#allocation9 + $0x22c] sm:$0xf]
        %v1463 = vld [vmem:[#allocation9 + $0x230] sm:$0xff]
        %v1464 = vld [vmem:[#allocation9 + $0x238] sm:$0xff]
        %v1465 = vld [vmem:[#allocation9 + $0x240] sm:$0xf]
        %v1466 = vld [vmem:[#allocation9 + $0x244] sm:$0xff]
        %v1467 = vld [vmem:[#allocation9 + $0x24c] sm:$0xff]
        %v1468 = vld [vmem:[#allocation9 + $0x254] sm:$0xf]
        %v1469 = vld [vmem:[#allocation9 + $0x258] sm:$0xff]
        %v1470 = vld [vmem:[#allocation9 + $0x260] sm:$0xff]
        %v1471 = vld [vmem:[#allocation9 + $0x268] sm:$0xf]
        %v1472 = vld [vmem:[#allocation9 + $0x26c] sm:$0xff]
        %v1473 = vld [vmem:[#allocation9 + $0x274] sm:$0xff]
        %v1474 = vld [vmem:[#allocation9 + $0x27c] sm:$0xf]
        %v1475 = vld [vmem:[#allocation9 + $0x280] sm:$0xff]
        %v1476 = vld [vmem:[#allocation9 + $0x288] sm:$0xff]
        %v1477 = vld [vmem:[#allocation9 + $0x290] sm:$0xf]
        %v1478 = vld [vmem:[#allocation9 + $0x294] sm:$0xff]
        %v1479 = vld [vmem:[#allocation9 + $0x29c] sm:$0xff]
        %v1480 = vld [vmem:[#allocation9 + $0x2a4] sm:$0xf]
        %v1481 = vld [vmem:[#allocation9 + $0x2a8] sm:$0xff]
        %v1482 = vld [vmem:[#allocation9 + $0x2b0] sm:$0xff]
        %v1483 = vld [vmem:[#allocation9 + $0x2b8] sm:$0xf]
        %v1484 = vld [vmem:[#allocation9 + $0x2bc] sm:$0xff]
        %v1485 = vld [vmem:[#allocation9 + $0x2c4] sm:$0xff]
        %v1486 = vld [vmem:[#allocation9 + $0x2cc] sm:$0xf]
        %v1487 = vld [vmem:[#allocation10] sm:$0x1f]
        %v1489 = vlaneseq
        %v1490 = vshrl.u32 %v1489, 7
        %v1491 = vsub.s32 0, %v1490
        %v1492 = vrot.slane %v1487, %v1491
        %v1493 = vlaneseq
        %v1494 = vshrl.u32 %v1493, 7
        %v1495 = vsub.s32 1, %v1494
        %v1496 = vrot.slane %v1487, %v1495
        %v1497 = vlaneseq
        %v1498 = vshrl.u32 %v1497, 7
        %v1499 = vsub.s32 2, %v1498
        %v1500 = vrot.slane %v1487, %v1499
        %v1501 = vlaneseq
        %v1502 = vshrl.u32 %v1501, 7
        %v1503 = vsub.s32 3, %v1502
        %v1504 = vrot.slane %v1487, %v1503
        %v1505 = vlaneseq
        %v1506 = vshrl.u32 %v1505, 7
        %v1507 = vsub.s32 4, %v1506
        %v1508 = vrot.slane %v1487, %v1507
        %v1622 = vunpack.c.l.b16 %v1379
        %v1623 = vunpack.c.h.b16 %v1379
        %v1624 = vunpack.c.l.b16 %v1380
        %v1625 = vunpack.c.h.b16 %v1380
        %v1626 = vunpack.c.l.b16 %v1381
        %v1627 = vunpack.c.l.b16 %v1382
        %v1628 = vunpack.c.h.b16 %v1382
        %v1629 = vunpack.c.l.b16 %v1383
        %v1630 = vunpack.c.h.b16 %v1383
        %v1631 = vunpack.c.l.b16 %v1384
        %v1632 = vunpack.c.l.b16 %v1385
        %v1633 = vunpack.c.h.b16 %v1385
        %v1634 = vunpack.c.l.b16 %v1386
        %v1635 = vunpack.c.h.b16 %v1386
        %v1636 = vunpack.c.l.b16 %v1387
        %v1637 = vunpack.c.l.b16 %v1388
        %v1638 = vunpack.c.h.b16 %v1388
        %v1639 = vunpack.c.l.b16 %v1389
        %v1640 = vunpack.c.h.b16 %v1389
        %v1641 = vunpack.c.l.b16 %v1390
        %v1642 = vunpack.c.l.b16 %v1391
        %v1643 = vunpack.c.h.b16 %v1391
        %v1644 = vunpack.c.l.b16 %v1392
        %v1645 = vunpack.c.h.b16 %v1392
        %v1646 = vunpack.c.l.b16 %v1393
        %v1647 = vunpack.c.l.b16 %v1394
        %v1648 = vunpack.c.h.b16 %v1394
        %v1649 = vunpack.c.l.b16 %v1395
        %v1650 = vunpack.c.h.b16 %v1395
        %v1651 = vunpack.c.l.b16 %v1396
        %v1652 = vunpack.c.l.b16 %v1397
        %v1653 = vunpack.c.h.b16 %v1397
        %v1654 = vunpack.c.l.b16 %v1398
        %v1655 = vunpack.c.h.b16 %v1398
        %v1656 = vunpack.c.l.b16 %v1399
        %v1657 = vunpack.c.l.b16 %v1400
        %v1658 = vunpack.c.h.b16 %v1400
        %v1659 = vunpack.c.l.b16 %v1401
        %v1660 = vunpack.c.h.b16 %v1401
        %v1661 = vunpack.c.l.b16 %v1402
        %v1662 = vunpack.c.l.b16 %v1403
        %v1663 = vunpack.c.h.b16 %v1403
        %v1664 = vunpack.c.l.b16 %v1404
        %v1665 = vunpack.c.h.b16 %v1404
        %v1666 = vunpack.c.l.b16 %v1405
        %v1667 = vunpack.c.l.b16 %v1406
        %v1668 = vunpack.c.h.b16 %v1406
        %v1669 = vunpack.c.l.b16 %v1407
        %v1670 = vunpack.c.h.b16 %v1407
        %v1671 = vunpack.c.l.b16 %v1408
        %v1672 = vunpack.c.l.b16 %v1409
        %v1673 = vunpack.c.h.b16 %v1409
        %v1674 = vunpack.c.l.b16 %v1410
        %v1675 = vunpack.c.h.b16 %v1410
        %v1676 = vunpack.c.l.b16 %v1411
        %v1677 = vunpack.c.l.b16 %v1412
        %v1678 = vunpack.c.h.b16 %v1412
        %v1679 = vunpack.c.l.b16 %v1413
        %v1680 = vunpack.c.h.b16 %v1413
        %v1681 = vunpack.c.l.b16 %v1414
        %v1682 = vunpack.c.l.b16 %v1415
        %v1683 = vunpack.c.h.b16 %v1415
        %v1684 = vunpack.c.l.b16 %v1416
        %v1685 = vunpack.c.h.b16 %v1416
        %v1686 = vunpack.c.l.b16 %v1417
        %v1687 = vunpack.c.l.b16 %v1418
        %v1688 = vunpack.c.h.b16 %v1418
        %v1689 = vunpack.c.l.b16 %v1419
        %v1690 = vunpack.c.h.b16 %v1419
        %v1691 = vunpack.c.l.b16 %v1420
        %v1692 = vunpack.c.l.b16 %v1421
        %v1693 = vunpack.c.h.b16 %v1421
        %v1694 = vunpack.c.l.b16 %v1422
        %v1695 = vunpack.c.h.b16 %v1422
        %v1696 = vunpack.c.l.b16 %v1423
        %v1697 = vunpack.c.l.b16 %v1424
        %v1698 = vunpack.c.h.b16 %v1424
        %v1699 = vunpack.c.l.b16 %v1425
        %v1700 = vunpack.c.h.b16 %v1425
        %v1701 = vunpack.c.l.b16 %v1426
        %v1702 = vunpack.c.l.b16 %v1427
        %v1703 = vunpack.c.h.b16 %v1427
        %v1704 = vunpack.c.l.b16 %v1428
        %v1705 = vunpack.c.h.b16 %v1428
        %v1706 = vunpack.c.l.b16 %v1429
        %v1707 = vunpack.c.l.b16 %v1430
        %v1708 = vunpack.c.h.b16 %v1430
        %v1709 = vunpack.c.l.b16 %v1431
        %v1710 = vunpack.c.h.b16 %v1431
        %v1711 = vunpack.c.l.b16 %v1432
        %v1712 = vunpack.c.l.b16 %v1433
        %v1713 = vunpack.c.h.b16 %v1433
        %v1714 = vunpack.c.l.b16 %v1434
        %v1715 = vunpack.c.h.b16 %v1434
        %v1716 = vunpack.c.l.b16 %v1435
        %v1717 = vunpack.c.l.b16 %v1436
        %v1718 = vunpack.c.h.b16 %v1436
        %v1719 = vunpack.c.l.b16 %v1437
        %v1720 = vunpack.c.h.b16 %v1437
        %v1721 = vunpack.c.l.b16 %v1438
        %v1722 = vunpack.c.l.b16 %v1439
        %v1723 = vunpack.c.h.b16 %v1439
        %v1724 = vunpack.c.l.b16 %v1440
        %v1725 = vunpack.c.h.b16 %v1440
        %v1726 = vunpack.c.l.b16 %v1441
        %v1727 = vunpack.c.l.b16 %v1442
        %v1728 = vunpack.c.h.b16 %v1442
        %v1729 = vunpack.c.l.b16 %v1443
        %v1730 = vunpack.c.h.b16 %v1443
        %v1731 = vunpack.c.l.b16 %v1444
        %v1732 = vunpack.c.l.b16 %v1445
        %v1733 = vunpack.c.h.b16 %v1445
        %v1734 = vunpack.c.l.b16 %v1446
        %v1735 = vunpack.c.h.b16 %v1446
        %v1736 = vunpack.c.l.b16 %v1447
        %v1737 = vunpack.c.l.b16 %v1448
        %v1738 = vunpack.c.h.b16 %v1448
        %v1739 = vunpack.c.l.b16 %v1449
        %v1740 = vunpack.c.h.b16 %v1449
        %v1741 = vunpack.c.l.b16 %v1450
        %v1742 = vunpack.c.l.b16 %v1451
        %v1743 = vunpack.c.h.b16 %v1451
        %v1744 = vunpack.c.l.b16 %v1452
        %v1745 = vunpack.c.h.b16 %v1452
        %v1746 = vunpack.c.l.b16 %v1453
        %v1747 = vunpack.c.l.b16 %v1454
        %v1748 = vunpack.c.h.b16 %v1454
        %v1749 = vunpack.c.l.b16 %v1455
        %v1750 = vunpack.c.h.b16 %v1455
        %v1751 = vunpack.c.l.b16 %v1456
        %v1752 = vunpack.c.l.b16 %v1457
        %v1753 = vunpack.c.h.b16 %v1457
        %v1754 = vunpack.c.l.b16 %v1458
        %v1755 = vunpack.c.h.b16 %v1458
        %v1756 = vunpack.c.l.b16 %v1459
        %v1757 = vunpack.c.l.b16 %v1460
        %v1758 = vunpack.c.h.b16 %v1460
        %v1759 = vunpack.c.l.b16 %v1461
        %v1760 = vunpack.c.h.b16 %v1461
        %v1761 = vunpack.c.l.b16 %v1462
        %v1762 = vunpack.c.l.b16 %v1463
        %v1763 = vunpack.c.h.b16 %v1463
        %v1764 = vunpack.c.l.b16 %v1464
        %v1765 = vunpack.c.h.b16 %v1464
        %v1766 = vunpack.c.l.b16 %v1465
        %v1767 = vunpack.c.l.b16 %v1466
        %v1768 = vunpack.c.h.b16 %v1466
        %v1769 = vunpack.c.l.b16 %v1467
        %v1770 = vunpack.c.h.b16 %v1467
        %v1771 = vunpack.c.l.b16 %v1468
        %v1772 = vunpack.c.l.b16 %v1469
        %v1773 = vunpack.c.h.b16 %v1469
        %v1774 = vunpack.c.l.b16 %v1470
        %v1775 = vunpack.c.h.b16 %v1470
        %v1776 = vunpack.c.l.b16 %v1471
        %v1777 = vunpack.c.l.b16 %v1472
        %v1778 = vunpack.c.h.b16 %v1472
        %v1779 = vunpack.c.l.b16 %v1473
        %v1780 = vunpack.c.h.b16 %v1473
        %v1781 = vunpack.c.l.b16 %v1474
        %v1782 = vunpack.c.l.b16 %v1475
        %v1783 = vunpack.c.h.b16 %v1475
        %v1784 = vunpack.c.l.b16 %v1476
        %v1785 = vunpack.c.h.b16 %v1476
        %v1786 = vunpack.c.l.b16 %v1477
        %v1787 = vunpack.c.l.b16 %v1478
        %v1788 = vunpack.c.h.b16 %v1478
        %v1789 = vunpack.c.l.b16 %v1479
        %v1790 = vunpack.c.h.b16 %v1479
        %v1791 = vunpack.c.l.b16 %v1480
        %v1792 = vunpack.c.l.b16 %v1481
        %v1793 = vunpack.c.h.b16 %v1481
        %v1794 = vunpack.c.l.b16 %v1482
        %v1795 = vunpack.c.h.b16 %v1482
        %v1796 = vunpack.c.l.b16 %v1483
        %v1797 = vunpack.c.l.b16 %v1484
        %v1798 = vunpack.c.h.b16 %v1484
        %v1799 = vunpack.c.l.b16 %v1485
        %v1800 = vunpack.c.h.b16 %v1485
        %v1801 = vunpack.c.l.b16 %v1486
        %v1802 = vpack.c.b16 %v1627, %v1622
        %v1803 = vpack.c.b16 %v1628, %v1623
        %v1804 = vpack.c.b16 %v1629, %v1624
        %v1805 = vpack.c.b16 %v1630, %v1625
        %v1806 = vpack.c.b16 %v1631, %v1626
        %v1807 = vpack.c.b16 %v1637, %v1632
        %v1808 = vpack.c.b16 %v1638, %v1633
        %v1809 = vpack.c.b16 %v1639, %v1634
        %v1810 = vpack.c.b16 %v1640, %v1635
        %v1811 = vpack.c.b16 %v1641, %v1636
        %v1812 = vpack.c.b16 %v1647, %v1642
        %v1813 = vpack.c.b16 %v1648, %v1643
        %v1814 = vpack.c.b16 %v1649, %v1644
        %v1815 = vpack.c.b16 %v1650, %v1645
        %v1816 = vpack.c.b16 %v1651, %v1646
        %v1817 = vpack.c.b16 %v1657, %v1652
        %v1818 = vpack.c.b16 %v1658, %v1653
        %v1819 = vpack.c.b16 %v1659, %v1654
        %v1820 = vpack.c.b16 %v1660, %v1655
        %v1821 = vpack.c.b16 %v1661, %v1656
        %v1822 = vpack.c.b16 %v1667, %v1662
        %v1823 = vpack.c.b16 %v1668, %v1663
        %v1824 = vpack.c.b16 %v1669, %v1664
        %v1825 = vpack.c.b16 %v1670, %v1665
        %v1826 = vpack.c.b16 %v1671, %v1666
        %v1827 = vpack.c.b16 %v1677, %v1672
        %v1828 = vpack.c.b16 %v1678, %v1673
        %v1829 = vpack.c.b16 %v1679, %v1674
        %v1830 = vpack.c.b16 %v1680, %v1675
        %v1831 = vpack.c.b16 %v1681, %v1676
        %v1832 = vpack.c.b16 %v1687, %v1682
        %v1833 = vpack.c.b16 %v1688, %v1683
        %v1834 = vpack.c.b16 %v1689, %v1684
        %v1835 = vpack.c.b16 %v1690, %v1685
        %v1836 = vpack.c.b16 %v1691, %v1686
        %v1837 = vpack.c.b16 %v1697, %v1692
        %v1838 = vpack.c.b16 %v1698, %v1693
        %v1839 = vpack.c.b16 %v1699, %v1694
        %v1840 = vpack.c.b16 %v1700, %v1695
        %v1841 = vpack.c.b16 %v1701, %v1696
        %v1842 = vpack.c.b16 %v1707, %v1702
        %v1843 = vpack.c.b16 %v1708, %v1703
        %v1844 = vpack.c.b16 %v1709, %v1704
        %v1845 = vpack.c.b16 %v1710, %v1705
        %v1846 = vpack.c.b16 %v1711, %v1706
        %v1847 = vpack.c.b16 %v1717, %v1712
        %v1848 = vpack.c.b16 %v1718, %v1713
        %v1849 = vpack.c.b16 %v1719, %v1714
        %v1850 = vpack.c.b16 %v1720, %v1715
        %v1851 = vpack.c.b16 %v1721, %v1716
        %v1852 = vpack.c.b16 %v1727, %v1722
        %v1853 = vpack.c.b16 %v1728, %v1723
        %v1854 = vpack.c.b16 %v1729, %v1724
        %v1855 = vpack.c.b16 %v1730, %v1725
        %v1856 = vpack.c.b16 %v1731, %v1726
        %v1857 = vpack.c.b16 %v1737, %v1732
        %v1858 = vpack.c.b16 %v1738, %v1733
        %v1859 = vpack.c.b16 %v1739, %v1734
        %v1860 = vpack.c.b16 %v1740, %v1735
        %v1861 = vpack.c.b16 %v1741, %v1736
        %v1862 = vpack.c.b16 %v1747, %v1742
        %v1863 = vpack.c.b16 %v1748, %v1743
        %v1864 = vpack.c.b16 %v1749, %v1744
        %v1865 = vpack.c.b16 %v1750, %v1745
        %v1866 = vpack.c.b16 %v1751, %v1746
        %v1867 = vpack.c.b16 %v1757, %v1752
        %v1868 = vpack.c.b16 %v1758, %v1753
        %v1869 = vpack.c.b16 %v1759, %v1754
        %v1870 = vpack.c.b16 %v1760, %v1755
        %v1871 = vpack.c.b16 %v1761, %v1756
        %v1872 = vpack.c.b16 %v1767, %v1762
        %v1873 = vpack.c.b16 %v1768, %v1763
        %v1874 = vpack.c.b16 %v1769, %v1764
        %v1875 = vpack.c.b16 %v1770, %v1765
        %v1876 = vpack.c.b16 %v1771, %v1766
        %v1877 = vpack.c.b16 %v1777, %v1772
        %v1878 = vpack.c.b16 %v1778, %v1773
        %v1879 = vpack.c.b16 %v1779, %v1774
        %v1880 = vpack.c.b16 %v1780, %v1775
        %v1881 = vpack.c.b16 %v1781, %v1776
        %v1882 = vpack.c.b16 %v1787, %v1782
        %v1883 = vpack.c.b16 %v1788, %v1783
        %v1884 = vpack.c.b16 %v1789, %v1784
        %v1885 = vpack.c.b16 %v1790, %v1785
        %v1886 = vpack.c.b16 %v1791, %v1786
        %v1887 = vpack.c.b16 %v1797, %v1792
        %v1888 = vpack.c.b16 %v1798, %v1793
        %v1889 = vpack.c.b16 %v1799, %v1794
        %v1890 = vpack.c.b16 %v1800, %v1795
        %v1891 = vpack.c.b16 %v1801, %v1796
        %vm1982 = vcmask 261120
        %v1984 = vsel %vm1982, %v1357, 0
        %v1987 = vsel %vm1982, %v1360, 0
        %v1990 = vsel %vm1982, %v1363, 0
        %v1993 = vsel %vm1982, %v1366, 0
        %v1996 = vsel %vm1982, %v1369, 0
        %v1999 = vsel %vm1982, %v1372, 0
        %v2002 = vsel %vm1982, %v1375, 0
        %v2005 = vsel %vm1982, %v1378, 0
        %2007 = vmatprep.subr.bf16.mxu0 %v1803
        %2008 = vmatpush1.bf16.msra.mxu0 %v1802
        %2009 = vmatprep.subr.bf16.mxu0 %v1808
        %2010 = vmatpush1.bf16.msra.mxu0 %v1807
        %2011 = vmatprep.subr.bf16.mxu0 %v1813
        %2012 = vmatpush1.bf16.msra.mxu0 %v1812
        %2013 = vmatprep.subr.bf16.mxu0 %v1818
        %2014 = vmatpush1.bf16.msra.mxu0 %v1817
        %2015 = vmatprep.subr.bf16.mxu0 %v1823
        %2016 = vmatpush1.bf16.msra.mxu0 %v1822
        %2017 = vmatprep.subr.bf16.mxu0 %v1828
        %2018 = vmatpush1.bf16.msra.mxu0 %v1827
        %2019 = vmatprep.subr.bf16.mxu0 %v1833
        %2020 = vmatpush1.bf16.msra.mxu0 %v1832
        %2021 = vmatprep.subr.bf16.mxu0 %v1838
        %2022 = vmatpush1.bf16.msra.mxu0 %v1837
        %2023 = vmatprep.subr.bf16.mxu0 %v1843
        %2024 = vmatpush1.bf16.msra.mxu0 %v1842
        %2025 = vmatprep.subr.bf16.mxu0 %v1848
        %2026 = vmatpush1.bf16.msra.mxu0 %v1847
        %2027 = vmatprep.subr.bf16.mxu0 %v1853
        %2028 = vmatpush1.bf16.msra.mxu0 %v1852
        %2029 = vmatprep.subr.bf16.mxu0 %v1858
        %2030 = vmatpush1.bf16.msra.mxu0 %v1857
        %2031 = vmatprep.subr.bf16.mxu0 %v1863
        %2032 = vmatpush1.bf16.msra.mxu0 %v1862
        %2033 = vmatprep.subr.bf16.mxu0 %v1868
        %2034 = vmatpush1.bf16.msra.mxu0 %v1867
        %2035 = vmatprep.subr.bf16.mxu0 %v1873
        %2036 = vmatpush1.bf16.msra.mxu0 %v1872
        %2037 = vmatprep.subr.bf16.mxu0 %v1878
        %2038 = vmatpush1.bf16.msra.mxu0 %v1877
        %2039 = vmatprep.mubr.bf16.mxu0 %v1356
        %2040 = vmatmul.mubr.bf16.gmra.mrb[0].mxu0 %v1355
        %v2041 = vpop.f32.mrb[0].mxu0
        %v2042 = vadd.f32 %v1492, %v2041
        %v2043 = vpop.f32.mrb[0].mxu0
        %v2044 = vadd.f32 %v1496, %v2043
        %v2045 = vpop.f32.mrb[0].mxu0
        %v2046 = vadd.f32 %v1492, %v2045
        %v2047 = vpop.f32.mrb[0].mxu0
        %v2048 = vadd.f32 %v1496, %v2047
        %2049 = vmatprep.mubr.bf16.mxu0 %v1359
        %2050 = vmatmul.mubr.bf16.gmra.mrb[0].mxu0 %v1358
        %v2051 = vpop.f32.mrb[0].mxu0
        %v2052 = vadd.f32 %v1492, %v2051
        %v2053 = vpop.f32.mrb[0].mxu0
        %v2054 = vadd.f32 %v1496, %v2053
        %v2055 = vpop.f32.mrb[0].mxu0
        %v2056 = vadd.f32 %v1492, %v2055
        %v2057 = vpop.f32.mrb[0].mxu0
        %v2058 = vadd.f32 %v1496, %v2057
        %2059 = vmatprep.mubr.bf16.mxu0 %v1362
        %2060 = vmatmul.mubr.bf16.gmra.mrb[0].mxu0 %v1361
        %v2061 = vpop.f32.mrb[0].mxu0
        %v2062 = vadd.f32 %v1492, %v2061
        %v2063 = vpop.f32.mrb[0].mxu0
        %v2064 = vadd.f32 %v1496, %v2063
        %v2065 = vpop.f32.mrb[0].mxu0
        %v2066 = vadd.f32 %v1492, %v2065
        %v2067 = vpop.f32.mrb[0].mxu0
        %v2068 = vadd.f32 %v1496, %v2067
        %2069 = vmatprep.mubr.bf16.mxu0 %v1365
        %2070 = vmatmul.mubr.bf16.gmra.mrb[0].mxu0 %v1364
        %v2071 = vpop.f32.mrb[0].mxu0
        %v2072 = vadd.f32 %v1492, %v2071
        %v2073 = vpop.f32.mrb[0].mxu0
        %v2074 = vadd.f32 %v1496, %v2073
        %v2075 = vpop.f32.mrb[0].mxu0
        %v2076 = vadd.f32 %v1492, %v2075
        %v2077 = vpop.f32.mrb[0].mxu0
        %v2078 = vadd.f32 %v1496, %v2077
        %2079 = vmatprep.mubr.bf16.mxu0 %v1368
        %2080 = vmatmul.mubr.bf16.gmra.mrb[0].mxu0 %v1367
        %v2081 = vpop.f32.mrb[0].mxu0
        %v2082 = vadd.f32 %v1492, %v2081
        %v2083 = vpop.f32.mrb[0].mxu0
        %v2084 = vadd.f32 %v1496, %v2083
        %v2085 = vpop.f32.mrb[0].mxu0
        %v2086 = vadd.f32 %v1492, %v2085
        %v2087 = vpop.f32.mrb[0].mxu0
        %v2088 = vadd.f32 %v1496, %v2087
        %2089 = vmatprep.mubr.bf16.mxu0 %v1371
        %2090 = vmatmul.mubr.bf16.gmra.mrb[0].mxu0 %v1370
        %v2091 = vpop.f32.mrb[0].mxu0
        %v2092 = vadd.f32 %v1492, %v2091
        %v2093 = vpop.f32.mrb[0].mxu0
        %v2094 = vadd.f32 %v1496, %v2093
        %v2095 = vpop.f32.mrb[0].mxu0
        %v2096 = vadd.f32 %v1492, %v2095
        %v2097 = vpop.f32.mrb[0].mxu0
        %v2098 = vadd.f32 %v1496, %v2097
        %2099 = vmatprep.mubr.bf16.mxu0 %v1374
        %2100 = vmatmul.mubr.bf16.gmra.mrb[0].mxu0 %v1373
        %v2101 = vpop.f32.mrb[0].mxu0
        %v2102 = vadd.f32 %v1492, %v2101
        %v2103 = vpop.f32.mrb[0].mxu0
        %v2104 = vadd.f32 %v1496, %v2103
        %v2105 = vpop.f32.mrb[0].mxu0
        %v2106 = vadd.f32 %v1492, %v2105
        %v2107 = vpop.f32.mrb[0].mxu0
        %v2108 = vadd.f32 %v1496, %v2107
        %2109 = vmatprep.mubr.bf16.mxu0 %v1377
        %2110 = vmatmul.mubr.bf16.gmra.mrb[0].mxu0 %v1376
        %v2111 = vpop.f32.mrb[0].mxu0
        %v2112 = vadd.f32 %v1492, %v2111
        %v2113 = vpop.f32.mrb[0].mxu0
        %v2114 = vadd.f32 %v1496, %v2113
        %v2115 = vpop.f32.mrb[0].mxu0
        %v2116 = vadd.f32 %v1492, %v2115
        %v2117 = vpop.f32.mrb[0].mxu0
        %v2118 = vadd.f32 %v1496, %v2117
        %2119 = vdwg.mxu0
        %2120 = vmatprep.subr.bf16.mxu0 %v1883
        %2121 = vmatpush1.bf16.msra.mxu0 %v1882
        %2122 = vmatprep.subr.bf16.mxu0 %v1888
        %2123 = vmatpush1.bf16.msra.mxu0 %v1887
        %2124 = vmatprep.subr.bf16.mxu0 0
        %2125 = vmatpush1.bf16.msra.mxu0 0
        %2126 = vmatprep.subr.bf16.mxu0 0
        %2127 = vmatpush1.bf16.msra.mxu0 0
        %2128 = vmatprep.subr.bf16.mxu0 0
        %2129 = vmatpush1.bf16.msra.mxu0 0
        %2130 = vmatprep.subr.bf16.mxu0 0
        %2131 = vmatpush1.bf16.msra.mxu0 0
        %2132 = vmatprep.subr.bf16.mxu0 0
        %2133 = vmatpush1.bf16.msra.mxu0 0
        %2134 = vmatprep.subr.bf16.mxu0 0
        %2135 = vmatpush1.bf16.msra.mxu0 0
        %2136 = vmatprep.subr.bf16.mxu0 0
        %2137 = vmatpush1.bf16.msra.mxu0 0
        %2138 = vmatprep.subr.bf16.mxu0 0
        %2139 = vmatpush1.bf16.msra.mxu0 0
        %2140 = vmatprep.subr.bf16.mxu0 0
        %2141 = vmatpush1.bf16.msra.mxu0 0
        %2142 = vmatprep.subr.bf16.mxu0 0
        %2143 = vmatpush1.bf16.msra.mxu0 0
        %2144 = vmatprep.subr.bf16.mxu0 0
        %2145 = vmatpush1.bf16.msra.mxu0 0
        %2146 = vmatprep.subr.bf16.mxu0 0
        %2147 = vmatpush1.bf16.msra.mxu0 0
        %2148 = vmatprep.subr.bf16.mxu0 0
        %2149 = vmatpush1.bf16.msra.mxu0 0
        %2150 = vmatprep.subr.bf16.mxu0 0
        %2151 = vmatpush1.bf16.msra.mxu0 0
        %2152 = vmatprep.mubr.bf16.mxu0 0
        %2153 = vmatmul.mubr.bf16.gmra.mrb[0].mxu0 %v1984
        %v2154 = vpop.f32.mrb[0].mxu0
        %v2155 = vadd.f32 %v2042, %v2154
        %v2156 = vpop.f32.mrb[0].mxu0
        %v2157 = vadd.f32 %v2044, %v2156
        %v2158 = vpop.f32.mrb[0].mxu0
        %v2159 = vadd.f32 %v2046, %v2158
        %v2160 = vpop.f32.mrb[0].mxu0
        %v2161 = vadd.f32 %v2048, %v2160
        %2162 = vmatprep.mubr.bf16.mxu0 0
        %2163 = vmatmul.mubr.bf16.gmra.mrb[0].mxu0 %v1987
        %v2164 = vpop.f32.mrb[0].mxu0
        %v2165 = vadd.f32 %v2052, %v2164
        %v2166 = vpop.f32.mrb[0].mxu0
        %v2167 = vadd.f32 %v2054, %v2166
        %v2168 = vpop.f32.mrb[0].mxu0
        %v2169 = vadd.f32 %v2056, %v2168
        %v2170 = vpop.f32.mrb[0].mxu0
        %v2171 = vadd.f32 %v2058, %v2170
        %2172 = vmatprep.mubr.bf16.mxu0 0
        %2173 = vmatmul.mubr.bf16.gmra.mrb[0].mxu0 %v1990
        %v2174 = vpop.f32.mrb[0].mxu0
        %v2175 = vadd.f32 %v2062, %v2174
        %v2176 = vpop.f32.mrb[0].mxu0
        %v2177 = vadd.f32 %v2064, %v2176
        %v2178 = vpop.f32.mrb[0].mxu0
        %v2179 = vadd.f32 %v2066, %v2178
        %v2180 = vpop.f32.mrb[0].mxu0
        %v2181 = vadd.f32 %v2068, %v2180
        %2182 = vmatprep.mubr.bf16.mxu0 0
        %2183 = vmatmul.mubr.bf16.gmra.mrb[0].mxu0 %v1993
        %v2184 = vpop.f32.mrb[0].mxu0
        %v2185 = vadd.f32 %v2072, %v2184
        %v2186 = vpop.f32.mrb[0].mxu0
        %v2187 = vadd.f32 %v2074, %v2186
        %v2188 = vpop.f32.mrb[0].mxu0
        %v2189 = vadd.f32 %v2076, %v2188
        %v2190 = vpop.f32.mrb[0].mxu0
        %v2191 = vadd.f32 %v2078, %v2190
        %2192 = vmatprep.mubr.bf16.mxu0 0
        %2193 = vmatmul.mubr.bf16.gmra.mrb[0].mxu0 %v1996
        %v2194 = vpop.f32.mrb[0].mxu0
        %v2195 = vadd.f32 %v2082, %v2194
        %v2196 = vpop.f32.mrb[0].mxu0
        %v2197 = vadd.f32 %v2084, %v2196
        %v2198 = vpop.f32.mrb[0].mxu0
        %v2199 = vadd.f32 %v2086, %v2198
        %v2200 = vpop.f32.mrb[0].mxu0
        %v2201 = vadd.f32 %v2088, %v2200
        %2202 = vmatprep.mubr.bf16.mxu0 0
        %2203 = vmatmul.mubr.bf16.gmra.mrb[0].mxu0 %v1999
        %v2204 = vpop.f32.mrb[0].mxu0
        %v2205 = vadd.f32 %v2092, %v2204
        %v2206 = vpop.f32.mrb[0].mxu0
        %v2207 = vadd.f32 %v2094, %v2206
        %v2208 = vpop.f32.mrb[0].mxu0
        %v2209 = vadd.f32 %v2096, %v2208
        %v2210 = vpop.f32.mrb[0].mxu0
        %v2211 = vadd.f32 %v2098, %v2210
        %2212 = vmatprep.mubr.bf16.mxu0 0
        %2213 = vmatmul.mubr.bf16.gmra.mrb[0].mxu0 %v2002
        %v2214 = vpop.f32.mrb[0].mxu0
        %v2215 = vadd.f32 %v2102, %v2214
        %v2216 = vpop.f32.mrb[0].mxu0
        %v2217 = vadd.f32 %v2104, %v2216
        %v2218 = vpop.f32.mrb[0].mxu0
        %v2219 = vadd.f32 %v2106, %v2218
        %v2220 = vpop.f32.mrb[0].mxu0
        %v2221 = vadd.f32 %v2108, %v2220
        %2222 = vmatprep.mubr.bf16.mxu0 0
        %2223 = vmatmul.mubr.bf16.gmra.mrb[0].mxu0 %v2005
        %v2224 = vpop.f32.mrb[0].mxu0
        %v2225 = vadd.f32 %v2112, %v2224
        %v2226 = vpop.f32.mrb[0].mxu0
        %v2227 = vadd.f32 %v2114, %v2226
        %v2228 = vpop.f32.mrb[0].mxu0
        %v2229 = vadd.f32 %v2116, %v2228
        %v2230 = vpop.f32.mrb[0].mxu0
        %v2231 = vadd.f32 %v2118, %v2230
        %2232 = vdwg.mxu0
        %2233 = vmatprep.subr.bf16.mxu0 %v1805
        %2234 = vmatpush1.bf16.msra.mxu0 %v1804
        %2235 = vmatprep.subr.bf16.mxu0 %v1810
        %2236 = vmatpush1.bf16.msra.mxu0 %v1809
        %2237 = vmatprep.subr.bf16.mxu0 %v1815
        %2238 = vmatpush1.bf16.msra.mxu0 %v1814
        %2239 = vmatprep.subr.bf16.mxu0 %v1820
        %2240 = vmatpush1.bf16.msra.mxu0 %v1819
        %2241 = vmatprep.subr.bf16.mxu0 %v1825
        %2242 = vmatpush1.bf16.msra.mxu0 %v1824
        %2243 = vmatprep.subr.bf16.mxu0 %v1830
        %2244 = vmatpush1.bf16.msra.mxu0 %v1829
        %2245 = vmatprep.subr.bf16.mxu0 %v1835
        %2246 = vmatpush1.bf16.msra.mxu0 %v1834
        %2247 = vmatprep.subr.bf16.mxu0 %v1840
        %2248 = vmatpush1.bf16.msra.mxu0 %v1839
        %2249 = vmatprep.subr.bf16.mxu0 %v1845
        %2250 = vmatpush1.bf16.msra.mxu0 %v1844
        %2251 = vmatprep.subr.bf16.mxu0 %v1850
        %2252 = vmatpush1.bf16.msra.mxu0 %v1849
        %2253 = vmatprep.subr.bf16.mxu0 %v1855
        %2254 = vmatpush1.bf16.msra.mxu0 %v1854
        %2255 = vmatprep.subr.bf16.mxu0 %v1860
        %2256 = vmatpush1.bf16.msra.mxu0 %v1859
        %2257 = vmatprep.subr.bf16.mxu0 %v1865
        %2258 = vmatpush1.bf16.msra.mxu0 %v1864
        %2259 = vmatprep.subr.bf16.mxu0 %v1870
        %2260 = vmatpush1.bf16.msra.mxu0 %v1869
        %2261 = vmatprep.subr.bf16.mxu0 %v1875
        %2262 = vmatpush1.bf16.msra.mxu0 %v1874
        %2263 = vmatprep.subr.bf16.mxu0 %v1880
        %2264 = vmatpush1.bf16.msra.mxu0 %v1879
        %2265 = vmatprep.mubr.bf16.mxu0 %v1356
        %2266 = vmatmul.mubr.bf16.gmra.mrb[0].mxu0 %v1355
        %v2267 = vpop.f32.mrb[0].mxu0
        %v2268 = vadd.f32 %v1500, %v2267
        %v2269 = vpop.f32.mrb[0].mxu0
        %v2270 = vadd.f32 %v1504, %v2269
        %v2271 = vpop.f32.mrb[0].mxu0
        %v2272 = vadd.f32 %v1500, %v2271
        %v2273 = vpop.f32.mrb[0].mxu0
        %v2274 = vadd.f32 %v1504, %v2273
        %2275 = vmatprep.mubr.bf16.mxu0 %v1359
        %2276 = vmatmul.mubr.bf16.gmra.mrb[0].mxu0 %v1358
        %v2277 = vpop.f32.mrb[0].mxu0
        %v2278 = vadd.f32 %v1500, %v2277
        %v2279 = vpop.f32.mrb[0].mxu0
        %v2280 = vadd.f32 %v1504, %v2279
        %v2281 = vpop.f32.mrb[0].mxu0
        %v2282 = vadd.f32 %v1500, %v2281
        %v2283 = vpop.f32.mrb[0].mxu0
        %v2284 = vadd.f32 %v1504, %v2283
        %2285 = vmatprep.mubr.bf16.mxu0 %v1362
        %2286 = vmatmul.mubr.bf16.gmra.mrb[0].mxu0 %v1361
        %v2287 = vpop.f32.mrb[0].mxu0
        %v2288 = vadd.f32 %v1500, %v2287
        %v2289 = vpop.f32.mrb[0].mxu0
        %v2290 = vadd.f32 %v1504, %v2289
        %v2291 = vpop.f32.mrb[0].mxu0
        %v2292 = vadd.f32 %v1500, %v2291
        %v2293 = vpop.f32.mrb[0].mxu0
        %v2294 = vadd.f32 %v1504, %v2293
        %2295 = vmatprep.mubr.bf16.mxu0 %v1365
        %2296 = vmatmul.mubr.bf16.gmra.mrb[0].mxu0 %v1364
        %v2297 = vpop.f32.mrb[0].mxu0
        %v2298 = vadd.f32 %v1500, %v2297
        %v2299 = vpop.f32.mrb[0].mxu0
        %v2300 = vadd.f32 %v1504, %v2299
        %v2301 = vpop.f32.mrb[0].mxu0
        %v2302 = vadd.f32 %v1500, %v2301
        %v2303 = vpop.f32.mrb[0].mxu0
        %v2304 = vadd.f32 %v1504, %v2303
        %2305 = vmatprep.mubr.bf16.mxu0 %v1368
        %2306 = vmatmul.mubr.bf16.gmra.mrb[0].mxu0 %v1367
        %v2307 = vpop.f32.mrb[0].mxu0
        %v2308 = vadd.f32 %v1500, %v2307
        %v2309 = vpop.f32.mrb[0].mxu0
        %v2310 = vadd.f32 %v1504, %v2309
        %v2311 = vpop.f32.mrb[0].mxu0
        %v2312 = vadd.f32 %v1500, %v2311
        %v2313 = vpop.f32.mrb[0].mxu0
        %v2314 = vadd.f32 %v1504, %v2313
        %2315 = vmatprep.mubr.bf16.mxu0 %v1371
        %2316 = vmatmul.mubr.bf16.gmra.mrb[0].mxu0 %v1370
        %v2317 = vpop.f32.mrb[0].mxu0
        %v2318 = vadd.f32 %v1500, %v2317
        %v2319 = vpop.f32.mrb[0].mxu0
        %v2320 = vadd.f32 %v1504, %v2319
        %v2321 = vpop.f32.mrb[0].mxu0
        %v2322 = vadd.f32 %v1500, %v2321
        %v2323 = vpop.f32.mrb[0].mxu0
        %v2324 = vadd.f32 %v1504, %v2323
        %2325 = vmatprep.mubr.bf16.mxu0 %v1374
        %2326 = vmatmul.mubr.bf16.gmra.mrb[0].mxu0 %v1373
        %v2327 = vpop.f32.mrb[0].mxu0
        %v2328 = vadd.f32 %v1500, %v2327
        %v2329 = vpop.f32.mrb[0].mxu0
        %v2330 = vadd.f32 %v1504, %v2329
        %v2331 = vpop.f32.mrb[0].mxu0
        %v2332 = vadd.f32 %v1500, %v2331
        %v2333 = vpop.f32.mrb[0].mxu0
        %v2334 = vadd.f32 %v1504, %v2333
        %2335 = vmatprep.mubr.bf16.mxu0 %v1377
        %2336 = vmatmul.mubr.bf16.gmra.mrb[0].mxu0 %v1376
        %v2337 = vpop.f32.mrb[0].mxu0
        %v2338 = vadd.f32 %v1500, %v2337
        %v2339 = vpop.f32.mrb[0].mxu0
        %v2340 = vadd.f32 %v1504, %v2339
        %v2341 = vpop.f32.mrb[0].mxu0
        %v2342 = vadd.f32 %v1500, %v2341
        %v2343 = vpop.f32.mrb[0].mxu0
        %v2344 = vadd.f32 %v1504, %v2343
        %2345 = vdwg.mxu0
        %2346 = vmatprep.subr.bf16.mxu0 %v1885
        %2347 = vmatpush1.bf16.msra.mxu0 %v1884
        %2348 = vmatprep.subr.bf16.mxu0 %v1890
        %2349 = vmatpush1.bf16.msra.mxu0 %v1889
        %2350 = vmatprep.subr.bf16.mxu0 0
        %2351 = vmatpush1.bf16.msra.mxu0 0
        %2352 = vmatprep.subr.bf16.mxu0 0
        %2353 = vmatpush1.bf16.msra.mxu0 0
        %2354 = vmatprep.subr.bf16.mxu0 0
        %2355 = vmatpush1.bf16.msra.mxu0 0
        %2356 = vmatprep.subr.bf16.mxu0 0
        %2357 = vmatpush1.bf16.msra.mxu0 0
        %2358 = vmatprep.subr.bf16.mxu0 0
        %2359 = vmatpush1.bf16.msra.mxu0 0
        %2360 = vmatprep.subr.bf16.mxu0 0
        %2361 = vmatpush1.bf16.msra.mxu0 0
        %2362 = vmatprep.subr.bf16.mxu0 0
        %2363 = vmatpush1.bf16.msra.mxu0 0
        %2364 = vmatprep.subr.bf16.mxu0 0
        %2365 = vmatpush1.bf16.msra.mxu0 0
        %2366 = vmatprep.subr.bf16.mxu0 0
        %2367 = vmatpush1.bf16.msra.mxu0 0
        %2368 = vmatprep.subr.bf16.mxu0 0
        %2369 = vmatpush1.bf16.msra.mxu0 0
        %2370 = vmatprep.subr.bf16.mxu0 0
        %2371 = vmatpush1.bf16.msra.mxu0 0
        %2372 = vmatprep.subr.bf16.mxu0 0
        %2373 = vmatpush1.bf16.msra.mxu0 0
        %2374 = vmatprep.subr.bf16.mxu0 0
        %2375 = vmatpush1.bf16.msra.mxu0 0
        %2376 = vmatprep.subr.bf16.mxu0 0
        %2377 = vmatpush1.bf16.msra.mxu0 0
        %2378 = vmatprep.mubr.bf16.mxu0 0
        %2379 = vmatmul.mubr.bf16.gmra.mrb[0].mxu0 %v1984
        %v2380 = vpop.f32.mrb[0].mxu0
        %v2381 = vadd.f32 %v2268, %v2380
        %v2382 = vpop.f32.mrb[0].mxu0
        %v2383 = vadd.f32 %v2270, %v2382
        %v2384 = vpop.f32.mrb[0].mxu0
        %v2385 = vadd.f32 %v2272, %v2384
        %v2386 = vpop.f32.mrb[0].mxu0
        %v2387 = vadd.f32 %v2274, %v2386
        %2388 = vmatprep.mubr.bf16.mxu0 0
        %2389 = vmatmul.mubr.bf16.gmra.mrb[0].mxu0 %v1987
        %v2390 = vpop.f32.mrb[0].mxu0
        %v2391 = vadd.f32 %v2278, %v2390
        %v2392 = vpop.f32.mrb[0].mxu0
        %v2393 = vadd.f32 %v2280, %v2392
        %v2394 = vpop.f32.mrb[0].mxu0
        %v2395 = vadd.f32 %v2282, %v2394
        %v2396 = vpop.f32.mrb[0].mxu0
        %v2397 = vadd.f32 %v2284, %v2396
        %2398 = vmatprep.mubr.bf16.mxu0 0
        %2399 = vmatmul.mubr.bf16.gmra.mrb[0].mxu0 %v1990
        %v2400 = vpop.f32.mrb[0].mxu0
        %v2401 = vadd.f32 %v2288, %v2400
        %v2402 = vpop.f32.mrb[0].mxu0
        %v2403 = vadd.f32 %v2290, %v2402
        %v2404 = vpop.f32.mrb[0].mxu0
        %v2405 = vadd.f32 %v2292, %v2404
        %v2406 = vpop.f32.mrb[0].mxu0
        %v2407 = vadd.f32 %v2294, %v2406
        %2408 = vmatprep.mubr.bf16.mxu0 0
        %2409 = vmatmul.mubr.bf16.gmra.mrb[0].mxu0 %v1993
        %v2410 = vpop.f32.mrb[0].mxu0
        %v2411 = vadd.f32 %v2298, %v2410
        %v2412 = vpop.f32.mrb[0].mxu0
        %v2413 = vadd.f32 %v2300, %v2412
        %v2414 = vpop.f32.mrb[0].mxu0
        %v2415 = vadd.f32 %v2302, %v2414
        %v2416 = vpop.f32.mrb[0].mxu0
        %v2417 = vadd.f32 %v2304, %v2416
        %2418 = vmatprep.mubr.bf16.mxu0 0
        %2419 = vmatmul.mubr.bf16.gmra.mrb[0].mxu0 %v1996
        %v2420 = vpop.f32.mrb[0].mxu0
        %v2421 = vadd.f32 %v2308, %v2420
        %v2422 = vpop.f32.mrb[0].mxu0
        %v2423 = vadd.f32 %v2310, %v2422
        %v2424 = vpop.f32.mrb[0].mxu0
        %v2425 = vadd.f32 %v2312, %v2424
        %v2426 = vpop.f32.mrb[0].mxu0
        %v2427 = vadd.f32 %v2314, %v2426
        %2428 = vmatprep.mubr.bf16.mxu0 0
        %2429 = vmatmul.mubr.bf16.gmra.mrb[0].mxu0 %v1999
        %v2430 = vpop.f32.mrb[0].mxu0
        %v2431 = vadd.f32 %v2318, %v2430
        %v2432 = vpop.f32.mrb[0].mxu0
        %v2433 = vadd.f32 %v2320, %v2432
        %v2434 = vpop.f32.mrb[0].mxu0
        %v2435 = vadd.f32 %v2322, %v2434
        %v2436 = vpop.f32.mrb[0].mxu0
        %v2437 = vadd.f32 %v2324, %v2436
        %2438 = vmatprep.mubr.bf16.mxu0 0
        %2439 = vmatmul.mubr.bf16.gmra.mrb[0].mxu0 %v2002
        %v2440 = vpop.f32.mrb[0].mxu0
        %v2441 = vadd.f32 %v2328, %v2440
        %v2442 = vpop.f32.mrb[0].mxu0
        %v2443 = vadd.f32 %v2330, %v2442
        %v2444 = vpop.f32.mrb[0].mxu0
        %v2445 = vadd.f32 %v2332, %v2444
        %v2446 = vpop.f32.mrb[0].mxu0
        %v2447 = vadd.f32 %v2334, %v2446
        %2448 = vmatprep.mubr.bf16.mxu0 0
        %2449 = vmatmul.mubr.bf16.gmra.mrb[0].mxu0 %v2005
        %v2450 = vpop.f32.mrb[0].mxu0
        %v2451 = vadd.f32 %v2338, %v2450
        %v2452 = vpop.f32.mrb[0].mxu0
        %v2453 = vadd.f32 %v2340, %v2452
        %v2454 = vpop.f32.mrb[0].mxu0
        %v2455 = vadd.f32 %v2342, %v2454
        %v2456 = vpop.f32.mrb[0].mxu0
        %v2457 = vadd.f32 %v2344, %v2456
        %2458 = vdwg.mxu0
        %2459 = vmatprep.subr.bf16.mxu0 0
        %2460 = vmatpush1.bf16.msra.mxu0 %v1806
        %2461 = vmatprep.subr.bf16.mxu0 0
        %2462 = vmatpush1.bf16.msra.mxu0 %v1811
        %2463 = vmatprep.subr.bf16.mxu0 0
        %2464 = vmatpush1.bf16.msra.mxu0 %v1816
        %2465 = vmatprep.subr.bf16.mxu0 0
        %2466 = vmatpush1.bf16.msra.mxu0 %v1821
        %2467 = vmatprep.subr.bf16.mxu0 0
        %2468 = vmatpush1.bf16.msra.mxu0 %v1826
        %2469 = vmatprep.subr.bf16.mxu0 0
        %2470 = vmatpush1.bf16.msra.mxu0 %v1831
        %2471 = vmatprep.subr.bf16.mxu0 0
        %2472 = vmatpush1.bf16.msra.mxu0 %v1836
        %2473 = vmatprep.subr.bf16.mxu0 0
        %2474 = vmatpush1.bf16.msra.mxu0 %v1841
        %2475 = vmatprep.subr.bf16.mxu0 0
        %2476 = vmatpush1.bf16.msra.mxu0 %v1846
        %2477 = vmatprep.subr.bf16.mxu0 0
        %2478 = vmatpush1.bf16.msra.mxu0 %v1851
        %2479 = vmatprep.subr.bf16.mxu0 0
        %2480 = vmatpush1.bf16.msra.mxu0 %v1856
        %2481 = vmatprep.subr.bf16.mxu0 0
        %2482 = vmatpush1.bf16.msra.mxu0 %v1861
        %2483 = vmatprep.subr.bf16.mxu0 0
        %2484 = vmatpush1.bf16.msra.mxu0 %v1866
        %2485 = vmatprep.subr.bf16.mxu0 0
        %2486 = vmatpush1.bf16.msra.mxu0 %v1871
        %2487 = vmatprep.subr.bf16.mxu0 0
        %2488 = vmatpush1.bf16.msra.mxu0 %v1876
        %2489 = vmatprep.subr.bf16.mxu0 0
        %2490 = vmatpush1.bf16.msra.mxu0 %v1881
        %2491 = vmatprep.mubr.bf16.mxu0 %v1356
        %2492 = vmatmul.mubr.bf16.gmra.mrb[0].mxu0 %v1355
        %v2493 = vpop.f32.mrb[0].mxu0
        %v2494 = vadd.f32 %v1508, %v2493
        %v2495 = vpop.f32.mrb[0].mxu0
        %v2496 = vpop.f32.mrb[0].mxu0
        %v2497 = vadd.f32 %v1508, %v2496
        %v2498 = vpop.f32.mrb[0].mxu0
        %2499 = vmatprep.mubr.bf16.mxu0 %v1359
        %2500 = vmatmul.mubr.bf16.gmra.mrb[0].mxu0 %v1358
        %v2501 = vpop.f32.mrb[0].mxu0
        %v2502 = vadd.f32 %v1508, %v2501
        %v2503 = vpop.f32.mrb[0].mxu0
        %v2504 = vpop.f32.mrb[0].mxu0
        %v2505 = vadd.f32 %v1508, %v2504
        %v2506 = vpop.f32.mrb[0].mxu0
        %2507 = vmatprep.mubr.bf16.mxu0 %v1362
        %2508 = vmatmul.mubr.bf16.gmra.mrb[0].mxu0 %v1361
        %v2509 = vpop.f32.mrb[0].mxu0
        %v2510 = vadd.f32 %v1508, %v2509
        %v2511 = vpop.f32.mrb[0].mxu0
        %v2512 = vpop.f32.mrb[0].mxu0
        %v2513 = vadd.f32 %v1508, %v2512
        %v2514 = vpop.f32.mrb[0].mxu0
        %2515 = vmatprep.mubr.bf16.mxu0 %v1365
        %2516 = vmatmul.mubr.bf16.gmra.mrb[0].mxu0 %v1364
        %v2517 = vpop.f32.mrb[0].mxu0
        %v2518 = vadd.f32 %v1508, %v2517
        %v2519 = vpop.f32.mrb[0].mxu0
        %v2520 = vpop.f32.mrb[0].mxu0
        %v2521 = vadd.f32 %v1508, %v2520
        %v2522 = vpop.f32.mrb[0].mxu0
        %2523 = vmatprep.mubr.bf16.mxu0 %v1368
        %2524 = vmatmul.mubr.bf16.gmra.mrb[0].mxu0 %v1367
        %v2525 = vpop.f32.mrb[0].mxu0
        %v2526 = vadd.f32 %v1508, %v2525
        %v2527 = vpop.f32.mrb[0].mxu0
        %v2528 = vpop.f32.mrb[0].mxu0
        %v2529 = vadd.f32 %v1508, %v2528
        %v2530 = vpop.f32.mrb[0].mxu0
        %2531 = vmatprep.mubr.bf16.mxu0 %v1371
        %2532 = vmatmul.mubr.bf16.gmra.mrb[0].mxu0 %v1370
        %v2533 = vpop.f32.mrb[0].mxu0
        %v2534 = vadd.f32 %v1508, %v2533
        %v2535 = vpop.f32.mrb[0].mxu0
        %v2536 = vpop.f32.mrb[0].mxu0
        %v2537 = vadd.f32 %v1508, %v2536
        %v2538 = vpop.f32.mrb[0].mxu0
        %2539 = vmatprep.mubr.bf16.mxu0 %v1374
        %2540 = vmatmul.mubr.bf16.gmra.mrb[0].mxu0 %v1373
        %v2541 = vpop.f32.mrb[0].mxu0
        %v2542 = vadd.f32 %v1508, %v2541
        %v2543 = vpop.f32.mrb[0].mxu0
        %v2544 = vpop.f32.mrb[0].mxu0
        %v2545 = vadd.f32 %v1508, %v2544
        %v2546 = vpop.f32.mrb[0].mxu0
        %2547 = vmatprep.mubr.bf16.mxu0 %v1377
        %2548 = vmatmul.mubr.bf16.gmra.mrb[0].mxu0 %v1376
        %v2549 = vpop.f32.mrb[0].mxu0
        %v2550 = vadd.f32 %v1508, %v2549
        %v2551 = vpop.f32.mrb[0].mxu0
        %v2552 = vpop.f32.mrb[0].mxu0
        %v2553 = vadd.f32 %v1508, %v2552
        %v2554 = vpop.f32.mrb[0].mxu0
        %2555 = vdwg.mxu0
        %2556 = vmatprep.subr.bf16.mxu0 0
        %2557 = vmatpush1.bf16.msra.mxu0 %v1886
        %2558 = vmatprep.subr.bf16.mxu0 0
        %2559 = vmatpush1.bf16.msra.mxu0 %v1891
        %2560 = vmatprep.subr.bf16.mxu0 0
        %2561 = vmatpush1.bf16.msra.mxu0 0
        %2562 = vmatprep.subr.bf16.mxu0 0
        %2563 = vmatpush1.bf16.msra.mxu0 0
        %2564 = vmatprep.subr.bf16.mxu0 0
        %2565 = vmatpush1.bf16.msra.mxu0 0
        %2566 = vmatprep.subr.bf16.mxu0 0
        %2567 = vmatpush1.bf16.msra.mxu0 0
        %2568 = vmatprep.subr.bf16.mxu0 0
        %2569 = vmatpush1.bf16.msra.mxu0 0
        %2570 = vmatprep.subr.bf16.mxu0 0
        %2571 = vmatpush1.bf16.msra.mxu0 0
        %2572 = vmatprep.subr.bf16.mxu0 0
        %2573 = vmatpush1.bf16.msra.mxu0 0
        %2574 = vmatprep.subr.bf16.mxu0 0
        %2575 = vmatpush1.bf16.msra.mxu0 0
        %2576 = vmatprep.subr.bf16.mxu0 0
        %2577 = vmatpush1.bf16.msra.mxu0 0
        %2578 = vmatprep.subr.bf16.mxu0 0
        %2579 = vmatpush1.bf16.msra.mxu0 0
        %2580 = vmatprep.subr.bf16.mxu0 0
        %2581 = vmatpush1.bf16.msra.mxu0 0
        %2582 = vmatprep.subr.bf16.mxu0 0
        %2583 = vmatpush1.bf16.msra.mxu0 0
        %2584 = vmatprep.subr.bf16.mxu0 0
        %2585 = vmatpush1.bf16.msra.mxu0 0
        %2586 = vmatprep.subr.bf16.mxu0 0
        %2587 = vmatpush1.bf16.msra.mxu0 0
        %2588 = vmatprep.mubr.bf16.mxu0 0
        %2589 = vmatmul.mubr.bf16.gmra.mrb[0].mxu0 %v1984
        %v2590 = vpop.f32.mrb[0].mxu0
        %v2591 = vadd.f32 %v2494, %v2590
        %v2592 = vpop.f32.mrb[0].mxu0
        %v2593 = vpop.f32.mrb[0].mxu0
        %v2594 = vadd.f32 %v2497, %v2593
        %v2595 = vpop.f32.mrb[0].mxu0
        %2596 = vmatprep.mubr.bf16.mxu0 0
        %2597 = vmatmul.mubr.bf16.gmra.mrb[0].mxu0 %v1987
        %v2598 = vpop.f32.mrb[0].mxu0
        %v2599 = vadd.f32 %v2502, %v2598
        %v2600 = vpop.f32.mrb[0].mxu0
        %v2601 = vpop.f32.mrb[0].mxu0
        %v2602 = vadd.f32 %v2505, %v2601
        %v2603 = vpop.f32.mrb[0].mxu0
        %2604 = vmatprep.mubr.bf16.mxu0 0
        %2605 = vmatmul.mubr.bf16.gmra.mrb[0].mxu0 %v1990
        %v2606 = vpop.f32.mrb[0].mxu0
        %v2607 = vadd.f32 %v2510, %v2606
        %v2608 = vpop.f32.mrb[0].mxu0
        %v2609 = vpop.f32.mrb[0].mxu0
        %v2610 = vadd.f32 %v2513, %v2609
        %v2611 = vpop.f32.mrb[0].mxu0
        %2612 = vmatprep.mubr.bf16.mxu0 0
        %2613 = vmatmul.mubr.bf16.gmra.mrb[0].mxu0 %v1993
        %v2614 = vpop.f32.mrb[0].mxu0
        %v2615 = vadd.f32 %v2518, %v2614
        %v2616 = vpop.f32.mrb[0].mxu0
        %v2617 = vpop.f32.mrb[0].mxu0
        %v2618 = vadd.f32 %v2521, %v2617
        %v2619 = vpop.f32.mrb[0].mxu0
        %2620 = vmatprep.mubr.bf16.mxu0 0
        %2621 = vmatmul.mubr.bf16.gmra.mrb[0].mxu0 %v1996
        %v2622 = vpop.f32.mrb[0].mxu0
        %v2623 = vadd.f32 %v2526, %v2622
        %v2624 = vpop.f32.mrb[0].mxu0
        %v2625 = vpop.f32.mrb[0].mxu0
        %v2626 = vadd.f32 %v2529, %v2625
        %v2627 = vpop.f32.mrb[0].mxu0
        %2628 = vmatprep.mubr.bf16.mxu0 0
        %2629 = vmatmul.mubr.bf16.gmra.mrb[0].mxu0 %v1999
        %v2630 = vpop.f32.mrb[0].mxu0
        %v2631 = vadd.f32 %v2534, %v2630
        %v2632 = vpop.f32.mrb[0].mxu0
        %v2633 = vpop.f32.mrb[0].mxu0
        %v2634 = vadd.f32 %v2537, %v2633
        %v2635 = vpop.f32.mrb[0].mxu0
        %2636 = vmatprep.mubr.bf16.mxu0 0
        %2637 = vmatmul.mubr.bf16.gmra.mrb[0].mxu0 %v2002
        %v2638 = vpop.f32.mrb[0].mxu0
        %v2639 = vadd.f32 %v2542, %v2638
        %v2640 = vpop.f32.mrb[0].mxu0
        %v2641 = vpop.f32.mrb[0].mxu0
        %v2642 = vadd.f32 %v2545, %v2641
        %v2643 = vpop.f32.mrb[0].mxu0
        %2644 = vmatprep.mubr.bf16.mxu0 0
        %2645 = vmatmul.mubr.bf16.gmra.mrb[0].mxu0 %v2005
        %v2646 = vpop.f32.mrb[0].mxu0
        %v2647 = vadd.f32 %v2550, %v2646
        %v2648 = vpop.f32.mrb[0].mxu0
        %v2649 = vpop.f32.mrb[0].mxu0
        %v2650 = vadd.f32 %v2553, %v2649
        %v2651 = vpop.f32.mrb[0].mxu0
        %2652 = vdwg.mxu0
        %v2653 = vmax.f32 %v2155, 0.0
        %v2654 = vmax.f32 %v2157, 0.0
        %v2655 = vmax.f32 %v2381, 0.0
        %v2656 = vmax.f32 %v2383, 0.0
        %v2657 = vmax.f32 %v2591, 0.0
        %v2658 = vmax.f32 %v2159, 0.0
        %v2659 = vmax.f32 %v2161, 0.0
        %v2660 = vmax.f32 %v2385, 0.0
        %v2661 = vmax.f32 %v2387, 0.0
        %v2662 = vmax.f32 %v2594, 0.0
        %v2663 = vmax.f32 %v2165, 0.0
        %v2664 = vmax.f32 %v2167, 0.0
        %v2665 = vmax.f32 %v2391, 0.0
        %v2666 = vmax.f32 %v2393, 0.0
        %v2667 = vmax.f32 %v2599, 0.0
        %v2668 = vmax.f32 %v2169, 0.0
        %v2669 = vmax.f32 %v2171, 0.0
        %v2670 = vmax.f32 %v2395, 0.0
        %v2671 = vmax.f32 %v2397, 0.0
        %v2672 = vmax.f32 %v2602, 0.0
        %v2673 = vmax.f32 %v2175, 0.0
        %v2674 = vmax.f32 %v2177, 0.0
        %v2675 = vmax.f32 %v2401, 0.0
        %v2676 = vmax.f32 %v2403, 0.0
        %v2677 = vmax.f32 %v2607, 0.0
        %v2678 = vmax.f32 %v2179, 0.0
        %v2679 = vmax.f32 %v2181, 0.0
        %v2680 = vmax.f32 %v2405, 0.0
        %v2681 = vmax.f32 %v2407, 0.0
        %v2682 = vmax.f32 %v2610, 0.0
        %v2683 = vmax.f32 %v2185, 0.0
        %v2684 = vmax.f32 %v2187, 0.0
        %v2685 = vmax.f32 %v2411, 0.0
        %v2686 = vmax.f32 %v2413, 0.0
        %v2687 = vmax.f32 %v2615, 0.0
        %v2688 = vmax.f32 %v2189, 0.0
        %v2689 = vmax.f32 %v2191, 0.0
        %v2690 = vmax.f32 %v2415, 0.0
        %v2691 = vmax.f32 %v2417, 0.0
        %v2692 = vmax.f32 %v2618, 0.0
        %v2693 = vmax.f32 %v2195, 0.0
        %v2694 = vmax.f32 %v2197, 0.0
        %v2695 = vmax.f32 %v2421, 0.0
        %v2696 = vmax.f32 %v2423, 0.0
        %v2697 = vmax.f32 %v2623, 0.0
        %v2698 = vmax.f32 %v2199, 0.0
        %v2699 = vmax.f32 %v2201, 0.0
        %v2700 = vmax.f32 %v2425, 0.0
        %v2701 = vmax.f32 %v2427, 0.0
        %v2702 = vmax.f32 %v2626, 0.0
        %v2703 = vmax.f32 %v2205, 0.0
        %v2704 = vmax.f32 %v2207, 0.0
        %v2705 = vmax.f32 %v2431, 0.0
        %v2706 = vmax.f32 %v2433, 0.0
        %v2707 = vmax.f32 %v2631, 0.0
        %v2708 = vmax.f32 %v2209, 0.0
        %v2709 = vmax.f32 %v2211, 0.0
        %v2710 = vmax.f32 %v2435, 0.0
        %v2711 = vmax.f32 %v2437, 0.0
        %v2712 = vmax.f32 %v2634, 0.0
        %v2713 = vmax.f32 %v2215, 0.0
        %v2714 = vmax.f32 %v2217, 0.0
        %v2715 = vmax.f32 %v2441, 0.0
        %v2716 = vmax.f32 %v2443, 0.0
        %v2717 = vmax.f32 %v2639, 0.0
        %v2718 = vmax.f32 %v2219, 0.0
        %v2719 = vmax.f32 %v2221, 0.0
        %v2720 = vmax.f32 %v2445, 0.0
        %v2721 = vmax.f32 %v2447, 0.0
        %v2722 = vmax.f32 %v2642, 0.0
        %v2723 = vmax.f32 %v2225, 0.0
        %v2724 = vmax.f32 %v2227, 0.0
        %v2725 = vmax.f32 %v2451, 0.0
        %v2726 = vmax.f32 %v2453, 0.0
        %v2727 = vmax.f32 %v2647, 0.0
        %v2728 = vmax.f32 %v2229, 0.0
        %v2729 = vmax.f32 %v2231, 0.0
        %v2730 = vmax.f32 %v2455, 0.0
        %v2731 = vmax.f32 %v2457, 0.0
        %v2732 = vmax.f32 %v2650, 0.0
        %v2733 = vpack.c.bf16 %v2658, %v2653
        %v2734 = vpack.c.bf16 %v2659, %v2654
        %v2735 = vpack.c.bf16 %v2660, %v2655
        %v2736 = vpack.c.bf16 %v2661, %v2656
        %v2737 = vpack.c.bf16 %v2662, %v2657
        %v2738 = vpack.c.bf16 %v2668, %v2663
        %v2739 = vpack.c.bf16 %v2669, %v2664
        %v2740 = vpack.c.bf16 %v2670, %v2665
        %v2741 = vpack.c.bf16 %v2671, %v2666
        %v2742 = vpack.c.bf16 %v2672, %v2667
        %v2743 = vpack.c.bf16 %v2678, %v2673
        %v2744 = vpack.c.bf16 %v2679, %v2674
        %v2745 = vpack.c.bf16 %v2680, %v2675
        %v2746 = vpack.c.bf16 %v2681, %v2676
        %v2747 = vpack.c.bf16 %v2682, %v2677
        %v2748 = vpack.c.bf16 %v2688, %v2683
        %v2749 = vpack.c.bf16 %v2689, %v2684
        %v2750 = vpack.c.bf16 %v2690, %v2685
        %v2751 = vpack.c.bf16 %v2691, %v2686
        %v2752 = vpack.c.bf16 %v2692, %v2687
        %v2753 = vpack.c.bf16 %v2698, %v2693
        %v2754 = vpack.c.bf16 %v2699, %v2694
        %v2755 = vpack.c.bf16 %v2700, %v2695
        %v2756 = vpack.c.bf16 %v2701, %v2696
        %v2757 = vpack.c.bf16 %v2702, %v2697
        %v2758 = vpack.c.bf16 %v2708, %v2703
        %v2759 = vpack.c.bf16 %v2709, %v2704
        %v2760 = vpack.c.bf16 %v2710, %v2705
        %v2761 = vpack.c.bf16 %v2711, %v2706
        %v2762 = vpack.c.bf16 %v2712, %v2707
        %v2763 = vpack.c.bf16 %v2718, %v2713
        %v2764 = vpack.c.bf16 %v2719, %v2714
        %v2765 = vpack.c.bf16 %v2720, %v2715
        %v2766 = vpack.c.bf16 %v2721, %v2716
        %v2767 = vpack.c.bf16 %v2722, %v2717
        %v2768 = vpack.c.bf16 %v2728, %v2723
        %v2769 = vpack.c.bf16 %v2729, %v2724
        %v2770 = vpack.c.bf16 %v2730, %v2725
        %v2771 = vpack.c.bf16 %v2731, %v2726
        %v2772 = vpack.c.bf16 %v2732, %v2727
        %v2773 = vld [vmem:[#allocation12] sm:$0xff]
        %v2774 = vld [vmem:[#allocation12 + $0x8] sm:$0xff]
        %v2775 = vld [vmem:[#allocation12 + $0x10] sm:$0xff]
        %v2776 = vld [vmem:[#allocation12 + $0x18] sm:$0xff]
        %v2777 = vld [vmem:[#allocation12 + $0x20] sm:$0xff]
        %v2778 = vld [vmem:[#allocation12 + $0x28] sm:$0xff]
        %v2779 = vld [vmem:[#allocation12 + $0x30] sm:$0xff]
        %v2780 = vld [vmem:[#allocation12 + $0x38] sm:$0xff]
        %v2781 = vld [vmem:[#allocation12 + $0x40] sm:$0xff]
        %v2782 = vld [vmem:[#allocation12 + $0x48] sm:$0xff]
        %v2783 = vld [vmem:[#allocation12 + $0x50] sm:$0xff]
        %v2784 = vld [vmem:[#allocation12 + $0x58] sm:$0xff]
        %v2785 = vld [vmem:[#allocation12 + $0x60] sm:$0xff]
        %v2786 = vld [vmem:[#allocation12 + $0x68] sm:$0xff]
        %v2787 = vld [vmem:[#allocation12 + $0x70] sm:$0xff]
        %v2788 = vld [vmem:[#allocation12 + $0x78] sm:$0xff]
        %v2789 = vld [vmem:[#allocation12 + $0x80] sm:$0xff]
        %v2790 = vld [vmem:[#allocation12 + $0x88] sm:$0xff]
        %v2791 = vld [vmem:[#allocation12 + $0x90] sm:$0xff]
        %v2792 = vld [vmem:[#allocation12 + $0x98] sm:$0xff]
        %v2793 = vld [vmem:[#allocation12 + $0xa0] sm:$0xff]
        %v2794 = vld [vmem:[#allocation12 + $0xa8] sm:$0xff]
        %v2795 = vld [vmem:[#allocation12 + $0xb0] sm:$0xff]
        %v2796 = vld [vmem:[#allocation12 + $0xb8] sm:$0xff]
        %v2797 = vld [vmem:[#allocation12 + $0xc0] sm:$0xff]
        %v2798 = vld [vmem:[#allocation12 + $0xc8] sm:$0xff]
        %v2799 = vld [vmem:[#allocation12 + $0xd0] sm:$0xff]
        %v2800 = vld [vmem:[#allocation12 + $0xd8] sm:$0xff]
        %v2801 = vld [vmem:[#allocation12 + $0xe0] sm:$0xff]
        %v2802 = vld [vmem:[#allocation12 + $0xe8] sm:$0xff]
        %v2803 = vld [vmem:[#allocation12 + $0xf0] sm:$0xff]
        %v2804 = vld [vmem:[#allocation12 + $0xf8] sm:$0xff]
        %v2805 = vld [vmem:[#allocation12 + $0x100] sm:$0xff]
        %v2806 = vld [vmem:[#allocation12 + $0x108] sm:$0xff]
        %v2807 = vld [vmem:[#allocation12 + $0x110] sm:$0xff]
        %v2808 = vld [vmem:[#allocation12 + $0x118] sm:$0xff]
        %v2809 = vld [vmem:[#allocation12 + $0x120] sm:$0xff]
        %v2810 = vld [vmem:[#allocation12 + $0x128] sm:$0xff]
        %v2811 = vld [vmem:[#allocation12 + $0x130] sm:$0xff]
        %v2812 = vld [vmem:[#allocation12 + $0x138] sm:$0xff]
        %v2813 = vld [vmem:[#allocation12 + $0x140] sm:$0xff]
        %v2814 = vld [vmem:[#allocation12 + $0x148] sm:$0xff]
        %v2815 = vld [vmem:[#allocation12 + $0x150] sm:$0xff]
        %v2816 = vld [vmem:[#allocation12 + $0x158] sm:$0xff]
        %v2817 = vld [vmem:[#allocation12 + $0x160] sm:$0xff]
        %v2818 = vld [vmem:[#allocation12 + $0x168] sm:$0xff]
        %v2819 = vld [vmem:[#allocation12 + $0x170] sm:$0xff]
        %v2820 = vld [vmem:[#allocation12 + $0x178] sm:$0xff]
        %v2821 = vld [vmem:[#allocation12 + $0x180] sm:$0xff]
        %v2822 = vld [vmem:[#allocation12 + $0x188] sm:$0xff]
        %v2823 = vld [vmem:[#allocation12 + $0x190] sm:$0xff]
        %v2824 = vld [vmem:[#allocation12 + $0x198] sm:$0xff]
        %v2825 = vld [vmem:[#allocation12 + $0x1a0] sm:$0xff]
        %v2826 = vld [vmem:[#allocation12 + $0x1a8] sm:$0xff]
        %v2827 = vld [vmem:[#allocation12 + $0x1b0] sm:$0xff]
        %v2828 = vld [vmem:[#allocation12 + $0x1b8] sm:$0xff]
        %v2829 = vld [vmem:[#allocation12 + $0x1c0] sm:$0xff]
        %v2830 = vld [vmem:[#allocation12 + $0x1c8] sm:$0xff]
        %v2831 = vld [vmem:[#allocation12 + $0x1d0] sm:$0xff]
        %v2832 = vld [vmem:[#allocation12 + $0x1d8] sm:$0xff]
        %v2833 = vld [vmem:[#allocation12 + $0x1e0] sm:$0xff]
        %v2834 = vld [vmem:[#allocation12 + $0x1e8] sm:$0xff]
        %v2835 = vld [vmem:[#allocation12 + $0x1f0] sm:$0xff]
        %v2836 = vld [vmem:[#allocation12 + $0x1f8] sm:$0xff]
        %v2837 = vld [vmem:[#allocation12 + $0x200] sm:$0xff]
        %v2838 = vld [vmem:[#allocation12 + $0x208] sm:$0xff]
        %v2839 = vld [vmem:[#allocation12 + $0x210] sm:$0xff]
        %v2840 = vld [vmem:[#allocation12 + $0x218] sm:$0xff]
        %v2841 = vld [vmem:[#allocation12 + $0x220] sm:$0xff]
        %v2842 = vld [vmem:[#allocation12 + $0x228] sm:$0xff]
        %v2843 = vld [vmem:[#allocation12 + $0x230] sm:$0xff]
        %v2844 = vld [vmem:[#allocation12 + $0x238] sm:$0xff]
        %v2845 = vld [vmem:[#allocation12 + $0x240] sm:$0xff]
        %v2846 = vld [vmem:[#allocation12 + $0x248] sm:$0xff]
        %v2847 = vld [vmem:[#allocation12 + $0x250] sm:$0xff]
        %v2848 = vld [vmem:[#allocation12 + $0x258] sm:$0xff]
        %v2849 = vld [vmem:[#allocation12 + $0x260] sm:$0xff]
        %v2850 = vld [vmem:[#allocation12 + $0x268] sm:$0xff]
        %v2851 = vld [vmem:[#allocation12 + $0x270] sm:$0xff]
        %v2852 = vld [vmem:[#allocation12 + $0x278] sm:$0xff]
        %v2853 = vld [vmem:[#allocation12 + $0x280] sm:$0xff]
        %v2854 = vld [vmem:[#allocation12 + $0x288] sm:$0xff]
        %v2855 = vld [vmem:[#allocation12 + $0x290] sm:$0xff]
        %v2856 = vld [vmem:[#allocation12 + $0x298] sm:$0xff]
        %v2857 = vld [vmem:[#allocation12 + $0x2a0] sm:$0xff]
        %v2858 = vld [vmem:[#allocation12 + $0x2a8] sm:$0xff]
        %v2859 = vld [vmem:[#allocation12 + $0x2b0] sm:$0xff]
        %v2860 = vld [vmem:[#allocation12 + $0x2b8] sm:$0xff]
        %v2861 = vld [vmem:[#allocation12 + $0x2c0] sm:$0xff]
        %v2862 = vld [vmem:[#allocation12 + $0x2c8] sm:$0xff]
        %v2863 = vld [vmem:[#allocation12 + $0x2d0] sm:$0xff]
        %v2864 = vld [vmem:[#allocation12 + $0x2d8] sm:$0xff]
        %v2865 = vld [vmem:[#allocation12 + $0x2e0] sm:$0xff]
        %v2866 = vld [vmem:[#allocation12 + $0x2e8] sm:$0xff]
        %v2867 = vld [vmem:[#allocation12 + $0x2f0] sm:$0xff]
        %v2868 = vld [vmem:[#allocation12 + $0x2f8] sm:$0xff]
        %v2869 = vld [vmem:[#allocation12 + $0x300] sm:$0xff]
        %v2870 = vld [vmem:[#allocation12 + $0x308] sm:$0xff]
        %v2871 = vld [vmem:[#allocation12 + $0x310] sm:$0xff]
        %v2872 = vld [vmem:[#allocation12 + $0x318] sm:$0xff]
        %v2873 = vld [vmem:[#allocation12 + $0x320] sm:$0xff]
        %v2874 = vld [vmem:[#allocation12 + $0x328] sm:$0xff]
        %v2875 = vld [vmem:[#allocation12 + $0x330] sm:$0xff]
        %v2876 = vld [vmem:[#allocation12 + $0x338] sm:$0xff]
        %v2877 = vld [vmem:[#allocation12 + $0x340] sm:$0xff]
        %v2878 = vld [vmem:[#allocation12 + $0x348] sm:$0xff]
        %v2879 = vld [vmem:[#allocation12 + $0x350] sm:$0xff]
        %v2880 = vld [vmem:[#allocation12 + $0x358] sm:$0xff]
        %v2881 = vld [vmem:[#allocation12 + $0x360] sm:$0xff]
        %v2882 = vld [vmem:[#allocation12 + $0x368] sm:$0xff]
        %v2883 = vld [vmem:[#allocation12 + $0x370] sm:$0xff]
        %v2884 = vld [vmem:[#allocation12 + $0x378] sm:$0xff]
        %v2885 = vld [vmem:[#allocation12 + $0x380] sm:$0xff]
        %v2886 = vld [vmem:[#allocation12 + $0x388] sm:$0xff]
        %v2887 = vld [vmem:[#allocation12 + $0x390] sm:$0xff]
        %v2888 = vld [vmem:[#allocation12 + $0x398] sm:$0xff]
        %v2889 = vld [vmem:[#allocation12 + $0x3a0] sm:$0xff]
        %v2890 = vld [vmem:[#allocation12 + $0x3a8] sm:$0xff]
        %v2891 = vld [vmem:[#allocation12 + $0x3b0] sm:$0xff]
        %v2892 = vld [vmem:[#allocation12 + $0x3b8] sm:$0xff]
        %v2893 = vld [vmem:[#allocation12 + $0x3c0] sm:$0xff]
        %v2894 = vld [vmem:[#allocation12 + $0x3c8] sm:$0xff]
        %v2895 = vld [vmem:[#allocation12 + $0x3d0] sm:$0xff]
        %v2896 = vld [vmem:[#allocation12 + $0x3d8] sm:$0xff]
        %v2897 = vld [vmem:[#allocation12 + $0x3e0] sm:$0xff]
        %v2898 = vld [vmem:[#allocation12 + $0x3e8] sm:$0xff]
        %v2899 = vld [vmem:[#allocation12 + $0x3f0] sm:$0xff]
        %v2900 = vld [vmem:[#allocation12 + $0x3f8] sm:$0xff]
        %v2901 = vld [vmem:[#allocation12 + $0x400] sm:$0xff]
        %v2902 = vld [vmem:[#allocation12 + $0x408] sm:$0xff]
        %v2903 = vld [vmem:[#allocation12 + $0x410] sm:$0xff]
        %v2904 = vld [vmem:[#allocation12 + $0x418] sm:$0xff]
        %v2905 = vld [vmem:[#allocation12 + $0x420] sm:$0xff]
        %v2906 = vld [vmem:[#allocation12 + $0x428] sm:$0xff]
        %v2907 = vld [vmem:[#allocation12 + $0x430] sm:$0xff]
        %v2908 = vld [vmem:[#allocation12 + $0x438] sm:$0xff]
        %v2909 = vld [vmem:[#allocation12 + $0x440] sm:$0xff]
        %v2910 = vld [vmem:[#allocation12 + $0x448] sm:$0xff]
        %v2911 = vld [vmem:[#allocation12 + $0x450] sm:$0xff]
        %v2912 = vld [vmem:[#allocation12 + $0x458] sm:$0xff]
        %v2913 = vld [vmem:[#allocation12 + $0x460] sm:$0xff]
        %v2914 = vld [vmem:[#allocation12 + $0x468] sm:$0xff]
        %v2915 = vld [vmem:[#allocation12 + $0x470] sm:$0xff]
        %v2916 = vld [vmem:[#allocation12 + $0x478] sm:$0xff]
        %v2917 = vld [vmem:[#allocation12 + $0x480] sm:$0xff]
        %v2918 = vld [vmem:[#allocation12 + $0x488] sm:$0xff]
        %v2919 = vld [vmem:[#allocation12 + $0x490] sm:$0xff]
        %v2920 = vld [vmem:[#allocation12 + $0x498] sm:$0xff]
        %v2921 = vld [vmem:[#allocation12 + $0x4a0] sm:$0xff]
        %v2922 = vld [vmem:[#allocation12 + $0x4a8] sm:$0xff]
        %v2923 = vld [vmem:[#allocation12 + $0x4b0] sm:$0xff]
        %v2924 = vld [vmem:[#allocation12 + $0x4b8] sm:$0xff]
        %v2925 = vld [vmem:[#allocation12 + $0x4c0] sm:$0xff]
        %v2926 = vld [vmem:[#allocation12 + $0x4c8] sm:$0xff]
        %v2927 = vld [vmem:[#allocation12 + $0x4d0] sm:$0xff]
        %v2928 = vld [vmem:[#allocation12 + $0x4d8] sm:$0xff]
        %v2929 = vld [vmem:[#allocation12 + $0x4e0] sm:$0xff]
        %v2930 = vld [vmem:[#allocation12 + $0x4e8] sm:$0xff]
        %v2931 = vld [vmem:[#allocation12 + $0x4f0] sm:$0xff]
        %v2932 = vld [vmem:[#allocation12 + $0x4f8] sm:$0xff]
        %v2933 = vld [vmem:[#allocation12 + $0x500] sm:$0xff]
        %v2934 = vld [vmem:[#allocation12 + $0x508] sm:$0xff]
        %v2935 = vld [vmem:[#allocation12 + $0x510] sm:$0xff]
        %v2936 = vld [vmem:[#allocation12 + $0x518] sm:$0xff]
        %v2937 = vld [vmem:[#allocation12 + $0x520] sm:$0xff]
        %v2938 = vld [vmem:[#allocation12 + $0x528] sm:$0xff]
        %v2939 = vld [vmem:[#allocation12 + $0x530] sm:$0xff]
        %v2940 = vld [vmem:[#allocation12 + $0x538] sm:$0xff]
        %v2941 = vld [vmem:[#allocation12 + $0x540] sm:$0xff]
        %v2942 = vld [vmem:[#allocation12 + $0x548] sm:$0xff]
        %v2943 = vld [vmem:[#allocation12 + $0x550] sm:$0xff]
        %v2944 = vld [vmem:[#allocation12 + $0x558] sm:$0xff]
        %v2945 = vld [vmem:[#allocation12 + $0x560] sm:$0xff]
        %v2946 = vld [vmem:[#allocation12 + $0x568] sm:$0xff]
        %v2947 = vld [vmem:[#allocation12 + $0x570] sm:$0xff]
        %v2948 = vld [vmem:[#allocation12 + $0x578] sm:$0xff]
        %v2949 = vld [vmem:[#allocation12 + $0x580] sm:$0xff]
        %v2950 = vld [vmem:[#allocation12 + $0x588] sm:$0xff]
        %v2951 = vld [vmem:[#allocation12 + $0x590] sm:$0xff]
        %v2952 = vld [vmem:[#allocation12 + $0x598] sm:$0xff]
        %v2953 = vld [vmem:[#allocation12 + $0x5a0] sm:$0xff]
        %v2954 = vld [vmem:[#allocation12 + $0x5a8] sm:$0xff]
        %v2955 = vld [vmem:[#allocation12 + $0x5b0] sm:$0xff]
        %v2956 = vld [vmem:[#allocation12 + $0x5b8] sm:$0xff]
        %v2957 = vld [vmem:[#allocation12 + $0x5c0] sm:$0xff]
        %v2958 = vld [vmem:[#allocation12 + $0x5c8] sm:$0xff]
        %v2959 = vld [vmem:[#allocation12 + $0x5d0] sm:$0xff]
        %v2960 = vld [vmem:[#allocation12 + $0x5d8] sm:$0xff]
        %v2961 = vld [vmem:[#allocation12 + $0x5e0] sm:$0xff]
        %v2962 = vld [vmem:[#allocation12 + $0x5e8] sm:$0xff]
        %v2963 = vld [vmem:[#allocation12 + $0x5f0] sm:$0xff]
        %v2964 = vld [vmem:[#allocation12 + $0x5f8] sm:$0xff]
        %v2965 = vld [vmem:[#allocation12 + $0x600] sm:$0xff]
        %v2966 = vld [vmem:[#allocation12 + $0x608] sm:$0xff]
        %v2967 = vld [vmem:[#allocation12 + $0x610] sm:$0xff]
        %v2968 = vld [vmem:[#allocation12 + $0x618] sm:$0xff]
        %v2969 = vld [vmem:[#allocation12 + $0x620] sm:$0xff]
        %v2970 = vld [vmem:[#allocation12 + $0x628] sm:$0xff]
        %v2971 = vld [vmem:[#allocation12 + $0x630] sm:$0xff]
        %v2972 = vld [vmem:[#allocation12 + $0x638] sm:$0xff]
        %v2973 = vld [vmem:[#allocation12 + $0x640] sm:$0xff]
        %v2974 = vld [vmem:[#allocation12 + $0x648] sm:$0xff]
        %v2975 = vld [vmem:[#allocation12 + $0x650] sm:$0xff]
        %v2976 = vld [vmem:[#allocation12 + $0x658] sm:$0xff]
        %v2977 = vld [vmem:[#allocation12 + $0x660] sm:$0xff]
        %v2978 = vld [vmem:[#allocation12 + $0x668] sm:$0xff]
        %v2979 = vld [vmem:[#allocation12 + $0x670] sm:$0xff]
        %v2980 = vld [vmem:[#allocation12 + $0x678] sm:$0xff]
        %v2981 = vld [vmem:[#allocation12 + $0x680] sm:$0xff]
        %v2982 = vld [vmem:[#allocation12 + $0x688] sm:$0xff]
        %v2983 = vld [vmem:[#allocation12 + $0x690] sm:$0xff]
        %v2984 = vld [vmem:[#allocation12 + $0x698] sm:$0xff]
        %v2985 = vld [vmem:[#allocation12 + $0x6a0] sm:$0xff]
        %v2986 = vld [vmem:[#allocation12 + $0x6a8] sm:$0xff]
        %v2987 = vld [vmem:[#allocation12 + $0x6b0] sm:$0xff]
        %v2988 = vld [vmem:[#allocation12 + $0x6b8] sm:$0xff]
        %v2989 = vld [vmem:[#allocation12 + $0x6c0] sm:$0xff]
        %v2990 = vld [vmem:[#allocation12 + $0x6c8] sm:$0xff]
        %v2991 = vld [vmem:[#allocation12 + $0x6d0] sm:$0xff]
        %v2992 = vld [vmem:[#allocation12 + $0x6d8] sm:$0xff]
        %v2993 = vld [vmem:[#allocation12 + $0x6e0] sm:$0xff]
        %v2994 = vld [vmem:[#allocation12 + $0x6e8] sm:$0xff]
        %v2995 = vld [vmem:[#allocation12 + $0x6f0] sm:$0xff]
        %v2996 = vld [vmem:[#allocation12 + $0x6f8] sm:$0xff]
        %v2997 = vld [vmem:[#allocation12 + $0x700] sm:$0xff]
        %v2998 = vld [vmem:[#allocation12 + $0x708] sm:$0xff]
        %v2999 = vld [vmem:[#allocation12 + $0x710] sm:$0xff]
        %v3000 = vld [vmem:[#allocation12 + $0x718] sm:$0xff]
        %v3001 = vld [vmem:[#allocation12 + $0x720] sm:$0xff]
        %v3002 = vld [vmem:[#allocation12 + $0x728] sm:$0xff]
        %v3003 = vld [vmem:[#allocation12 + $0x730] sm:$0xff]
        %v3004 = vld [vmem:[#allocation12 + $0x738] sm:$0xff]
        %v3005 = vld [vmem:[#allocation12 + $0x740] sm:$0xff]
        %v3006 = vld [vmem:[#allocation12 + $0x748] sm:$0xff]
        %v3007 = vld [vmem:[#allocation12 + $0x750] sm:$0xff]
        %v3008 = vld [vmem:[#allocation12 + $0x758] sm:$0xff]
        %v3009 = vld [vmem:[#allocation12 + $0x760] sm:$0xff]
        %v3010 = vld [vmem:[#allocation12 + $0x768] sm:$0xff]
        %v3011 = vld [vmem:[#allocation12 + $0x770] sm:$0xff]
        %v3012 = vld [vmem:[#allocation12 + $0x778] sm:$0xff]
        %v3013 = vld [vmem:[#allocation12 + $0x780] sm:$0xff]
        %v3014 = vld [vmem:[#allocation12 + $0x788] sm:$0xff]
        %v3015 = vld [vmem:[#allocation12 + $0x790] sm:$0xff]
        %v3016 = vld [vmem:[#allocation12 + $0x798] sm:$0xff]
        %v3017 = vld [vmem:[#allocation12 + $0x7a0] sm:$0xff]
        %v3018 = vld [vmem:[#allocation12 + $0x7a8] sm:$0xff]
        %v3019 = vld [vmem:[#allocation12 + $0x7b0] sm:$0xff]
        %v3020 = vld [vmem:[#allocation12 + $0x7b8] sm:$0xff]
        %v3021 = vld [vmem:[#allocation12 + $0x7c0] sm:$0xff]
        %v3022 = vld [vmem:[#allocation12 + $0x7c8] sm:$0xff]
        %v3023 = vld [vmem:[#allocation12 + $0x7d0] sm:$0xff]
        %v3024 = vld [vmem:[#allocation12 + $0x7d8] sm:$0xff]
        %v3025 = vld [vmem:[#allocation12 + $0x7e0] sm:$0xff]
        %v3026 = vld [vmem:[#allocation12 + $0x7e8] sm:$0xff]
        %v3027 = vld [vmem:[#allocation12 + $0x7f0] sm:$0xff]
        %v3028 = vld [vmem:[#allocation12 + $0x7f8] sm:$0xff]
        %v3029 = vld [vmem:[#allocation12 + $0x800] sm:$0xff]
        %v3030 = vld [vmem:[#allocation12 + $0x808] sm:$0xff]
        %v3031 = vld [vmem:[#allocation12 + $0x810] sm:$0xff]
        %v3032 = vld [vmem:[#allocation12 + $0x818] sm:$0xff]
        %v3033 = vld [vmem:[#allocation12 + $0x820] sm:$0xff]
        %v3034 = vld [vmem:[#allocation12 + $0x828] sm:$0xff]
        %v3035 = vld [vmem:[#allocation12 + $0x830] sm:$0xff]
        %v3036 = vld [vmem:[#allocation12 + $0x838] sm:$0xff]
        %v3037 = vld [vmem:[#allocation12 + $0x840] sm:$0xff]
        %v3038 = vld [vmem:[#allocation12 + $0x848] sm:$0xff]
        %v3039 = vld [vmem:[#allocation12 + $0x850] sm:$0xff]
        %v3040 = vld [vmem:[#allocation12 + $0x858] sm:$0xff]
        %v3041 = vld [vmem:[#allocation12 + $0x860] sm:$0xff]
        %v3042 = vld [vmem:[#allocation12 + $0x868] sm:$0xff]
        %v3043 = vld [vmem:[#allocation12 + $0x870] sm:$0xff]
        %v3044 = vld [vmem:[#allocation12 + $0x878] sm:$0xff]
        %v3045 = vld [vmem:[#allocation13] sm:$0xff]
        %v3047 = vlaneseq
        %v3048 = vshrl.u32 %v3047, 7
        %v3049 = vsub.s32 0, %v3048
        %v3050 = vrot.slane %v3045, %v3049
        %v3051 = vlaneseq
        %v3052 = vshrl.u32 %v3051, 7
        %v3053 = vsub.s32 1, %v3052
        %v3054 = vrot.slane %v3045, %v3053
        %v3055 = vlaneseq
        %v3056 = vshrl.u32 %v3055, 7
        %v3057 = vsub.s32 2, %v3056
        %v3058 = vrot.slane %v3045, %v3057
        %v3059 = vlaneseq
        %v3060 = vshrl.u32 %v3059, 7
        %v3061 = vsub.s32 3, %v3060
        %v3062 = vrot.slane %v3045, %v3061
        %v3063 = vlaneseq
        %v3064 = vshrl.u32 %v3063, 7
        %v3065 = vsub.s32 4, %v3064
        %v3066 = vrot.slane %v3045, %v3065
        %v3067 = vlaneseq
        %v3068 = vshrl.u32 %v3067, 7
        %v3069 = vsub.s32 5, %v3068
        %v3070 = vrot.slane %v3045, %v3069
        %v3071 = vlaneseq
        %v3072 = vshrl.u32 %v3071, 7
        %v3073 = vsub.s32 6, %v3072
        %v3074 = vrot.slane %v3045, %v3073
        %v3075 = vlaneseq
        %v3076 = vshrl.u32 %v3075, 7
        %v3077 = vsub.s32 7, %v3076
        %v3078 = vrot.slane %v3045, %v3077
        %v3359 = vunpack.c.l.b16 %v2773
        %v3360 = vunpack.c.h.b16 %v2773
        %v3361 = vunpack.c.l.b16 %v2774
        %v3362 = vunpack.c.h.b16 %v2774
        %v3363 = vunpack.c.l.b16 %v2775
        %v3364 = vunpack.c.h.b16 %v2775
        %v3365 = vunpack.c.l.b16 %v2776
        %v3366 = vunpack.c.h.b16 %v2776
        %v3367 = vunpack.c.l.b16 %v2777
        %v3368 = vunpack.c.h.b16 %v2777
        %v3369 = vunpack.c.l.b16 %v2778
        %v3370 = vunpack.c.h.b16 %v2778
        %v3371 = vunpack.c.l.b16 %v2779
        %v3372 = vunpack.c.h.b16 %v2779
        %v3373 = vunpack.c.l.b16 %v2780
        %v3374 = vunpack.c.h.b16 %v2780
        %v3375 = vunpack.c.l.b16 %v2781
        %v3376 = vunpack.c.h.b16 %v2781
        %v3377 = vunpack.c.l.b16 %v2782
        %v3378 = vunpack.c.h.b16 %v2782
        %v3379 = vunpack.c.l.b16 %v2783
        %v3380 = vunpack.c.h.b16 %v2783
        %v3381 = vunpack.c.l.b16 %v2784
        %v3382 = vunpack.c.h.b16 %v2784
        %v3383 = vunpack.c.l.b16 %v2785
        %v3384 = vunpack.c.h.b16 %v2785
        %v3385 = vunpack.c.l.b16 %v2786
        %v3386 = vunpack.c.h.b16 %v2786
        %v3387 = vunpack.c.l.b16 %v2787
        %v3388 = vunpack.c.h.b16 %v2787
        %v3389 = vunpack.c.l.b16 %v2788
        %v3390 = vunpack.c.h.b16 %v2788
        %v3391 = vunpack.c.l.b16 %v2789
        %v3392 = vunpack.c.h.b16 %v2789
        %v3393 = vunpack.c.l.b16 %v2790
        %v3394 = vunpack.c.h.b16 %v2790
        %v3395 = vunpack.c.l.b16 %v2791
        %v3396 = vunpack.c.h.b16 %v2791
        %v3397 = vunpack.c.l.b16 %v2792
        %v3398 = vunpack.c.h.b16 %v2792
        %v3399 = vunpack.c.l.b16 %v2793
        %v3400 = vunpack.c.h.b16 %v2793
        %v3401 = vunpack.c.l.b16 %v2794
        %v3402 = vunpack.c.h.b16 %v2794
        %v3403 = vunpack.c.l.b16 %v2795
        %v3404 = vunpack.c.h.b16 %v2795
        %v3405 = vunpack.c.l.b16 %v2796
        %v3406 = vunpack.c.h.b16 %v2796
        %v3407 = vunpack.c.l.b16 %v2797
        %v3408 = vunpack.c.h.b16 %v2797
        %v3409 = vunpack.c.l.b16 %v2798
        %v3410 = vunpack.c.h.b16 %v2798
        %v3411 = vunpack.c.l.b16 %v2799
        %v3412 = vunpack.c.h.b16 %v2799
        %v3413 = vunpack.c.l.b16 %v2800
        %v3414 = vunpack.c.h.b16 %v2800
        %v3415 = vunpack.c.l.b16 %v2801
        %v3416 = vunpack.c.h.b16 %v2801
        %v3417 = vunpack.c.l.b16 %v2802
        %v3418 = vunpack.c.h.b16 %v2802
        %v3419 = vunpack.c.l.b16 %v2803
        %v3420 = vunpack.c.h.b16 %v2803
        %v3421 = vunpack.c.l.b16 %v2804
        %v3422 = vunpack.c.h.b16 %v2804
        %v3423 = vunpack.c.l.b16 %v2805
        %v3424 = vunpack.c.h.b16 %v2805
        %v3425 = vunpack.c.l.b16 %v2806
        %v3426 = vunpack.c.h.b16 %v2806
        %v3427 = vunpack.c.l.b16 %v2807
        %v3428 = vunpack.c.h.b16 %v2807
        %v3429 = vunpack.c.l.b16 %v2808
        %v3430 = vunpack.c.h.b16 %v2808
        %v3431 = vunpack.c.l.b16 %v2809
        %v3432 = vunpack.c.h.b16 %v2809
        %v3433 = vunpack.c.l.b16 %v2810
        %v3434 = vunpack.c.h.b16 %v2810
        %v3435 = vunpack.c.l.b16 %v2811
        %v3436 = vunpack.c.h.b16 %v2811
        %v3437 = vunpack.c.l.b16 %v2812
        %v3438 = vunpack.c.h.b16 %v2812
        %v3439 = vunpack.c.l.b16 %v2813
        %v3440 = vunpack.c.h.b16 %v2813
        %v3441 = vunpack.c.l.b16 %v2814
        %v3442 = vunpack.c.h.b16 %v2814
        %v3443 = vunpack.c.l.b16 %v2815
        %v3444 = vunpack.c.h.b16 %v2815
        %v3445 = vunpack.c.l.b16 %v2816
        %v3446 = vunpack.c.h.b16 %v2816
        %v3447 = vunpack.c.l.b16 %v2817
        %v3448 = vunpack.c.h.b16 %v2817
        %v3449 = vunpack.c.l.b16 %v2818
        %v3450 = vunpack.c.h.b16 %v2818
        %v3451 = vunpack.c.l.b16 %v2819
        %v3452 = vunpack.c.h.b16 %v2819
        %v3453 = vunpack.c.l.b16 %v2820
        %v3454 = vunpack.c.h.b16 %v2820
        %v3455 = vunpack.c.l.b16 %v2821
        %v3456 = vunpack.c.h.b16 %v2821
        %v3457 = vunpack.c.l.b16 %v2822
        %v3458 = vunpack.c.h.b16 %v2822
        %v3459 = vunpack.c.l.b16 %v2823
        %v3460 = vunpack.c.h.b16 %v2823
        %v3461 = vunpack.c.l.b16 %v2824
        %v3462 = vunpack.c.h.b16 %v2824
        %v3463 = vunpack.c.l.b16 %v2825
        %v3464 = vunpack.c.h.b16 %v2825
        %v3465 = vunpack.c.l.b16 %v2826
        %v3466 = vunpack.c.h.b16 %v2826
        %v3467 = vunpack.c.l.b16 %v2827
        %v3468 = vunpack.c.h.b16 %v2827
        %v3469 = vunpack.c.l.b16 %v2828
        %v3470 = vunpack.c.h.b16 %v2828
        %v3471 = vunpack.c.l.b16 %v2829
        %v3472 = vunpack.c.h.b16 %v2829
        %v3473 = vunpack.c.l.b16 %v2830
        %v3474 = vunpack.c.h.b16 %v2830
        %v3475 = vunpack.c.l.b16 %v2831
        %v3476 = vunpack.c.h.b16 %v2831
        %v3477 = vunpack.c.l.b16 %v2832
        %v3478 = vunpack.c.h.b16 %v2832
        %v3479 = vunpack.c.l.b16 %v2833
        %v3480 = vunpack.c.h.b16 %v2833
        %v3481 = vunpack.c.l.b16 %v2834
        %v3482 = vunpack.c.h.b16 %v2834
        %v3483 = vunpack.c.l.b16 %v2835
        %v3484 = vunpack.c.h.b16 %v2835
        %v3485 = vunpack.c.l.b16 %v2836
        %v3486 = vunpack.c.h.b16 %v2836
        %v3487 = vunpack.c.l.b16 %v2837
        %v3488 = vunpack.c.h.b16 %v2837
        %v3489 = vunpack.c.l.b16 %v2838
        %v3490 = vunpack.c.h.b16 %v2838
        %v3491 = vunpack.c.l.b16 %v2839
        %v3492 = vunpack.c.h.b16 %v2839
        %v3493 = vunpack.c.l.b16 %v2840
        %v3494 = vunpack.c.h.b16 %v2840
        %v3495 = vunpack.c.l.b16 %v2841
        %v3496 = vunpack.c.h.b16 %v2841
        %v3497 = vunpack.c.l.b16 %v2842
        %v3498 = vunpack.c.h.b16 %v2842
        %v3499 = vunpack.c.l.b16 %v2843
        %v3500 = vunpack.c.h.b16 %v2843
        %v3501 = vunpack.c.l.b16 %v2844
        %v3502 = vunpack.c.h.b16 %v2844
        %v3503 = vunpack.c.l.b16 %v2845
        %v3504 = vunpack.c.h.b16 %v2845
        %v3505 = vunpack.c.l.b16 %v2846
        %v3506 = vunpack.c.h.b16 %v2846
        %v3507 = vunpack.c.l.b16 %v2847
        %v3508 = vunpack.c.h.b16 %v2847
        %v3509 = vunpack.c.l.b16 %v2848
        %v3510 = vunpack.c.h.b16 %v2848
        %v3511 = vunpack.c.l.b16 %v2849
        %v3512 = vunpack.c.h.b16 %v2849
        %v3513 = vunpack.c.l.b16 %v2850
        %v3514 = vunpack.c.h.b16 %v2850
        %v3515 = vunpack.c.l.b16 %v2851
        %v3516 = vunpack.c.h.b16 %v2851
        %v3517 = vunpack.c.l.b16 %v2852
        %v3518 = vunpack.c.h.b16 %v2852
        %v3519 = vunpack.c.l.b16 %v2853
        %v3520 = vunpack.c.h.b16 %v2853
        %v3521 = vunpack.c.l.b16 %v2854
        %v3522 = vunpack.c.h.b16 %v2854
        %v3523 = vunpack.c.l.b16 %v2855
        %v3524 = vunpack.c.h.b16 %v2855
        %v3525 = vunpack.c.l.b16 %v2856
        %v3526 = vunpack.c.h.b16 %v2856
        %v3527 = vunpack.c.l.b16 %v2857
        %v3528 = vunpack.c.h.b16 %v2857
        %v3529 = vunpack.c.l.b16 %v2858
        %v3530 = vunpack.c.h.b16 %v2858
        %v3531 = vunpack.c.l.b16 %v2859
        %v3532 = vunpack.c.h.b16 %v2859
        %v3533 = vunpack.c.l.b16 %v2860
        %v3534 = vunpack.c.h.b16 %v2860
        %v3535 = vunpack.c.l.b16 %v2861
        %v3536 = vunpack.c.h.b16 %v2861
        %v3537 = vunpack.c.l.b16 %v2862
        %v3538 = vunpack.c.h.b16 %v2862
        %v3539 = vunpack.c.l.b16 %v2863
        %v3540 = vunpack.c.h.b16 %v2863
        %v3541 = vunpack.c.l.b16 %v2864
        %v3542 = vunpack.c.h.b16 %v2864
        %v3543 = vunpack.c.l.b16 %v2865
        %v3544 = vunpack.c.h.b16 %v2865
        %v3545 = vunpack.c.l.b16 %v2866
        %v3546 = vunpack.c.h.b16 %v2866
        %v3547 = vunpack.c.l.b16 %v2867
        %v3548 = vunpack.c.h.b16 %v2867
        %v3549 = vunpack.c.l.b16 %v2868
        %v3550 = vunpack.c.h.b16 %v2868
        %v3551 = vunpack.c.l.b16 %v2869
        %v3552 = vunpack.c.h.b16 %v2869
        %v3553 = vunpack.c.l.b16 %v2870
        %v3554 = vunpack.c.h.b16 %v2870
        %v3555 = vunpack.c.l.b16 %v2871
        %v3556 = vunpack.c.h.b16 %v2871
        %v3557 = vunpack.c.l.b16 %v2872
        %v3558 = vunpack.c.h.b16 %v2872
        %v3559 = vunpack.c.l.b16 %v2873
        %v3560 = vunpack.c.h.b16 %v2873
        %v3561 = vunpack.c.l.b16 %v2874
        %v3562 = vunpack.c.h.b16 %v2874
        %v3563 = vunpack.c.l.b16 %v2875
        %v3564 = vunpack.c.h.b16 %v2875
        %v3565 = vunpack.c.l.b16 %v2876
        %v3566 = vunpack.c.h.b16 %v2876
        %v3567 = vunpack.c.l.b16 %v2877
        %v3568 = vunpack.c.h.b16 %v2877
        %v3569 = vunpack.c.l.b16 %v2878
        %v3570 = vunpack.c.h.b16 %v2878
        %v3571 = vunpack.c.l.b16 %v2879
        %v3572 = vunpack.c.h.b16 %v2879
        %v3573 = vunpack.c.l.b16 %v2880
        %v3574 = vunpack.c.h.b16 %v2880
        %v3575 = vunpack.c.l.b16 %v2881
        %v3576 = vunpack.c.h.b16 %v2881
        %v3577 = vunpack.c.l.b16 %v2882
        %v3578 = vunpack.c.h.b16 %v2882
        %v3579 = vunpack.c.l.b16 %v2883
        %v3580 = vunpack.c.h.b16 %v2883
        %v3581 = vunpack.c.l.b16 %v2884
        %v3582 = vunpack.c.h.b16 %v2884
        %v3583 = vunpack.c.l.b16 %v2885
        %v3584 = vunpack.c.h.b16 %v2885
        %v3585 = vunpack.c.l.b16 %v2886
        %v3586 = vunpack.c.h.b16 %v2886
        %v3587 = vunpack.c.l.b16 %v2887
        %v3588 = vunpack.c.h.b16 %v2887
        %v3589 = vunpack.c.l.b16 %v2888
        %v3590 = vunpack.c.h.b16 %v2888
        %v3591 = vunpack.c.l.b16 %v2889
        %v3592 = vunpack.c.h.b16 %v2889
        %v3593 = vunpack.c.l.b16 %v2890
        %v3594 = vunpack.c.h.b16 %v2890
        %v3595 = vunpack.c.l.b16 %v2891
        %v3596 = vunpack.c.h.b16 %v2891
        %v3597 = vunpack.c.l.b16 %v2892
        %v3598 = vunpack.c.h.b16 %v2892
        %v3599 = vunpack.c.l.b16 %v2893
        %v3600 = vunpack.c.h.b16 %v2893
        %v3601 = vunpack.c.l.b16 %v2894
        %v3602 = vunpack.c.h.b16 %v2894
        %v3603 = vunpack.c.l.b16 %v2895
        %v3604 = vunpack.c.h.b16 %v2895
        %v3605 = vunpack.c.l.b16 %v2896
        %v3606 = vunpack.c.h.b16 %v2896
        %v3607 = vunpack.c.l.b16 %v2897
        %v3608 = vunpack.c.h.b16 %v2897
        %v3609 = vunpack.c.l.b16 %v2898
        %v3610 = vunpack.c.h.b16 %v2898
        %v3611 = vunpack.c.l.b16 %v2899
        %v3612 = vunpack.c.h.b16 %v2899
        %v3613 = vunpack.c.l.b16 %v2900
        %v3614 = vunpack.c.h.b16 %v2900
        %v3615 = vunpack.c.l.b16 %v2901
        %v3616 = vunpack.c.h.b16 %v2901
        %v3617 = vunpack.c.l.b16 %v2902
        %v3618 = vunpack.c.h.b16 %v2902
        %v3619 = vunpack.c.l.b16 %v2903
        %v3620 = vunpack.c.h.b16 %v2903
        %v3621 = vunpack.c.l.b16 %v2904
        %v3622 = vunpack.c.h.b16 %v2904
        %v3623 = vunpack.c.l.b16 %v2905
        %v3624 = vunpack.c.h.b16 %v2905
        %v3625 = vunpack.c.l.b16 %v2906
        %v3626 = vunpack.c.h.b16 %v2906
        %v3627 = vunpack.c.l.b16 %v2907
        %v3628 = vunpack.c.h.b16 %v2907
        %v3629 = vunpack.c.l.b16 %v2908
        %v3630 = vunpack.c.h.b16 %v2908
        %v3631 = vunpack.c.l.b16 %v2909
        %v3632 = vunpack.c.h.b16 %v2909
        %v3633 = vunpack.c.l.b16 %v2910
        %v3634 = vunpack.c.h.b16 %v2910
        %v3635 = vunpack.c.l.b16 %v2911
        %v3636 = vunpack.c.h.b16 %v2911
        %v3637 = vunpack.c.l.b16 %v2912
        %v3638 = vunpack.c.h.b16 %v2912
        %v3639 = vunpack.c.l.b16 %v2913
        %v3640 = vunpack.c.h.b16 %v2913
        %v3641 = vunpack.c.l.b16 %v2914
        %v3642 = vunpack.c.h.b16 %v2914
        %v3643 = vunpack.c.l.b16 %v2915
        %v3644 = vunpack.c.h.b16 %v2915
        %v3645 = vunpack.c.l.b16 %v2916
        %v3646 = vunpack.c.h.b16 %v2916
        %v3647 = vunpack.c.l.b16 %v2917
        %v3648 = vunpack.c.h.b16 %v2917
        %v3649 = vunpack.c.l.b16 %v2918
        %v3650 = vunpack.c.h.b16 %v2918
        %v3651 = vunpack.c.l.b16 %v2919
        %v3652 = vunpack.c.h.b16 %v2919
        %v3653 = vunpack.c.l.b16 %v2920
        %v3654 = vunpack.c.h.b16 %v2920
        %v3655 = vunpack.c.l.b16 %v2921
        %v3656 = vunpack.c.h.b16 %v2921
        %v3657 = vunpack.c.l.b16 %v2922
        %v3658 = vunpack.c.h.b16 %v2922
        %v3659 = vunpack.c.l.b16 %v2923
        %v3660 = vunpack.c.h.b16 %v2923
        %v3661 = vunpack.c.l.b16 %v2924
        %v3662 = vunpack.c.h.b16 %v2924
        %v3663 = vunpack.c.l.b16 %v2925
        %v3664 = vunpack.c.h.b16 %v2925
        %v3665 = vunpack.c.l.b16 %v2926
        %v3666 = vunpack.c.h.b16 %v2926
        %v3667 = vunpack.c.l.b16 %v2927
        %v3668 = vunpack.c.h.b16 %v2927
        %v3669 = vunpack.c.l.b16 %v2928
        %v3670 = vunpack.c.h.b16 %v2928
        %v3671 = vunpack.c.l.b16 %v2929
        %v3672 = vunpack.c.h.b16 %v2929
        %v3673 = vunpack.c.l.b16 %v2930
        %v3674 = vunpack.c.h.b16 %v2930
        %v3675 = vunpack.c.l.b16 %v2931
        %v3676 = vunpack.c.h.b16 %v2931
        %v3677 = vunpack.c.l.b16 %v2932
        %v3678 = vunpack.c.h.b16 %v2932
        %v3679 = vunpack.c.l.b16 %v2933
        %v3680 = vunpack.c.h.b16 %v2933
        %v3681 = vunpack.c.l.b16 %v2934
        %v3682 = vunpack.c.h.b16 %v2934
        %v3683 = vunpack.c.l.b16 %v2935
        %v3684 = vunpack.c.h.b16 %v2935
        %v3685 = vunpack.c.l.b16 %v2936
        %v3686 = vunpack.c.h.b16 %v2936
        %v3687 = vunpack.c.l.b16 %v2937
        %v3688 = vunpack.c.h.b16 %v2937
        %v3689 = vunpack.c.l.b16 %v2938
        %v3690 = vunpack.c.h.b16 %v2938
        %v3691 = vunpack.c.l.b16 %v2939
        %v3692 = vunpack.c.h.b16 %v2939
        %v3693 = vunpack.c.l.b16 %v2940
        %v3694 = vunpack.c.h.b16 %v2940
        %v3695 = vunpack.c.l.b16 %v2941
        %v3696 = vunpack.c.h.b16 %v2941
        %v3697 = vunpack.c.l.b16 %v2942
        %v3698 = vunpack.c.h.b16 %v2942
        %v3699 = vunpack.c.l.b16 %v2943
        %v3700 = vunpack.c.h.b16 %v2943
        %v3701 = vunpack.c.l.b16 %v2944
        %v3702 = vunpack.c.h.b16 %v2944
        %v3703 = vunpack.c.l.b16 %v2945
        %v3704 = vunpack.c.h.b16 %v2945
        %v3705 = vunpack.c.l.b16 %v2946
        %v3706 = vunpack.c.h.b16 %v2946
        %v3707 = vunpack.c.l.b16 %v2947
        %v3708 = vunpack.c.h.b16 %v2947
        %v3709 = vunpack.c.l.b16 %v2948
        %v3710 = vunpack.c.h.b16 %v2948
        %v3711 = vunpack.c.l.b16 %v2949
        %v3712 = vunpack.c.h.b16 %v2949
        %v3713 = vunpack.c.l.b16 %v2950
        %v3714 = vunpack.c.h.b16 %v2950
        %v3715 = vunpack.c.l.b16 %v2951
        %v3716 = vunpack.c.h.b16 %v2951
        %v3717 = vunpack.c.l.b16 %v2952
        %v3718 = vunpack.c.h.b16 %v2952
        %v3719 = vunpack.c.l.b16 %v2953
        %v3720 = vunpack.c.h.b16 %v2953
        %v3721 = vunpack.c.l.b16 %v2954
        %v3722 = vunpack.c.h.b16 %v2954
        %v3723 = vunpack.c.l.b16 %v2955
        %v3724 = vunpack.c.h.b16 %v2955
        %v3725 = vunpack.c.l.b16 %v2956
        %v3726 = vunpack.c.h.b16 %v2956
        %v3727 = vunpack.c.l.b16 %v2957
        %v3728 = vunpack.c.h.b16 %v2957
        %v3729 = vunpack.c.l.b16 %v2958
        %v3730 = vunpack.c.h.b16 %v2958
        %v3731 = vunpack.c.l.b16 %v2959
        %v3732 = vunpack.c.h.b16 %v2959
        %v3733 = vunpack.c.l.b16 %v2960
        %v3734 = vunpack.c.h.b16 %v2960
        %v3735 = vunpack.c.l.b16 %v2961
        %v3736 = vunpack.c.h.b16 %v2961
        %v3737 = vunpack.c.l.b16 %v2962
        %v3738 = vunpack.c.h.b16 %v2962
        %v3739 = vunpack.c.l.b16 %v2963
        %v3740 = vunpack.c.h.b16 %v2963
        %v3741 = vunpack.c.l.b16 %v2964
        %v3742 = vunpack.c.h.b16 %v2964
        %v3743 = vunpack.c.l.b16 %v2965
        %v3744 = vunpack.c.h.b16 %v2965
        %v3745 = vunpack.c.l.b16 %v2966
        %v3746 = vunpack.c.h.b16 %v2966
        %v3747 = vunpack.c.l.b16 %v2967
        %v3748 = vunpack.c.h.b16 %v2967
        %v3749 = vunpack.c.l.b16 %v2968
        %v3750 = vunpack.c.h.b16 %v2968
        %v3751 = vunpack.c.l.b16 %v2969
        %v3752 = vunpack.c.h.b16 %v2969
        %v3753 = vunpack.c.l.b16 %v2970
        %v3754 = vunpack.c.h.b16 %v2970
        %v3755 = vunpack.c.l.b16 %v2971
        %v3756 = vunpack.c.h.b16 %v2971
        %v3757 = vunpack.c.l.b16 %v2972
        %v3758 = vunpack.c.h.b16 %v2972
        %v3759 = vunpack.c.l.b16 %v2973
        %v3760 = vunpack.c.h.b16 %v2973
        %v3761 = vunpack.c.l.b16 %v2974
        %v3762 = vunpack.c.h.b16 %v2974
        %v3763 = vunpack.c.l.b16 %v2975
        %v3764 = vunpack.c.h.b16 %v2975
        %v3765 = vunpack.c.l.b16 %v2976
        %v3766 = vunpack.c.h.b16 %v2976
        %v3767 = vunpack.c.l.b16 %v2977
        %v3768 = vunpack.c.h.b16 %v2977
        %v3769 = vunpack.c.l.b16 %v2978
        %v3770 = vunpack.c.h.b16 %v2978
        %v3771 = vunpack.c.l.b16 %v2979
        %v3772 = vunpack.c.h.b16 %v2979
        %v3773 = vunpack.c.l.b16 %v2980
        %v3774 = vunpack.c.h.b16 %v2980
        %v3775 = vunpack.c.l.b16 %v2981
        %v3776 = vunpack.c.h.b16 %v2981
        %v3777 = vunpack.c.l.b16 %v2982
        %v3778 = vunpack.c.h.b16 %v2982
        %v3779 = vunpack.c.l.b16 %v2983
        %v3780 = vunpack.c.h.b16 %v2983
        %v3781 = vunpack.c.l.b16 %v2984
        %v3782 = vunpack.c.h.b16 %v2984
        %v3783 = vunpack.c.l.b16 %v2985
        %v3784 = vunpack.c.h.b16 %v2985
        %v3785 = vunpack.c.l.b16 %v2986
        %v3786 = vunpack.c.h.b16 %v2986
        %v3787 = vunpack.c.l.b16 %v2987
        %v3788 = vunpack.c.h.b16 %v2987
        %v3789 = vunpack.c.l.b16 %v2988
        %v3790 = vunpack.c.h.b16 %v2988
        %v3791 = vunpack.c.l.b16 %v2989
        %v3792 = vunpack.c.h.b16 %v2989
        %v3793 = vunpack.c.l.b16 %v2990
        %v3794 = vunpack.c.h.b16 %v2990
        %v3795 = vunpack.c.l.b16 %v2991
        %v3796 = vunpack.c.h.b16 %v2991
        %v3797 = vunpack.c.l.b16 %v2992
        %v3798 = vunpack.c.h.b16 %v2992
        %v3799 = vunpack.c.l.b16 %v2993
        %v3800 = vunpack.c.h.b16 %v2993
        %v3801 = vunpack.c.l.b16 %v2994
        %v3802 = vunpack.c.h.b16 %v2994
        %v3803 = vunpack.c.l.b16 %v2995
        %v3804 = vunpack.c.h.b16 %v2995
        %v3805 = vunpack.c.l.b16 %v2996
        %v3806 = vunpack.c.h.b16 %v2996
        %v3807 = vunpack.c.l.b16 %v2997
        %v3808 = vunpack.c.h.b16 %v2997
        %v3809 = vunpack.c.l.b16 %v2998
        %v3810 = vunpack.c.h.b16 %v2998
        %v3811 = vunpack.c.l.b16 %v2999
        %v3812 = vunpack.c.h.b16 %v2999
        %v3813 = vunpack.c.l.b16 %v3000
        %v3814 = vunpack.c.h.b16 %v3000
        %v3815 = vunpack.c.l.b16 %v3001
        %v3816 = vunpack.c.h.b16 %v3001
        %v3817 = vunpack.c.l.b16 %v3002
        %v3818 = vunpack.c.h.b16 %v3002
        %v3819 = vunpack.c.l.b16 %v3003
        %v3820 = vunpack.c.h.b16 %v3003
        %v3821 = vunpack.c.l.b16 %v3004
        %v3822 = vunpack.c.h.b16 %v3004
        %v3823 = vunpack.c.l.b16 %v3005
        %v3824 = vunpack.c.h.b16 %v3005
        %v3825 = vunpack.c.l.b16 %v3006
        %v3826 = vunpack.c.h.b16 %v3006
        %v3827 = vunpack.c.l.b16 %v3007
        %v3828 = vunpack.c.h.b16 %v3007
        %v3829 = vunpack.c.l.b16 %v3008
        %v3830 = vunpack.c.h.b16 %v3008
        %v3831 = vunpack.c.l.b16 %v3009
        %v3832 = vunpack.c.h.b16 %v3009
        %v3833 = vunpack.c.l.b16 %v3010
        %v3834 = vunpack.c.h.b16 %v3010
        %v3835 = vunpack.c.l.b16 %v3011
        %v3836 = vunpack.c.h.b16 %v3011
        %v3837 = vunpack.c.l.b16 %v3012
        %v3838 = vunpack.c.h.b16 %v3012
        %v3839 = vunpack.c.l.b16 %v3013
        %v3840 = vunpack.c.h.b16 %v3013
        %v3841 = vunpack.c.l.b16 %v3014
        %v3842 = vunpack.c.h.b16 %v3014
        %v3843 = vunpack.c.l.b16 %v3015
        %v3844 = vunpack.c.h.b16 %v3015
        %v3845 = vunpack.c.l.b16 %v3016
        %v3846 = vunpack.c.h.b16 %v3016
        %v3847 = vunpack.c.l.b16 %v3017
        %v3848 = vunpack.c.h.b16 %v3017
        %v3849 = vunpack.c.l.b16 %v3018
        %v3850 = vunpack.c.h.b16 %v3018
        %v3851 = vunpack.c.l.b16 %v3019
        %v3852 = vunpack.c.h.b16 %v3019
        %v3853 = vunpack.c.l.b16 %v3020
        %v3854 = vunpack.c.h.b16 %v3020
        %v3855 = vunpack.c.l.b16 %v3021
        %v3856 = vunpack.c.h.b16 %v3021
        %v3857 = vunpack.c.l.b16 %v3022
        %v3858 = vunpack.c.h.b16 %v3022
        %v3859 = vunpack.c.l.b16 %v3023
        %v3860 = vunpack.c.h.b16 %v3023
        %v3861 = vunpack.c.l.b16 %v3024
        %v3862 = vunpack.c.h.b16 %v3024
        %v3863 = vunpack.c.l.b16 %v3025
        %v3864 = vunpack.c.h.b16 %v3025
        %v3865 = vunpack.c.l.b16 %v3026
        %v3866 = vunpack.c.h.b16 %v3026
        %v3867 = vunpack.c.l.b16 %v3027
        %v3868 = vunpack.c.h.b16 %v3027
        %v3869 = vunpack.c.l.b16 %v3028
        %v3870 = vunpack.c.h.b16 %v3028
        %v3871 = vunpack.c.l.b16 %v3029
        %v3872 = vunpack.c.h.b16 %v3029
        %v3873 = vunpack.c.l.b16 %v3030
        %v3874 = vunpack.c.h.b16 %v3030
        %v3875 = vunpack.c.l.b16 %v3031
        %v3876 = vunpack.c.h.b16 %v3031
        %v3877 = vunpack.c.l.b16 %v3032
        %v3878 = vunpack.c.h.b16 %v3032
        %v3879 = vunpack.c.l.b16 %v3033
        %v3880 = vunpack.c.h.b16 %v3033
        %v3881 = vunpack.c.l.b16 %v3034
        %v3882 = vunpack.c.h.b16 %v3034
        %v3883 = vunpack.c.l.b16 %v3035
        %v3884 = vunpack.c.h.b16 %v3035
        %v3885 = vunpack.c.l.b16 %v3036
        %v3886 = vunpack.c.h.b16 %v3036
        %v3887 = vunpack.c.l.b16 %v3037
        %v3888 = vunpack.c.h.b16 %v3037
        %v3889 = vunpack.c.l.b16 %v3038
        %v3890 = vunpack.c.h.b16 %v3038
        %v3891 = vunpack.c.l.b16 %v3039
        %v3892 = vunpack.c.h.b16 %v3039
        %v3893 = vunpack.c.l.b16 %v3040
        %v3894 = vunpack.c.h.b16 %v3040
        %v3895 = vunpack.c.l.b16 %v3041
        %v3896 = vunpack.c.h.b16 %v3041
        %v3897 = vunpack.c.l.b16 %v3042
        %v3898 = vunpack.c.h.b16 %v3042
        %v3899 = vunpack.c.l.b16 %v3043
        %v3900 = vunpack.c.h.b16 %v3043
        %v3901 = vunpack.c.l.b16 %v3044
        %v3902 = vunpack.c.h.b16 %v3044
        %v3903 = vpack.c.b16 %v3367, %v3359
        %v3904 = vpack.c.b16 %v3368, %v3360
        %v3905 = vpack.c.b16 %v3369, %v3361
        %v3906 = vpack.c.b16 %v3370, %v3362
        %v3907 = vpack.c.b16 %v3371, %v3363
        %v3908 = vpack.c.b16 %v3372, %v3364
        %v3909 = vpack.c.b16 %v3373, %v3365
        %v3910 = vpack.c.b16 %v3374, %v3366
        %v3911 = vpack.c.b16 %v3383, %v3375
        %v3912 = vpack.c.b16 %v3384, %v3376
        %v3913 = vpack.c.b16 %v3385, %v3377
        %v3914 = vpack.c.b16 %v3386, %v3378
        %v3915 = vpack.c.b16 %v3387, %v3379
        %v3916 = vpack.c.b16 %v3388, %v3380
        %v3917 = vpack.c.b16 %v3389, %v3381
        %v3918 = vpack.c.b16 %v3390, %v3382
        %v3919 = vpack.c.b16 %v3399, %v3391
        %v3920 = vpack.c.b16 %v3400, %v3392
        %v3921 = vpack.c.b16 %v3401, %v3393
        %v3922 = vpack.c.b16 %v3402, %v3394
        %v3923 = vpack.c.b16 %v3403, %v3395
        %v3924 = vpack.c.b16 %v3404, %v3396
        %v3925 = vpack.c.b16 %v3405, %v3397
        %v3926 = vpack.c.b16 %v3406, %v3398
        %v3927 = vpack.c.b16 %v3415, %v3407
        %v3928 = vpack.c.b16 %v3416, %v3408
        %v3929 = vpack.c.b16 %v3417, %v3409
        %v3930 = vpack.c.b16 %v3418, %v3410
        %v3931 = vpack.c.b16 %v3419, %v3411
        %v3932 = vpack.c.b16 %v3420, %v3412
        %v3933 = vpack.c.b16 %v3421, %v3413
        %v3934 = vpack.c.b16 %v3422, %v3414
        %v3935 = vpack.c.b16 %v3431, %v3423
        %v3936 = vpack.c.b16 %v3432, %v3424
        %v3937 = vpack.c.b16 %v3433, %v3425
        %v3938 = vpack.c.b16 %v3434, %v3426
        %v3939 = vpack.c.b16 %v3435, %v3427
        %v3940 = vpack.c.b16 %v3436, %v3428
        %v3941 = vpack.c.b16 %v3437, %v3429
        %v3942 = vpack.c.b16 %v3438, %v3430
        %v3943 = vpack.c.b16 %v3447, %v3439
        %v3944 = vpack.c.b16 %v3448, %v3440
        %v3945 = vpack.c.b16 %v3449, %v3441
        %v3946 = vpack.c.b16 %v3450, %v3442
        %v3947 = vpack.c.b16 %v3451, %v3443
        %v3948 = vpack.c.b16 %v3452, %v3444
        %v3949 = vpack.c.b16 %v3453, %v3445
        %v3950 = vpack.c.b16 %v3454, %v3446
        %v3951 = vpack.c.b16 %v3463, %v3455
        %v3952 = vpack.c.b16 %v3464, %v3456
        %v3953 = vpack.c.b16 %v3465, %v3457
        %v3954 = vpack.c.b16 %v3466, %v3458
        %v3955 = vpack.c.b16 %v3467, %v3459
        %v3956 = vpack.c.b16 %v3468, %v3460
        %v3957 = vpack.c.b16 %v3469, %v3461
        %v3958 = vpack.c.b16 %v3470, %v3462
        %v3959 = vpack.c.b16 %v3479, %v3471
        %v3960 = vpack.c.b16 %v3480, %v3472
        %v3961 = vpack.c.b16 %v3481, %v3473
        %v3962 = vpack.c.b16 %v3482, %v3474
        %v3963 = vpack.c.b16 %v3483, %v3475
        %v3964 = vpack.c.b16 %v3484, %v3476
        %v3965 = vpack.c.b16 %v3485, %v3477
        %v3966 = vpack.c.b16 %v3486, %v3478
        %v3967 = vpack.c.b16 %v3495, %v3487
        %v3968 = vpack.c.b16 %v3496, %v3488
        %v3969 = vpack.c.b16 %v3497, %v3489
        %v3970 = vpack.c.b16 %v3498, %v3490
        %v3971 = vpack.c.b16 %v3499, %v3491
        %v3972 = vpack.c.b16 %v3500, %v3492
        %v3973 = vpack.c.b16 %v3501, %v3493
        %v3974 = vpack.c.b16 %v3502, %v3494
        %v3975 = vpack.c.b16 %v3511, %v3503
        %v3976 = vpack.c.b16 %v3512, %v3504
        %v3977 = vpack.c.b16 %v3513, %v3505
        %v3978 = vpack.c.b16 %v3514, %v3506
        %v3979 = vpack.c.b16 %v3515, %v3507
        %v3980 = vpack.c.b16 %v3516, %v3508
        %v3981 = vpack.c.b16 %v3517, %v3509
        %v3982 = vpack.c.b16 %v3518, %v3510
        %v3983 = vpack.c.b16 %v3527, %v3519
        %v3984 = vpack.c.b16 %v3528, %v3520
        %v3985 = vpack.c.b16 %v3529, %v3521
        %v3986 = vpack.c.b16 %v3530, %v3522
        %v3987 = vpack.c.b16 %v3531, %v3523
        %v3988 = vpack.c.b16 %v3532, %v3524
        %v3989 = vpack.c.b16 %v3533, %v3525
        %v3990 = vpack.c.b16 %v3534, %v3526
        %v3991 = vpack.c.b16 %v3543, %v3535
        %v3992 = vpack.c.b16 %v3544, %v3536
        %v3993 = vpack.c.b16 %v3545, %v3537
        %v3994 = vpack.c.b16 %v3546, %v3538
        %v3995 = vpack.c.b16 %v3547, %v3539
        %v3996 = vpack.c.b16 %v3548, %v3540
        %v3997 = vpack.c.b16 %v3549, %v3541
        %v3998 = vpack.c.b16 %v3550, %v3542
        %v3999 = vpack.c.b16 %v3559, %v3551
        %v4000 = vpack.c.b16 %v3560, %v3552
        %v4001 = vpack.c.b16 %v3561, %v3553
        %v4002 = vpack.c.b16 %v3562, %v3554
        %v4003 = vpack.c.b16 %v3563, %v3555
        %v4004 = vpack.c.b16 %v3564, %v3556
        %v4005 = vpack.c.b16 %v3565, %v3557
        %v4006 = vpack.c.b16 %v3566, %v3558
        %v4007 = vpack.c.b16 %v3575, %v3567
        %v4008 = vpack.c.b16 %v3576, %v3568
        %v4009 = vpack.c.b16 %v3577, %v3569
        %v4010 = vpack.c.b16 %v3578, %v3570
        %v4011 = vpack.c.b16 %v3579, %v3571
        %v4012 = vpack.c.b16 %v3580, %v3572
        %v4013 = vpack.c.b16 %v3581, %v3573
        %v4014 = vpack.c.b16 %v3582, %v3574
        %v4015 = vpack.c.b16 %v3591, %v3583
        %v4016 = vpack.c.b16 %v3592, %v3584
        %v4017 = vpack.c.b16 %v3593, %v3585
        %v4018 = vpack.c.b16 %v3594, %v3586
        %v4019 = vpack.c.b16 %v3595, %v3587
        %v4020 = vpack.c.b16 %v3596, %v3588
        %v4021 = vpack.c.b16 %v3597, %v3589
        %v4022 = vpack.c.b16 %v3598, %v3590
        %v4023 = vpack.c.b16 %v3607, %v3599
        %v4024 = vpack.c.b16 %v3608, %v3600
        %v4025 = vpack.c.b16 %v3609, %v3601
        %v4026 = vpack.c.b16 %v3610, %v3602
        %v4027 = vpack.c.b16 %v3611, %v3603
        %v4028 = vpack.c.b16 %v3612, %v3604
        %v4029 = vpack.c.b16 %v3613, %v3605
        %v4030 = vpack.c.b16 %v3614, %v3606
        %v4031 = vpack.c.b16 %v3623, %v3615
        %v4032 = vpack.c.b16 %v3624, %v3616
        %v4033 = vpack.c.b16 %v3625, %v3617
        %v4034 = vpack.c.b16 %v3626, %v3618
        %v4035 = vpack.c.b16 %v3627, %v3619
        %v4036 = vpack.c.b16 %v3628, %v3620
        %v4037 = vpack.c.b16 %v3629, %v3621
        %v4038 = vpack.c.b16 %v3630, %v3622
        %v4039 = vpack.c.b16 %v3639, %v3631
        %v4040 = vpack.c.b16 %v3640, %v3632
        %v4041 = vpack.c.b16 %v3641, %v3633
        %v4042 = vpack.c.b16 %v3642, %v3634
        %v4043 = vpack.c.b16 %v3643, %v3635
        %v4044 = vpack.c.b16 %v3644, %v3636
        %v4045 = vpack.c.b16 %v3645, %v3637
        %v4046 = vpack.c.b16 %v3646, %v3638
        %v4047 = vpack.c.b16 %v3655, %v3647
        %v4048 = vpack.c.b16 %v3656, %v3648
        %v4049 = vpack.c.b16 %v3657, %v3649
        %v4050 = vpack.c.b16 %v3658, %v3650
        %v4051 = vpack.c.b16 %v3659, %v3651
        %v4052 = vpack.c.b16 %v3660, %v3652
        %v4053 = vpack.c.b16 %v3661, %v3653
        %v4054 = vpack.c.b16 %v3662, %v3654
        %v4055 = vpack.c.b16 %v3671, %v3663
        %v4056 = vpack.c.b16 %v3672, %v3664
        %v4057 = vpack.c.b16 %v3673, %v3665
        %v4058 = vpack.c.b16 %v3674, %v3666
        %v4059 = vpack.c.b16 %v3675, %v3667
        %v4060 = vpack.c.b16 %v3676, %v3668
        %v4061 = vpack.c.b16 %v3677, %v3669
        %v4062 = vpack.c.b16 %v3678, %v3670
        %v4063 = vpack.c.b16 %v3687, %v3679
        %v4064 = vpack.c.b16 %v3688, %v3680
        %v4065 = vpack.c.b16 %v3689, %v3681
        %v4066 = vpack.c.b16 %v3690, %v3682
        %v4067 = vpack.c.b16 %v3691, %v3683
        %v4068 = vpack.c.b16 %v3692, %v3684
        %v4069 = vpack.c.b16 %v3693, %v3685
        %v4070 = vpack.c.b16 %v3694, %v3686
        %v4071 = vpack.c.b16 %v3703, %v3695
        %v4072 = vpack.c.b16 %v3704, %v3696
        %v4073 = vpack.c.b16 %v3705, %v3697
        %v4074 = vpack.c.b16 %v3706, %v3698
        %v4075 = vpack.c.b16 %v3707, %v3699
        %v4076 = vpack.c.b16 %v3708, %v3700
        %v4077 = vpack.c.b16 %v3709, %v3701
        %v4078 = vpack.c.b16 %v3710, %v3702
        %v4079 = vpack.c.b16 %v3719, %v3711
        %v4080 = vpack.c.b16 %v3720, %v3712
        %v4081 = vpack.c.b16 %v3721, %v3713
        %v4082 = vpack.c.b16 %v3722, %v3714
        %v4083 = vpack.c.b16 %v3723, %v3715
        %v4084 = vpack.c.b16 %v3724, %v3716
        %v4085 = vpack.c.b16 %v3725, %v3717
        %v4086 = vpack.c.b16 %v3726, %v3718
        %v4087 = vpack.c.b16 %v3735, %v3727
        %v4088 = vpack.c.b16 %v3736, %v3728
        %v4089 = vpack.c.b16 %v3737, %v3729
        %v4090 = vpack.c.b16 %v3738, %v3730
        %v4091 = vpack.c.b16 %v3739, %v3731
        %v4092 = vpack.c.b16 %v3740, %v3732
        %v4093 = vpack.c.b16 %v3741, %v3733
        %v4094 = vpack.c.b16 %v3742, %v3734
        %v4095 = vpack.c.b16 %v3751, %v3743
        %v4096 = vpack.c.b16 %v3752, %v3744
        %v4097 = vpack.c.b16 %v3753, %v3745
        %v4098 = vpack.c.b16 %v3754, %v3746
        %v4099 = vpack.c.b16 %v3755, %v3747
        %v4100 = vpack.c.b16 %v3756, %v3748
        %v4101 = vpack.c.b16 %v3757, %v3749
        %v4102 = vpack.c.b16 %v3758, %v3750
        %v4103 = vpack.c.b16 %v3767, %v3759
        %v4104 = vpack.c.b16 %v3768, %v3760
        %v4105 = vpack.c.b16 %v3769, %v3761
        %v4106 = vpack.c.b16 %v3770, %v3762
        %v4107 = vpack.c.b16 %v3771, %v3763
        %v4108 = vpack.c.b16 %v3772, %v3764
        %v4109 = vpack.c.b16 %v3773, %v3765
        %v4110 = vpack.c.b16 %v3774, %v3766
        %v4111 = vpack.c.b16 %v3783, %v3775
        %v4112 = vpack.c.b16 %v3784, %v3776
        %v4113 = vpack.c.b16 %v3785, %v3777
        %v4114 = vpack.c.b16 %v3786, %v3778
        %v4115 = vpack.c.b16 %v3787, %v3779
        %v4116 = vpack.c.b16 %v3788, %v3780
        %v4117 = vpack.c.b16 %v3789, %v3781
        %v4118 = vpack.c.b16 %v3790, %v3782
        %v4119 = vpack.c.b16 %v3799, %v3791
        %v4120 = vpack.c.b16 %v3800, %v3792
        %v4121 = vpack.c.b16 %v3801, %v3793
        %v4122 = vpack.c.b16 %v3802, %v3794
        %v4123 = vpack.c.b16 %v3803, %v3795
        %v4124 = vpack.c.b16 %v3804, %v3796
        %v4125 = vpack.c.b16 %v3805, %v3797
        %v4126 = vpack.c.b16 %v3806, %v3798
        %v4127 = vpack.c.b16 %v3815, %v3807
        %v4128 = vpack.c.b16 %v3816, %v3808
        %v4129 = vpack.c.b16 %v3817, %v3809
        %v4130 = vpack.c.b16 %v3818, %v3810
        %v4131 = vpack.c.b16 %v3819, %v3811
        %v4132 = vpack.c.b16 %v3820, %v3812
        %v4133 = vpack.c.b16 %v3821, %v3813
        %v4134 = vpack.c.b16 %v3822, %v3814
        %v4135 = vpack.c.b16 %v3831, %v3823
        %v4136 = vpack.c.b16 %v3832, %v3824
        %v4137 = vpack.c.b16 %v3833, %v3825
        %v4138 = vpack.c.b16 %v3834, %v3826
        %v4139 = vpack.c.b16 %v3835, %v3827
        %v4140 = vpack.c.b16 %v3836, %v3828
        %v4141 = vpack.c.b16 %v3837, %v3829
        %v4142 = vpack.c.b16 %v3838, %v3830
        %v4143 = vpack.c.b16 %v3847, %v3839
        %v4144 = vpack.c.b16 %v3848, %v3840
        %v4145 = vpack.c.b16 %v3849, %v3841
        %v4146 = vpack.c.b16 %v3850, %v3842
        %v4147 = vpack.c.b16 %v3851, %v3843
        %v4148 = vpack.c.b16 %v3852, %v3844
        %v4149 = vpack.c.b16 %v3853, %v3845
        %v4150 = vpack.c.b16 %v3854, %v3846
        %v4151 = vpack.c.b16 %v3863, %v3855
        %v4152 = vpack.c.b16 %v3864, %v3856
        %v4153 = vpack.c.b16 %v3865, %v3857
        %v4154 = vpack.c.b16 %v3866, %v3858
        %v4155 = vpack.c.b16 %v3867, %v3859
        %v4156 = vpack.c.b16 %v3868, %v3860
        %v4157 = vpack.c.b16 %v3869, %v3861
        %v4158 = vpack.c.b16 %v3870, %v3862
        %v4159 = vpack.c.b16 %v3879, %v3871
        %v4160 = vpack.c.b16 %v3880, %v3872
        %v4161 = vpack.c.b16 %v3881, %v3873
        %v4162 = vpack.c.b16 %v3882, %v3874
        %v4163 = vpack.c.b16 %v3883, %v3875
        %v4164 = vpack.c.b16 %v3884, %v3876
        %v4165 = vpack.c.b16 %v3885, %v3877
        %v4166 = vpack.c.b16 %v3886, %v3878
        %v4167 = vpack.c.b16 %v3895, %v3887
        %v4168 = vpack.c.b16 %v3896, %v3888
        %v4169 = vpack.c.b16 %v3897, %v3889
        %v4170 = vpack.c.b16 %v3898, %v3890
        %v4171 = vpack.c.b16 %v3899, %v3891
        %v4172 = vpack.c.b16 %v3900, %v3892
        %v4173 = vpack.c.b16 %v3901, %v3893
        %v4174 = vpack.c.b16 %v3902, %v3894
        %v4448 = vsel %vm1982, %v2737, 0
        %v4451 = vsel %vm1982, %v2742, 0
        %v4454 = vsel %vm1982, %v2747, 0
        %v4457 = vsel %vm1982, %v2752, 0
        %v4460 = vsel %vm1982, %v2757, 0
        %v4463 = vsel %vm1982, %v2762, 0
        %v4466 = vsel %vm1982, %v2767, 0
        %v4469 = vsel %vm1982, %v2772, 0
        %4471 = vmatprep.subr.bf16.mxu0 %v3904
        %4472 = vmatpush1.bf16.msra.mxu0 %v3903
        %4473 = vmatprep.subr.bf16.mxu0 %v3912
        %4474 = vmatpush1.bf16.msra.mxu0 %v3911
        %4475 = vmatprep.subr.bf16.mxu0 %v3920
        %4476 = vmatpush1.bf16.msra.mxu0 %v3919
        %4477 = vmatprep.subr.bf16.mxu0 %v3928
        %4478 = vmatpush1.bf16.msra.mxu0 %v3927
        %4479 = vmatprep.subr.bf16.mxu0 %v3936
        %4480 = vmatpush1.bf16.msra.mxu0 %v3935
        %4481 = vmatprep.subr.bf16.mxu0 %v3944
        %4482 = vmatpush1.bf16.msra.mxu0 %v3943
        %4483 = vmatprep.subr.bf16.mxu0 %v3952
        %4484 = vmatpush1.bf16.msra.mxu0 %v3951
        %4485 = vmatprep.subr.bf16.mxu0 %v3960
        %4486 = vmatpush1.bf16.msra.mxu0 %v3959
        %4487 = vmatprep.subr.bf16.mxu0 %v3968
        %4488 = vmatpush1.bf16.msra.mxu0 %v3967
        %4489 = vmatprep.subr.bf16.mxu0 %v3976
        %4490 = vmatpush1.bf16.msra.mxu0 %v3975
        %4491 = vmatprep.subr.bf16.mxu0 %v3984
        %4492 = vmatpush1.bf16.msra.mxu0 %v3983
        %4493 = vmatprep.subr.bf16.mxu0 %v3992
        %4494 = vmatpush1.bf16.msra.mxu0 %v3991
        %4495 = vmatprep.subr.bf16.mxu0 %v4000
        %4496 = vmatpush1.bf16.msra.mxu0 %v3999
        %4497 = vmatprep.subr.bf16.mxu0 %v4008
        %4498 = vmatpush1.bf16.msra.mxu0 %v4007
        %4499 = vmatprep.subr.bf16.mxu0 %v4016
        %4500 = vmatpush1.bf16.msra.mxu0 %v4015
        %4501 = vmatprep.subr.bf16.mxu0 %v4024
        %4502 = vmatpush1.bf16.msra.mxu0 %v4023
        %4503 = vmatprep.mubr.bf16.mxu0 %v2734
        %4504 = vmatmul.mubr.bf16.gmra.mrb[0].mxu0 %v2733
        %v4505 = vpop.f32.mrb[0].mxu0
        %v4506 = vadd.f32 %v3050, %v4505
        %v4507 = vpop.f32.mrb[0].mxu0
        %v4508 = vadd.f32 %v3054, %v4507
        %v4509 = vpop.f32.mrb[0].mxu0
        %v4510 = vadd.f32 %v3050, %v4509
        %v4511 = vpop.f32.mrb[0].mxu0
        %v4512 = vadd.f32 %v3054, %v4511
        %4513 = vmatprep.mubr.bf16.mxu0 %v2739
        %4514 = vmatmul.mubr.bf16.gmra.mrb[0].mxu0 %v2738
        %v4515 = vpop.f32.mrb[0].mxu0
        %v4516 = vadd.f32 %v3050, %v4515
        %v4517 = vpop.f32.mrb[0].mxu0
        %v4518 = vadd.f32 %v3054, %v4517
        %v4519 = vpop.f32.mrb[0].mxu0
        %v4520 = vadd.f32 %v3050, %v4519
        %v4521 = vpop.f32.mrb[0].mxu0
        %v4522 = vadd.f32 %v3054, %v4521
        %4523 = vmatprep.mubr.bf16.mxu0 %v2744
        %4524 = vmatmul.mubr.bf16.gmra.mrb[0].mxu0 %v2743
        %v4525 = vpop.f32.mrb[0].mxu0
        %v4526 = vadd.f32 %v3050, %v4525
        %v4527 = vpop.f32.mrb[0].mxu0
        %v4528 = vadd.f32 %v3054, %v4527
        %v4529 = vpop.f32.mrb[0].mxu0
        %v4530 = vadd.f32 %v3050, %v4529
        %v4531 = vpop.f32.mrb[0].mxu0
        %v4532 = vadd.f32 %v3054, %v4531
        %4533 = vmatprep.mubr.bf16.mxu0 %v2749
        %4534 = vmatmul.mubr.bf16.gmra.mrb[0].mxu0 %v2748
        %v4535 = vpop.f32.mrb[0].mxu0
        %v4536 = vadd.f32 %v3050, %v4535
        %v4537 = vpop.f32.mrb[0].mxu0
        %v4538 = vadd.f32 %v3054, %v4537
        %v4539 = vpop.f32.mrb[0].mxu0
        %v4540 = vadd.f32 %v3050, %v4539
        %v4541 = vpop.f32.mrb[0].mxu0
        %v4542 = vadd.f32 %v3054, %v4541
        %4543 = vmatprep.mubr.bf16.mxu0 %v2754
        %4544 = vmatmul.mubr.bf16.gmra.mrb[0].mxu0 %v2753
        %v4545 = vpop.f32.mrb[0].mxu0
        %v4546 = vadd.f32 %v3050, %v4545
        %v4547 = vpop.f32.mrb[0].mxu0
        %v4548 = vadd.f32 %v3054, %v4547
        %v4549 = vpop.f32.mrb[0].mxu0
        %v4550 = vadd.f32 %v3050, %v4549
        %v4551 = vpop.f32.mrb[0].mxu0
        %v4552 = vadd.f32 %v3054, %v4551
        %4553 = vmatprep.mubr.bf16.mxu0 %v2759
        %4554 = vmatmul.mubr.bf16.gmra.mrb[0].mxu0 %v2758
        %v4555 = vpop.f32.mrb[0].mxu0
        %v4556 = vadd.f32 %v3050, %v4555
        %v4557 = vpop.f32.mrb[0].mxu0
        %v4558 = vadd.f32 %v3054, %v4557
        %v4559 = vpop.f32.mrb[0].mxu0
        %v4560 = vadd.f32 %v3050, %v4559
        %v4561 = vpop.f32.mrb[0].mxu0
        %v4562 = vadd.f32 %v3054, %v4561
        %4563 = vmatprep.mubr.bf16.mxu0 %v2764
        %4564 = vmatmul.mubr.bf16.gmra.mrb[0].mxu0 %v2763
        %v4565 = vpop.f32.mrb[0].mxu0
        %v4566 = vadd.f32 %v3050, %v4565
        %v4567 = vpop.f32.mrb[0].mxu0
        %v4568 = vadd.f32 %v3054, %v4567
        %v4569 = vpop.f32.mrb[0].mxu0
        %v4570 = vadd.f32 %v3050, %v4569
        %v4571 = vpop.f32.mrb[0].mxu0
        %v4572 = vadd.f32 %v3054, %v4571
        %4573 = vmatprep.mubr.bf16.mxu0 %v2769
        %4574 = vmatmul.mubr.bf16.gmra.mrb[0].mxu0 %v2768
        %v4575 = vpop.f32.mrb[0].mxu0
        %v4576 = vadd.f32 %v3050, %v4575
        %v4577 = vpop.f32.mrb[0].mxu0
        %v4578 = vadd.f32 %v3054, %v4577
        %v4579 = vpop.f32.mrb[0].mxu0
        %v4580 = vadd.f32 %v3050, %v4579
        %v4581 = vpop.f32.mrb[0].mxu0
        %v4582 = vadd.f32 %v3054, %v4581
        %4583 = vdwg.mxu0
        %4584 = vmatprep.subr.bf16.mxu0 %v4032
        %4585 = vmatpush1.bf16.msra.mxu0 %v4031
        %4586 = vmatprep.subr.bf16.mxu0 %v4040
        %4587 = vmatpush1.bf16.msra.mxu0 %v4039
        %4588 = vmatprep.subr.bf16.mxu0 %v4048
        %4589 = vmatpush1.bf16.msra.mxu0 %v4047
        %4590 = vmatprep.subr.bf16.mxu0 %v4056
        %4591 = vmatpush1.bf16.msra.mxu0 %v4055
        %4592 = vmatprep.subr.bf16.mxu0 %v4064
        %4593 = vmatpush1.bf16.msra.mxu0 %v4063
        %4594 = vmatprep.subr.bf16.mxu0 %v4072
        %4595 = vmatpush1.bf16.msra.mxu0 %v4071
        %4596 = vmatprep.subr.bf16.mxu0 %v4080
        %4597 = vmatpush1.bf16.msra.mxu0 %v4079
        %4598 = vmatprep.subr.bf16.mxu0 %v4088
        %4599 = vmatpush1.bf16.msra.mxu0 %v4087
        %4600 = vmatprep.subr.bf16.mxu0 %v4096
        %4601 = vmatpush1.bf16.msra.mxu0 %v4095
        %4602 = vmatprep.subr.bf16.mxu0 %v4104
        %4603 = vmatpush1.bf16.msra.mxu0 %v4103
        %4604 = vmatprep.subr.bf16.mxu0 %v4112
        %4605 = vmatpush1.bf16.msra.mxu0 %v4111
        %4606 = vmatprep.subr.bf16.mxu0 %v4120
        %4607 = vmatpush1.bf16.msra.mxu0 %v4119
        %4608 = vmatprep.subr.bf16.mxu0 %v4128
        %4609 = vmatpush1.bf16.msra.mxu0 %v4127
        %4610 = vmatprep.subr.bf16.mxu0 %v4136
        %4611 = vmatpush1.bf16.msra.mxu0 %v4135
        %4612 = vmatprep.subr.bf16.mxu0 %v4144
        %4613 = vmatpush1.bf16.msra.mxu0 %v4143
        %4614 = vmatprep.subr.bf16.mxu0 %v4152
        %4615 = vmatpush1.bf16.msra.mxu0 %v4151
        %4616 = vmatprep.mubr.bf16.mxu0 %v2736
        %4617 = vmatmul.mubr.bf16.gmra.mrb[0].mxu0 %v2735
        %v4618 = vpop.f32.mrb[0].mxu0
        %v4619 = vadd.f32 %v4506, %v4618
        %v4620 = vpop.f32.mrb[0].mxu0
        %v4621 = vadd.f32 %v4508, %v4620
        %v4622 = vpop.f32.mrb[0].mxu0
        %v4623 = vadd.f32 %v4510, %v4622
        %v4624 = vpop.f32.mrb[0].mxu0
        %v4625 = vadd.f32 %v4512, %v4624
        %4626 = vmatprep.mubr.bf16.mxu0 %v2741
        %4627 = vmatmul.mubr.bf16.gmra.mrb[0].mxu0 %v2740
        %v4628 = vpop.f32.mrb[0].mxu0
        %v4629 = vadd.f32 %v4516, %v4628
        %v4630 = vpop.f32.mrb[0].mxu0
        %v4631 = vadd.f32 %v4518, %v4630
        %v4632 = vpop.f32.mrb[0].mxu0
        %v4633 = vadd.f32 %v4520, %v4632
        %v4634 = vpop.f32.mrb[0].mxu0
        %v4635 = vadd.f32 %v4522, %v4634
        %4636 = vmatprep.mubr.bf16.mxu0 %v2746
        %4637 = vmatmul.mubr.bf16.gmra.mrb[0].mxu0 %v2745
        %v4638 = vpop.f32.mrb[0].mxu0
        %v4639 = vadd.f32 %v4526, %v4638
        %v4640 = vpop.f32.mrb[0].mxu0
        %v4641 = vadd.f32 %v4528, %v4640
        %v4642 = vpop.f32.mrb[0].mxu0
        %v4643 = vadd.f32 %v4530, %v4642
        %v4644 = vpop.f32.mrb[0].mxu0
        %v4645 = vadd.f32 %v4532, %v4644
        %4646 = vmatprep.mubr.bf16.mxu0 %v2751
        %4647 = vmatmul.mubr.bf16.gmra.mrb[0].mxu0 %v2750
        %v4648 = vpop.f32.mrb[0].mxu0
        %v4649 = vadd.f32 %v4536, %v4648
        %v4650 = vpop.f32.mrb[0].mxu0
        %v4651 = vadd.f32 %v4538, %v4650
        %v4652 = vpop.f32.mrb[0].mxu0
        %v4653 = vadd.f32 %v4540, %v4652
        %v4654 = vpop.f32.mrb[0].mxu0
        %v4655 = vadd.f32 %v4542, %v4654
        %4656 = vmatprep.mubr.bf16.mxu0 %v2756
        %4657 = vmatmul.mubr.bf16.gmra.mrb[0].mxu0 %v2755
        %v4658 = vpop.f32.mrb[0].mxu0
        %v4659 = vadd.f32 %v4546, %v4658
        %v4660 = vpop.f32.mrb[0].mxu0
        %v4661 = vadd.f32 %v4548, %v4660
        %v4662 = vpop.f32.mrb[0].mxu0
        %v4663 = vadd.f32 %v4550, %v4662
        %v4664 = vpop.f32.mrb[0].mxu0
        %v4665 = vadd.f32 %v4552, %v4664
        %4666 = vmatprep.mubr.bf16.mxu0 %v2761
        %4667 = vmatmul.mubr.bf16.gmra.mrb[0].mxu0 %v2760
        %v4668 = vpop.f32.mrb[0].mxu0
        %v4669 = vadd.f32 %v4556, %v4668
        %v4670 = vpop.f32.mrb[0].mxu0
        %v4671 = vadd.f32 %v4558, %v4670
        %v4672 = vpop.f32.mrb[0].mxu0
        %v4673 = vadd.f32 %v4560, %v4672
        %v4674 = vpop.f32.mrb[0].mxu0
        %v4675 = vadd.f32 %v4562, %v4674
        %4676 = vmatprep.mubr.bf16.mxu0 %v2766
        %4677 = vmatmul.mubr.bf16.gmra.mrb[0].mxu0 %v2765
        %v4678 = vpop.f32.mrb[0].mxu0
        %v4679 = vadd.f32 %v4566, %v4678
        %v4680 = vpop.f32.mrb[0].mxu0
        %v4681 = vadd.f32 %v4568, %v4680
        %v4682 = vpop.f32.mrb[0].mxu0
        %v4683 = vadd.f32 %v4570, %v4682
        %v4684 = vpop.f32.mrb[0].mxu0
        %v4685 = vadd.f32 %v4572, %v4684
        %4686 = vmatprep.mubr.bf16.mxu0 %v2771
        %4687 = vmatmul.mubr.bf16.gmra.mrb[0].mxu0 %v2770
        %v4688 = vpop.f32.mrb[0].mxu0
        %v4689 = vadd.f32 %v4576, %v4688
        %v4690 = vpop.f32.mrb[0].mxu0
        %v4691 = vadd.f32 %v4578, %v4690
        %v4692 = vpop.f32.mrb[0].mxu0
        %v4693 = vadd.f32 %v4580, %v4692
        %v4694 = vpop.f32.mrb[0].mxu0
        %v4695 = vadd.f32 %v4582, %v4694
        %4696 = vdwg.mxu0
        %4697 = vmatprep.subr.bf16.mxu0 %v4160
        %4698 = vmatpush1.bf16.msra.mxu0 %v4159
        %4699 = vmatprep.subr.bf16.mxu0 %v4168
        %4700 = vmatpush1.bf16.msra.mxu0 %v4167
        %4701 = vmatprep.subr.bf16.mxu0 0
        %4702 = vmatpush1.bf16.msra.mxu0 0
        %4703 = vmatprep.subr.bf16.mxu0 0
        %4704 = vmatpush1.bf16.msra.mxu0 0
        %4705 = vmatprep.subr.bf16.mxu0 0
        %4706 = vmatpush1.bf16.msra.mxu0 0
        %4707 = vmatprep.subr.bf16.mxu0 0
        %4708 = vmatpush1.bf16.msra.mxu0 0
        %4709 = vmatprep.subr.bf16.mxu0 0
        %4710 = vmatpush1.bf16.msra.mxu0 0
        %4711 = vmatprep.subr.bf16.mxu0 0
        %4712 = vmatpush1.bf16.msra.mxu0 0
        %4713 = vmatprep.subr.bf16.mxu0 0
        %4714 = vmatpush1.bf16.msra.mxu0 0
        %4715 = vmatprep.subr.bf16.mxu0 0
        %4716 = vmatpush1.bf16.msra.mxu0 0
        %4717 = vmatprep.subr.bf16.mxu0 0
        %4718 = vmatpush1.bf16.msra.mxu0 0
        %4719 = vmatprep.subr.bf16.mxu0 0
        %4720 = vmatpush1.bf16.msra.mxu0 0
        %4721 = vmatprep.subr.bf16.mxu0 0
        %4722 = vmatpush1.bf16.msra.mxu0 0
        %4723 = vmatprep.subr.bf16.mxu0 0
        %4724 = vmatpush1.bf16.msra.mxu0 0
        %4725 = vmatprep.subr.bf16.mxu0 0
        %4726 = vmatpush1.bf16.msra.mxu0 0
        %4727 = vmatprep.subr.bf16.mxu0 0
        %4728 = vmatpush1.bf16.msra.mxu0 0
        %4729 = vmatprep.mubr.bf16.mxu0 0
        %4730 = vmatmul.mubr.bf16.gmra.mrb[0].mxu0 %v4448
        %v4731 = vpop.f32.mrb[0].mxu0
        %v4732 = vadd.f32 %v4619, %v4731
        %v4733 = vpop.f32.mrb[0].mxu0
        %v4734 = vadd.f32 %v4621, %v4733
        %v4735 = vpop.f32.mrb[0].mxu0
        %v4736 = vadd.f32 %v4623, %v4735
        %v4737 = vpop.f32.mrb[0].mxu0
        %v4738 = vadd.f32 %v4625, %v4737
        %4739 = vmatprep.mubr.bf16.mxu0 0
        %4740 = vmatmul.mubr.bf16.gmra.mrb[0].mxu0 %v4451
        %v4741 = vpop.f32.mrb[0].mxu0
        %v4742 = vadd.f32 %v4629, %v4741
        %v4743 = vpop.f32.mrb[0].mxu0
        %v4744 = vadd.f32 %v4631, %v4743
        %v4745 = vpop.f32.mrb[0].mxu0
        %v4746 = vadd.f32 %v4633, %v4745
        %v4747 = vpop.f32.mrb[0].mxu0
        %v4748 = vadd.f32 %v4635, %v4747
        %4749 = vmatprep.mubr.bf16.mxu0 0
        %4750 = vmatmul.mubr.bf16.gmra.mrb[0].mxu0 %v4454
        %v4751 = vpop.f32.mrb[0].mxu0
        %v4752 = vadd.f32 %v4639, %v4751
        %v4753 = vpop.f32.mrb[0].mxu0
        %v4754 = vadd.f32 %v4641, %v4753
        %v4755 = vpop.f32.mrb[0].mxu0
        %v4756 = vadd.f32 %v4643, %v4755
        %v4757 = vpop.f32.mrb[0].mxu0
        %v4758 = vadd.f32 %v4645, %v4757
        %4759 = vmatprep.mubr.bf16.mxu0 0
        %4760 = vmatmul.mubr.bf16.gmra.mrb[0].mxu0 %v4457
        %v4761 = vpop.f32.mrb[0].mxu0
        %v4762 = vadd.f32 %v4649, %v4761
        %v4763 = vpop.f32.mrb[0].mxu0
        %v4764 = vadd.f32 %v4651, %v4763
        %v4765 = vpop.f32.mrb[0].mxu0
        %v4766 = vadd.f32 %v4653, %v4765
        %v4767 = vpop.f32.mrb[0].mxu0
        %v4768 = vadd.f32 %v4655, %v4767
        %4769 = vmatprep.mubr.bf16.mxu0 0
        %4770 = vmatmul.mubr.bf16.gmra.mrb[0].mxu0 %v4460
        %v4771 = vpop.f32.mrb[0].mxu0
        %v4772 = vadd.f32 %v4659, %v4771
        %v4773 = vpop.f32.mrb[0].mxu0
        %v4774 = vadd.f32 %v4661, %v4773
        %v4775 = vpop.f32.mrb[0].mxu0
        %v4776 = vadd.f32 %v4663, %v4775
        %v4777 = vpop.f32.mrb[0].mxu0
        %v4778 = vadd.f32 %v4665, %v4777
        %4779 = vmatprep.mubr.bf16.mxu0 0
        %4780 = vmatmul.mubr.bf16.gmra.mrb[0].mxu0 %v4463
        %v4781 = vpop.f32.mrb[0].mxu0
        %v4782 = vadd.f32 %v4669, %v4781
        %v4783 = vpop.f32.mrb[0].mxu0
        %v4784 = vadd.f32 %v4671, %v4783
        %v4785 = vpop.f32.mrb[0].mxu0
        %v4786 = vadd.f32 %v4673, %v4785
        %v4787 = vpop.f32.mrb[0].mxu0
        %v4788 = vadd.f32 %v4675, %v4787
        %4789 = vmatprep.mubr.bf16.mxu0 0
        %4790 = vmatmul.mubr.bf16.gmra.mrb[0].mxu0 %v4466
        %v4791 = vpop.f32.mrb[0].mxu0
        %v4792 = vadd.f32 %v4679, %v4791
        %v4793 = vpop.f32.mrb[0].mxu0
        %v4794 = vadd.f32 %v4681, %v4793
        %v4795 = vpop.f32.mrb[0].mxu0
        %v4796 = vadd.f32 %v4683, %v4795
        %v4797 = vpop.f32.mrb[0].mxu0
        %v4798 = vadd.f32 %v4685, %v4797
        %4799 = vmatprep.mubr.bf16.mxu0 0
        %4800 = vmatmul.mubr.bf16.gmra.mrb[0].mxu0 %v4469
        %v4801 = vpop.f32.mrb[0].mxu0
        %v4802 = vadd.f32 %v4689, %v4801
        %v4803 = vpop.f32.mrb[0].mxu0
        %v4804 = vadd.f32 %v4691, %v4803
        %v4805 = vpop.f32.mrb[0].mxu0
        %v4806 = vadd.f32 %v4693, %v4805
        %v4807 = vpop.f32.mrb[0].mxu0
        %v4808 = vadd.f32 %v4695, %v4807
        %4809 = vdwg.mxu0
        %4810 = vmatprep.subr.bf16.mxu0 %v3906
        %4811 = vmatpush1.bf16.msra.mxu0 %v3905
        %4812 = vmatprep.subr.bf16.mxu0 %v3914
        %4813 = vmatpush1.bf16.msra.mxu0 %v3913
        %4814 = vmatprep.subr.bf16.mxu0 %v3922
        %4815 = vmatpush1.bf16.msra.mxu0 %v3921
        %4816 = vmatprep.subr.bf16.mxu0 %v3930
        %4817 = vmatpush1.bf16.msra.mxu0 %v3929
        %4818 = vmatprep.subr.bf16.mxu0 %v3938
        %4819 = vmatpush1.bf16.msra.mxu0 %v3937
        %4820 = vmatprep.subr.bf16.mxu0 %v3946
        %4821 = vmatpush1.bf16.msra.mxu0 %v3945
        %4822 = vmatprep.subr.bf16.mxu0 %v3954
        %4823 = vmatpush1.bf16.msra.mxu0 %v3953
        %4824 = vmatprep.subr.bf16.mxu0 %v3962
        %4825 = vmatpush1.bf16.msra.mxu0 %v3961
        %4826 = vmatprep.subr.bf16.mxu0 %v3970
        %4827 = vmatpush1.bf16.msra.mxu0 %v3969
        %4828 = vmatprep.subr.bf16.mxu0 %v3978
        %4829 = vmatpush1.bf16.msra.mxu0 %v3977
        %4830 = vmatprep.subr.bf16.mxu0 %v3986
        %4831 = vmatpush1.bf16.msra.mxu0 %v3985
        %4832 = vmatprep.subr.bf16.mxu0 %v3994
        %4833 = vmatpush1.bf16.msra.mxu0 %v3993
        %4834 = vmatprep.subr.bf16.mxu0 %v4002
        %4835 = vmatpush1.bf16.msra.mxu0 %v4001
        %4836 = vmatprep.subr.bf16.mxu0 %v4010
        %4837 = vmatpush1.bf16.msra.mxu0 %v4009
        %4838 = vmatprep.subr.bf16.mxu0 %v4018
        %4839 = vmatpush1.bf16.msra.mxu0 %v4017
        %4840 = vmatprep.subr.bf16.mxu0 %v4026
        %4841 = vmatpush1.bf16.msra.mxu0 %v4025
        %4842 = vmatprep.mubr.bf16.mxu0 %v2734
        %4843 = vmatmul.mubr.bf16.gmra.mrb[0].mxu0 %v2733
        %v4844 = vpop.f32.mrb[0].mxu0
        %v4845 = vadd.f32 %v3058, %v4844
        %v4846 = vpop.f32.mrb[0].mxu0
        %v4847 = vadd.f32 %v3062, %v4846
        %v4848 = vpop.f32.mrb[0].mxu0
        %v4849 = vadd.f32 %v3058, %v4848
        %v4850 = vpop.f32.mrb[0].mxu0
        %v4851 = vadd.f32 %v3062, %v4850
        %4852 = vmatprep.mubr.bf16.mxu0 %v2739
        %4853 = vmatmul.mubr.bf16.gmra.mrb[0].mxu0 %v2738
        %v4854 = vpop.f32.mrb[0].mxu0
        %v4855 = vadd.f32 %v3058, %v4854
        %v4856 = vpop.f32.mrb[0].mxu0
        %v4857 = vadd.f32 %v3062, %v4856
        %v4858 = vpop.f32.mrb[0].mxu0
        %v4859 = vadd.f32 %v3058, %v4858
        %v4860 = vpop.f32.mrb[0].mxu0
        %v4861 = vadd.f32 %v3062, %v4860
        %4862 = vmatprep.mubr.bf16.mxu0 %v2744
        %4863 = vmatmul.mubr.bf16.gmra.mrb[0].mxu0 %v2743
        %v4864 = vpop.f32.mrb[0].mxu0
        %v4865 = vadd.f32 %v3058, %v4864
        %v4866 = vpop.f32.mrb[0].mxu0
        %v4867 = vadd.f32 %v3062, %v4866
        %v4868 = vpop.f32.mrb[0].mxu0
        %v4869 = vadd.f32 %v3058, %v4868
        %v4870 = vpop.f32.mrb[0].mxu0
        %v4871 = vadd.f32 %v3062, %v4870
        %4872 = vmatprep.mubr.bf16.mxu0 %v2749
        %4873 = vmatmul.mubr.bf16.gmra.mrb[0].mxu0 %v2748
        %v4874 = vpop.f32.mrb[0].mxu0
        %v4875 = vadd.f32 %v3058, %v4874
        %v4876 = vpop.f32.mrb[0].mxu0
        %v4877 = vadd.f32 %v3062, %v4876
        %v4878 = vpop.f32.mrb[0].mxu0
        %v4879 = vadd.f32 %v3058, %v4878
        %v4880 = vpop.f32.mrb[0].mxu0
        %v4881 = vadd.f32 %v3062, %v4880
        %4882 = vmatprep.mubr.bf16.mxu0 %v2754
        %4883 = vmatmul.mubr.bf16.gmra.mrb[0].mxu0 %v2753
        %v4884 = vpop.f32.mrb[0].mxu0
        %v4885 = vadd.f32 %v3058, %v4884
        %v4886 = vpop.f32.mrb[0].mxu0
        %v4887 = vadd.f32 %v3062, %v4886
        %v4888 = vpop.f32.mrb[0].mxu0
        %v4889 = vadd.f32 %v3058, %v4888
        %v4890 = vpop.f32.mrb[0].mxu0
        %v4891 = vadd.f32 %v3062, %v4890
        %4892 = vmatprep.mubr.bf16.mxu0 %v2759
        %4893 = vmatmul.mubr.bf16.gmra.mrb[0].mxu0 %v2758
        %v4894 = vpop.f32.mrb[0].mxu0
        %v4895 = vadd.f32 %v3058, %v4894
        %v4896 = vpop.f32.mrb[0].mxu0
        %v4897 = vadd.f32 %v3062, %v4896
        %v4898 = vpop.f32.mrb[0].mxu0
        %v4899 = vadd.f32 %v3058, %v4898
        %v4900 = vpop.f32.mrb[0].mxu0
        %v4901 = vadd.f32 %v3062, %v4900
        %4902 = vmatprep.mubr.bf16.mxu0 %v2764
        %4903 = vmatmul.mubr.bf16.gmra.mrb[0].mxu0 %v2763
        %v4904 = vpop.f32.mrb[0].mxu0
        %v4905 = vadd.f32 %v3058, %v4904
        %v4906 = vpop.f32.mrb[0].mxu0
        %v4907 = vadd.f32 %v3062, %v4906
        %v4908 = vpop.f32.mrb[0].mxu0
        %v4909 = vadd.f32 %v3058, %v4908
        %v4910 = vpop.f32.mrb[0].mxu0
        %v4911 = vadd.f32 %v3062, %v4910
        %4912 = vmatprep.mubr.bf16.mxu0 %v2769
        %4913 = vmatmul.mubr.bf16.gmra.mrb[0].mxu0 %v2768
        %v4914 = vpop.f32.mrb[0].mxu0
        %v4915 = vadd.f32 %v3058, %v4914
        %v4916 = vpop.f32.mrb[0].mxu0
        %v4917 = vadd.f32 %v3062, %v4916
        %v4918 = vpop.f32.mrb[0].mxu0
        %v4919 = vadd.f32 %v3058, %v4918
        %v4920 = vpop.f32.mrb[0].mxu0
        %v4921 = vadd.f32 %v3062, %v4920
        %4922 = vdwg.mxu0
        %4923 = vmatprep.subr.bf16.mxu0 %v4034
        %4924 = vmatpush1.bf16.msra.mxu0 %v4033
        %4925 = vmatprep.subr.bf16.mxu0 %v4042
        %4926 = vmatpush1.bf16.msra.mxu0 %v4041
        %4927 = vmatprep.subr.bf16.mxu0 %v4050
        %4928 = vmatpush1.bf16.msra.mxu0 %v4049
        %4929 = vmatprep.subr.bf16.mxu0 %v4058
        %4930 = vmatpush1.bf16.msra.mxu0 %v4057
        %4931 = vmatprep.subr.bf16.mxu0 %v4066
        %4932 = vmatpush1.bf16.msra.mxu0 %v4065
        %4933 = vmatprep.subr.bf16.mxu0 %v4074
        %4934 = vmatpush1.bf16.msra.mxu0 %v4073
        %4935 = vmatprep.subr.bf16.mxu0 %v4082
        %4936 = vmatpush1.bf16.msra.mxu0 %v4081
        %4937 = vmatprep.subr.bf16.mxu0 %v4090
        %4938 = vmatpush1.bf16.msra.mxu0 %v4089
        %4939 = vmatprep.subr.bf16.mxu0 %v4098
        %4940 = vmatpush1.bf16.msra.mxu0 %v4097
        %4941 = vmatprep.subr.bf16.mxu0 %v4106
        %4942 = vmatpush1.bf16.msra.mxu0 %v4105
        %4943 = vmatprep.subr.bf16.mxu0 %v4114
        %4944 = vmatpush1.bf16.msra.mxu0 %v4113
        %4945 = vmatprep.subr.bf16.mxu0 %v4122
        %4946 = vmatpush1.bf16.msra.mxu0 %v4121
        %4947 = vmatprep.subr.bf16.mxu0 %v4130
        %4948 = vmatpush1.bf16.msra.mxu0 %v4129
        %4949 = vmatprep.subr.bf16.mxu0 %v4138
        %4950 = vmatpush1.bf16.msra.mxu0 %v4137
        %4951 = vmatprep.subr.bf16.mxu0 %v4146
        %4952 = vmatpush1.bf16.msra.mxu0 %v4145
        %4953 = vmatprep.subr.bf16.mxu0 %v4154
        %4954 = vmatpush1.bf16.msra.mxu0 %v4153
        %4955 = vmatprep.mubr.bf16.mxu0 %v2736
        %4956 = vmatmul.mubr.bf16.gmra.mrb[0].mxu0 %v2735
        %v4957 = vpop.f32.mrb[0].mxu0
        %v4958 = vadd.f32 %v4845, %v4957
        %v4959 = vpop.f32.mrb[0].mxu0
        %v4960 = vadd.f32 %v4847, %v4959
        %v4961 = vpop.f32.mrb[0].mxu0
        %v4962 = vadd.f32 %v4849, %v4961
        %v4963 = vpop.f32.mrb[0].mxu0
        %v4964 = vadd.f32 %v4851, %v4963
        %4965 = vmatprep.mubr.bf16.mxu0 %v2741
        %4966 = vmatmul.mubr.bf16.gmra.mrb[0].mxu0 %v2740
        %v4967 = vpop.f32.mrb[0].mxu0
        %v4968 = vadd.f32 %v4855, %v4967
        %v4969 = vpop.f32.mrb[0].mxu0
        %v4970 = vadd.f32 %v4857, %v4969
        %v4971 = vpop.f32.mrb[0].mxu0
        %v4972 = vadd.f32 %v4859, %v4971
        %v4973 = vpop.f32.mrb[0].mxu0
        %v4974 = vadd.f32 %v4861, %v4973
        %4975 = vmatprep.mubr.bf16.mxu0 %v2746
        %4976 = vmatmul.mubr.bf16.gmra.mrb[0].mxu0 %v2745
        %v4977 = vpop.f32.mrb[0].mxu0
        %v4978 = vadd.f32 %v4865, %v4977
        %v4979 = vpop.f32.mrb[0].mxu0
        %v4980 = vadd.f32 %v4867, %v4979
        %v4981 = vpop.f32.mrb[0].mxu0
        %v4982 = vadd.f32 %v4869, %v4981
        %v4983 = vpop.f32.mrb[0].mxu0
        %v4984 = vadd.f32 %v4871, %v4983
        %4985 = vmatprep.mubr.bf16.mxu0 %v2751
        %4986 = vmatmul.mubr.bf16.gmra.mrb[0].mxu0 %v2750
        %v4987 = vpop.f32.mrb[0].mxu0
        %v4988 = vadd.f32 %v4875, %v4987
        %v4989 = vpop.f32.mrb[0].mxu0
        %v4990 = vadd.f32 %v4877, %v4989
        %v4991 = vpop.f32.mrb[0].mxu0
        %v4992 = vadd.f32 %v4879, %v4991
        %v4993 = vpop.f32.mrb[0].mxu0
        %v4994 = vadd.f32 %v4881, %v4993
        %4995 = vmatprep.mubr.bf16.mxu0 %v2756
        %4996 = vmatmul.mubr.bf16.gmra.mrb[0].mxu0 %v2755
        %v4997 = vpop.f32.mrb[0].mxu0
        %v4998 = vadd.f32 %v4885, %v4997
        %v4999 = vpop.f32.mrb[0].mxu0
        %v5000 = vadd.f32 %v4887, %v4999
        %v5001 = vpop.f32.mrb[0].mxu0
        %v5002 = vadd.f32 %v4889, %v5001
        %v5003 = vpop.f32.mrb[0].mxu0
        %v5004 = vadd.f32 %v4891, %v5003
        %5005 = vmatprep.mubr.bf16.mxu0 %v2761
        %5006 = vmatmul.mubr.bf16.gmra.mrb[0].mxu0 %v2760
        %v5007 = vpop.f32.mrb[0].mxu0
        %v5008 = vadd.f32 %v4895, %v5007
        %v5009 = vpop.f32.mrb[0].mxu0
        %v5010 = vadd.f32 %v4897, %v5009
        %v5011 = vpop.f32.mrb[0].mxu0
        %v5012 = vadd.f32 %v4899, %v5011
        %v5013 = vpop.f32.mrb[0].mxu0
        %v5014 = vadd.f32 %v4901, %v5013
        %5015 = vmatprep.mubr.bf16.mxu0 %v2766
        %5016 = vmatmul.mubr.bf16.gmra.mrb[0].mxu0 %v2765
        %v5017 = vpop.f32.mrb[0].mxu0
        %v5018 = vadd.f32 %v4905, %v5017
        %v5019 = vpop.f32.mrb[0].mxu0
        %v5020 = vadd.f32 %v4907, %v5019
        %v5021 = vpop.f32.mrb[0].mxu0
        %v5022 = vadd.f32 %v4909, %v5021
        %v5023 = vpop.f32.mrb[0].mxu0
        %v5024 = vadd.f32 %v4911, %v5023
        %5025 = vmatprep.mubr.bf16.mxu0 %v2771
        %5026 = vmatmul.mubr.bf16.gmra.mrb[0].mxu0 %v2770
        %v5027 = vpop.f32.mrb[0].mxu0
        %v5028 = vadd.f32 %v4915, %v5027
        %v5029 = vpop.f32.mrb[0].mxu0
        %v5030 = vadd.f32 %v4917, %v5029
        %v5031 = vpop.f32.mrb[0].mxu0
        %v5032 = vadd.f32 %v4919, %v5031
        %v5033 = vpop.f32.mrb[0].mxu0
        %v5034 = vadd.f32 %v4921, %v5033
        %5035 = vdwg.mxu0
        %5036 = vmatprep.subr.bf16.mxu0 %v4162
        %5037 = vmatpush1.bf16.msra.mxu0 %v4161
        %5038 = vmatprep.subr.bf16.mxu0 %v4170
        %5039 = vmatpush1.bf16.msra.mxu0 %v4169
        %5040 = vmatprep.subr.bf16.mxu0 0
        %5041 = vmatpush1.bf16.msra.mxu0 0
        %5042 = vmatprep.subr.bf16.mxu0 0
        %5043 = vmatpush1.bf16.msra.mxu0 0
        %5044 = vmatprep.subr.bf16.mxu0 0
        %5045 = vmatpush1.bf16.msra.mxu0 0
        %5046 = vmatprep.subr.bf16.mxu0 0
        %5047 = vmatpush1.bf16.msra.mxu0 0
        %5048 = vmatprep.subr.bf16.mxu0 0
        %5049 = vmatpush1.bf16.msra.mxu0 0
        %5050 = vmatprep.subr.bf16.mxu0 0
        %5051 = vmatpush1.bf16.msra.mxu0 0
        %5052 = vmatprep.subr.bf16.mxu0 0
        %5053 = vmatpush1.bf16.msra.mxu0 0
        %5054 = vmatprep.subr.bf16.mxu0 0
        %5055 = vmatpush1.bf16.msra.mxu0 0
        %5056 = vmatprep.subr.bf16.mxu0 0
        %5057 = vmatpush1.bf16.msra.mxu0 0
        %5058 = vmatprep.subr.bf16.mxu0 0
        %5059 = vmatpush1.bf16.msra.mxu0 0
        %5060 = vmatprep.subr.bf16.mxu0 0
        %5061 = vmatpush1.bf16.msra.mxu0 0
        %5062 = vmatprep.subr.bf16.mxu0 0
        %5063 = vmatpush1.bf16.msra.mxu0 0
        %5064 = vmatprep.subr.bf16.mxu0 0
        %5065 = vmatpush1.bf16.msra.mxu0 0
        %5066 = vmatprep.subr.bf16.mxu0 0
        %5067 = vmatpush1.bf16.msra.mxu0 0
        %5068 = vmatprep.mubr.bf16.mxu0 0
        %5069 = vmatmul.mubr.bf16.gmra.mrb[0].mxu0 %v4448
        %v5070 = vpop.f32.mrb[0].mxu0
        %v5071 = vadd.f32 %v4958, %v5070
        %v5072 = vpop.f32.mrb[0].mxu0
        %v5073 = vadd.f32 %v4960, %v5072
        %v5074 = vpop.f32.mrb[0].mxu0
        %v5075 = vadd.f32 %v4962, %v5074
        %v5076 = vpop.f32.mrb[0].mxu0
        %v5077 = vadd.f32 %v4964, %v5076
        %5078 = vmatprep.mubr.bf16.mxu0 0
        %5079 = vmatmul.mubr.bf16.gmra.mrb[0].mxu0 %v4451
        %v5080 = vpop.f32.mrb[0].mxu0
        %v5081 = vadd.f32 %v4968, %v5080
        %v5082 = vpop.f32.mrb[0].mxu0
        %v5083 = vadd.f32 %v4970, %v5082
        %v5084 = vpop.f32.mrb[0].mxu0
        %v5085 = vadd.f32 %v4972, %v5084
        %v5086 = vpop.f32.mrb[0].mxu0
        %v5087 = vadd.f32 %v4974, %v5086
        %5088 = vmatprep.mubr.bf16.mxu0 0
        %5089 = vmatmul.mubr.bf16.gmra.mrb[0].mxu0 %v4454
        %v5090 = vpop.f32.mrb[0].mxu0
        %v5091 = vadd.f32 %v4978, %v5090
        %v5092 = vpop.f32.mrb[0].mxu0
        %v5093 = vadd.f32 %v4980, %v5092
        %v5094 = vpop.f32.mrb[0].mxu0
        %v5095 = vadd.f32 %v4982, %v5094
        %v5096 = vpop.f32.mrb[0].mxu0
        %v5097 = vadd.f32 %v4984, %v5096
        %5098 = vmatprep.mubr.bf16.mxu0 0
        %5099 = vmatmul.mubr.bf16.gmra.mrb[0].mxu0 %v4457
        %v5100 = vpop.f32.mrb[0].mxu0
        %v5101 = vadd.f32 %v4988, %v5100
        %v5102 = vpop.f32.mrb[0].mxu0
        %v5103 = vadd.f32 %v4990, %v5102
        %v5104 = vpop.f32.mrb[0].mxu0
        %v5105 = vadd.f32 %v4992, %v5104
        %v5106 = vpop.f32.mrb[0].mxu0
        %v5107 = vadd.f32 %v4994, %v5106
        %5108 = vmatprep.mubr.bf16.mxu0 0
        %5109 = vmatmul.mubr.bf16.gmra.mrb[0].mxu0 %v4460
        %v5110 = vpop.f32.mrb[0].mxu0
        %v5111 = vadd.f32 %v4998, %v5110
        %v5112 = vpop.f32.mrb[0].mxu0
        %v5113 = vadd.f32 %v5000, %v5112
        %v5114 = vpop.f32.mrb[0].mxu0
        %v5115 = vadd.f32 %v5002, %v5114
        %v5116 = vpop.f32.mrb[0].mxu0
        %v5117 = vadd.f32 %v5004, %v5116
        %5118 = vmatprep.mubr.bf16.mxu0 0
        %5119 = vmatmul.mubr.bf16.gmra.mrb[0].mxu0 %v4463
        %v5120 = vpop.f32.mrb[0].mxu0
        %v5121 = vadd.f32 %v5008, %v5120
        %v5122 = vpop.f32.mrb[0].mxu0
        %v5123 = vadd.f32 %v5010, %v5122
        %v5124 = vpop.f32.mrb[0].mxu0
        %v5125 = vadd.f32 %v5012, %v5124
        %v5126 = vpop.f32.mrb[0].mxu0
        %v5127 = vadd.f32 %v5014, %v5126
        %5128 = vmatprep.mubr.bf16.mxu0 0
        %5129 = vmatmul.mubr.bf16.gmra.mrb[0].mxu0 %v4466
        %v5130 = vpop.f32.mrb[0].mxu0
        %v5131 = vadd.f32 %v5018, %v5130
        %v5132 = vpop.f32.mrb[0].mxu0
        %v5133 = vadd.f32 %v5020, %v5132
        %v5134 = vpop.f32.mrb[0].mxu0
        %v5135 = vadd.f32 %v5022, %v5134
        %v5136 = vpop.f32.mrb[0].mxu0
        %v5137 = vadd.f32 %v5024, %v5136
        %5138 = vmatprep.mubr.bf16.mxu0 0
        %5139 = vmatmul.mubr.bf16.gmra.mrb[0].mxu0 %v4469
        %v5140 = vpop.f32.mrb[0].mxu0
        %v5141 = vadd.f32 %v5028, %v5140
        %v5142 = vpop.f32.mrb[0].mxu0
        %v5143 = vadd.f32 %v5030, %v5142
        %v5144 = vpop.f32.mrb[0].mxu0
        %v5145 = vadd.f32 %v5032, %v5144
        %v5146 = vpop.f32.mrb[0].mxu0
        %v5147 = vadd.f32 %v5034, %v5146
        %5148 = vdwg.mxu0
        %5149 = vmatprep.subr.bf16.mxu0 %v3908
        %5150 = vmatpush1.bf16.msra.mxu0 %v3907
        %5151 = vmatprep.subr.bf16.mxu0 %v3916
        %5152 = vmatpush1.bf16.msra.mxu0 %v3915
        %5153 = vmatprep.subr.bf16.mxu0 %v3924
        %5154 = vmatpush1.bf16.msra.mxu0 %v3923
        %5155 = vmatprep.subr.bf16.mxu0 %v3932
        %5156 = vmatpush1.bf16.msra.mxu0 %v3931
        %5157 = vmatprep.subr.bf16.mxu0 %v3940
        %5158 = vmatpush1.bf16.msra.mxu0 %v3939
        %5159 = vmatprep.subr.bf16.mxu0 %v3948
        %5160 = vmatpush1.bf16.msra.mxu0 %v3947
        %5161 = vmatprep.subr.bf16.mxu0 %v3956
        %5162 = vmatpush1.bf16.msra.mxu0 %v3955
        %5163 = vmatprep.subr.bf16.mxu0 %v3964
        %5164 = vmatpush1.bf16.msra.mxu0 %v3963
        %5165 = vmatprep.subr.bf16.mxu0 %v3972
        %5166 = vmatpush1.bf16.msra.mxu0 %v3971
        %5167 = vmatprep.subr.bf16.mxu0 %v3980
        %5168 = vmatpush1.bf16.msra.mxu0 %v3979
        %5169 = vmatprep.subr.bf16.mxu0 %v3988
        %5170 = vmatpush1.bf16.msra.mxu0 %v3987
        %5171 = vmatprep.subr.bf16.mxu0 %v3996
        %5172 = vmatpush1.bf16.msra.mxu0 %v3995
        %5173 = vmatprep.subr.bf16.mxu0 %v4004
        %5174 = vmatpush1.bf16.msra.mxu0 %v4003
        %5175 = vmatprep.subr.bf16.mxu0 %v4012
        %5176 = vmatpush1.bf16.msra.mxu0 %v4011
        %5177 = vmatprep.subr.bf16.mxu0 %v4020
        %5178 = vmatpush1.bf16.msra.mxu0 %v4019
        %5179 = vmatprep.subr.bf16.mxu0 %v4028
        %5180 = vmatpush1.bf16.msra.mxu0 %v4027
        %5181 = vmatprep.mubr.bf16.mxu0 %v2734
        %5182 = vmatmul.mubr.bf16.gmra.mrb[0].mxu0 %v2733
        %v5183 = vpop.f32.mrb[0].mxu0
        %v5184 = vadd.f32 %v3066, %v5183
        %v5185 = vpop.f32.mrb[0].mxu0
        %v5186 = vadd.f32 %v3070, %v5185
        %v5187 = vpop.f32.mrb[0].mxu0
        %v5188 = vadd.f32 %v3066, %v5187
        %v5189 = vpop.f32.mrb[0].mxu0
        %v5190 = vadd.f32 %v3070, %v5189
        %5191 = vmatprep.mubr.bf16.mxu0 %v2739
        %5192 = vmatmul.mubr.bf16.gmra.mrb[0].mxu0 %v2738
        %v5193 = vpop.f32.mrb[0].mxu0
        %v5194 = vadd.f32 %v3066, %v5193
        %v5195 = vpop.f32.mrb[0].mxu0
        %v5196 = vadd.f32 %v3070, %v5195
        %v5197 = vpop.f32.mrb[0].mxu0
        %v5198 = vadd.f32 %v3066, %v5197
        %v5199 = vpop.f32.mrb[0].mxu0
        %v5200 = vadd.f32 %v3070, %v5199
        %5201 = vmatprep.mubr.bf16.mxu0 %v2744
        %5202 = vmatmul.mubr.bf16.gmra.mrb[0].mxu0 %v2743
        %v5203 = vpop.f32.mrb[0].mxu0
        %v5204 = vadd.f32 %v3066, %v5203
        %v5205 = vpop.f32.mrb[0].mxu0
        %v5206 = vadd.f32 %v3070, %v5205
        %v5207 = vpop.f32.mrb[0].mxu0
        %v5208 = vadd.f32 %v3066, %v5207
        %v5209 = vpop.f32.mrb[0].mxu0
        %v5210 = vadd.f32 %v3070, %v5209
        %5211 = vmatprep.mubr.bf16.mxu0 %v2749
        %5212 = vmatmul.mubr.bf16.gmra.mrb[0].mxu0 %v2748
        %v5213 = vpop.f32.mrb[0].mxu0
        %v5214 = vadd.f32 %v3066, %v5213
        %v5215 = vpop.f32.mrb[0].mxu0
        %v5216 = vadd.f32 %v3070, %v5215
        %v5217 = vpop.f32.mrb[0].mxu0
        %v5218 = vadd.f32 %v3066, %v5217
        %v5219 = vpop.f32.mrb[0].mxu0
        %v5220 = vadd.f32 %v3070, %v5219
        %5221 = vmatprep.mubr.bf16.mxu0 %v2754
        %5222 = vmatmul.mubr.bf16.gmra.mrb[0].mxu0 %v2753
        %v5223 = vpop.f32.mrb[0].mxu0
        %v5224 = vadd.f32 %v3066, %v5223
        %v5225 = vpop.f32.mrb[0].mxu0
        %v5226 = vadd.f32 %v3070, %v5225
        %v5227 = vpop.f32.mrb[0].mxu0
        %v5228 = vadd.f32 %v3066, %v5227
        %v5229 = vpop.f32.mrb[0].mxu0
        %v5230 = vadd.f32 %v3070, %v5229
        %5231 = vmatprep.mubr.bf16.mxu0 %v2759
        %5232 = vmatmul.mubr.bf16.gmra.mrb[0].mxu0 %v2758
        %v5233 = vpop.f32.mrb[0].mxu0
        %v5234 = vadd.f32 %v3066, %v5233
        %v5235 = vpop.f32.mrb[0].mxu0
        %v5236 = vadd.f32 %v3070, %v5235
        %v5237 = vpop.f32.mrb[0].mxu0
        %v5238 = vadd.f32 %v3066, %v5237
        %v5239 = vpop.f32.mrb[0].mxu0
        %v5240 = vadd.f32 %v3070, %v5239
        %5241 = vmatprep.mubr.bf16.mxu0 %v2764
        %5242 = vmatmul.mubr.bf16.gmra.mrb[0].mxu0 %v2763
        %v5243 = vpop.f32.mrb[0].mxu0
        %v5244 = vadd.f32 %v3066, %v5243
        %v5245 = vpop.f32.mrb[0].mxu0
        %v5246 = vadd.f32 %v3070, %v5245
        %v5247 = vpop.f32.mrb[0].mxu0
        %v5248 = vadd.f32 %v3066, %v5247
        %v5249 = vpop.f32.mrb[0].mxu0
        %v5250 = vadd.f32 %v3070, %v5249
        %5251 = vmatprep.mubr.bf16.mxu0 %v2769
        %5252 = vmatmul.mubr.bf16.gmra.mrb[0].mxu0 %v2768
        %v5253 = vpop.f32.mrb[0].mxu0
        %v5254 = vadd.f32 %v3066, %v5253
        %v5255 = vpop.f32.mrb[0].mxu0
        %v5256 = vadd.f32 %v3070, %v5255
        %v5257 = vpop.f32.mrb[0].mxu0
        %v5258 = vadd.f32 %v3066, %v5257
        %v5259 = vpop.f32.mrb[0].mxu0
        %v5260 = vadd.f32 %v3070, %v5259
        %5261 = vdwg.mxu0
        %5262 = vmatprep.subr.bf16.mxu0 %v4036
        %5263 = vmatpush1.bf16.msra.mxu0 %v4035
        %5264 = vmatprep.subr.bf16.mxu0 %v4044
        %5265 = vmatpush1.bf16.msra.mxu0 %v4043
        %5266 = vmatprep.subr.bf16.mxu0 %v4052
        %5267 = vmatpush1.bf16.msra.mxu0 %v4051
        %5268 = vmatprep.subr.bf16.mxu0 %v4060
        %5269 = vmatpush1.bf16.msra.mxu0 %v4059
        %5270 = vmatprep.subr.bf16.mxu0 %v4068
        %5271 = vmatpush1.bf16.msra.mxu0 %v4067
        %5272 = vmatprep.subr.bf16.mxu0 %v4076
        %5273 = vmatpush1.bf16.msra.mxu0 %v4075
        %5274 = vmatprep.subr.bf16.mxu0 %v4084
        %5275 = vmatpush1.bf16.msra.mxu0 %v4083
        %5276 = vmatprep.subr.bf16.mxu0 %v4092
        %5277 = vmatpush1.bf16.msra.mxu0 %v4091
        %5278 = vmatprep.subr.bf16.mxu0 %v4100
        %5279 = vmatpush1.bf16.msra.mxu0 %v4099
        %5280 = vmatprep.subr.bf16.mxu0 %v4108
        %5281 = vmatpush1.bf16.msra.mxu0 %v4107
        %5282 = vmatprep.subr.bf16.mxu0 %v4116
        %5283 = vmatpush1.bf16.msra.mxu0 %v4115
        %5284 = vmatprep.subr.bf16.mxu0 %v4124
        %5285 = vmatpush1.bf16.msra.mxu0 %v4123
        %5286 = vmatprep.subr.bf16.mxu0 %v4132
        %5287 = vmatpush1.bf16.msra.mxu0 %v4131
        %5288 = vmatprep.subr.bf16.mxu0 %v4140
        %5289 = vmatpush1.bf16.msra.mxu0 %v4139
        %5290 = vmatprep.subr.bf16.mxu0 %v4148
        %5291 = vmatpush1.bf16.msra.mxu0 %v4147
        %5292 = vmatprep.subr.bf16.mxu0 %v4156
        %5293 = vmatpush1.bf16.msra.mxu0 %v4155
        %5294 = vmatprep.mubr.bf16.mxu0 %v2736
        %5295 = vmatmul.mubr.bf16.gmra.mrb[0].mxu0 %v2735
        %v5296 = vpop.f32.mrb[0].mxu0
        %v5297 = vadd.f32 %v5184, %v5296
        %v5298 = vpop.f32.mrb[0].mxu0
        %v5299 = vadd.f32 %v5186, %v5298
        %v5300 = vpop.f32.mrb[0].mxu0
        %v5301 = vadd.f32 %v5188, %v5300
        %v5302 = vpop.f32.mrb[0].mxu0
        %v5303 = vadd.f32 %v5190, %v5302
        %5304 = vmatprep.mubr.bf16.mxu0 %v2741
        %5305 = vmatmul.mubr.bf16.gmra.mrb[0].mxu0 %v2740
        %v5306 = vpop.f32.mrb[0].mxu0
        %v5307 = vadd.f32 %v5194, %v5306
        %v5308 = vpop.f32.mrb[0].mxu0
        %v5309 = vadd.f32 %v5196, %v5308
        %v5310 = vpop.f32.mrb[0].mxu0
        %v5311 = vadd.f32 %v5198, %v5310
        %v5312 = vpop.f32.mrb[0].mxu0
        %v5313 = vadd.f32 %v5200, %v5312
        %5314 = vmatprep.mubr.bf16.mxu0 %v2746
        %5315 = vmatmul.mubr.bf16.gmra.mrb[0].mxu0 %v2745
        %v5316 = vpop.f32.mrb[0].mxu0
        %v5317 = vadd.f32 %v5204, %v5316
        %v5318 = vpop.f32.mrb[0].mxu0
        %v5319 = vadd.f32 %v5206, %v5318
        %v5320 = vpop.f32.mrb[0].mxu0
        %v5321 = vadd.f32 %v5208, %v5320
        %v5322 = vpop.f32.mrb[0].mxu0
        %v5323 = vadd.f32 %v5210, %v5322
        %5324 = vmatprep.mubr.bf16.mxu0 %v2751
        %5325 = vmatmul.mubr.bf16.gmra.mrb[0].mxu0 %v2750
        %v5326 = vpop.f32.mrb[0].mxu0
        %v5327 = vadd.f32 %v5214, %v5326
        %v5328 = vpop.f32.mrb[0].mxu0
        %v5329 = vadd.f32 %v5216, %v5328
        %v5330 = vpop.f32.mrb[0].mxu0
        %v5331 = vadd.f32 %v5218, %v5330
        %v5332 = vpop.f32.mrb[0].mxu0
        %v5333 = vadd.f32 %v5220, %v5332
        %5334 = vmatprep.mubr.bf16.mxu0 %v2756
        %5335 = vmatmul.mubr.bf16.gmra.mrb[0].mxu0 %v2755
        %v5336 = vpop.f32.mrb[0].mxu0
        %v5337 = vadd.f32 %v5224, %v5336
        %v5338 = vpop.f32.mrb[0].mxu0
        %v5339 = vadd.f32 %v5226, %v5338
        %v5340 = vpop.f32.mrb[0].mxu0
        %v5341 = vadd.f32 %v5228, %v5340
        %v5342 = vpop.f32.mrb[0].mxu0
        %v5343 = vadd.f32 %v5230, %v5342
        %5344 = vmatprep.mubr.bf16.mxu0 %v2761
        %5345 = vmatmul.mubr.bf16.gmra.mrb[0].mxu0 %v2760
        %v5346 = vpop.f32.mrb[0].mxu0
        %v5347 = vadd.f32 %v5234, %v5346
        %v5348 = vpop.f32.mrb[0].mxu0
        %v5349 = vadd.f32 %v5236, %v5348
        %v5350 = vpop.f32.mrb[0].mxu0
        %v5351 = vadd.f32 %v5238, %v5350
        %v5352 = vpop.f32.mrb[0].mxu0
        %v5353 = vadd.f32 %v5240, %v5352
        %5354 = vmatprep.mubr.bf16.mxu0 %v2766
        %5355 = vmatmul.mubr.bf16.gmra.mrb[0].mxu0 %v2765
        %v5356 = vpop.f32.mrb[0].mxu0
        %v5357 = vadd.f32 %v5244, %v5356
        %v5358 = vpop.f32.mrb[0].mxu0
        %v5359 = vadd.f32 %v5246, %v5358
        %v5360 = vpop.f32.mrb[0].mxu0
        %v5361 = vadd.f32 %v5248, %v5360
        %v5362 = vpop.f32.mrb[0].mxu0
        %v5363 = vadd.f32 %v5250, %v5362
        %5364 = vmatprep.mubr.bf16.mxu0 %v2771
        %5365 = vmatmul.mubr.bf16.gmra.mrb[0].mxu0 %v2770
        %v5366 = vpop.f32.mrb[0].mxu0
        %v5367 = vadd.f32 %v5254, %v5366
        %v5368 = vpop.f32.mrb[0].mxu0
        %v5369 = vadd.f32 %v5256, %v5368
        %v5370 = vpop.f32.mrb[0].mxu0
        %v5371 = vadd.f32 %v5258, %v5370
        %v5372 = vpop.f32.mrb[0].mxu0
        %v5373 = vadd.f32 %v5260, %v5372
        %5374 = vdwg.mxu0
        %5375 = vmatprep.subr.bf16.mxu0 %v4164
        %5376 = vmatpush1.bf16.msra.mxu0 %v4163
        %5377 = vmatprep.subr.bf16.mxu0 %v4172
        %5378 = vmatpush1.bf16.msra.mxu0 %v4171
        %5379 = vmatprep.subr.bf16.mxu0 0
        %5380 = vmatpush1.bf16.msra.mxu0 0
        %5381 = vmatprep.subr.bf16.mxu0 0
        %5382 = vmatpush1.bf16.msra.mxu0 0
        %5383 = vmatprep.subr.bf16.mxu0 0
        %5384 = vmatpush1.bf16.msra.mxu0 0
        %5385 = vmatprep.subr.bf16.mxu0 0
        %5386 = vmatpush1.bf16.msra.mxu0 0
        %5387 = vmatprep.subr.bf16.mxu0 0
        %5388 = vmatpush1.bf16.msra.mxu0 0
        %5389 = vmatprep.subr.bf16.mxu0 0
        %5390 = vmatpush1.bf16.msra.mxu0 0
        %5391 = vmatprep.subr.bf16.mxu0 0
        %5392 = vmatpush1.bf16.msra.mxu0 0
        %5393 = vmatprep.subr.bf16.mxu0 0
        %5394 = vmatpush1.bf16.msra.mxu0 0
        %5395 = vmatprep.subr.bf16.mxu0 0
        %5396 = vmatpush1.bf16.msra.mxu0 0
        %5397 = vmatprep.subr.bf16.mxu0 0
        %5398 = vmatpush1.bf16.msra.mxu0 0
        %5399 = vmatprep.subr.bf16.mxu0 0
        %5400 = vmatpush1.bf16.msra.mxu0 0
        %5401 = vmatprep.subr.bf16.mxu0 0
        %5402 = vmatpush1.bf16.msra.mxu0 0
        %5403 = vmatprep.subr.bf16.mxu0 0
        %5404 = vmatpush1.bf16.msra.mxu0 0
        %5405 = vmatprep.subr.bf16.mxu0 0
        %5406 = vmatpush1.bf16.msra.mxu0 0
        %5407 = vmatprep.mubr.bf16.mxu0 0
        %5408 = vmatmul.mubr.bf16.gmra.mrb[0].mxu0 %v4448
        %v5409 = vpop.f32.mrb[0].mxu0
        %v5410 = vadd.f32 %v5297, %v5409
        %v5411 = vpop.f32.mrb[0].mxu0
        %v5412 = vadd.f32 %v5299, %v5411
        %v5413 = vpop.f32.mrb[0].mxu0
        %v5414 = vadd.f32 %v5301, %v5413
        %v5415 = vpop.f32.mrb[0].mxu0
        %v5416 = vadd.f32 %v5303, %v5415
        %5417 = vmatprep.mubr.bf16.mxu0 0
        %5418 = vmatmul.mubr.bf16.gmra.mrb[0].mxu0 %v4451
        %v5419 = vpop.f32.mrb[0].mxu0
        %v5420 = vadd.f32 %v5307, %v5419
        %v5421 = vpop.f32.mrb[0].mxu0
        %v5422 = vadd.f32 %v5309, %v5421
        %v5423 = vpop.f32.mrb[0].mxu0
        %v5424 = vadd.f32 %v5311, %v5423
        %v5425 = vpop.f32.mrb[0].mxu0
        %v5426 = vadd.f32 %v5313, %v5425
        %5427 = vmatprep.mubr.bf16.mxu0 0
        %5428 = vmatmul.mubr.bf16.gmra.mrb[0].mxu0 %v4454
        %v5429 = vpop.f32.mrb[0].mxu0
        %v5430 = vadd.f32 %v5317, %v5429
        %v5431 = vpop.f32.mrb[0].mxu0
        %v5432 = vadd.f32 %v5319, %v5431
        %v5433 = vpop.f32.mrb[0].mxu0
        %v5434 = vadd.f32 %v5321, %v5433
        %v5435 = vpop.f32.mrb[0].mxu0
        %v5436 = vadd.f32 %v5323, %v5435
        %5437 = vmatprep.mubr.bf16.mxu0 0
        %5438 = vmatmul.mubr.bf16.gmra.mrb[0].mxu0 %v4457
        %v5439 = vpop.f32.mrb[0].mxu0
        %v5440 = vadd.f32 %v5327, %v5439
        %v5441 = vpop.f32.mrb[0].mxu0
        %v5442 = vadd.f32 %v5329, %v5441
        %v5443 = vpop.f32.mrb[0].mxu0
        %v5444 = vadd.f32 %v5331, %v5443
        %v5445 = vpop.f32.mrb[0].mxu0
        %v5446 = vadd.f32 %v5333, %v5445
        %5447 = vmatprep.mubr.bf16.mxu0 0
        %5448 = vmatmul.mubr.bf16.gmra.mrb[0].mxu0 %v4460
        %v5449 = vpop.f32.mrb[0].mxu0
        %v5450 = vadd.f32 %v5337, %v5449
        %v5451 = vpop.f32.mrb[0].mxu0
        %v5452 = vadd.f32 %v5339, %v5451
        %v5453 = vpop.f32.mrb[0].mxu0
        %v5454 = vadd.f32 %v5341, %v5453
        %v5455 = vpop.f32.mrb[0].mxu0
        %v5456 = vadd.f32 %v5343, %v5455
        %5457 = vmatprep.mubr.bf16.mxu0 0
        %5458 = vmatmul.mubr.bf16.gmra.mrb[0].mxu0 %v4463
        %v5459 = vpop.f32.mrb[0].mxu0
        %v5460 = vadd.f32 %v5347, %v5459
        %v5461 = vpop.f32.mrb[0].mxu0
        %v5462 = vadd.f32 %v5349, %v5461
        %v5463 = vpop.f32.mrb[0].mxu0
        %v5464 = vadd.f32 %v5351, %v5463
        %v5465 = vpop.f32.mrb[0].mxu0
        %v5466 = vadd.f32 %v5353, %v5465
        %5467 = vmatprep.mubr.bf16.mxu0 0
        %5468 = vmatmul.mubr.bf16.gmra.mrb[0].mxu0 %v4466
        %v5469 = vpop.f32.mrb[0].mxu0
        %v5470 = vadd.f32 %v5357, %v5469
        %v5471 = vpop.f32.mrb[0].mxu0
        %v5472 = vadd.f32 %v5359, %v5471
        %v5473 = vpop.f32.mrb[0].mxu0
        %v5474 = vadd.f32 %v5361, %v5473
        %v5475 = vpop.f32.mrb[0].mxu0
        %v5476 = vadd.f32 %v5363, %v5475
        %5477 = vmatprep.mubr.bf16.mxu0 0
        %5478 = vmatmul.mubr.bf16.gmra.mrb[0].mxu0 %v4469
        %v5479 = vpop.f32.mrb[0].mxu0
        %v5480 = vadd.f32 %v5367, %v5479
        %v5481 = vpop.f32.mrb[0].mxu0
        %v5482 = vadd.f32 %v5369, %v5481
        %v5483 = vpop.f32.mrb[0].mxu0
        %v5484 = vadd.f32 %v5371, %v5483
        %v5485 = vpop.f32.mrb[0].mxu0
        %v5486 = vadd.f32 %v5373, %v5485
        %5487 = vdwg.mxu0
        %5488 = vmatprep.subr.bf16.mxu0 %v3910
        %5489 = vmatpush1.bf16.msra.mxu0 %v3909
        %5490 = vmatprep.subr.bf16.mxu0 %v3918
        %5491 = vmatpush1.bf16.msra.mxu0 %v3917
        %5492 = vmatprep.subr.bf16.mxu0 %v3926
        %5493 = vmatpush1.bf16.msra.mxu0 %v3925
        %5494 = vmatprep.subr.bf16.mxu0 %v3934
        %5495 = vmatpush1.bf16.msra.mxu0 %v3933
        %5496 = vmatprep.subr.bf16.mxu0 %v3942
        %5497 = vmatpush1.bf16.msra.mxu0 %v3941
        %5498 = vmatprep.subr.bf16.mxu0 %v3950
        %5499 = vmatpush1.bf16.msra.mxu0 %v3949
        %5500 = vmatprep.subr.bf16.mxu0 %v3958
        %5501 = vmatpush1.bf16.msra.mxu0 %v3957
        %5502 = vmatprep.subr.bf16.mxu0 %v3966
        %5503 = vmatpush1.bf16.msra.mxu0 %v3965
        %5504 = vmatprep.subr.bf16.mxu0 %v3974
        %5505 = vmatpush1.bf16.msra.mxu0 %v3973
        %5506 = vmatprep.subr.bf16.mxu0 %v3982
        %5507 = vmatpush1.bf16.msra.mxu0 %v3981
        %5508 = vmatprep.subr.bf16.mxu0 %v3990
        %5509 = vmatpush1.bf16.msra.mxu0 %v3989
        %5510 = vmatprep.subr.bf16.mxu0 %v3998
        %5511 = vmatpush1.bf16.msra.mxu0 %v3997
        %5512 = vmatprep.subr.bf16.mxu0 %v4006
        %5513 = vmatpush1.bf16.msra.mxu0 %v4005
        %5514 = vmatprep.subr.bf16.mxu0 %v4014
        %5515 = vmatpush1.bf16.msra.mxu0 %v4013
        %5516 = vmatprep.subr.bf16.mxu0 %v4022
        %5517 = vmatpush1.bf16.msra.mxu0 %v4021
        %5518 = vmatprep.subr.bf16.mxu0 %v4030
        %5519 = vmatpush1.bf16.msra.mxu0 %v4029
        %5520 = vmatprep.mubr.bf16.mxu0 %v2734
        %5521 = vmatmul.mubr.bf16.gmra.mrb[0].mxu0 %v2733
        %v5522 = vpop.f32.mrb[0].mxu0
        %v5523 = vadd.f32 %v3074, %v5522
        %v5524 = vpop.f32.mrb[0].mxu0
        %v5525 = vadd.f32 %v3078, %v5524
        %v5526 = vpop.f32.mrb[0].mxu0
        %v5527 = vadd.f32 %v3074, %v5526
        %v5528 = vpop.f32.mrb[0].mxu0
        %v5529 = vadd.f32 %v3078, %v5528
        %5530 = vmatprep.mubr.bf16.mxu0 %v2739
        %5531 = vmatmul.mubr.bf16.gmra.mrb[0].mxu0 %v2738
        %v5532 = vpop.f32.mrb[0].mxu0
        %v5533 = vadd.f32 %v3074, %v5532
        %v5534 = vpop.f32.mrb[0].mxu0
        %v5535 = vadd.f32 %v3078, %v5534
        %v5536 = vpop.f32.mrb[0].mxu0
        %v5537 = vadd.f32 %v3074, %v5536
        %v5538 = vpop.f32.mrb[0].mxu0
        %v5539 = vadd.f32 %v3078, %v5538
        %5540 = vmatprep.mubr.bf16.mxu0 %v2744
        %5541 = vmatmul.mubr.bf16.gmra.mrb[0].mxu0 %v2743
        %v5542 = vpop.f32.mrb[0].mxu0
        %v5543 = vadd.f32 %v3074, %v5542
        %v5544 = vpop.f32.mrb[0].mxu0
        %v5545 = vadd.f32 %v3078, %v5544
        %v5546 = vpop.f32.mrb[0].mxu0
        %v5547 = vadd.f32 %v3074, %v5546
        %v5548 = vpop.f32.mrb[0].mxu0
        %v5549 = vadd.f32 %v3078, %v5548
        %5550 = vmatprep.mubr.bf16.mxu0 %v2749
        %5551 = vmatmul.mubr.bf16.gmra.mrb[0].mxu0 %v2748
        %v5552 = vpop.f32.mrb[0].mxu0
        %v5553 = vadd.f32 %v3074, %v5552
        %v5554 = vpop.f32.mrb[0].mxu0
        %v5555 = vadd.f32 %v3078, %v5554
        %v5556 = vpop.f32.mrb[0].mxu0
        %v5557 = vadd.f32 %v3074, %v5556
        %v5558 = vpop.f32.mrb[0].mxu0
        %v5559 = vadd.f32 %v3078, %v5558
        %5560 = vmatprep.mubr.bf16.mxu0 %v2754
        %5561 = vmatmul.mubr.bf16.gmra.mrb[0].mxu0 %v2753
        %v5562 = vpop.f32.mrb[0].mxu0
        %v5563 = vadd.f32 %v3074, %v5562
        %v5564 = vpop.f32.mrb[0].mxu0
        %v5565 = vadd.f32 %v3078, %v5564
        %v5566 = vpop.f32.mrb[0].mxu0
        %v5567 = vadd.f32 %v3074, %v5566
        %v5568 = vpop.f32.mrb[0].mxu0
        %v5569 = vadd.f32 %v3078, %v5568
        %5570 = vmatprep.mubr.bf16.mxu0 %v2759
        %5571 = vmatmul.mubr.bf16.gmra.mrb[0].mxu0 %v2758
        %v5572 = vpop.f32.mrb[0].mxu0
        %v5573 = vadd.f32 %v3074, %v5572
        %v5574 = vpop.f32.mrb[0].mxu0
        %v5575 = vadd.f32 %v3078, %v5574
        %v5576 = vpop.f32.mrb[0].mxu0
        %v5577 = vadd.f32 %v3074, %v5576
        %v5578 = vpop.f32.mrb[0].mxu0
        %v5579 = vadd.f32 %v3078, %v5578
        %5580 = vmatprep.mubr.bf16.mxu0 %v2764
        %5581 = vmatmul.mubr.bf16.gmra.mrb[0].mxu0 %v2763
        %v5582 = vpop.f32.mrb[0].mxu0
        %v5583 = vadd.f32 %v3074, %v5582
        %v5584 = vpop.f32.mrb[0].mxu0
        %v5585 = vadd.f32 %v3078, %v5584
        %v5586 = vpop.f32.mrb[0].mxu0
        %v5587 = vadd.f32 %v3074, %v5586
        %v5588 = vpop.f32.mrb[0].mxu0
        %v5589 = vadd.f32 %v3078, %v5588
        %5590 = vmatprep.mubr.bf16.mxu0 %v2769
        %5591 = vmatmul.mubr.bf16.gmra.mrb[0].mxu0 %v2768
        %v5592 = vpop.f32.mrb[0].mxu0
        %v5593 = vadd.f32 %v3074, %v5592
        %v5594 = vpop.f32.mrb[0].mxu0
        %v5595 = vadd.f32 %v3078, %v5594
        %v5596 = vpop.f32.mrb[0].mxu0
        %v5597 = vadd.f32 %v3074, %v5596
        %v5598 = vpop.f32.mrb[0].mxu0
        %v5599 = vadd.f32 %v3078, %v5598
        %5600 = vdwg.mxu0
        %5601 = vmatprep.subr.bf16.mxu0 %v4038
        %5602 = vmatpush1.bf16.msra.mxu0 %v4037
        %5603 = vmatprep.subr.bf16.mxu0 %v4046
        %5604 = vmatpush1.bf16.msra.mxu0 %v4045
        %5605 = vmatprep.subr.bf16.mxu0 %v4054
        %5606 = vmatpush1.bf16.msra.mxu0 %v4053
        %5607 = vmatprep.subr.bf16.mxu0 %v4062
        %5608 = vmatpush1.bf16.msra.mxu0 %v4061
        %5609 = vmatprep.subr.bf16.mxu0 %v4070
        %5610 = vmatpush1.bf16.msra.mxu0 %v4069
        %5611 = vmatprep.subr.bf16.mxu0 %v4078
        %5612 = vmatpush1.bf16.msra.mxu0 %v4077
        %5613 = vmatprep.subr.bf16.mxu0 %v4086
        %5614 = vmatpush1.bf16.msra.mxu0 %v4085
        %5615 = vmatprep.subr.bf16.mxu0 %v4094
        %5616 = vmatpush1.bf16.msra.mxu0 %v4093
        %5617 = vmatprep.subr.bf16.mxu0 %v4102
        %5618 = vmatpush1.bf16.msra.mxu0 %v4101
        %5619 = vmatprep.subr.bf16.mxu0 %v4110
        %5620 = vmatpush1.bf16.msra.mxu0 %v4109
        %5621 = vmatprep.subr.bf16.mxu0 %v4118
        %5622 = vmatpush1.bf16.msra.mxu0 %v4117
        %5623 = vmatprep.subr.bf16.mxu0 %v4126
        %5624 = vmatpush1.bf16.msra.mxu0 %v4125
        %5625 = vmatprep.subr.bf16.mxu0 %v4134
        %5626 = vmatpush1.bf16.msra.mxu0 %v4133
        %5627 = vmatprep.subr.bf16.mxu0 %v4142
        %5628 = vmatpush1.bf16.msra.mxu0 %v4141
        %5629 = vmatprep.subr.bf16.mxu0 %v4150
        %5630 = vmatpush1.bf16.msra.mxu0 %v4149
        %5631 = vmatprep.subr.bf16.mxu0 %v4158
        %5632 = vmatpush1.bf16.msra.mxu0 %v4157
        %5633 = vmatprep.mubr.bf16.mxu0 %v2736
        %5634 = vmatmul.mubr.bf16.gmra.mrb[0].mxu0 %v2735
        %v5635 = vpop.f32.mrb[0].mxu0
        %v5636 = vadd.f32 %v5523, %v5635
        %v5637 = vpop.f32.mrb[0].mxu0
        %v5638 = vadd.f32 %v5525, %v5637
        %v5639 = vpop.f32.mrb[0].mxu0
        %v5640 = vadd.f32 %v5527, %v5639
        %v5641 = vpop.f32.mrb[0].mxu0
        %v5642 = vadd.f32 %v5529, %v5641
        %5643 = vmatprep.mubr.bf16.mxu0 %v2741
        %5644 = vmatmul.mubr.bf16.gmra.mrb[0].mxu0 %v2740
        %v5645 = vpop.f32.mrb[0].mxu0
        %v5646 = vadd.f32 %v5533, %v5645
        %v5647 = vpop.f32.mrb[0].mxu0
        %v5648 = vadd.f32 %v5535, %v5647
        %v5649 = vpop.f32.mrb[0].mxu0
        %v5650 = vadd.f32 %v5537, %v5649
        %v5651 = vpop.f32.mrb[0].mxu0
        %v5652 = vadd.f32 %v5539, %v5651
        %5653 = vmatprep.mubr.bf16.mxu0 %v2746
        %5654 = vmatmul.mubr.bf16.gmra.mrb[0].mxu0 %v2745
        %v5655 = vpop.f32.mrb[0].mxu0
        %v5656 = vadd.f32 %v5543, %v5655
        %v5657 = vpop.f32.mrb[0].mxu0
        %v5658 = vadd.f32 %v5545, %v5657
        %v5659 = vpop.f32.mrb[0].mxu0
        %v5660 = vadd.f32 %v5547, %v5659
        %v5661 = vpop.f32.mrb[0].mxu0
        %v5662 = vadd.f32 %v5549, %v5661
        %5663 = vmatprep.mubr.bf16.mxu0 %v2751
        %5664 = vmatmul.mubr.bf16.gmra.mrb[0].mxu0 %v2750
        %v5665 = vpop.f32.mrb[0].mxu0
        %v5666 = vadd.f32 %v5553, %v5665
        %v5667 = vpop.f32.mrb[0].mxu0
        %v5668 = vadd.f32 %v5555, %v5667
        %v5669 = vpop.f32.mrb[0].mxu0
        %v5670 = vadd.f32 %v5557, %v5669
        %v5671 = vpop.f32.mrb[0].mxu0
        %v5672 = vadd.f32 %v5559, %v5671
        %5673 = vmatprep.mubr.bf16.mxu0 %v2756
        %5674 = vmatmul.mubr.bf16.gmra.mrb[0].mxu0 %v2755
        %v5675 = vpop.f32.mrb[0].mxu0
        %v5676 = vadd.f32 %v5563, %v5675
        %v5677 = vpop.f32.mrb[0].mxu0
        %v5678 = vadd.f32 %v5565, %v5677
        %v5679 = vpop.f32.mrb[0].mxu0
        %v5680 = vadd.f32 %v5567, %v5679
        %v5681 = vpop.f32.mrb[0].mxu0
        %v5682 = vadd.f32 %v5569, %v5681
        %5683 = vmatprep.mubr.bf16.mxu0 %v2761
        %5684 = vmatmul.mubr.bf16.gmra.mrb[0].mxu0 %v2760
        %v5685 = vpop.f32.mrb[0].mxu0
        %v5686 = vadd.f32 %v5573, %v5685
        %v5687 = vpop.f32.mrb[0].mxu0
        %v5688 = vadd.f32 %v5575, %v5687
        %v5689 = vpop.f32.mrb[0].mxu0
        %v5690 = vadd.f32 %v5577, %v5689
        %v5691 = vpop.f32.mrb[0].mxu0
        %v5692 = vadd.f32 %v5579, %v5691
        %5693 = vmatprep.mubr.bf16.mxu0 %v2766
        %5694 = vmatmul.mubr.bf16.gmra.mrb[0].mxu0 %v2765
        %v5695 = vpop.f32.mrb[0].mxu0
        %v5696 = vadd.f32 %v5583, %v5695
        %v5697 = vpop.f32.mrb[0].mxu0
        %v5698 = vadd.f32 %v5585, %v5697
        %v5699 = vpop.f32.mrb[0].mxu0
        %v5700 = vadd.f32 %v5587, %v5699
        %v5701 = vpop.f32.mrb[0].mxu0
        %v5702 = vadd.f32 %v5589, %v5701
        %5703 = vmatprep.mubr.bf16.mxu0 %v2771
        %5704 = vmatmul.mubr.bf16.gmra.mrb[0].mxu0 %v2770
        %v5705 = vpop.f32.mrb[0].mxu0
        %v5706 = vadd.f32 %v5593, %v5705
        %v5707 = vpop.f32.mrb[0].mxu0
        %v5708 = vadd.f32 %v5595, %v5707
        %v5709 = vpop.f32.mrb[0].mxu0
        %v5710 = vadd.f32 %v5597, %v5709
        %v5711 = vpop.f32.mrb[0].mxu0
        %v5712 = vadd.f32 %v5599, %v5711
        %5713 = vdwg.mxu0
        %5714 = vmatprep.subr.bf16.mxu0 %v4166
        %5715 = vmatpush1.bf16.msra.mxu0 %v4165
        %5716 = vmatprep.subr.bf16.mxu0 %v4174
        %5717 = vmatpush1.bf16.msra.mxu0 %v4173
        %5718 = vmatprep.subr.bf16.mxu0 0
        %5719 = vmatpush1.bf16.msra.mxu0 0
        %5720 = vmatprep.subr.bf16.mxu0 0
        %5721 = vmatpush1.bf16.msra.mxu0 0
        %5722 = vmatprep.subr.bf16.mxu0 0
        %5723 = vmatpush1.bf16.msra.mxu0 0
        %5724 = vmatprep.subr.bf16.mxu0 0
        %5725 = vmatpush1.bf16.msra.mxu0 0
        %5726 = vmatprep.subr.bf16.mxu0 0
        %5727 = vmatpush1.bf16.msra.mxu0 0
        %5728 = vmatprep.subr.bf16.mxu0 0
        %5729 = vmatpush1.bf16.msra.mxu0 0
        %5730 = vmatprep.subr.bf16.mxu0 0
        %5731 = vmatpush1.bf16.msra.mxu0 0
        %5732 = vmatprep.subr.bf16.mxu0 0
        %5733 = vmatpush1.bf16.msra.mxu0 0
        %5734 = vmatprep.subr.bf16.mxu0 0
        %5735 = vmatpush1.bf16.msra.mxu0 0
        %5736 = vmatprep.subr.bf16.mxu0 0
        %5737 = vmatpush1.bf16.msra.mxu0 0
        %5738 = vmatprep.subr.bf16.mxu0 0
        %5739 = vmatpush1.bf16.msra.mxu0 0
        %5740 = vmatprep.subr.bf16.mxu0 0
        %5741 = vmatpush1.bf16.msra.mxu0 0
        %5742 = vmatprep.subr.bf16.mxu0 0
        %5743 = vmatpush1.bf16.msra.mxu0 0
        %5744 = vmatprep.subr.bf16.mxu0 0
        %5745 = vmatpush1.bf16.msra.mxu0 0
        %5746 = vmatprep.mubr.bf16.mxu0 0
        %5747 = vmatmul.mubr.bf16.gmra.mrb[0].mxu0 %v4448
        %v5748 = vpop.f32.mrb[0].mxu0
        %v5749 = vadd.f32 %v5636, %v5748
        %v5750 = vpop.f32.mrb[0].mxu0
        %v5751 = vadd.f32 %v5638, %v5750
        %v5752 = vpop.f32.mrb[0].mxu0
        %v5753 = vadd.f32 %v5640, %v5752
        %v5754 = vpop.f32.mrb[0].mxu0
        %v5755 = vadd.f32 %v5642, %v5754
        %5756 = vmatprep.mubr.bf16.mxu0 0
        %5757 = vmatmul.mubr.bf16.gmra.mrb[0].mxu0 %v4451
        %v5758 = vpop.f32.mrb[0].mxu0
        %v5759 = vadd.f32 %v5646, %v5758
        %v5760 = vpop.f32.mrb[0].mxu0
        %v5761 = vadd.f32 %v5648, %v5760
        %v5762 = vpop.f32.mrb[0].mxu0
        %v5763 = vadd.f32 %v5650, %v5762
        %v5764 = vpop.f32.mrb[0].mxu0
        %v5765 = vadd.f32 %v5652, %v5764
        %5766 = vmatprep.mubr.bf16.mxu0 0
        %5767 = vmatmul.mubr.bf16.gmra.mrb[0].mxu0 %v4454
        %v5768 = vpop.f32.mrb[0].mxu0
        %v5769 = vadd.f32 %v5656, %v5768
        %v5770 = vpop.f32.mrb[0].mxu0
        %v5771 = vadd.f32 %v5658, %v5770
        %v5772 = vpop.f32.mrb[0].mxu0
        %v5773 = vadd.f32 %v5660, %v5772
        %v5774 = vpop.f32.mrb[0].mxu0
        %v5775 = vadd.f32 %v5662, %v5774
        %5776 = vmatprep.mubr.bf16.mxu0 0
        %5777 = vmatmul.mubr.bf16.gmra.mrb[0].mxu0 %v4457
        %v5778 = vpop.f32.mrb[0].mxu0
        %v5779 = vadd.f32 %v5666, %v5778
        %v5780 = vpop.f32.mrb[0].mxu0
        %v5781 = vadd.f32 %v5668, %v5780
        %v5782 = vpop.f32.mrb[0].mxu0
        %v5783 = vadd.f32 %v5670, %v5782
        %v5784 = vpop.f32.mrb[0].mxu0
        %v5785 = vadd.f32 %v5672, %v5784
        %5786 = vmatprep.mubr.bf16.mxu0 0
        %5787 = vmatmul.mubr.bf16.gmra.mrb[0].mxu0 %v4460
        %v5788 = vpop.f32.mrb[0].mxu0
        %v5789 = vadd.f32 %v5676, %v5788
        %v5790 = vpop.f32.mrb[0].mxu0
        %v5791 = vadd.f32 %v5678, %v5790
        %v5792 = vpop.f32.mrb[0].mxu0
        %v5793 = vadd.f32 %v5680, %v5792
        %v5794 = vpop.f32.mrb[0].mxu0
        %v5795 = vadd.f32 %v5682, %v5794
        %5796 = vmatprep.mubr.bf16.mxu0 0
        %5797 = vmatmul.mubr.bf16.gmra.mrb[0].mxu0 %v4463
        %v5798 = vpop.f32.mrb[0].mxu0
        %v5799 = vadd.f32 %v5686, %v5798
        %v5800 = vpop.f32.mrb[0].mxu0
        %v5801 = vadd.f32 %v5688, %v5800
        %v5802 = vpop.f32.mrb[0].mxu0
        %v5803 = vadd.f32 %v5690, %v5802
        %v5804 = vpop.f32.mrb[0].mxu0
        %v5805 = vadd.f32 %v5692, %v5804
        %5806 = vmatprep.mubr.bf16.mxu0 0
        %5807 = vmatmul.mubr.bf16.gmra.mrb[0].mxu0 %v4466
        %v5808 = vpop.f32.mrb[0].mxu0
        %v5809 = vadd.f32 %v5696, %v5808
        %v5810 = vpop.f32.mrb[0].mxu0
        %v5811 = vadd.f32 %v5698, %v5810
        %v5812 = vpop.f32.mrb[0].mxu0
        %v5813 = vadd.f32 %v5700, %v5812
        %v5814 = vpop.f32.mrb[0].mxu0
        %v5815 = vadd.f32 %v5702, %v5814
        %5816 = vmatprep.mubr.bf16.mxu0 0
        %5817 = vmatmul.mubr.bf16.gmra.mrb[0].mxu0 %v4469
        %v5818 = vpop.f32.mrb[0].mxu0
        %v5819 = vadd.f32 %v5706, %v5818
        %v5820 = vpop.f32.mrb[0].mxu0
        %v5821 = vadd.f32 %v5708, %v5820
        %v5822 = vpop.f32.mrb[0].mxu0
        %v5823 = vadd.f32 %v5710, %v5822
        %v5824 = vpop.f32.mrb[0].mxu0
        %v5825 = vadd.f32 %v5712, %v5824
        %5826 = vdwg.mxu0
        %v5827 = vmax.f32 %v4732, 0.0
        %v5828 = vmax.f32 %v4734, 0.0
        %v5829 = vmax.f32 %v5071, 0.0
        %v5830 = vmax.f32 %v5073, 0.0
        %v5831 = vmax.f32 %v5410, 0.0
        %v5832 = vmax.f32 %v5412, 0.0
        %v5833 = vmax.f32 %v5749, 0.0
        %v5834 = vmax.f32 %v5751, 0.0
        %v5835 = vmax.f32 %v4736, 0.0
        %v5836 = vmax.f32 %v4738, 0.0
        %v5837 = vmax.f32 %v5075, 0.0
        %v5838 = vmax.f32 %v5077, 0.0
        %v5839 = vmax.f32 %v5414, 0.0
        %v5840 = vmax.f32 %v5416, 0.0
        %v5841 = vmax.f32 %v5753, 0.0
        %v5842 = vmax.f32 %v5755, 0.0
        %v5843 = vmax.f32 %v4742, 0.0
        %v5844 = vmax.f32 %v4744, 0.0
        %v5845 = vmax.f32 %v5081, 0.0
        %v5846 = vmax.f32 %v5083, 0.0
        %v5847 = vmax.f32 %v5420, 0.0
        %v5848 = vmax.f32 %v5422, 0.0
        %v5849 = vmax.f32 %v5759, 0.0
        %v5850 = vmax.f32 %v5761, 0.0
        %v5851 = vmax.f32 %v4746, 0.0
        %v5852 = vmax.f32 %v4748, 0.0
        %v5853 = vmax.f32 %v5085, 0.0
        %v5854 = vmax.f32 %v5087, 0.0
        %v5855 = vmax.f32 %v5424, 0.0
        %v5856 = vmax.f32 %v5426, 0.0
        %v5857 = vmax.f32 %v5763, 0.0
        %v5858 = vmax.f32 %v5765, 0.0
        %v5859 = vmax.f32 %v4752, 0.0
        %v5860 = vmax.f32 %v4754, 0.0
        %v5861 = vmax.f32 %v5091, 0.0
        %v5862 = vmax.f32 %v5093, 0.0
        %v5863 = vmax.f32 %v5430, 0.0
        %v5864 = vmax.f32 %v5432, 0.0
        %v5865 = vmax.f32 %v5769, 0.0
        %v5866 = vmax.f32 %v5771, 0.0
        %v5867 = vmax.f32 %v4756, 0.0
        %v5868 = vmax.f32 %v4758, 0.0
        %v5869 = vmax.f32 %v5095, 0.0
        %v5870 = vmax.f32 %v5097, 0.0
        %v5871 = vmax.f32 %v5434, 0.0
        %v5872 = vmax.f32 %v5436, 0.0
        %v5873 = vmax.f32 %v5773, 0.0
        %v5874 = vmax.f32 %v5775, 0.0
        %v5875 = vmax.f32 %v4762, 0.0
        %v5876 = vmax.f32 %v4764, 0.0
        %v5877 = vmax.f32 %v5101, 0.0
        %v5878 = vmax.f32 %v5103, 0.0
        %v5879 = vmax.f32 %v5440, 0.0
        %v5880 = vmax.f32 %v5442, 0.0
        %v5881 = vmax.f32 %v5779, 0.0
        %v5882 = vmax.f32 %v5781, 0.0
        %v5883 = vmax.f32 %v4766, 0.0
        %v5884 = vmax.f32 %v4768, 0.0
        %v5885 = vmax.f32 %v5105, 0.0
        %v5886 = vmax.f32 %v5107, 0.0
        %v5887 = vmax.f32 %v5444, 0.0
        %v5888 = vmax.f32 %v5446, 0.0
        %v5889 = vmax.f32 %v5783, 0.0
        %v5890 = vmax.f32 %v5785, 0.0
        %v5891 = vmax.f32 %v4772, 0.0
        %v5892 = vmax.f32 %v4774, 0.0
        %v5893 = vmax.f32 %v5111, 0.0
        %v5894 = vmax.f32 %v5113, 0.0
        %v5895 = vmax.f32 %v5450, 0.0
        %v5896 = vmax.f32 %v5452, 0.0
        %v5897 = vmax.f32 %v5789, 0.0
        %v5898 = vmax.f32 %v5791, 0.0
        %v5899 = vmax.f32 %v4776, 0.0
        %v5900 = vmax.f32 %v4778, 0.0
        %v5901 = vmax.f32 %v5115, 0.0
        %v5902 = vmax.f32 %v5117, 0.0
        %v5903 = vmax.f32 %v5454, 0.0
        %v5904 = vmax.f32 %v5456, 0.0
        %v5905 = vmax.f32 %v5793, 0.0
        %v5906 = vmax.f32 %v5795, 0.0
        %v5907 = vmax.f32 %v4782, 0.0
        %v5908 = vmax.f32 %v4784, 0.0
        %v5909 = vmax.f32 %v5121, 0.0
        %v5910 = vmax.f32 %v5123, 0.0
        %v5911 = vmax.f32 %v5460, 0.0
        %v5912 = vmax.f32 %v5462, 0.0
        %v5913 = vmax.f32 %v5799, 0.0
        %v5914 = vmax.f32 %v5801, 0.0
        %v5915 = vmax.f32 %v4786, 0.0
        %v5916 = vmax.f32 %v4788, 0.0
        %v5917 = vmax.f32 %v5125, 0.0
        %v5918 = vmax.f32 %v5127, 0.0
        %v5919 = vmax.f32 %v5464, 0.0
        %v5920 = vmax.f32 %v5466, 0.0
        %v5921 = vmax.f32 %v5803, 0.0
        %v5922 = vmax.f32 %v5805, 0.0
        %v5923 = vmax.f32 %v4792, 0.0
        %v5924 = vmax.f32 %v4794, 0.0
        %v5925 = vmax.f32 %v5131, 0.0
        %v5926 = vmax.f32 %v5133, 0.0
        %v5927 = vmax.f32 %v5470, 0.0
        %v5928 = vmax.f32 %v5472, 0.0
        %v5929 = vmax.f32 %v5809, 0.0
        %v5930 = vmax.f32 %v5811, 0.0
        %v5931 = vmax.f32 %v4796, 0.0
        %v5932 = vmax.f32 %v4798, 0.0
        %v5933 = vmax.f32 %v5135, 0.0
        %v5934 = vmax.f32 %v5137, 0.0
        %v5935 = vmax.f32 %v5474, 0.0
        %v5936 = vmax.f32 %v5476, 0.0
        %v5937 = vmax.f32 %v5813, 0.0
        %v5938 = vmax.f32 %v5815, 0.0
        %v5939 = vmax.f32 %v4802, 0.0
        %v5940 = vmax.f32 %v4804, 0.0
        %v5941 = vmax.f32 %v5141, 0.0
        %v5942 = vmax.f32 %v5143, 0.0
        %v5943 = vmax.f32 %v5480, 0.0
        %v5944 = vmax.f32 %v5482, 0.0
        %v5945 = vmax.f32 %v5819, 0.0
        %v5946 = vmax.f32 %v5821, 0.0
        %v5947 = vmax.f32 %v4806, 0.0
        %v5948 = vmax.f32 %v4808, 0.0
        %v5949 = vmax.f32 %v5145, 0.0
        %v5950 = vmax.f32 %v5147, 0.0
        %v5951 = vmax.f32 %v5484, 0.0
        %v5952 = vmax.f32 %v5486, 0.0
        %v5953 = vmax.f32 %v5823, 0.0
        %v5954 = vmax.f32 %v5825, 0.0
        %v5955 = vpack.c.bf16 %v5835, %v5827
        %v5956 = vpack.c.bf16 %v5836, %v5828
        %v5957 = vpack.c.bf16 %v5837, %v5829
        %v5958 = vpack.c.bf16 %v5838, %v5830
        %v5959 = vpack.c.bf16 %v5839, %v5831
        %v5960 = vpack.c.bf16 %v5840, %v5832
        %v5961 = vpack.c.bf16 %v5841, %v5833
        %v5962 = vpack.c.bf16 %v5842, %v5834
        %v5963 = vpack.c.bf16 %v5851, %v5843
        %v5964 = vpack.c.bf16 %v5852, %v5844
        %v5965 = vpack.c.bf16 %v5853, %v5845
        %v5966 = vpack.c.bf16 %v5854, %v5846
        %v5967 = vpack.c.bf16 %v5855, %v5847
        %v5968 = vpack.c.bf16 %v5856, %v5848
        %v5969 = vpack.c.bf16 %v5857, %v5849
        %v5970 = vpack.c.bf16 %v5858, %v5850
        %v5971 = vpack.c.bf16 %v5867, %v5859
        %v5972 = vpack.c.bf16 %v5868, %v5860
        %v5973 = vpack.c.bf16 %v5869, %v5861
        %v5974 = vpack.c.bf16 %v5870, %v5862
        %v5975 = vpack.c.bf16 %v5871, %v5863
        %v5976 = vpack.c.bf16 %v5872, %v5864
        %v5977 = vpack.c.bf16 %v5873, %v5865
        %v5978 = vpack.c.bf16 %v5874, %v5866
        %v5979 = vpack.c.bf16 %v5883, %v5875
        %v5980 = vpack.c.bf16 %v5884, %v5876
        %v5981 = vpack.c.bf16 %v5885, %v5877
        %v5982 = vpack.c.bf16 %v5886, %v5878
        %v5983 = vpack.c.bf16 %v5887, %v5879
        %v5984 = vpack.c.bf16 %v5888, %v5880
        %v5985 = vpack.c.bf16 %v5889, %v5881
        %v5986 = vpack.c.bf16 %v5890, %v5882
        %v5987 = vpack.c.bf16 %v5899, %v5891
        %v5988 = vpack.c.bf16 %v5900, %v5892
        %v5989 = vpack.c.bf16 %v5901, %v5893
        %v5990 = vpack.c.bf16 %v5902, %v5894
        %v5991 = vpack.c.bf16 %v5903, %v5895
        %v5992 = vpack.c.bf16 %v5904, %v5896
        %v5993 = vpack.c.bf16 %v5905, %v5897
        %v5994 = vpack.c.bf16 %v5906, %v5898
        %v5995 = vpack.c.bf16 %v5915, %v5907
        %v5996 = vpack.c.bf16 %v5916, %v5908
        %v5997 = vpack.c.bf16 %v5917, %v5909
        %v5998 = vpack.c.bf16 %v5918, %v5910
        %v5999 = vpack.c.bf16 %v5919, %v5911
        %v6000 = vpack.c.bf16 %v5920, %v5912
        %v6001 = vpack.c.bf16 %v5921, %v5913
        %v6002 = vpack.c.bf16 %v5922, %v5914
        %v6003 = vpack.c.bf16 %v5931, %v5923
        %v6004 = vpack.c.bf16 %v5932, %v5924
        %v6005 = vpack.c.bf16 %v5933, %v5925
        %v6006 = vpack.c.bf16 %v5934, %v5926
        %v6007 = vpack.c.bf16 %v5935, %v5927
        %v6008 = vpack.c.bf16 %v5936, %v5928
        %v6009 = vpack.c.bf16 %v5937, %v5929
        %v6010 = vpack.c.bf16 %v5938, %v5930
        %v6011 = vpack.c.bf16 %v5947, %v5939
        %v6012 = vpack.c.bf16 %v5948, %v5940
        %v6013 = vpack.c.bf16 %v5949, %v5941
        %v6014 = vpack.c.bf16 %v5950, %v5942
        %v6015 = vpack.c.bf16 %v5951, %v5943
        %v6016 = vpack.c.bf16 %v5952, %v5944
        %v6017 = vpack.c.bf16 %v5953, %v5945
        %v6018 = vpack.c.bf16 %v5954, %v5946
        %v6019 = vld [vmem:[#allocation15] sm:$0xff]
        %v6020 = vld [vmem:[#allocation15 + $0x8] sm:$0xff]
        %v6021 = vld [vmem:[#allocation15 + $0x10] sm:$0xff]
        %v6022 = vld [vmem:[#allocation15 + $0x18] sm:$0xff]
        %v6023 = vld [vmem:[#allocation15 + $0x20] sm:$0xff]
        %v6024 = vld [vmem:[#allocation15 + $0x28] sm:$0xff]
        %v6025 = vld [vmem:[#allocation15 + $0x30] sm:$0xff]
        %v6026 = vld [vmem:[#allocation15 + $0x38] sm:$0xff]
        %v6027 = vld [vmem:[#allocation15 + $0x40] sm:$0xff]
        %v6028 = vld [vmem:[#allocation15 + $0x48] sm:$0xff]
        %v6029 = vld [vmem:[#allocation15 + $0x50] sm:$0xff]
        %v6030 = vld [vmem:[#allocation15 + $0x58] sm:$0xff]
        %v6031 = vld [vmem:[#allocation15 + $0x60] sm:$0xff]
        %v6032 = vld [vmem:[#allocation15 + $0x68] sm:$0xff]
        %v6033 = vld [vmem:[#allocation15 + $0x70] sm:$0xff]
        %v6034 = vld [vmem:[#allocation15 + $0x78] sm:$0xff]
        %v6035 = vld [vmem:[#allocation15 + $0x80] sm:$0xff]
        %v6036 = vld [vmem:[#allocation15 + $0x88] sm:$0xff]
        %v6037 = vld [vmem:[#allocation15 + $0x90] sm:$0xff]
        %v6038 = vld [vmem:[#allocation15 + $0x98] sm:$0xff]
        %v6039 = vld [vmem:[#allocation15 + $0xa0] sm:$0xff]
        %v6040 = vld [vmem:[#allocation15 + $0xa8] sm:$0xff]
        %v6041 = vld [vmem:[#allocation15 + $0xb0] sm:$0xff]
        %v6042 = vld [vmem:[#allocation15 + $0xb8] sm:$0xff]
        %v6043 = vld [vmem:[#allocation15 + $0xc0] sm:$0xff]
        %v6044 = vld [vmem:[#allocation15 + $0xc8] sm:$0xff]
        %v6045 = vld [vmem:[#allocation15 + $0xd0] sm:$0xff]
        %v6046 = vld [vmem:[#allocation15 + $0xd8] sm:$0xff]
        %v6047 = vld [vmem:[#allocation15 + $0xe0] sm:$0xff]
        %v6048 = vld [vmem:[#allocation15 + $0xe8] sm:$0xff]
        %v6049 = vld [vmem:[#allocation15 + $0xf0] sm:$0xff]
        %v6050 = vld [vmem:[#allocation15 + $0xf8] sm:$0xff]
        %v6051 = vld [vmem:[#allocation15 + $0x100] sm:$0xff]
        %v6052 = vld [vmem:[#allocation15 + $0x108] sm:$0xff]
        %v6053 = vld [vmem:[#allocation15 + $0x110] sm:$0xff]
        %v6054 = vld [vmem:[#allocation15 + $0x118] sm:$0xff]
        %v6055 = vld [vmem:[#allocation15 + $0x120] sm:$0xff]
        %v6056 = vld [vmem:[#allocation15 + $0x128] sm:$0xff]
        %v6057 = vld [vmem:[#allocation15 + $0x130] sm:$0xff]
        %v6058 = vld [vmem:[#allocation15 + $0x138] sm:$0xff]
        %v6059 = vld [vmem:[#allocation15 + $0x140] sm:$0xff]
        %v6060 = vld [vmem:[#allocation15 + $0x148] sm:$0xff]
        %v6061 = vld [vmem:[#allocation15 + $0x150] sm:$0xff]
        %v6062 = vld [vmem:[#allocation15 + $0x158] sm:$0xff]
        %v6063 = vld [vmem:[#allocation15 + $0x160] sm:$0xff]
        %v6064 = vld [vmem:[#allocation15 + $0x168] sm:$0xff]
        %v6065 = vld [vmem:[#allocation15 + $0x170] sm:$0xff]
        %v6066 = vld [vmem:[#allocation15 + $0x178] sm:$0xff]
        %v6067 = vld [vmem:[#allocation15 + $0x180] sm:$0xff]
        %v6068 = vld [vmem:[#allocation15 + $0x188] sm:$0xff]
        %v6069 = vld [vmem:[#allocation15 + $0x190] sm:$0xff]
        %v6070 = vld [vmem:[#allocation15 + $0x198] sm:$0xff]
        %v6071 = vld [vmem:[#allocation15 + $0x1a0] sm:$0xff]
        %v6072 = vld [vmem:[#allocation15 + $0x1a8] sm:$0xff]
        %v6073 = vld [vmem:[#allocation15 + $0x1b0] sm:$0xff]
        %v6074 = vld [vmem:[#allocation15 + $0x1b8] sm:$0xff]
        %v6075 = vld [vmem:[#allocation15 + $0x1c0] sm:$0xff]
        %v6076 = vld [vmem:[#allocation15 + $0x1c8] sm:$0xff]
        %v6077 = vld [vmem:[#allocation15 + $0x1d0] sm:$0xff]
        %v6078 = vld [vmem:[#allocation15 + $0x1d8] sm:$0xff]
        %v6079 = vld [vmem:[#allocation15 + $0x1e0] sm:$0xff]
        %v6080 = vld [vmem:[#allocation15 + $0x1e8] sm:$0xff]
        %v6081 = vld [vmem:[#allocation15 + $0x1f0] sm:$0xff]
        %v6082 = vld [vmem:[#allocation15 + $0x1f8] sm:$0xff]
        %v6083 = vld [vmem:[#allocation15 + $0x200] sm:$0xff]
        %v6084 = vld [vmem:[#allocation15 + $0x208] sm:$0xff]
        %v6085 = vld [vmem:[#allocation15 + $0x210] sm:$0xff]
        %v6086 = vld [vmem:[#allocation15 + $0x218] sm:$0xff]
        %v6087 = vld [vmem:[#allocation15 + $0x220] sm:$0xff]
        %v6088 = vld [vmem:[#allocation15 + $0x228] sm:$0xff]
        %v6089 = vld [vmem:[#allocation15 + $0x230] sm:$0xff]
        %v6090 = vld [vmem:[#allocation15 + $0x238] sm:$0xff]
        %v6091 = vld [vmem:[#allocation15 + $0x240] sm:$0xff]
        %v6092 = vld [vmem:[#allocation15 + $0x248] sm:$0xff]
        %v6093 = vld [vmem:[#allocation15 + $0x250] sm:$0xff]
        %v6094 = vld [vmem:[#allocation15 + $0x258] sm:$0xff]
        %v6095 = vld [vmem:[#allocation15 + $0x260] sm:$0xff]
        %v6096 = vld [vmem:[#allocation15 + $0x268] sm:$0xff]
        %v6097 = vld [vmem:[#allocation15 + $0x270] sm:$0xff]
        %v6098 = vld [vmem:[#allocation15 + $0x278] sm:$0xff]
        %v6099 = vld [vmem:[#allocation15 + $0x280] sm:$0xff]
        %v6100 = vld [vmem:[#allocation15 + $0x288] sm:$0xff]
        %v6101 = vld [vmem:[#allocation15 + $0x290] sm:$0xff]
        %v6102 = vld [vmem:[#allocation15 + $0x298] sm:$0xff]
        %v6103 = vld [vmem:[#allocation15 + $0x2a0] sm:$0xff]
        %v6104 = vld [vmem:[#allocation15 + $0x2a8] sm:$0xff]
        %v6105 = vld [vmem:[#allocation15 + $0x2b0] sm:$0xff]
        %v6106 = vld [vmem:[#allocation15 + $0x2b8] sm:$0xff]
        %v6107 = vld [vmem:[#allocation15 + $0x2c0] sm:$0xff]
        %v6108 = vld [vmem:[#allocation15 + $0x2c8] sm:$0xff]
        %v6109 = vld [vmem:[#allocation15 + $0x2d0] sm:$0xff]
        %v6110 = vld [vmem:[#allocation15 + $0x2d8] sm:$0xff]
        %v6111 = vld [vmem:[#allocation15 + $0x2e0] sm:$0xff]
        %v6112 = vld [vmem:[#allocation15 + $0x2e8] sm:$0xff]
        %v6113 = vld [vmem:[#allocation15 + $0x2f0] sm:$0xff]
        %v6114 = vld [vmem:[#allocation15 + $0x2f8] sm:$0xff]
        %v6115 = vld [vmem:[#allocation15 + $0x300] sm:$0xff]
        %v6116 = vld [vmem:[#allocation15 + $0x308] sm:$0xff]
        %v6117 = vld [vmem:[#allocation15 + $0x310] sm:$0xff]
        %v6118 = vld [vmem:[#allocation15 + $0x318] sm:$0xff]
        %v6119 = vld [vmem:[#allocation15 + $0x320] sm:$0xff]
        %v6120 = vld [vmem:[#allocation15 + $0x328] sm:$0xff]
        %v6121 = vld [vmem:[#allocation15 + $0x330] sm:$0xff]
        %v6122 = vld [vmem:[#allocation15 + $0x338] sm:$0xff]
        %v6123 = vld [vmem:[#allocation15 + $0x340] sm:$0xff]
        %v6124 = vld [vmem:[#allocation15 + $0x348] sm:$0xff]
        %v6125 = vld [vmem:[#allocation15 + $0x350] sm:$0xff]
        %v6126 = vld [vmem:[#allocation15 + $0x358] sm:$0xff]
        %v6127 = vld [vmem:[#allocation15 + $0x360] sm:$0xff]
        %v6128 = vld [vmem:[#allocation15 + $0x368] sm:$0xff]
        %v6129 = vld [vmem:[#allocation15 + $0x370] sm:$0xff]
        %v6130 = vld [vmem:[#allocation15 + $0x378] sm:$0xff]
        %v6131 = vld [vmem:[#allocation15 + $0x380] sm:$0xff]
        %v6132 = vld [vmem:[#allocation15 + $0x388] sm:$0xff]
        %v6133 = vld [vmem:[#allocation15 + $0x390] sm:$0xff]
        %v6134 = vld [vmem:[#allocation15 + $0x398] sm:$0xff]
        %v6135 = vld [vmem:[#allocation15 + $0x3a0] sm:$0xff]
        %v6136 = vld [vmem:[#allocation15 + $0x3a8] sm:$0xff]
        %v6137 = vld [vmem:[#allocation15 + $0x3b0] sm:$0xff]
        %v6138 = vld [vmem:[#allocation15 + $0x3b8] sm:$0xff]
        %v6139 = vld [vmem:[#allocation15 + $0x3c0] sm:$0xff]
        %v6140 = vld [vmem:[#allocation15 + $0x3c8] sm:$0xff]
        %v6141 = vld [vmem:[#allocation15 + $0x3d0] sm:$0xff]
        %v6142 = vld [vmem:[#allocation15 + $0x3d8] sm:$0xff]
        %v6143 = vld [vmem:[#allocation15 + $0x3e0] sm:$0xff]
        %v6144 = vld [vmem:[#allocation15 + $0x3e8] sm:$0xff]
        %v6145 = vld [vmem:[#allocation15 + $0x3f0] sm:$0xff]
        %v6146 = vld [vmem:[#allocation15 + $0x3f8] sm:$0xff]
        %v6147 = vld [vmem:[#allocation15 + $0x400] sm:$0xff]
        %v6148 = vld [vmem:[#allocation15 + $0x408] sm:$0xff]
        %v6149 = vld [vmem:[#allocation15 + $0x410] sm:$0xff]
        %v6150 = vld [vmem:[#allocation15 + $0x418] sm:$0xff]
        %v6151 = vld [vmem:[#allocation15 + $0x420] sm:$0xff]
        %v6152 = vld [vmem:[#allocation15 + $0x428] sm:$0xff]
        %v6153 = vld [vmem:[#allocation15 + $0x430] sm:$0xff]
        %v6154 = vld [vmem:[#allocation15 + $0x438] sm:$0xff]
        %v6155 = vld [vmem:[#allocation15 + $0x440] sm:$0xff]
        %v6156 = vld [vmem:[#allocation15 + $0x448] sm:$0xff]
        %v6157 = vld [vmem:[#allocation15 + $0x450] sm:$0xff]
        %v6158 = vld [vmem:[#allocation15 + $0x458] sm:$0xff]
        %v6159 = vld [vmem:[#allocation15 + $0x460] sm:$0xff]
        %v6160 = vld [vmem:[#allocation15 + $0x468] sm:$0xff]
        %v6161 = vld [vmem:[#allocation15 + $0x470] sm:$0xff]
        %v6162 = vld [vmem:[#allocation15 + $0x478] sm:$0xff]
        %v6163 = vld [vmem:[#allocation15 + $0x480] sm:$0xff]
        %v6164 = vld [vmem:[#allocation15 + $0x488] sm:$0xff]
        %v6165 = vld [vmem:[#allocation15 + $0x490] sm:$0xff]
        %v6166 = vld [vmem:[#allocation15 + $0x498] sm:$0xff]
        %v6167 = vld [vmem:[#allocation15 + $0x4a0] sm:$0xff]
        %v6168 = vld [vmem:[#allocation15 + $0x4a8] sm:$0xff]
        %v6169 = vld [vmem:[#allocation15 + $0x4b0] sm:$0xff]
        %v6170 = vld [vmem:[#allocation15 + $0x4b8] sm:$0xff]
        %v6171 = vld [vmem:[#allocation15 + $0x4c0] sm:$0xff]
        %v6172 = vld [vmem:[#allocation15 + $0x4c8] sm:$0xff]
        %v6173 = vld [vmem:[#allocation15 + $0x4d0] sm:$0xff]
        %v6174 = vld [vmem:[#allocation15 + $0x4d8] sm:$0xff]
        %v6175 = vld [vmem:[#allocation15 + $0x4e0] sm:$0xff]
        %v6176 = vld [vmem:[#allocation15 + $0x4e8] sm:$0xff]
        %v6177 = vld [vmem:[#allocation15 + $0x4f0] sm:$0xff]
        %v6178 = vld [vmem:[#allocation15 + $0x4f8] sm:$0xff]
        %v6179 = vld [vmem:[#allocation15 + $0x500] sm:$0xff]
        %v6180 = vld [vmem:[#allocation15 + $0x508] sm:$0xff]
        %v6181 = vld [vmem:[#allocation15 + $0x510] sm:$0xff]
        %v6182 = vld [vmem:[#allocation15 + $0x518] sm:$0xff]
        %v6183 = vld [vmem:[#allocation15 + $0x520] sm:$0xff]
        %v6184 = vld [vmem:[#allocation15 + $0x528] sm:$0xff]
        %v6185 = vld [vmem:[#allocation15 + $0x530] sm:$0xff]
        %v6186 = vld [vmem:[#allocation15 + $0x538] sm:$0xff]
        %v6187 = vld [vmem:[#allocation15 + $0x540] sm:$0xff]
        %v6188 = vld [vmem:[#allocation15 + $0x548] sm:$0xff]
        %v6189 = vld [vmem:[#allocation15 + $0x550] sm:$0xff]
        %v6190 = vld [vmem:[#allocation15 + $0x558] sm:$0xff]
        %v6191 = vld [vmem:[#allocation15 + $0x560] sm:$0xff]
        %v6192 = vld [vmem:[#allocation15 + $0x568] sm:$0xff]
        %v6193 = vld [vmem:[#allocation15 + $0x570] sm:$0xff]
        %v6194 = vld [vmem:[#allocation15 + $0x578] sm:$0xff]
        %v6195 = vld [vmem:[#allocation15 + $0x580] sm:$0xff]
        %v6196 = vld [vmem:[#allocation15 + $0x588] sm:$0xff]
        %v6197 = vld [vmem:[#allocation15 + $0x590] sm:$0xff]
        %v6198 = vld [vmem:[#allocation15 + $0x598] sm:$0xff]
        %v6199 = vld [vmem:[#allocation15 + $0x5a0] sm:$0xff]
        %v6200 = vld [vmem:[#allocation15 + $0x5a8] sm:$0xff]
        %v6201 = vld [vmem:[#allocation15 + $0x5b0] sm:$0xff]
        %v6202 = vld [vmem:[#allocation15 + $0x5b8] sm:$0xff]
        %v6203 = vld [vmem:[#allocation15 + $0x5c0] sm:$0xff]
        %v6204 = vld [vmem:[#allocation15 + $0x5c8] sm:$0xff]
        %v6205 = vld [vmem:[#allocation15 + $0x5d0] sm:$0xff]
        %v6206 = vld [vmem:[#allocation15 + $0x5d8] sm:$0xff]
        %v6207 = vld [vmem:[#allocation15 + $0x5e0] sm:$0xff]
        %v6208 = vld [vmem:[#allocation15 + $0x5e8] sm:$0xff]
        %v6209 = vld [vmem:[#allocation15 + $0x5f0] sm:$0xff]
        %v6210 = vld [vmem:[#allocation15 + $0x5f8] sm:$0xff]
        %v6211 = vld [vmem:[#allocation15 + $0x600] sm:$0xff]
        %v6212 = vld [vmem:[#allocation15 + $0x608] sm:$0xff]
        %v6213 = vld [vmem:[#allocation15 + $0x610] sm:$0xff]
        %v6214 = vld [vmem:[#allocation15 + $0x618] sm:$0xff]
        %v6215 = vld [vmem:[#allocation15 + $0x620] sm:$0xff]
        %v6216 = vld [vmem:[#allocation15 + $0x628] sm:$0xff]
        %v6217 = vld [vmem:[#allocation15 + $0x630] sm:$0xff]
        %v6218 = vld [vmem:[#allocation15 + $0x638] sm:$0xff]
        %v6219 = vld [vmem:[#allocation15 + $0x640] sm:$0xff]
        %v6220 = vld [vmem:[#allocation15 + $0x648] sm:$0xff]
        %v6221 = vld [vmem:[#allocation15 + $0x650] sm:$0xff]
        %v6222 = vld [vmem:[#allocation15 + $0x658] sm:$0xff]
        %v6223 = vld [vmem:[#allocation15 + $0x660] sm:$0xff]
        %v6224 = vld [vmem:[#allocation15 + $0x668] sm:$0xff]
        %v6225 = vld [vmem:[#allocation15 + $0x670] sm:$0xff]
        %v6226 = vld [vmem:[#allocation15 + $0x678] sm:$0xff]
        %v6227 = vld [vmem:[#allocation15 + $0x680] sm:$0xff]
        %v6228 = vld [vmem:[#allocation15 + $0x688] sm:$0xff]
        %v6229 = vld [vmem:[#allocation15 + $0x690] sm:$0xff]
        %v6230 = vld [vmem:[#allocation15 + $0x698] sm:$0xff]
        %v6231 = vld [vmem:[#allocation15 + $0x6a0] sm:$0xff]
        %v6232 = vld [vmem:[#allocation15 + $0x6a8] sm:$0xff]
        %v6233 = vld [vmem:[#allocation15 + $0x6b0] sm:$0xff]
        %v6234 = vld [vmem:[#allocation15 + $0x6b8] sm:$0xff]
        %v6235 = vld [vmem:[#allocation15 + $0x6c0] sm:$0xff]
        %v6236 = vld [vmem:[#allocation15 + $0x6c8] sm:$0xff]
        %v6237 = vld [vmem:[#allocation15 + $0x6d0] sm:$0xff]
        %v6238 = vld [vmem:[#allocation15 + $0x6d8] sm:$0xff]
        %v6239 = vld [vmem:[#allocation15 + $0x6e0] sm:$0xff]
        %v6240 = vld [vmem:[#allocation15 + $0x6e8] sm:$0xff]
        %v6241 = vld [vmem:[#allocation15 + $0x6f0] sm:$0xff]
        %v6242 = vld [vmem:[#allocation15 + $0x6f8] sm:$0xff]
        %v6243 = vld [vmem:[#allocation15 + $0x700] sm:$0xff]
        %v6244 = vld [vmem:[#allocation15 + $0x708] sm:$0xff]
        %v6245 = vld [vmem:[#allocation15 + $0x710] sm:$0xff]
        %v6246 = vld [vmem:[#allocation15 + $0x718] sm:$0xff]
        %v6247 = vld [vmem:[#allocation15 + $0x720] sm:$0xff]
        %v6248 = vld [vmem:[#allocation15 + $0x728] sm:$0xff]
        %v6249 = vld [vmem:[#allocation15 + $0x730] sm:$0xff]
        %v6250 = vld [vmem:[#allocation15 + $0x738] sm:$0xff]
        %v6251 = vld [vmem:[#allocation15 + $0x740] sm:$0xff]
        %v6252 = vld [vmem:[#allocation15 + $0x748] sm:$0xff]
        %v6253 = vld [vmem:[#allocation15 + $0x750] sm:$0xff]
        %v6254 = vld [vmem:[#allocation15 + $0x758] sm:$0xff]
        %v6255 = vld [vmem:[#allocation15 + $0x760] sm:$0xff]
        %v6256 = vld [vmem:[#allocation15 + $0x768] sm:$0xff]
        %v6257 = vld [vmem:[#allocation15 + $0x770] sm:$0xff]
        %v6258 = vld [vmem:[#allocation15 + $0x778] sm:$0xff]
        %v6259 = vld [vmem:[#allocation15 + $0x780] sm:$0xff]
        %v6260 = vld [vmem:[#allocation15 + $0x788] sm:$0xff]
        %v6261 = vld [vmem:[#allocation15 + $0x790] sm:$0xff]
        %v6262 = vld [vmem:[#allocation15 + $0x798] sm:$0xff]
        %v6263 = vld [vmem:[#allocation15 + $0x7a0] sm:$0xff]
        %v6264 = vld [vmem:[#allocation15 + $0x7a8] sm:$0xff]
        %v6265 = vld [vmem:[#allocation15 + $0x7b0] sm:$0xff]
        %v6266 = vld [vmem:[#allocation15 + $0x7b8] sm:$0xff]
        %v6267 = vld [vmem:[#allocation15 + $0x7c0] sm:$0xff]
        %v6268 = vld [vmem:[#allocation15 + $0x7c8] sm:$0xff]
        %v6269 = vld [vmem:[#allocation15 + $0x7d0] sm:$0xff]
        %v6270 = vld [vmem:[#allocation15 + $0x7d8] sm:$0xff]
        %v6271 = vld [vmem:[#allocation15 + $0x7e0] sm:$0xff]
        %v6272 = vld [vmem:[#allocation15 + $0x7e8] sm:$0xff]
        %v6273 = vld [vmem:[#allocation15 + $0x7f0] sm:$0xff]
        %v6274 = vld [vmem:[#allocation15 + $0x7f8] sm:$0xff]
        %v6275 = vld [vmem:[#allocation15 + $0x800] sm:$0xff]
        %v6276 = vld [vmem:[#allocation15 + $0x808] sm:$0xff]
        %v6277 = vld [vmem:[#allocation15 + $0x810] sm:$0xff]
        %v6278 = vld [vmem:[#allocation15 + $0x818] sm:$0xff]
        %v6279 = vld [vmem:[#allocation15 + $0x820] sm:$0xff]
        %v6280 = vld [vmem:[#allocation15 + $0x828] sm:$0xff]
        %v6281 = vld [vmem:[#allocation15 + $0x830] sm:$0xff]
        %v6282 = vld [vmem:[#allocation15 + $0x838] sm:$0xff]
        %v6283 = vld [vmem:[#allocation15 + $0x840] sm:$0xff]
        %v6284 = vld [vmem:[#allocation15 + $0x848] sm:$0xff]
        %v6285 = vld [vmem:[#allocation15 + $0x850] sm:$0xff]
        %v6286 = vld [vmem:[#allocation15 + $0x858] sm:$0xff]
        %v6287 = vld [vmem:[#allocation15 + $0x860] sm:$0xff]
        %v6288 = vld [vmem:[#allocation15 + $0x868] sm:$0xff]
        %v6289 = vld [vmem:[#allocation15 + $0x870] sm:$0xff]
        %v6290 = vld [vmem:[#allocation15 + $0x878] sm:$0xff]
        %v6291 = vld [vmem:[#allocation15 + $0x880] sm:$0xff]
        %v6292 = vld [vmem:[#allocation15 + $0x888] sm:$0xff]
        %v6293 = vld [vmem:[#allocation15 + $0x890] sm:$0xff]
        %v6294 = vld [vmem:[#allocation15 + $0x898] sm:$0xff]
        %v6295 = vld [vmem:[#allocation15 + $0x8a0] sm:$0xff]
        %v6296 = vld [vmem:[#allocation15 + $0x8a8] sm:$0xff]
        %v6297 = vld [vmem:[#allocation15 + $0x8b0] sm:$0xff]
        %v6298 = vld [vmem:[#allocation15 + $0x8b8] sm:$0xff]
        %v6299 = vld [vmem:[#allocation15 + $0x8c0] sm:$0xff]
        %v6300 = vld [vmem:[#allocation15 + $0x8c8] sm:$0xff]
        %v6301 = vld [vmem:[#allocation15 + $0x8d0] sm:$0xff]
        %v6302 = vld [vmem:[#allocation15 + $0x8d8] sm:$0xff]
        %v6303 = vld [vmem:[#allocation15 + $0x8e0] sm:$0xff]
        %v6304 = vld [vmem:[#allocation15 + $0x8e8] sm:$0xff]
        %v6305 = vld [vmem:[#allocation15 + $0x8f0] sm:$0xff]
        %v6306 = vld [vmem:[#allocation15 + $0x8f8] sm:$0xff]
        %v6307 = vld [vmem:[#allocation15 + $0x900] sm:$0xff]
        %v6308 = vld [vmem:[#allocation15 + $0x908] sm:$0xff]
        %v6309 = vld [vmem:[#allocation15 + $0x910] sm:$0xff]
        %v6310 = vld [vmem:[#allocation15 + $0x918] sm:$0xff]
        %v6311 = vld [vmem:[#allocation15 + $0x920] sm:$0xff]
        %v6312 = vld [vmem:[#allocation15 + $0x928] sm:$0xff]
        %v6313 = vld [vmem:[#allocation15 + $0x930] sm:$0xff]
        %v6314 = vld [vmem:[#allocation15 + $0x938] sm:$0xff]
        %v6315 = vld [vmem:[#allocation15 + $0x940] sm:$0xff]
        %v6316 = vld [vmem:[#allocation15 + $0x948] sm:$0xff]
        %v6317 = vld [vmem:[#allocation15 + $0x950] sm:$0xff]
        %v6318 = vld [vmem:[#allocation15 + $0x958] sm:$0xff]
        %v6319 = vld [vmem:[#allocation15 + $0x960] sm:$0xff]
        %v6320 = vld [vmem:[#allocation15 + $0x968] sm:$0xff]
        %v6321 = vld [vmem:[#allocation15 + $0x970] sm:$0xff]
        %v6322 = vld [vmem:[#allocation15 + $0x978] sm:$0xff]
        %v6323 = vld [vmem:[#allocation15 + $0x980] sm:$0xff]
        %v6324 = vld [vmem:[#allocation15 + $0x988] sm:$0xff]
        %v6325 = vld [vmem:[#allocation15 + $0x990] sm:$0xff]
        %v6326 = vld [vmem:[#allocation15 + $0x998] sm:$0xff]
        %v6327 = vld [vmem:[#allocation15 + $0x9a0] sm:$0xff]
        %v6328 = vld [vmem:[#allocation15 + $0x9a8] sm:$0xff]
        %v6329 = vld [vmem:[#allocation15 + $0x9b0] sm:$0xff]
        %v6330 = vld [vmem:[#allocation15 + $0x9b8] sm:$0xff]
        %v6331 = vld [vmem:[#allocation15 + $0x9c0] sm:$0xff]
        %v6332 = vld [vmem:[#allocation15 + $0x9c8] sm:$0xff]
        %v6333 = vld [vmem:[#allocation15 + $0x9d0] sm:$0xff]
        %v6334 = vld [vmem:[#allocation15 + $0x9d8] sm:$0xff]
        %v6335 = vld [vmem:[#allocation15 + $0x9e0] sm:$0xff]
        %v6336 = vld [vmem:[#allocation15 + $0x9e8] sm:$0xff]
        %v6337 = vld [vmem:[#allocation15 + $0x9f0] sm:$0xff]
        %v6338 = vld [vmem:[#allocation15 + $0x9f8] sm:$0xff]
        %v6339 = vld [vmem:[#allocation15 + $0xa00] sm:$0xff]
        %v6340 = vld [vmem:[#allocation15 + $0xa08] sm:$0xff]
        %v6341 = vld [vmem:[#allocation15 + $0xa10] sm:$0xff]
        %v6342 = vld [vmem:[#allocation15 + $0xa18] sm:$0xff]
        %v6343 = vld [vmem:[#allocation15 + $0xa20] sm:$0xff]
        %v6344 = vld [vmem:[#allocation15 + $0xa28] sm:$0xff]
        %v6345 = vld [vmem:[#allocation15 + $0xa30] sm:$0xff]
        %v6346 = vld [vmem:[#allocation15 + $0xa38] sm:$0xff]
        %v6347 = vld [vmem:[#allocation15 + $0xa40] sm:$0xff]
        %v6348 = vld [vmem:[#allocation15 + $0xa48] sm:$0xff]
        %v6349 = vld [vmem:[#allocation15 + $0xa50] sm:$0xff]
        %v6350 = vld [vmem:[#allocation15 + $0xa58] sm:$0xff]
        %v6351 = vld [vmem:[#allocation15 + $0xa60] sm:$0xff]
        %v6352 = vld [vmem:[#allocation15 + $0xa68] sm:$0xff]
        %v6353 = vld [vmem:[#allocation15 + $0xa70] sm:$0xff]
        %v6354 = vld [vmem:[#allocation15 + $0xa78] sm:$0xff]
        %v6355 = vld [vmem:[#allocation15 + $0xa80] sm:$0xff]
        %v6356 = vld [vmem:[#allocation15 + $0xa88] sm:$0xff]
        %v6357 = vld [vmem:[#allocation15 + $0xa90] sm:$0xff]
        %v6358 = vld [vmem:[#allocation15 + $0xa98] sm:$0xff]
        %v6359 = vld [vmem:[#allocation15 + $0xaa0] sm:$0xff]
        %v6360 = vld [vmem:[#allocation15 + $0xaa8] sm:$0xff]
        %v6361 = vld [vmem:[#allocation15 + $0xab0] sm:$0xff]
        %v6362 = vld [vmem:[#allocation15 + $0xab8] sm:$0xff]
        %v6363 = vld [vmem:[#allocation15 + $0xac0] sm:$0xff]
        %v6364 = vld [vmem:[#allocation15 + $0xac8] sm:$0xff]
        %v6365 = vld [vmem:[#allocation15 + $0xad0] sm:$0xff]
        %v6366 = vld [vmem:[#allocation15 + $0xad8] sm:$0xff]
        %v6367 = vld [vmem:[#allocation15 + $0xae0] sm:$0xff]
        %v6368 = vld [vmem:[#allocation15 + $0xae8] sm:$0xff]
        %v6369 = vld [vmem:[#allocation15 + $0xaf0] sm:$0xff]
        %v6370 = vld [vmem:[#allocation15 + $0xaf8] sm:$0xff]
        %v6371 = vld [vmem:[#allocation15 + $0xb00] sm:$0xff]
        %v6372 = vld [vmem:[#allocation15 + $0xb08] sm:$0xff]
        %v6373 = vld [vmem:[#allocation15 + $0xb10] sm:$0xff]
        %v6374 = vld [vmem:[#allocation15 + $0xb18] sm:$0xff]
        %v6375 = vld [vmem:[#allocation15 + $0xb20] sm:$0xff]
        %v6376 = vld [vmem:[#allocation15 + $0xb28] sm:$0xff]
        %v6377 = vld [vmem:[#allocation15 + $0xb30] sm:$0xff]
        %v6378 = vld [vmem:[#allocation15 + $0xb38] sm:$0xff]
        %v6379 = vld [vmem:[#allocation15 + $0xb40] sm:$0xff]
        %v6380 = vld [vmem:[#allocation15 + $0xb48] sm:$0xff]
        %v6381 = vld [vmem:[#allocation15 + $0xb50] sm:$0xff]
        %v6382 = vld [vmem:[#allocation15 + $0xb58] sm:$0xff]
        %v6383 = vld [vmem:[#allocation15 + $0xb60] sm:$0xff]
        %v6384 = vld [vmem:[#allocation15 + $0xb68] sm:$0xff]
        %v6385 = vld [vmem:[#allocation15 + $0xb70] sm:$0xff]
        %v6386 = vld [vmem:[#allocation15 + $0xb78] sm:$0xff]
        %v6387 = vld [vmem:[#allocation15 + $0xb80] sm:$0xff]
        %v6388 = vld [vmem:[#allocation15 + $0xb88] sm:$0xff]
        %v6389 = vld [vmem:[#allocation15 + $0xb90] sm:$0xff]
        %v6390 = vld [vmem:[#allocation15 + $0xb98] sm:$0xff]
        %v6391 = vld [vmem:[#allocation15 + $0xba0] sm:$0xff]
        %v6392 = vld [vmem:[#allocation15 + $0xba8] sm:$0xff]
        %v6393 = vld [vmem:[#allocation15 + $0xbb0] sm:$0xff]
        %v6394 = vld [vmem:[#allocation15 + $0xbb8] sm:$0xff]
        %v6395 = vld [vmem:[#allocation15 + $0xbc0] sm:$0xff]
        %v6396 = vld [vmem:[#allocation15 + $0xbc8] sm:$0xff]
        %v6397 = vld [vmem:[#allocation15 + $0xbd0] sm:$0xff]
        %v6398 = vld [vmem:[#allocation15 + $0xbd8] sm:$0xff]
        %v6399 = vld [vmem:[#allocation15 + $0xbe0] sm:$0xff]
        %v6400 = vld [vmem:[#allocation15 + $0xbe8] sm:$0xff]
        %v6401 = vld [vmem:[#allocation15 + $0xbf0] sm:$0xff]
        %v6402 = vld [vmem:[#allocation15 + $0xbf8] sm:$0xff]
        %v6403 = vld [vmem:[#allocation15 + $0xc00] sm:$0xff]
        %v6404 = vld [vmem:[#allocation15 + $0xc08] sm:$0xff]
        %v6405 = vld [vmem:[#allocation15 + $0xc10] sm:$0xff]
        %v6406 = vld [vmem:[#allocation15 + $0xc18] sm:$0xff]
        %v6407 = vld [vmem:[#allocation15 + $0xc20] sm:$0xff]
        %v6408 = vld [vmem:[#allocation15 + $0xc28] sm:$0xff]
        %v6409 = vld [vmem:[#allocation15 + $0xc30] sm:$0xff]
        %v6410 = vld [vmem:[#allocation15 + $0xc38] sm:$0xff]
        %v6411 = vld [vmem:[#allocation15 + $0xc40] sm:$0xff]
        %v6412 = vld [vmem:[#allocation15 + $0xc48] sm:$0xff]
        %v6413 = vld [vmem:[#allocation15 + $0xc50] sm:$0xff]
        %v6414 = vld [vmem:[#allocation15 + $0xc58] sm:$0xff]
        %v6415 = vld [vmem:[#allocation15 + $0xc60] sm:$0xff]
        %v6416 = vld [vmem:[#allocation15 + $0xc68] sm:$0xff]
        %v6417 = vld [vmem:[#allocation15 + $0xc70] sm:$0xff]
        %v6418 = vld [vmem:[#allocation15 + $0xc78] sm:$0xff]
        %v6419 = vld [vmem:[#allocation15 + $0xc80] sm:$0xff]
        %v6420 = vld [vmem:[#allocation15 + $0xc88] sm:$0xff]
        %v6421 = vld [vmem:[#allocation15 + $0xc90] sm:$0xff]
        %v6422 = vld [vmem:[#allocation15 + $0xc98] sm:$0xff]
        %v6423 = vld [vmem:[#allocation15 + $0xca0] sm:$0xff]
        %v6424 = vld [vmem:[#allocation15 + $0xca8] sm:$0xff]
        %v6425 = vld [vmem:[#allocation15 + $0xcb0] sm:$0xff]
        %v6426 = vld [vmem:[#allocation15 + $0xcb8] sm:$0xff]
        %v6427 = vld [vmem:[#allocation15 + $0xcc0] sm:$0xff]
        %v6428 = vld [vmem:[#allocation15 + $0xcc8] sm:$0xff]
        %v6429 = vld [vmem:[#allocation15 + $0xcd0] sm:$0xff]
        %v6430 = vld [vmem:[#allocation15 + $0xcd8] sm:$0xff]
        %v6431 = vld [vmem:[#allocation15 + $0xce0] sm:$0xff]
        %v6432 = vld [vmem:[#allocation15 + $0xce8] sm:$0xff]
        %v6433 = vld [vmem:[#allocation15 + $0xcf0] sm:$0xff]
        %v6434 = vld [vmem:[#allocation15 + $0xcf8] sm:$0xff]
        %v6435 = vld [vmem:[#allocation15 + $0xd00] sm:$0xff]
        %v6436 = vld [vmem:[#allocation15 + $0xd08] sm:$0xff]
        %v6437 = vld [vmem:[#allocation15 + $0xd10] sm:$0xff]
        %v6438 = vld [vmem:[#allocation15 + $0xd18] sm:$0xff]
        %v6439 = vld [vmem:[#allocation15 + $0xd20] sm:$0xff]
        %v6440 = vld [vmem:[#allocation15 + $0xd28] sm:$0xff]
        %v6441 = vld [vmem:[#allocation15 + $0xd30] sm:$0xff]
        %v6442 = vld [vmem:[#allocation15 + $0xd38] sm:$0xff]
        %v6443 = vld [vmem:[#allocation15 + $0xd40] sm:$0xff]
        %v6444 = vld [vmem:[#allocation15 + $0xd48] sm:$0xff]
        %v6445 = vld [vmem:[#allocation15 + $0xd50] sm:$0xff]
        %v6446 = vld [vmem:[#allocation15 + $0xd58] sm:$0xff]
        %v6447 = vld [vmem:[#allocation15 + $0xd60] sm:$0xff]
        %v6448 = vld [vmem:[#allocation15 + $0xd68] sm:$0xff]
        %v6449 = vld [vmem:[#allocation15 + $0xd70] sm:$0xff]
        %v6450 = vld [vmem:[#allocation15 + $0xd78] sm:$0xff]
        %v6451 = vld [vmem:[#allocation15 + $0xd80] sm:$0xff]
        %v6452 = vld [vmem:[#allocation15 + $0xd88] sm:$0xff]
        %v6453 = vld [vmem:[#allocation15 + $0xd90] sm:$0xff]
        %v6454 = vld [vmem:[#allocation15 + $0xd98] sm:$0xff]
        %v6455 = vld [vmem:[#allocation15 + $0xda0] sm:$0xff]
        %v6456 = vld [vmem:[#allocation15 + $0xda8] sm:$0xff]
        %v6457 = vld [vmem:[#allocation15 + $0xdb0] sm:$0xff]
        %v6458 = vld [vmem:[#allocation15 + $0xdb8] sm:$0xff]
        %v6459 = vld [vmem:[#allocation15 + $0xdc0] sm:$0xff]
        %v6460 = vld [vmem:[#allocation15 + $0xdc8] sm:$0xff]
        %v6461 = vld [vmem:[#allocation15 + $0xdd0] sm:$0xff]
        %v6462 = vld [vmem:[#allocation15 + $0xdd8] sm:$0xff]
        %v6463 = vld [vmem:[#allocation15 + $0xde0] sm:$0xff]
        %v6464 = vld [vmem:[#allocation15 + $0xde8] sm:$0xff]
        %v6465 = vld [vmem:[#allocation15 + $0xdf0] sm:$0xff]
        %v6466 = vld [vmem:[#allocation15 + $0xdf8] sm:$0xff]
        %v6467 = vld [vmem:[#allocation15 + $0xe00] sm:$0xff]
        %v6468 = vld [vmem:[#allocation15 + $0xe08] sm:$0xff]
        %v6469 = vld [vmem:[#allocation15 + $0xe10] sm:$0xff]
        %v6470 = vld [vmem:[#allocation15 + $0xe18] sm:$0xff]
        %v6471 = vld [vmem:[#allocation15 + $0xe20] sm:$0xff]
        %v6472 = vld [vmem:[#allocation15 + $0xe28] sm:$0xff]
        %v6473 = vld [vmem:[#allocation15 + $0xe30] sm:$0xff]
        %v6474 = vld [vmem:[#allocation15 + $0xe38] sm:$0xff]
        %v6475 = vld [vmem:[#allocation15 + $0xe40] sm:$0xff]
        %v6476 = vld [vmem:[#allocation15 + $0xe48] sm:$0xff]
        %v6477 = vld [vmem:[#allocation15 + $0xe50] sm:$0xff]
        %v6478 = vld [vmem:[#allocation15 + $0xe58] sm:$0xff]
        %v6479 = vld [vmem:[#allocation15 + $0xe60] sm:$0xff]
        %v6480 = vld [vmem:[#allocation15 + $0xe68] sm:$0xff]
        %v6481 = vld [vmem:[#allocation15 + $0xe70] sm:$0xff]
        %v6482 = vld [vmem:[#allocation15 + $0xe78] sm:$0xff]
        %v6483 = vld [vmem:[#allocation15 + $0xe80] sm:$0xff]
        %v6484 = vld [vmem:[#allocation15 + $0xe88] sm:$0xff]
        %v6485 = vld [vmem:[#allocation15 + $0xe90] sm:$0xff]
        %v6486 = vld [vmem:[#allocation15 + $0xe98] sm:$0xff]
        %v6487 = vld [vmem:[#allocation15 + $0xea0] sm:$0xff]
        %v6488 = vld [vmem:[#allocation15 + $0xea8] sm:$0xff]
        %v6489 = vld [vmem:[#allocation15 + $0xeb0] sm:$0xff]
        %v6490 = vld [vmem:[#allocation15 + $0xeb8] sm:$0xff]
        %v6491 = vld [vmem:[#allocation15 + $0xec0] sm:$0xff]
        %v6492 = vld [vmem:[#allocation15 + $0xec8] sm:$0xff]
        %v6493 = vld [vmem:[#allocation15 + $0xed0] sm:$0xff]
        %v6494 = vld [vmem:[#allocation15 + $0xed8] sm:$0xff]
        %v6495 = vld [vmem:[#allocation15 + $0xee0] sm:$0xff]
        %v6496 = vld [vmem:[#allocation15 + $0xee8] sm:$0xff]
        %v6497 = vld [vmem:[#allocation15 + $0xef0] sm:$0xff]
        %v6498 = vld [vmem:[#allocation15 + $0xef8] sm:$0xff]
        %v6499 = vld [vmem:[#allocation15 + $0xf00] sm:$0xff]
        %v6500 = vld [vmem:[#allocation15 + $0xf08] sm:$0xff]
        %v6501 = vld [vmem:[#allocation15 + $0xf10] sm:$0xff]
        %v6502 = vld [vmem:[#allocation15 + $0xf18] sm:$0xff]
        %v6503 = vld [vmem:[#allocation15 + $0xf20] sm:$0xff]
        %v6504 = vld [vmem:[#allocation15 + $0xf28] sm:$0xff]
        %v6505 = vld [vmem:[#allocation15 + $0xf30] sm:$0xff]
        %v6506 = vld [vmem:[#allocation15 + $0xf38] sm:$0xff]
        %v6507 = vld [vmem:[#allocation15 + $0xf40] sm:$0xff]
        %v6508 = vld [vmem:[#allocation15 + $0xf48] sm:$0xff]
        %v6509 = vld [vmem:[#allocation15 + $0xf50] sm:$0xff]
        %v6510 = vld [vmem:[#allocation15 + $0xf58] sm:$0xff]
        %v6511 = vld [vmem:[#allocation15 + $0xf60] sm:$0xff]
        %v6512 = vld [vmem:[#allocation15 + $0xf68] sm:$0xff]
        %v6513 = vld [vmem:[#allocation15 + $0xf70] sm:$0xff]
        %v6514 = vld [vmem:[#allocation15 + $0xf78] sm:$0xff]
        %v6515 = vld [vmem:[#allocation15 + $0xf80] sm:$0xff]
        %v6516 = vld [vmem:[#allocation15 + $0xf88] sm:$0xff]
        %v6517 = vld [vmem:[#allocation15 + $0xf90] sm:$0xff]
        %v6518 = vld [vmem:[#allocation15 + $0xf98] sm:$0xff]
        %v6519 = vld [vmem:[#allocation15 + $0xfa0] sm:$0xff]
        %v6520 = vld [vmem:[#allocation15 + $0xfa8] sm:$0xff]
        %v6521 = vld [vmem:[#allocation15 + $0xfb0] sm:$0xff]
        %v6522 = vld [vmem:[#allocation15 + $0xfb8] sm:$0xff]
        %v6523 = vld [vmem:[#allocation15 + $0xfc0] sm:$0xff]
        %v6524 = vld [vmem:[#allocation15 + $0xfc8] sm:$0xff]
        %v6525 = vld [vmem:[#allocation15 + $0xfd0] sm:$0xff]
        %v6526 = vld [vmem:[#allocation15 + $0xfd8] sm:$0xff]
        %v6527 = vld [vmem:[#allocation15 + $0xfe0] sm:$0xff]
        %v6528 = vld [vmem:[#allocation15 + $0xfe8] sm:$0xff]
        %v6529 = vld [vmem:[#allocation15 + $0xff0] sm:$0xff]
        %v6530 = vld [vmem:[#allocation15 + $0xff8] sm:$0xff]
        %v6531 = vld [vmem:[#allocation16] sm:$0xff]
        %v6533 = vlaneseq
        %v6534 = vshrl.u32 %v6533, 7
        %v6535 = vsub.s32 0, %v6534
        %v6536 = vrot.slane %v6531, %v6535
        %v6537 = vlaneseq
        %v6538 = vshrl.u32 %v6537, 7
        %v6539 = vsub.s32 1, %v6538
        %v6540 = vrot.slane %v6531, %v6539
        %v6541 = vlaneseq
        %v6542 = vshrl.u32 %v6541, 7
        %v6543 = vsub.s32 2, %v6542
        %v6544 = vrot.slane %v6531, %v6543
        %v6545 = vlaneseq
        %v6546 = vshrl.u32 %v6545, 7
        %v6547 = vsub.s32 3, %v6546
        %v6548 = vrot.slane %v6531, %v6547
        %v6549 = vlaneseq
        %v6550 = vshrl.u32 %v6549, 7
        %v6551 = vsub.s32 4, %v6550
        %v6552 = vrot.slane %v6531, %v6551
        %v6553 = vlaneseq
        %v6554 = vshrl.u32 %v6553, 7
        %v6555 = vsub.s32 5, %v6554
        %v6556 = vrot.slane %v6531, %v6555
        %v6557 = vlaneseq
        %v6558 = vshrl.u32 %v6557, 7
        %v6559 = vsub.s32 6, %v6558
        %v6560 = vrot.slane %v6531, %v6559
        %v6561 = vlaneseq
        %v6562 = vshrl.u32 %v6561, 7
        %v6563 = vsub.s32 7, %v6562
        %v6564 = vrot.slane %v6531, %v6563
        %v7085 = vunpack.c.l.b16 %v6019
        %v7086 = vunpack.c.h.b16 %v6019
        %v7087 = vunpack.c.l.b16 %v6020
        %v7088 = vunpack.c.h.b16 %v6020
        %v7089 = vunpack.c.l.b16 %v6021
        %v7090 = vunpack.c.h.b16 %v6021
        %v7091 = vunpack.c.l.b16 %v6022
        %v7092 = vunpack.c.h.b16 %v6022
        %v7093 = vunpack.c.l.b16 %v6023
        %v7094 = vunpack.c.h.b16 %v6023
        %v7095 = vunpack.c.l.b16 %v6024
        %v7096 = vunpack.c.h.b16 %v6024
        %v7097 = vunpack.c.l.b16 %v6025
        %v7098 = vunpack.c.h.b16 %v6025
        %v7099 = vunpack.c.l.b16 %v6026
        %v7100 = vunpack.c.h.b16 %v6026
        %v7101 = vunpack.c.l.b16 %v6027
        %v7102 = vunpack.c.h.b16 %v6027
        %v7103 = vunpack.c.l.b16 %v6028
        %v7104 = vunpack.c.h.b16 %v6028
        %v7105 = vunpack.c.l.b16 %v6029
        %v7106 = vunpack.c.h.b16 %v6029
        %v7107 = vunpack.c.l.b16 %v6030
        %v7108 = vunpack.c.h.b16 %v6030
        %v7109 = vunpack.c.l.b16 %v6031
        %v7110 = vunpack.c.h.b16 %v6031
        %v7111 = vunpack.c.l.b16 %v6032
        %v7112 = vunpack.c.h.b16 %v6032
        %v7113 = vunpack.c.l.b16 %v6033
        %v7114 = vunpack.c.h.b16 %v6033
        %v7115 = vunpack.c.l.b16 %v6034
        %v7116 = vunpack.c.h.b16 %v6034
        %v7117 = vunpack.c.l.b16 %v6035
        %v7118 = vunpack.c.h.b16 %v6035
        %v7119 = vunpack.c.l.b16 %v6036
        %v7120 = vunpack.c.h.b16 %v6036
        %v7121 = vunpack.c.l.b16 %v6037
        %v7122 = vunpack.c.h.b16 %v6037
        %v7123 = vunpack.c.l.b16 %v6038
        %v7124 = vunpack.c.h.b16 %v6038
        %v7125 = vunpack.c.l.b16 %v6039
        %v7126 = vunpack.c.h.b16 %v6039
        %v7127 = vunpack.c.l.b16 %v6040
        %v7128 = vunpack.c.h.b16 %v6040
        %v7129 = vunpack.c.l.b16 %v6041
        %v7130 = vunpack.c.h.b16 %v6041
        %v7131 = vunpack.c.l.b16 %v6042
        %v7132 = vunpack.c.h.b16 %v6042
        %v7133 = vunpack.c.l.b16 %v6043
        %v7134 = vunpack.c.h.b16 %v6043
        %v7135 = vunpack.c.l.b16 %v6044
        %v7136 = vunpack.c.h.b16 %v6044
        %v7137 = vunpack.c.l.b16 %v6045
        %v7138 = vunpack.c.h.b16 %v6045
        %v7139 = vunpack.c.l.b16 %v6046
        %v7140 = vunpack.c.h.b16 %v6046
        %v7141 = vunpack.c.l.b16 %v6047
        %v7142 = vunpack.c.h.b16 %v6047
        %v7143 = vunpack.c.l.b16 %v6048
        %v7144 = vunpack.c.h.b16 %v6048
        %v7145 = vunpack.c.l.b16 %v6049
        %v7146 = vunpack.c.h.b16 %v6049
        %v7147 = vunpack.c.l.b16 %v6050
        %v7148 = vunpack.c.h.b16 %v6050
        %v7149 = vunpack.c.l.b16 %v6051
        %v7150 = vunpack.c.h.b16 %v6051
        %v7151 = vunpack.c.l.b16 %v6052
        %v7152 = vunpack.c.h.b16 %v6052
        %v7153 = vunpack.c.l.b16 %v6053
        %v7154 = vunpack.c.h.b16 %v6053
        %v7155 = vunpack.c.l.b16 %v6054
        %v7156 = vunpack.c.h.b16 %v6054
        %v7157 = vunpack.c.l.b16 %v6055
        %v7158 = vunpack.c.h.b16 %v6055
        %v7159 = vunpack.c.l.b16 %v6056
        %v7160 = vunpack.c.h.b16 %v6056
        %v7161 = vunpack.c.l.b16 %v6057
        %v7162 = vunpack.c.h.b16 %v6057
        %v7163 = vunpack.c.l.b16 %v6058
        %v7164 = vunpack.c.h.b16 %v6058
        %v7165 = vunpack.c.l.b16 %v6059
        %v7166 = vunpack.c.h.b16 %v6059
        %v7167 = vunpack.c.l.b16 %v6060
        %v7168 = vunpack.c.h.b16 %v6060
        %v7169 = vunpack.c.l.b16 %v6061
        %v7170 = vunpack.c.h.b16 %v6061
        %v7171 = vunpack.c.l.b16 %v6062
        %v7172 = vunpack.c.h.b16 %v6062
        %v7173 = vunpack.c.l.b16 %v6063
        %v7174 = vunpack.c.h.b16 %v6063
        %v7175 = vunpack.c.l.b16 %v6064
        %v7176 = vunpack.c.h.b16 %v6064
        %v7177 = vunpack.c.l.b16 %v6065
        %v7178 = vunpack.c.h.b16 %v6065
        %v7179 = vunpack.c.l.b16 %v6066
        %v7180 = vunpack.c.h.b16 %v6066
        %v7181 = vunpack.c.l.b16 %v6067
        %v7182 = vunpack.c.h.b16 %v6067
        %v7183 = vunpack.c.l.b16 %v6068
        %v7184 = vunpack.c.h.b16 %v6068
        %v7185 = vunpack.c.l.b16 %v6069
        %v7186 = vunpack.c.h.b16 %v6069
        %v7187 = vunpack.c.l.b16 %v6070
        %v7188 = vunpack.c.h.b16 %v6070
        %v7189 = vunpack.c.l.b16 %v6071
        %v7190 = vunpack.c.h.b16 %v6071
        %v7191 = vunpack.c.l.b16 %v6072
        %v7192 = vunpack.c.h.b16 %v6072
        %v7193 = vunpack.c.l.b16 %v6073
        %v7194 = vunpack.c.h.b16 %v6073
        %v7195 = vunpack.c.l.b16 %v6074
        %v7196 = vunpack.c.h.b16 %v6074
        %v7197 = vunpack.c.l.b16 %v6075
        %v7198 = vunpack.c.h.b16 %v6075
        %v7199 = vunpack.c.l.b16 %v6076
        %v7200 = vunpack.c.h.b16 %v6076
        %v7201 = vunpack.c.l.b16 %v6077
        %v7202 = vunpack.c.h.b16 %v6077
        %v7203 = vunpack.c.l.b16 %v6078
        %v7204 = vunpack.c.h.b16 %v6078
        %v7205 = vunpack.c.l.b16 %v6079
        %v7206 = vunpack.c.h.b16 %v6079
        %v7207 = vunpack.c.l.b16 %v6080
        %v7208 = vunpack.c.h.b16 %v6080
        %v7209 = vunpack.c.l.b16 %v6081
        %v7210 = vunpack.c.h.b16 %v6081
        %v7211 = vunpack.c.l.b16 %v6082
        %v7212 = vunpack.c.h.b16 %v6082
        %v7213 = vunpack.c.l.b16 %v6083
        %v7214 = vunpack.c.h.b16 %v6083
        %v7215 = vunpack.c.l.b16 %v6084
        %v7216 = vunpack.c.h.b16 %v6084
        %v7217 = vunpack.c.l.b16 %v6085
        %v7218 = vunpack.c.h.b16 %v6085
        %v7219 = vunpack.c.l.b16 %v6086
        %v7220 = vunpack.c.h.b16 %v6086
        %v7221 = vunpack.c.l.b16 %v6087
        %v7222 = vunpack.c.h.b16 %v6087
        %v7223 = vunpack.c.l.b16 %v6088
        %v7224 = vunpack.c.h.b16 %v6088
        %v7225 = vunpack.c.l.b16 %v6089
        %v7226 = vunpack.c.h.b16 %v6089
        %v7227 = vunpack.c.l.b16 %v6090
        %v7228 = vunpack.c.h.b16 %v6090
        %v7229 = vunpack.c.l.b16 %v6091
        %v7230 = vunpack.c.h.b16 %v6091
        %v7231 = vunpack.c.l.b16 %v6092
        %v7232 = vunpack.c.h.b16 %v6092
        %v7233 = vunpack.c.l.b16 %v6093
        %v7234 = vunpack.c.h.b16 %v6093
        %v7235 = vunpack.c.l.b16 %v6094
        %v7236 = vunpack.c.h.b16 %v6094
        %v7237 = vunpack.c.l.b16 %v6095
        %v7238 = vunpack.c.h.b16 %v6095
        %v7239 = vunpack.c.l.b16 %v6096
        %v7240 = vunpack.c.h.b16 %v6096
        %v7241 = vunpack.c.l.b16 %v6097
        %v7242 = vunpack.c.h.b16 %v6097
        %v7243 = vunpack.c.l.b16 %v6098
        %v7244 = vunpack.c.h.b16 %v6098
        %v7245 = vunpack.c.l.b16 %v6099
        %v7246 = vunpack.c.h.b16 %v6099
        %v7247 = vunpack.c.l.b16 %v6100
        %v7248 = vunpack.c.h.b16 %v6100
        %v7249 = vunpack.c.l.b16 %v6101
        %v7250 = vunpack.c.h.b16 %v6101
        %v7251 = vunpack.c.l.b16 %v6102
        %v7252 = vunpack.c.h.b16 %v6102
        %v7253 = vunpack.c.l.b16 %v6103
        %v7254 = vunpack.c.h.b16 %v6103
        %v7255 = vunpack.c.l.b16 %v6104
        %v7256 = vunpack.c.h.b16 %v6104
        %v7257 = vunpack.c.l.b16 %v6105
        %v7258 = vunpack.c.h.b16 %v6105
        %v7259 = vunpack.c.l.b16 %v6106
        %v7260 = vunpack.c.h.b16 %v6106
        %v7261 = vunpack.c.l.b16 %v6107
        %v7262 = vunpack.c.h.b16 %v6107
        %v7263 = vunpack.c.l.b16 %v6108
        %v7264 = vunpack.c.h.b16 %v6108
        %v7265 = vunpack.c.l.b16 %v6109
        %v7266 = vunpack.c.h.b16 %v6109
        %v7267 = vunpack.c.l.b16 %v6110
        %v7268 = vunpack.c.h.b16 %v6110
        %v7269 = vunpack.c.l.b16 %v6111
        %v7270 = vunpack.c.h.b16 %v6111
        %v7271 = vunpack.c.l.b16 %v6112
        %v7272 = vunpack.c.h.b16 %v6112
        %v7273 = vunpack.c.l.b16 %v6113
        %v7274 = vunpack.c.h.b16 %v6113
        %v7275 = vunpack.c.l.b16 %v6114
        %v7276 = vunpack.c.h.b16 %v6114
        %v7277 = vunpack.c.l.b16 %v6115
        %v7278 = vunpack.c.h.b16 %v6115
        %v7279 = vunpack.c.l.b16 %v6116
        %v7280 = vunpack.c.h.b16 %v6116
        %v7281 = vunpack.c.l.b16 %v6117
        %v7282 = vunpack.c.h.b16 %v6117
        %v7283 = vunpack.c.l.b16 %v6118
        %v7284 = vunpack.c.h.b16 %v6118
        %v7285 = vunpack.c.l.b16 %v6119
        %v7286 = vunpack.c.h.b16 %v6119
        %v7287 = vunpack.c.l.b16 %v6120
        %v7288 = vunpack.c.h.b16 %v6120
        %v7289 = vunpack.c.l.b16 %v6121
        %v7290 = vunpack.c.h.b16 %v6121
        %v7291 = vunpack.c.l.b16 %v6122
        %v7292 = vunpack.c.h.b16 %v6122
        %v7293 = vunpack.c.l.b16 %v6123
        %v7294 = vunpack.c.h.b16 %v6123
        %v7295 = vunpack.c.l.b16 %v6124
        %v7296 = vunpack.c.h.b16 %v6124
        %v7297 = vunpack.c.l.b16 %v6125
        %v7298 = vunpack.c.h.b16 %v6125
        %v7299 = vunpack.c.l.b16 %v6126
        %v7300 = vunpack.c.h.b16 %v6126
        %v7301 = vunpack.c.l.b16 %v6127
        %v7302 = vunpack.c.h.b16 %v6127
        %v7303 = vunpack.c.l.b16 %v6128
        %v7304 = vunpack.c.h.b16 %v6128
        %v7305 = vunpack.c.l.b16 %v6129
        %v7306 = vunpack.c.h.b16 %v6129
        %v7307 = vunpack.c.l.b16 %v6130
        %v7308 = vunpack.c.h.b16 %v6130
        %v7309 = vunpack.c.l.b16 %v6131
        %v7310 = vunpack.c.h.b16 %v6131
        %v7311 = vunpack.c.l.b16 %v6132
        %v7312 = vunpack.c.h.b16 %v6132
        %v7313 = vunpack.c.l.b16 %v6133
        %v7314 = vunpack.c.h.b16 %v6133
        %v7315 = vunpack.c.l.b16 %v6134
        %v7316 = vunpack.c.h.b16 %v6134
        %v7317 = vunpack.c.l.b16 %v6135
        %v7318 = vunpack.c.h.b16 %v6135
        %v7319 = vunpack.c.l.b16 %v6136
        %v7320 = vunpack.c.h.b16 %v6136
        %v7321 = vunpack.c.l.b16 %v6137
        %v7322 = vunpack.c.h.b16 %v6137
        %v7323 = vunpack.c.l.b16 %v6138
        %v7324 = vunpack.c.h.b16 %v6138
        %v7325 = vunpack.c.l.b16 %v6139
        %v7326 = vunpack.c.h.b16 %v6139
        %v7327 = vunpack.c.l.b16 %v6140
        %v7328 = vunpack.c.h.b16 %v6140
        %v7329 = vunpack.c.l.b16 %v6141
        %v7330 = vunpack.c.h.b16 %v6141
        %v7331 = vunpack.c.l.b16 %v6142
        %v7332 = vunpack.c.h.b16 %v6142
        %v7333 = vunpack.c.l.b16 %v6143
        %v7334 = vunpack.c.h.b16 %v6143
        %v7335 = vunpack.c.l.b16 %v6144
        %v7336 = vunpack.c.h.b16 %v6144
        %v7337 = vunpack.c.l.b16 %v6145
        %v7338 = vunpack.c.h.b16 %v6145
        %v7339 = vunpack.c.l.b16 %v6146
        %v7340 = vunpack.c.h.b16 %v6146
        %v7341 = vunpack.c.l.b16 %v6147
        %v7342 = vunpack.c.h.b16 %v6147
        %v7343 = vunpack.c.l.b16 %v6148
        %v7344 = vunpack.c.h.b16 %v6148
        %v7345 = vunpack.c.l.b16 %v6149
        %v7346 = vunpack.c.h.b16 %v6149
        %v7347 = vunpack.c.l.b16 %v6150
        %v7348 = vunpack.c.h.b16 %v6150
        %v7349 = vunpack.c.l.b16 %v6151
        %v7350 = vunpack.c.h.b16 %v6151
        %v7351 = vunpack.c.l.b16 %v6152
        %v7352 = vunpack.c.h.b16 %v6152
        %v7353 = vunpack.c.l.b16 %v6153
        %v7354 = vunpack.c.h.b16 %v6153
        %v7355 = vunpack.c.l.b16 %v6154
        %v7356 = vunpack.c.h.b16 %v6154
        %v7357 = vunpack.c.l.b16 %v6155
        %v7358 = vunpack.c.h.b16 %v6155
        %v7359 = vunpack.c.l.b16 %v6156
        %v7360 = vunpack.c.h.b16 %v6156
        %v7361 = vunpack.c.l.b16 %v6157
        %v7362 = vunpack.c.h.b16 %v6157
        %v7363 = vunpack.c.l.b16 %v6158
        %v7364 = vunpack.c.h.b16 %v6158
        %v7365 = vunpack.c.l.b16 %v6159
        %v7366 = vunpack.c.h.b16 %v6159
        %v7367 = vunpack.c.l.b16 %v6160
        %v7368 = vunpack.c.h.b16 %v6160
        %v7369 = vunpack.c.l.b16 %v6161
        %v7370 = vunpack.c.h.b16 %v6161
        %v7371 = vunpack.c.l.b16 %v6162
        %v7372 = vunpack.c.h.b16 %v6162
        %v7373 = vunpack.c.l.b16 %v6163
        %v7374 = vunpack.c.h.b16 %v6163
        %v7375 = vunpack.c.l.b16 %v6164
        %v7376 = vunpack.c.h.b16 %v6164
        %v7377 = vunpack.c.l.b16 %v6165
        %v7378 = vunpack.c.h.b16 %v6165
        %v7379 = vunpack.c.l.b16 %v6166
        %v7380 = vunpack.c.h.b16 %v6166
        %v7381 = vunpack.c.l.b16 %v6167
        %v7382 = vunpack.c.h.b16 %v6167
        %v7383 = vunpack.c.l.b16 %v6168
        %v7384 = vunpack.c.h.b16 %v6168
        %v7385 = vunpack.c.l.b16 %v6169
        %v7386 = vunpack.c.h.b16 %v6169
        %v7387 = vunpack.c.l.b16 %v6170
        %v7388 = vunpack.c.h.b16 %v6170
        %v7389 = vunpack.c.l.b16 %v6171
        %v7390 = vunpack.c.h.b16 %v6171
        %v7391 = vunpack.c.l.b16 %v6172
        %v7392 = vunpack.c.h.b16 %v6172
        %v7393 = vunpack.c.l.b16 %v6173
        %v7394 = vunpack.c.h.b16 %v6173
        %v7395 = vunpack.c.l.b16 %v6174
        %v7396 = vunpack.c.h.b16 %v6174
        %v7397 = vunpack.c.l.b16 %v6175
        %v7398 = vunpack.c.h.b16 %v6175
        %v7399 = vunpack.c.l.b16 %v6176
        %v7400 = vunpack.c.h.b16 %v6176
        %v7401 = vunpack.c.l.b16 %v6177
        %v7402 = vunpack.c.h.b16 %v6177
        %v7403 = vunpack.c.l.b16 %v6178
        %v7404 = vunpack.c.h.b16 %v6178
        %v7405 = vunpack.c.l.b16 %v6179
        %v7406 = vunpack.c.h.b16 %v6179
        %v7407 = vunpack.c.l.b16 %v6180
        %v7408 = vunpack.c.h.b16 %v6180
        %v7409 = vunpack.c.l.b16 %v6181
        %v7410 = vunpack.c.h.b16 %v6181
        %v7411 = vunpack.c.l.b16 %v6182
        %v7412 = vunpack.c.h.b16 %v6182
        %v7413 = vunpack.c.l.b16 %v6183
        %v7414 = vunpack.c.h.b16 %v6183
        %v7415 = vunpack.c.l.b16 %v6184
        %v7416 = vunpack.c.h.b16 %v6184
        %v7417 = vunpack.c.l.b16 %v6185
        %v7418 = vunpack.c.h.b16 %v6185
        %v7419 = vunpack.c.l.b16 %v6186
        %v7420 = vunpack.c.h.b16 %v6186
        %v7421 = vunpack.c.l.b16 %v6187
        %v7422 = vunpack.c.h.b16 %v6187
        %v7423 = vunpack.c.l.b16 %v6188
        %v7424 = vunpack.c.h.b16 %v6188
        %v7425 = vunpack.c.l.b16 %v6189
        %v7426 = vunpack.c.h.b16 %v6189
        %v7427 = vunpack.c.l.b16 %v6190
        %v7428 = vunpack.c.h.b16 %v6190
        %v7429 = vunpack.c.l.b16 %v6191
        %v7430 = vunpack.c.h.b16 %v6191
        %v7431 = vunpack.c.l.b16 %v6192
        %v7432 = vunpack.c.h.b16 %v6192
        %v7433 = vunpack.c.l.b16 %v6193
        %v7434 = vunpack.c.h.b16 %v6193
        %v7435 = vunpack.c.l.b16 %v6194
        %v7436 = vunpack.c.h.b16 %v6194
        %v7437 = vunpack.c.l.b16 %v6195
        %v7438 = vunpack.c.h.b16 %v6195
        %v7439 = vunpack.c.l.b16 %v6196
        %v7440 = vunpack.c.h.b16 %v6196
        %v7441 = vunpack.c.l.b16 %v6197
        %v7442 = vunpack.c.h.b16 %v6197
        %v7443 = vunpack.c.l.b16 %v6198
        %v7444 = vunpack.c.h.b16 %v6198
        %v7445 = vunpack.c.l.b16 %v6199
        %v7446 = vunpack.c.h.b16 %v6199
        %v7447 = vunpack.c.l.b16 %v6200
        %v7448 = vunpack.c.h.b16 %v6200
        %v7449 = vunpack.c.l.b16 %v6201
        %v7450 = vunpack.c.h.b16 %v6201
        %v7451 = vunpack.c.l.b16 %v6202
        %v7452 = vunpack.c.h.b16 %v6202
        %v7453 = vunpack.c.l.b16 %v6203
        %v7454 = vunpack.c.h.b16 %v6203
        %v7455 = vunpack.c.l.b16 %v6204
        %v7456 = vunpack.c.h.b16 %v6204
        %v7457 = vunpack.c.l.b16 %v6205
        %v7458 = vunpack.c.h.b16 %v6205
        %v7459 = vunpack.c.l.b16 %v6206
        %v7460 = vunpack.c.h.b16 %v6206
        %v7461 = vunpack.c.l.b16 %v6207
        %v7462 = vunpack.c.h.b16 %v6207
        %v7463 = vunpack.c.l.b16 %v6208
        %v7464 = vunpack.c.h.b16 %v6208
        %v7465 = vunpack.c.l.b16 %v6209
        %v7466 = vunpack.c.h.b16 %v6209
        %v7467 = vunpack.c.l.b16 %v6210
        %v7468 = vunpack.c.h.b16 %v6210
        %v7469 = vunpack.c.l.b16 %v6211
        %v7470 = vunpack.c.h.b16 %v6211
        %v7471 = vunpack.c.l.b16 %v6212
        %v7472 = vunpack.c.h.b16 %v6212
        %v7473 = vunpack.c.l.b16 %v6213
        %v7474 = vunpack.c.h.b16 %v6213
        %v7475 = vunpack.c.l.b16 %v6214
        %v7476 = vunpack.c.h.b16 %v6214
        %v7477 = vunpack.c.l.b16 %v6215
        %v7478 = vunpack.c.h.b16 %v6215
        %v7479 = vunpack.c.l.b16 %v6216
        %v7480 = vunpack.c.h.b16 %v6216
        %v7481 = vunpack.c.l.b16 %v6217
        %v7482 = vunpack.c.h.b16 %v6217
        %v7483 = vunpack.c.l.b16 %v6218
        %v7484 = vunpack.c.h.b16 %v6218
        %v7485 = vunpack.c.l.b16 %v6219
        %v7486 = vunpack.c.h.b16 %v6219
        %v7487 = vunpack.c.l.b16 %v6220
        %v7488 = vunpack.c.h.b16 %v6220
        %v7489 = vunpack.c.l.b16 %v6221
        %v7490 = vunpack.c.h.b16 %v6221
        %v7491 = vunpack.c.l.b16 %v6222
        %v7492 = vunpack.c.h.b16 %v6222
        %v7493 = vunpack.c.l.b16 %v6223
        %v7494 = vunpack.c.h.b16 %v6223
        %v7495 = vunpack.c.l.b16 %v6224
        %v7496 = vunpack.c.h.b16 %v6224
        %v7497 = vunpack.c.l.b16 %v6225
        %v7498 = vunpack.c.h.b16 %v6225
        %v7499 = vunpack.c.l.b16 %v6226
        %v7500 = vunpack.c.h.b16 %v6226
        %v7501 = vunpack.c.l.b16 %v6227
        %v7502 = vunpack.c.h.b16 %v6227
        %v7503 = vunpack.c.l.b16 %v6228
        %v7504 = vunpack.c.h.b16 %v6228
        %v7505 = vunpack.c.l.b16 %v6229
        %v7506 = vunpack.c.h.b16 %v6229
        %v7507 = vunpack.c.l.b16 %v6230
        %v7508 = vunpack.c.h.b16 %v6230
        %v7509 = vunpack.c.l.b16 %v6231
        %v7510 = vunpack.c.h.b16 %v6231
        %v7511 = vunpack.c.l.b16 %v6232
        %v7512 = vunpack.c.h.b16 %v6232
        %v7513 = vunpack.c.l.b16 %v6233
        %v7514 = vunpack.c.h.b16 %v6233
        %v7515 = vunpack.c.l.b16 %v6234
        %v7516 = vunpack.c.h.b16 %v6234
        %v7517 = vunpack.c.l.b16 %v6235
        %v7518 = vunpack.c.h.b16 %v6235
        %v7519 = vunpack.c.l.b16 %v6236
        %v7520 = vunpack.c.h.b16 %v6236
        %v7521 = vunpack.c.l.b16 %v6237
        %v7522 = vunpack.c.h.b16 %v6237
        %v7523 = vunpack.c.l.b16 %v6238
        %v7524 = vunpack.c.h.b16 %v6238
        %v7525 = vunpack.c.l.b16 %v6239
        %v7526 = vunpack.c.h.b16 %v6239
        %v7527 = vunpack.c.l.b16 %v6240
        %v7528 = vunpack.c.h.b16 %v6240
        %v7529 = vunpack.c.l.b16 %v6241
        %v7530 = vunpack.c.h.b16 %v6241
        %v7531 = vunpack.c.l.b16 %v6242
        %v7532 = vunpack.c.h.b16 %v6242
        %v7533 = vunpack.c.l.b16 %v6243
        %v7534 = vunpack.c.h.b16 %v6243
        %v7535 = vunpack.c.l.b16 %v6244
        %v7536 = vunpack.c.h.b16 %v6244
        %v7537 = vunpack.c.l.b16 %v6245
        %v7538 = vunpack.c.h.b16 %v6245
        %v7539 = vunpack.c.l.b16 %v6246
        %v7540 = vunpack.c.h.b16 %v6246
        %v7541 = vunpack.c.l.b16 %v6247
        %v7542 = vunpack.c.h.b16 %v6247
        %v7543 = vunpack.c.l.b16 %v6248
        %v7544 = vunpack.c.h.b16 %v6248
        %v7545 = vunpack.c.l.b16 %v6249
        %v7546 = vunpack.c.h.b16 %v6249
        %v7547 = vunpack.c.l.b16 %v6250
        %v7548 = vunpack.c.h.b16 %v6250
        %v7549 = vunpack.c.l.b16 %v6251
        %v7550 = vunpack.c.h.b16 %v6251
        %v7551 = vunpack.c.l.b16 %v6252
        %v7552 = vunpack.c.h.b16 %v6252
        %v7553 = vunpack.c.l.b16 %v6253
        %v7554 = vunpack.c.h.b16 %v6253
        %v7555 = vunpack.c.l.b16 %v6254
        %v7556 = vunpack.c.h.b16 %v6254
        %v7557 = vunpack.c.l.b16 %v6255
        %v7558 = vunpack.c.h.b16 %v6255
        %v7559 = vunpack.c.l.b16 %v6256
        %v7560 = vunpack.c.h.b16 %v6256
        %v7561 = vunpack.c.l.b16 %v6257
        %v7562 = vunpack.c.h.b16 %v6257
        %v7563 = vunpack.c.l.b16 %v6258
        %v7564 = vunpack.c.h.b16 %v6258
        %v7565 = vunpack.c.l.b16 %v6259
        %v7566 = vunpack.c.h.b16 %v6259
        %v7567 = vunpack.c.l.b16 %v6260
        %v7568 = vunpack.c.h.b16 %v6260
        %v7569 = vunpack.c.l.b16 %v6261
        %v7570 = vunpack.c.h.b16 %v6261
        %v7571 = vunpack.c.l.b16 %v6262
        %v7572 = vunpack.c.h.b16 %v6262
        %v7573 = vunpack.c.l.b16 %v6263
        %v7574 = vunpack.c.h.b16 %v6263
        %v7575 = vunpack.c.l.b16 %v6264
        %v7576 = vunpack.c.h.b16 %v6264
        %v7577 = vunpack.c.l.b16 %v6265
        %v7578 = vunpack.c.h.b16 %v6265
        %v7579 = vunpack.c.l.b16 %v6266
        %v7580 = vunpack.c.h.b16 %v6266
        %v7581 = vunpack.c.l.b16 %v6267
        %v7582 = vunpack.c.h.b16 %v6267
        %v7583 = vunpack.c.l.b16 %v6268
        %v7584 = vunpack.c.h.b16 %v6268
        %v7585 = vunpack.c.l.b16 %v6269
        %v7586 = vunpack.c.h.b16 %v6269
        %v7587 = vunpack.c.l.b16 %v6270
        %v7588 = vunpack.c.h.b16 %v6270
        %v7589 = vunpack.c.l.b16 %v6271
        %v7590 = vunpack.c.h.b16 %v6271
        %v7591 = vunpack.c.l.b16 %v6272
        %v7592 = vunpack.c.h.b16 %v6272
        %v7593 = vunpack.c.l.b16 %v6273
        %v7594 = vunpack.c.h.b16 %v6273
        %v7595 = vunpack.c.l.b16 %v6274
        %v7596 = vunpack.c.h.b16 %v6274
        %v7597 = vunpack.c.l.b16 %v6275
        %v7598 = vunpack.c.h.b16 %v6275
        %v7599 = vunpack.c.l.b16 %v6276
        %v7600 = vunpack.c.h.b16 %v6276
        %v7601 = vunpack.c.l.b16 %v6277
        %v7602 = vunpack.c.h.b16 %v6277
        %v7603 = vunpack.c.l.b16 %v6278
        %v7604 = vunpack.c.h.b16 %v6278
        %v7605 = vunpack.c.l.b16 %v6279
        %v7606 = vunpack.c.h.b16 %v6279
        %v7607 = vunpack.c.l.b16 %v6280
        %v7608 = vunpack.c.h.b16 %v6280
        %v7609 = vunpack.c.l.b16 %v6281
        %v7610 = vunpack.c.h.b16 %v6281
        %v7611 = vunpack.c.l.b16 %v6282
        %v7612 = vunpack.c.h.b16 %v6282
        %v7613 = vunpack.c.l.b16 %v6283
        %v7614 = vunpack.c.h.b16 %v6283
        %v7615 = vunpack.c.l.b16 %v6284
        %v7616 = vunpack.c.h.b16 %v6284
        %v7617 = vunpack.c.l.b16 %v6285
        %v7618 = vunpack.c.h.b16 %v6285
        %v7619 = vunpack.c.l.b16 %v6286
        %v7620 = vunpack.c.h.b16 %v6286
        %v7621 = vunpack.c.l.b16 %v6287
        %v7622 = vunpack.c.h.b16 %v6287
        %v7623 = vunpack.c.l.b16 %v6288
        %v7624 = vunpack.c.h.b16 %v6288
        %v7625 = vunpack.c.l.b16 %v6289
        %v7626 = vunpack.c.h.b16 %v6289
        %v7627 = vunpack.c.l.b16 %v6290
        %v7628 = vunpack.c.h.b16 %v6290
        %v7629 = vunpack.c.l.b16 %v6291
        %v7630 = vunpack.c.h.b16 %v6291
        %v7631 = vunpack.c.l.b16 %v6292
        %v7632 = vunpack.c.h.b16 %v6292
        %v7633 = vunpack.c.l.b16 %v6293
        %v7634 = vunpack.c.h.b16 %v6293
        %v7635 = vunpack.c.l.b16 %v6294
        %v7636 = vunpack.c.h.b16 %v6294
        %v7637 = vunpack.c.l.b16 %v6295
        %v7638 = vunpack.c.h.b16 %v6295
        %v7639 = vunpack.c.l.b16 %v6296
        %v7640 = vunpack.c.h.b16 %v6296
        %v7641 = vunpack.c.l.b16 %v6297
        %v7642 = vunpack.c.h.b16 %v6297
        %v7643 = vunpack.c.l.b16 %v6298
        %v7644 = vunpack.c.h.b16 %v6298
        %v7645 = vunpack.c.l.b16 %v6299
        %v7646 = vunpack.c.h.b16 %v6299
        %v7647 = vunpack.c.l.b16 %v6300
        %v7648 = vunpack.c.h.b16 %v6300
        %v7649 = vunpack.c.l.b16 %v6301
        %v7650 = vunpack.c.h.b16 %v6301
        %v7651 = vunpack.c.l.b16 %v6302
        %v7652 = vunpack.c.h.b16 %v6302
        %v7653 = vunpack.c.l.b16 %v6303
        %v7654 = vunpack.c.h.b16 %v6303
        %v7655 = vunpack.c.l.b16 %v6304
        %v7656 = vunpack.c.h.b16 %v6304
        %v7657 = vunpack.c.l.b16 %v6305
        %v7658 = vunpack.c.h.b16 %v6305
        %v7659 = vunpack.c.l.b16 %v6306
        %v7660 = vunpack.c.h.b16 %v6306
        %v7661 = vunpack.c.l.b16 %v6307
        %v7662 = vunpack.c.h.b16 %v6307
        %v7663 = vunpack.c.l.b16 %v6308
        %v7664 = vunpack.c.h.b16 %v6308
        %v7665 = vunpack.c.l.b16 %v6309
        %v7666 = vunpack.c.h.b16 %v6309
        %v7667 = vunpack.c.l.b16 %v6310
        %v7668 = vunpack.c.h.b16 %v6310
        %v7669 = vunpack.c.l.b16 %v6311
        %v7670 = vunpack.c.h.b16 %v6311
        %v7671 = vunpack.c.l.b16 %v6312
        %v7672 = vunpack.c.h.b16 %v6312
        %v7673 = vunpack.c.l.b16 %v6313
        %v7674 = vunpack.c.h.b16 %v6313
        %v7675 = vunpack.c.l.b16 %v6314
        %v7676 = vunpack.c.h.b16 %v6314
        %v7677 = vunpack.c.l.b16 %v6315
        %v7678 = vunpack.c.h.b16 %v6315
        %v7679 = vunpack.c.l.b16 %v6316
        %v7680 = vunpack.c.h.b16 %v6316
        %v7681 = vunpack.c.l.b16 %v6317
        %v7682 = vunpack.c.h.b16 %v6317
        %v7683 = vunpack.c.l.b16 %v6318
        %v7684 = vunpack.c.h.b16 %v6318
        %v7685 = vunpack.c.l.b16 %v6319
        %v7686 = vunpack.c.h.b16 %v6319
        %v7687 = vunpack.c.l.b16 %v6320
        %v7688 = vunpack.c.h.b16 %v6320
        %v7689 = vunpack.c.l.b16 %v6321
        %v7690 = vunpack.c.h.b16 %v6321
        %v7691 = vunpack.c.l.b16 %v6322
        %v7692 = vunpack.c.h.b16 %v6322
        %v7693 = vunpack.c.l.b16 %v6323
        %v7694 = vunpack.c.h.b16 %v6323
        %v7695 = vunpack.c.l.b16 %v6324
        %v7696 = vunpack.c.h.b16 %v6324
        %v7697 = vunpack.c.l.b16 %v6325
        %v7698 = vunpack.c.h.b16 %v6325
        %v7699 = vunpack.c.l.b16 %v6326
        %v7700 = vunpack.c.h.b16 %v6326
        %v7701 = vunpack.c.l.b16 %v6327
        %v7702 = vunpack.c.h.b16 %v6327
        %v7703 = vunpack.c.l.b16 %v6328
        %v7704 = vunpack.c.h.b16 %v6328
        %v7705 = vunpack.c.l.b16 %v6329
        %v7706 = vunpack.c.h.b16 %v6329
        %v7707 = vunpack.c.l.b16 %v6330
        %v7708 = vunpack.c.h.b16 %v6330
        %v7709 = vunpack.c.l.b16 %v6331
        %v7710 = vunpack.c.h.b16 %v6331
        %v7711 = vunpack.c.l.b16 %v6332
        %v7712 = vunpack.c.h.b16 %v6332
        %v7713 = vunpack.c.l.b16 %v6333
        %v7714 = vunpack.c.h.b16 %v6333
        %v7715 = vunpack.c.l.b16 %v6334
        %v7716 = vunpack.c.h.b16 %v6334
        %v7717 = vunpack.c.l.b16 %v6335
        %v7718 = vunpack.c.h.b16 %v6335
        %v7719 = vunpack.c.l.b16 %v6336
        %v7720 = vunpack.c.h.b16 %v6336
        %v7721 = vunpack.c.l.b16 %v6337
        %v7722 = vunpack.c.h.b16 %v6337
        %v7723 = vunpack.c.l.b16 %v6338
        %v7724 = vunpack.c.h.b16 %v6338
        %v7725 = vunpack.c.l.b16 %v6339
        %v7726 = vunpack.c.h.b16 %v6339
        %v7727 = vunpack.c.l.b16 %v6340
        %v7728 = vunpack.c.h.b16 %v6340
        %v7729 = vunpack.c.l.b16 %v6341
        %v7730 = vunpack.c.h.b16 %v6341
        %v7731 = vunpack.c.l.b16 %v6342
        %v7732 = vunpack.c.h.b16 %v6342
        %v7733 = vunpack.c.l.b16 %v6343
        %v7734 = vunpack.c.h.b16 %v6343
        %v7735 = vunpack.c.l.b16 %v6344
        %v7736 = vunpack.c.h.b16 %v6344
        %v7737 = vunpack.c.l.b16 %v6345
        %v7738 = vunpack.c.h.b16 %v6345
        %v7739 = vunpack.c.l.b16 %v6346
        %v7740 = vunpack.c.h.b16 %v6346
        %v7741 = vunpack.c.l.b16 %v6347
        %v7742 = vunpack.c.h.b16 %v6347
        %v7743 = vunpack.c.l.b16 %v6348
        %v7744 = vunpack.c.h.b16 %v6348
        %v7745 = vunpack.c.l.b16 %v6349
        %v7746 = vunpack.c.h.b16 %v6349
        %v7747 = vunpack.c.l.b16 %v6350
        %v7748 = vunpack.c.h.b16 %v6350
        %v7749 = vunpack.c.l.b16 %v6351
        %v7750 = vunpack.c.h.b16 %v6351
        %v7751 = vunpack.c.l.b16 %v6352
        %v7752 = vunpack.c.h.b16 %v6352
        %v7753 = vunpack.c.l.b16 %v6353
        %v7754 = vunpack.c.h.b16 %v6353
        %v7755 = vunpack.c.l.b16 %v6354
        %v7756 = vunpack.c.h.b16 %v6354
        %v7757 = vunpack.c.l.b16 %v6355
        %v7758 = vunpack.c.h.b16 %v6355
        %v7759 = vunpack.c.l.b16 %v6356
        %v7760 = vunpack.c.h.b16 %v6356
        %v7761 = vunpack.c.l.b16 %v6357
        %v7762 = vunpack.c.h.b16 %v6357
        %v7763 = vunpack.c.l.b16 %v6358
        %v7764 = vunpack.c.h.b16 %v6358
        %v7765 = vunpack.c.l.b16 %v6359
        %v7766 = vunpack.c.h.b16 %v6359
        %v7767 = vunpack.c.l.b16 %v6360
        %v7768 = vunpack.c.h.b16 %v6360
        %v7769 = vunpack.c.l.b16 %v6361
        %v7770 = vunpack.c.h.b16 %v6361
        %v7771 = vunpack.c.l.b16 %v6362
        %v7772 = vunpack.c.h.b16 %v6362
        %v7773 = vunpack.c.l.b16 %v6363
        %v7774 = vunpack.c.h.b16 %v6363
        %v7775 = vunpack.c.l.b16 %v6364
        %v7776 = vunpack.c.h.b16 %v6364
        %v7777 = vunpack.c.l.b16 %v6365
        %v7778 = vunpack.c.h.b16 %v6365
        %v7779 = vunpack.c.l.b16 %v6366
        %v7780 = vunpack.c.h.b16 %v6366
        %v7781 = vunpack.c.l.b16 %v6367
        %v7782 = vunpack.c.h.b16 %v6367
        %v7783 = vunpack.c.l.b16 %v6368
        %v7784 = vunpack.c.h.b16 %v6368
        %v7785 = vunpack.c.l.b16 %v6369
        %v7786 = vunpack.c.h.b16 %v6369
        %v7787 = vunpack.c.l.b16 %v6370
        %v7788 = vunpack.c.h.b16 %v6370
        %v7789 = vunpack.c.l.b16 %v6371
        %v7790 = vunpack.c.h.b16 %v6371
        %v7791 = vunpack.c.l.b16 %v6372
        %v7792 = vunpack.c.h.b16 %v6372
        %v7793 = vunpack.c.l.b16 %v6373
        %v7794 = vunpack.c.h.b16 %v6373
        %v7795 = vunpack.c.l.b16 %v6374
        %v7796 = vunpack.c.h.b16 %v6374
        %v7797 = vunpack.c.l.b16 %v6375
        %v7798 = vunpack.c.h.b16 %v6375
        %v7799 = vunpack.c.l.b16 %v6376
        %v7800 = vunpack.c.h.b16 %v6376
        %v7801 = vunpack.c.l.b16 %v6377
        %v7802 = vunpack.c.h.b16 %v6377
        %v7803 = vunpack.c.l.b16 %v6378
        %v7804 = vunpack.c.h.b16 %v6378
        %v7805 = vunpack.c.l.b16 %v6379
        %v7806 = vunpack.c.h.b16 %v6379
        %v7807 = vunpack.c.l.b16 %v6380
        %v7808 = vunpack.c.h.b16 %v6380
        %v7809 = vunpack.c.l.b16 %v6381
        %v7810 = vunpack.c.h.b16 %v6381
        %v7811 = vunpack.c.l.b16 %v6382
        %v7812 = vunpack.c.h.b16 %v6382
        %v7813 = vunpack.c.l.b16 %v6383
        %v7814 = vunpack.c.h.b16 %v6383
        %v7815 = vunpack.c.l.b16 %v6384
        %v7816 = vunpack.c.h.b16 %v6384
        %v7817 = vunpack.c.l.b16 %v6385
        %v7818 = vunpack.c.h.b16 %v6385
        %v7819 = vunpack.c.l.b16 %v6386
        %v7820 = vunpack.c.h.b16 %v6386
        %v7821 = vunpack.c.l.b16 %v6387
        %v7822 = vunpack.c.h.b16 %v6387
        %v7823 = vunpack.c.l.b16 %v6388
        %v7824 = vunpack.c.h.b16 %v6388
        %v7825 = vunpack.c.l.b16 %v6389
        %v7826 = vunpack.c.h.b16 %v6389
        %v7827 = vunpack.c.l.b16 %v6390
        %v7828 = vunpack.c.h.b16 %v6390
        %v7829 = vunpack.c.l.b16 %v6391
        %v7830 = vunpack.c.h.b16 %v6391
        %v7831 = vunpack.c.l.b16 %v6392
        %v7832 = vunpack.c.h.b16 %v6392
        %v7833 = vunpack.c.l.b16 %v6393
        %v7834 = vunpack.c.h.b16 %v6393
        %v7835 = vunpack.c.l.b16 %v6394
        %v7836 = vunpack.c.h.b16 %v6394
        %v7837 = vunpack.c.l.b16 %v6395
        %v7838 = vunpack.c.h.b16 %v6395
        %v7839 = vunpack.c.l.b16 %v6396
        %v7840 = vunpack.c.h.b16 %v6396
        %v7841 = vunpack.c.l.b16 %v6397
        %v7842 = vunpack.c.h.b16 %v6397
        %v7843 = vunpack.c.l.b16 %v6398
        %v7844 = vunpack.c.h.b16 %v6398
        %v7845 = vunpack.c.l.b16 %v6399
        %v7846 = vunpack.c.h.b16 %v6399
        %v7847 = vunpack.c.l.b16 %v6400
        %v7848 = vunpack.c.h.b16 %v6400
        %v7849 = vunpack.c.l.b16 %v6401
        %v7850 = vunpack.c.h.b16 %v6401
        %v7851 = vunpack.c.l.b16 %v6402
        %v7852 = vunpack.c.h.b16 %v6402
        %v7853 = vunpack.c.l.b16 %v6403
        %v7854 = vunpack.c.h.b16 %v6403
        %v7855 = vunpack.c.l.b16 %v6404
        %v7856 = vunpack.c.h.b16 %v6404
        %v7857 = vunpack.c.l.b16 %v6405
        %v7858 = vunpack.c.h.b16 %v6405
        %v7859 = vunpack.c.l.b16 %v6406
        %v7860 = vunpack.c.h.b16 %v6406
        %v7861 = vunpack.c.l.b16 %v6407
        %v7862 = vunpack.c.h.b16 %v6407
        %v7863 = vunpack.c.l.b16 %v6408
        %v7864 = vunpack.c.h.b16 %v6408
        %v7865 = vunpack.c.l.b16 %v6409
        %v7866 = vunpack.c.h.b16 %v6409
        %v7867 = vunpack.c.l.b16 %v6410
        %v7868 = vunpack.c.h.b16 %v6410
        %v7869 = vunpack.c.l.b16 %v6411
        %v7870 = vunpack.c.h.b16 %v6411
        %v7871 = vunpack.c.l.b16 %v6412
        %v7872 = vunpack.c.h.b16 %v6412
        %v7873 = vunpack.c.l.b16 %v6413
        %v7874 = vunpack.c.h.b16 %v6413
        %v7875 = vunpack.c.l.b16 %v6414
        %v7876 = vunpack.c.h.b16 %v6414
        %v7877 = vunpack.c.l.b16 %v6415
        %v7878 = vunpack.c.h.b16 %v6415
        %v7879 = vunpack.c.l.b16 %v6416
        %v7880 = vunpack.c.h.b16 %v6416
        %v7881 = vunpack.c.l.b16 %v6417
        %v7882 = vunpack.c.h.b16 %v6417
        %v7883 = vunpack.c.l.b16 %v6418
        %v7884 = vunpack.c.h.b16 %v6418
        %v7885 = vunpack.c.l.b16 %v6419
        %v7886 = vunpack.c.h.b16 %v6419
        %v7887 = vunpack.c.l.b16 %v6420
        %v7888 = vunpack.c.h.b16 %v6420
        %v7889 = vunpack.c.l.b16 %v6421
        %v7890 = vunpack.c.h.b16 %v6421
        %v7891 = vunpack.c.l.b16 %v6422
        %v7892 = vunpack.c.h.b16 %v6422
        %v7893 = vunpack.c.l.b16 %v6423
        %v7894 = vunpack.c.h.b16 %v6423
        %v7895 = vunpack.c.l.b16 %v6424
        %v7896 = vunpack.c.h.b16 %v6424
        %v7897 = vunpack.c.l.b16 %v6425
        %v7898 = vunpack.c.h.b16 %v6425
        %v7899 = vunpack.c.l.b16 %v6426
        %v7900 = vunpack.c.h.b16 %v6426
        %v7901 = vunpack.c.l.b16 %v6427
        %v7902 = vunpack.c.h.b16 %v6427
        %v7903 = vunpack.c.l.b16 %v6428
        %v7904 = vunpack.c.h.b16 %v6428
        %v7905 = vunpack.c.l.b16 %v6429
        %v7906 = vunpack.c.h.b16 %v6429
        %v7907 = vunpack.c.l.b16 %v6430
        %v7908 = vunpack.c.h.b16 %v6430
        %v7909 = vunpack.c.l.b16 %v6431
        %v7910 = vunpack.c.h.b16 %v6431
        %v7911 = vunpack.c.l.b16 %v6432
        %v7912 = vunpack.c.h.b16 %v6432
        %v7913 = vunpack.c.l.b16 %v6433
        %v7914 = vunpack.c.h.b16 %v6433
        %v7915 = vunpack.c.l.b16 %v6434
        %v7916 = vunpack.c.h.b16 %v6434
        %v7917 = vunpack.c.l.b16 %v6435
        %v7918 = vunpack.c.h.b16 %v6435
        %v7919 = vunpack.c.l.b16 %v6436
        %v7920 = vunpack.c.h.b16 %v6436
        %v7921 = vunpack.c.l.b16 %v6437
        %v7922 = vunpack.c.h.b16 %v6437
        %v7923 = vunpack.c.l.b16 %v6438
        %v7924 = vunpack.c.h.b16 %v6438
        %v7925 = vunpack.c.l.b16 %v6439
        %v7926 = vunpack.c.h.b16 %v6439
        %v7927 = vunpack.c.l.b16 %v6440
        %v7928 = vunpack.c.h.b16 %v6440
        %v7929 = vunpack.c.l.b16 %v6441
        %v7930 = vunpack.c.h.b16 %v6441
        %v7931 = vunpack.c.l.b16 %v6442
        %v7932 = vunpack.c.h.b16 %v6442
        %v7933 = vunpack.c.l.b16 %v6443
        %v7934 = vunpack.c.h.b16 %v6443
        %v7935 = vunpack.c.l.b16 %v6444
        %v7936 = vunpack.c.h.b16 %v6444
        %v7937 = vunpack.c.l.b16 %v6445
        %v7938 = vunpack.c.h.b16 %v6445
        %v7939 = vunpack.c.l.b16 %v6446
        %v7940 = vunpack.c.h.b16 %v6446
        %v7941 = vunpack.c.l.b16 %v6447
        %v7942 = vunpack.c.h.b16 %v6447
        %v7943 = vunpack.c.l.b16 %v6448
        %v7944 = vunpack.c.h.b16 %v6448
        %v7945 = vunpack.c.l.b16 %v6449
        %v7946 = vunpack.c.h.b16 %v6449
        %v7947 = vunpack.c.l.b16 %v6450
        %v7948 = vunpack.c.h.b16 %v6450
        %v7949 = vunpack.c.l.b16 %v6451
        %v7950 = vunpack.c.h.b16 %v6451
        %v7951 = vunpack.c.l.b16 %v6452
        %v7952 = vunpack.c.h.b16 %v6452
        %v7953 = vunpack.c.l.b16 %v6453
        %v7954 = vunpack.c.h.b16 %v6453
        %v7955 = vunpack.c.l.b16 %v6454
        %v7956 = vunpack.c.h.b16 %v6454
        %v7957 = vunpack.c.l.b16 %v6455
        %v7958 = vunpack.c.h.b16 %v6455
        %v7959 = vunpack.c.l.b16 %v6456
        %v7960 = vunpack.c.h.b16 %v6456
        %v7961 = vunpack.c.l.b16 %v6457
        %v7962 = vunpack.c.h.b16 %v6457
        %v7963 = vunpack.c.l.b16 %v6458
        %v7964 = vunpack.c.h.b16 %v6458
        %v7965 = vunpack.c.l.b16 %v6459
        %v7966 = vunpack.c.h.b16 %v6459
        %v7967 = vunpack.c.l.b16 %v6460
        %v7968 = vunpack.c.h.b16 %v6460
        %v7969 = vunpack.c.l.b16 %v6461
        %v7970 = vunpack.c.h.b16 %v6461
        %v7971 = vunpack.c.l.b16 %v6462
        %v7972 = vunpack.c.h.b16 %v6462
        %v7973 = vunpack.c.l.b16 %v6463
        %v7974 = vunpack.c.h.b16 %v6463
        %v7975 = vunpack.c.l.b16 %v6464
        %v7976 = vunpack.c.h.b16 %v6464
        %v7977 = vunpack.c.l.b16 %v6465
        %v7978 = vunpack.c.h.b16 %v6465
        %v7979 = vunpack.c.l.b16 %v6466
        %v7980 = vunpack.c.h.b16 %v6466
        %v7981 = vunpack.c.l.b16 %v6467
        %v7982 = vunpack.c.h.b16 %v6467
        %v7983 = vunpack.c.l.b16 %v6468
        %v7984 = vunpack.c.h.b16 %v6468
        %v7985 = vunpack.c.l.b16 %v6469
        %v7986 = vunpack.c.h.b16 %v6469
        %v7987 = vunpack.c.l.b16 %v6470
        %v7988 = vunpack.c.h.b16 %v6470
        %v7989 = vunpack.c.l.b16 %v6471
        %v7990 = vunpack.c.h.b16 %v6471
        %v7991 = vunpack.c.l.b16 %v6472
        %v7992 = vunpack.c.h.b16 %v6472
        %v7993 = vunpack.c.l.b16 %v6473
        %v7994 = vunpack.c.h.b16 %v6473
        %v7995 = vunpack.c.l.b16 %v6474
        %v7996 = vunpack.c.h.b16 %v6474
        %v7997 = vunpack.c.l.b16 %v6475
        %v7998 = vunpack.c.h.b16 %v6475
        %v7999 = vunpack.c.l.b16 %v6476
        %v8000 = vunpack.c.h.b16 %v6476
        %v8001 = vunpack.c.l.b16 %v6477
        %v8002 = vunpack.c.h.b16 %v6477
        %v8003 = vunpack.c.l.b16 %v6478
        %v8004 = vunpack.c.h.b16 %v6478
        %v8005 = vunpack.c.l.b16 %v6479
        %v8006 = vunpack.c.h.b16 %v6479
        %v8007 = vunpack.c.l.b16 %v6480
        %v8008 = vunpack.c.h.b16 %v6480
        %v8009 = vunpack.c.l.b16 %v6481
        %v8010 = vunpack.c.h.b16 %v6481
        %v8011 = vunpack.c.l.b16 %v6482
        %v8012 = vunpack.c.h.b16 %v6482
        %v8013 = vunpack.c.l.b16 %v6483
        %v8014 = vunpack.c.h.b16 %v6483
        %v8015 = vunpack.c.l.b16 %v6484
        %v8016 = vunpack.c.h.b16 %v6484
        %v8017 = vunpack.c.l.b16 %v6485
        %v8018 = vunpack.c.h.b16 %v6485
        %v8019 = vunpack.c.l.b16 %v6486
        %v8020 = vunpack.c.h.b16 %v6486
        %v8021 = vunpack.c.l.b16 %v6487
        %v8022 = vunpack.c.h.b16 %v6487
        %v8023 = vunpack.c.l.b16 %v6488
        %v8024 = vunpack.c.h.b16 %v6488
        %v8025 = vunpack.c.l.b16 %v6489
        %v8026 = vunpack.c.h.b16 %v6489
        %v8027 = vunpack.c.l.b16 %v6490
        %v8028 = vunpack.c.h.b16 %v6490
        %v8029 = vunpack.c.l.b16 %v6491
        %v8030 = vunpack.c.h.b16 %v6491
        %v8031 = vunpack.c.l.b16 %v6492
        %v8032 = vunpack.c.h.b16 %v6492
        %v8033 = vunpack.c.l.b16 %v6493
        %v8034 = vunpack.c.h.b16 %v6493
        %v8035 = vunpack.c.l.b16 %v6494
        %v8036 = vunpack.c.h.b16 %v6494
        %v8037 = vunpack.c.l.b16 %v6495
        %v8038 = vunpack.c.h.b16 %v6495
        %v8039 = vunpack.c.l.b16 %v6496
        %v8040 = vunpack.c.h.b16 %v6496
        %v8041 = vunpack.c.l.b16 %v6497
        %v8042 = vunpack.c.h.b16 %v6497
        %v8043 = vunpack.c.l.b16 %v6498
        %v8044 = vunpack.c.h.b16 %v6498
        %v8045 = vunpack.c.l.b16 %v6499
        %v8046 = vunpack.c.h.b16 %v6499
        %v8047 = vunpack.c.l.b16 %v6500
        %v8048 = vunpack.c.h.b16 %v6500
        %v8049 = vunpack.c.l.b16 %v6501
        %v8050 = vunpack.c.h.b16 %v6501
        %v8051 = vunpack.c.l.b16 %v6502
        %v8052 = vunpack.c.h.b16 %v6502
        %v8053 = vunpack.c.l.b16 %v6503
        %v8054 = vunpack.c.h.b16 %v6503
        %v8055 = vunpack.c.l.b16 %v6504
        %v8056 = vunpack.c.h.b16 %v6504
        %v8057 = vunpack.c.l.b16 %v6505
        %v8058 = vunpack.c.h.b16 %v6505
        %v8059 = vunpack.c.l.b16 %v6506
        %v8060 = vunpack.c.h.b16 %v6506
        %v8061 = vunpack.c.l.b16 %v6507
        %v8062 = vunpack.c.h.b16 %v6507
        %v8063 = vunpack.c.l.b16 %v6508
        %v8064 = vunpack.c.h.b16 %v6508
        %v8065 = vunpack.c.l.b16 %v6509
        %v8066 = vunpack.c.h.b16 %v6509
        %v8067 = vunpack.c.l.b16 %v6510
        %v8068 = vunpack.c.h.b16 %v6510
        %v8069 = vunpack.c.l.b16 %v6511
        %v8070 = vunpack.c.h.b16 %v6511
        %v8071 = vunpack.c.l.b16 %v6512
        %v8072 = vunpack.c.h.b16 %v6512
        %v8073 = vunpack.c.l.b16 %v6513
        %v8074 = vunpack.c.h.b16 %v6513
        %v8075 = vunpack.c.l.b16 %v6514
        %v8076 = vunpack.c.h.b16 %v6514
        %v8077 = vunpack.c.l.b16 %v6515
        %v8078 = vunpack.c.h.b16 %v6515
        %v8079 = vunpack.c.l.b16 %v6516
        %v8080 = vunpack.c.h.b16 %v6516
        %v8081 = vunpack.c.l.b16 %v6517
        %v8082 = vunpack.c.h.b16 %v6517
        %v8083 = vunpack.c.l.b16 %v6518
        %v8084 = vunpack.c.h.b16 %v6518
        %v8085 = vunpack.c.l.b16 %v6519
        %v8086 = vunpack.c.h.b16 %v6519
        %v8087 = vunpack.c.l.b16 %v6520
        %v8088 = vunpack.c.h.b16 %v6520
        %v8089 = vunpack.c.l.b16 %v6521
        %v8090 = vunpack.c.h.b16 %v6521
        %v8091 = vunpack.c.l.b16 %v6522
        %v8092 = vunpack.c.h.b16 %v6522
        %v8093 = vunpack.c.l.b16 %v6523
        %v8094 = vunpack.c.h.b16 %v6523
        %v8095 = vunpack.c.l.b16 %v6524
        %v8096 = vunpack.c.h.b16 %v6524
        %v8097 = vunpack.c.l.b16 %v6525
        %v8098 = vunpack.c.h.b16 %v6525
        %v8099 = vunpack.c.l.b16 %v6526
        %v8100 = vunpack.c.h.b16 %v6526
        %v8101 = vunpack.c.l.b16 %v6527
        %v8102 = vunpack.c.h.b16 %v6527
        %v8103 = vunpack.c.l.b16 %v6528
        %v8104 = vunpack.c.h.b16 %v6528
        %v8105 = vunpack.c.l.b16 %v6529
        %v8106 = vunpack.c.h.b16 %v6529
        %v8107 = vunpack.c.l.b16 %v6530
        %v8108 = vunpack.c.h.b16 %v6530
        %v8109 = vpack.c.b16 %v7093, %v7085
        %v8110 = vpack.c.b16 %v7094, %v7086
        %v8111 = vpack.c.b16 %v7095, %v7087
        %v8112 = vpack.c.b16 %v7096, %v7088
        %v8113 = vpack.c.b16 %v7097, %v7089
        %v8114 = vpack.c.b16 %v7098, %v7090
        %v8115 = vpack.c.b16 %v7099, %v7091
        %v8116 = vpack.c.b16 %v7100, %v7092
        %v8117 = vpack.c.b16 %v7109, %v7101
        %v8118 = vpack.c.b16 %v7110, %v7102
        %v8119 = vpack.c.b16 %v7111, %v7103
        %v8120 = vpack.c.b16 %v7112, %v7104
        %v8121 = vpack.c.b16 %v7113, %v7105
        %v8122 = vpack.c.b16 %v7114, %v7106
        %v8123 = vpack.c.b16 %v7115, %v7107
        %v8124 = vpack.c.b16 %v7116, %v7108
        %v8125 = vpack.c.b16 %v7125, %v7117
        %v8126 = vpack.c.b16 %v7126, %v7118
        %v8127 = vpack.c.b16 %v7127, %v7119
        %v8128 = vpack.c.b16 %v7128, %v7120
        %v8129 = vpack.c.b16 %v7129, %v7121
        %v8130 = vpack.c.b16 %v7130, %v7122
        %v8131 = vpack.c.b16 %v7131, %v7123
        %v8132 = vpack.c.b16 %v7132, %v7124
        %v8133 = vpack.c.b16 %v7141, %v7133
        %v8134 = vpack.c.b16 %v7142, %v7134
        %v8135 = vpack.c.b16 %v7143, %v7135
        %v8136 = vpack.c.b16 %v7144, %v7136
        %v8137 = vpack.c.b16 %v7145, %v7137
        %v8138 = vpack.c.b16 %v7146, %v7138
        %v8139 = vpack.c.b16 %v7147, %v7139
        %v8140 = vpack.c.b16 %v7148, %v7140
        %v8141 = vpack.c.b16 %v7157, %v7149
        %v8142 = vpack.c.b16 %v7158, %v7150
        %v8143 = vpack.c.b16 %v7159, %v7151
        %v8144 = vpack.c.b16 %v7160, %v7152
        %v8145 = vpack.c.b16 %v7161, %v7153
        %v8146 = vpack.c.b16 %v7162, %v7154
        %v8147 = vpack.c.b16 %v7163, %v7155
        %v8148 = vpack.c.b16 %v7164, %v7156
        %v8149 = vpack.c.b16 %v7173, %v7165
        %v8150 = vpack.c.b16 %v7174, %v7166
        %v8151 = vpack.c.b16 %v7175, %v7167
        %v8152 = vpack.c.b16 %v7176, %v7168
        %v8153 = vpack.c.b16 %v7177, %v7169
        %v8154 = vpack.c.b16 %v7178, %v7170
        %v8155 = vpack.c.b16 %v7179, %v7171
        %v8156 = vpack.c.b16 %v7180, %v7172
        %v8157 = vpack.c.b16 %v7189, %v7181
        %v8158 = vpack.c.b16 %v7190, %v7182
        %v8159 = vpack.c.b16 %v7191, %v7183
        %v8160 = vpack.c.b16 %v7192, %v7184
        %v8161 = vpack.c.b16 %v7193, %v7185
        %v8162 = vpack.c.b16 %v7194, %v7186
        %v8163 = vpack.c.b16 %v7195, %v7187
        %v8164 = vpack.c.b16 %v7196, %v7188
        %v8165 = vpack.c.b16 %v7205, %v7197
        %v8166 = vpack.c.b16 %v7206, %v7198
        %v8167 = vpack.c.b16 %v7207, %v7199
        %v8168 = vpack.c.b16 %v7208, %v7200
        %v8169 = vpack.c.b16 %v7209, %v7201
        %v8170 = vpack.c.b16 %v7210, %v7202
        %v8171 = vpack.c.b16 %v7211, %v7203
        %v8172 = vpack.c.b16 %v7212, %v7204
        %v8173 = vpack.c.b16 %v7221, %v7213
        %v8174 = vpack.c.b16 %v7222, %v7214
        %v8175 = vpack.c.b16 %v7223, %v7215
        %v8176 = vpack.c.b16 %v7224, %v7216
        %v8177 = vpack.c.b16 %v7225, %v7217
        %v8178 = vpack.c.b16 %v7226, %v7218
        %v8179 = vpack.c.b16 %v7227, %v7219
        %v8180 = vpack.c.b16 %v7228, %v7220
        %v8181 = vpack.c.b16 %v7237, %v7229
        %v8182 = vpack.c.b16 %v7238, %v7230
        %v8183 = vpack.c.b16 %v7239, %v7231
        %v8184 = vpack.c.b16 %v7240, %v7232
        %v8185 = vpack.c.b16 %v7241, %v7233
        %v8186 = vpack.c.b16 %v7242, %v7234
        %v8187 = vpack.c.b16 %v7243, %v7235
        %v8188 = vpack.c.b16 %v7244, %v7236
        %v8189 = vpack.c.b16 %v7253, %v7245
        %v8190 = vpack.c.b16 %v7254, %v7246
        %v8191 = vpack.c.b16 %v7255, %v7247
        %v8192 = vpack.c.b16 %v7256, %v7248
        %v8193 = vpack.c.b16 %v7257, %v7249
        %v8194 = vpack.c.b16 %v7258, %v7250
        %v8195 = vpack.c.b16 %v7259, %v7251
        %v8196 = vpack.c.b16 %v7260, %v7252
        %v8197 = vpack.c.b16 %v7269, %v7261
        %v8198 = vpack.c.b16 %v7270, %v7262
        %v8199 = vpack.c.b16 %v7271, %v7263
        %v8200 = vpack.c.b16 %v7272, %v7264
        %v8201 = vpack.c.b16 %v7273, %v7265
        %v8202 = vpack.c.b16 %v7274, %v7266
        %v8203 = vpack.c.b16 %v7275, %v7267
        %v8204 = vpack.c.b16 %v7276, %v7268
        %v8205 = vpack.c.b16 %v7285, %v7277
        %v8206 = vpack.c.b16 %v7286, %v7278
        %v8207 = vpack.c.b16 %v7287, %v7279
        %v8208 = vpack.c.b16 %v7288, %v7280
        %v8209 = vpack.c.b16 %v7289, %v7281
        %v8210 = vpack.c.b16 %v7290, %v7282
        %v8211 = vpack.c.b16 %v7291, %v7283
        %v8212 = vpack.c.b16 %v7292, %v7284
        %v8213 = vpack.c.b16 %v7301, %v7293
        %v8214 = vpack.c.b16 %v7302, %v7294
        %v8215 = vpack.c.b16 %v7303, %v7295
        %v8216 = vpack.c.b16 %v7304, %v7296
        %v8217 = vpack.c.b16 %v7305, %v7297
        %v8218 = vpack.c.b16 %v7306, %v7298
        %v8219 = vpack.c.b16 %v7307, %v7299
        %v8220 = vpack.c.b16 %v7308, %v7300
        %v8221 = vpack.c.b16 %v7317, %v7309
        %v8222 = vpack.c.b16 %v7318, %v7310
        %v8223 = vpack.c.b16 %v7319, %v7311
        %v8224 = vpack.c.b16 %v7320, %v7312
        %v8225 = vpack.c.b16 %v7321, %v7313
        %v8226 = vpack.c.b16 %v7322, %v7314
        %v8227 = vpack.c.b16 %v7323, %v7315
        %v8228 = vpack.c.b16 %v7324, %v7316
        %v8229 = vpack.c.b16 %v7333, %v7325
        %v8230 = vpack.c.b16 %v7334, %v7326
        %v8231 = vpack.c.b16 %v7335, %v7327
        %v8232 = vpack.c.b16 %v7336, %v7328
        %v8233 = vpack.c.b16 %v7337, %v7329
        %v8234 = vpack.c.b16 %v7338, %v7330
        %v8235 = vpack.c.b16 %v7339, %v7331
        %v8236 = vpack.c.b16 %v7340, %v7332
        %v8237 = vpack.c.b16 %v7349, %v7341
        %v8238 = vpack.c.b16 %v7350, %v7342
        %v8239 = vpack.c.b16 %v7351, %v7343
        %v8240 = vpack.c.b16 %v7352, %v7344
        %v8241 = vpack.c.b16 %v7353, %v7345
        %v8242 = vpack.c.b16 %v7354, %v7346
        %v8243 = vpack.c.b16 %v7355, %v7347
        %v8244 = vpack.c.b16 %v7356, %v7348
        %v8245 = vpack.c.b16 %v7365, %v7357
        %v8246 = vpack.c.b16 %v7366, %v7358
        %v8247 = vpack.c.b16 %v7367, %v7359
        %v8248 = vpack.c.b16 %v7368, %v7360
        %v8249 = vpack.c.b16 %v7369, %v7361
        %v8250 = vpack.c.b16 %v7370, %v7362
        %v8251 = vpack.c.b16 %v7371, %v7363
        %v8252 = vpack.c.b16 %v7372, %v7364
        %v8253 = vpack.c.b16 %v7381, %v7373
        %v8254 = vpack.c.b16 %v7382, %v7374
        %v8255 = vpack.c.b16 %v7383, %v7375
        %v8256 = vpack.c.b16 %v7384, %v7376
        %v8257 = vpack.c.b16 %v7385, %v7377
        %v8258 = vpack.c.b16 %v7386, %v7378
        %v8259 = vpack.c.b16 %v7387, %v7379
        %v8260 = vpack.c.b16 %v7388, %v7380
        %v8261 = vpack.c.b16 %v7397, %v7389
        %v8262 = vpack.c.b16 %v7398, %v7390
        %v8263 = vpack.c.b16 %v7399, %v7391
        %v8264 = vpack.c.b16 %v7400, %v7392
        %v8265 = vpack.c.b16 %v7401, %v7393
        %v8266 = vpack.c.b16 %v7402, %v7394
        %v8267 = vpack.c.b16 %v7403, %v7395
        %v8268 = vpack.c.b16 %v7404, %v7396
        %v8269 = vpack.c.b16 %v7413, %v7405
        %v8270 = vpack.c.b16 %v7414, %v7406
        %v8271 = vpack.c.b16 %v7415, %v7407
        %v8272 = vpack.c.b16 %v7416, %v7408
        %v8273 = vpack.c.b16 %v7417, %v7409
        %v8274 = vpack.c.b16 %v7418, %v7410
        %v8275 = vpack.c.b16 %v7419, %v7411
        %v8276 = vpack.c.b16 %v7420, %v7412
        %v8277 = vpack.c.b16 %v7429, %v7421
        %v8278 = vpack.c.b16 %v7430, %v7422
        %v8279 = vpack.c.b16 %v7431, %v7423
        %v8280 = vpack.c.b16 %v7432, %v7424
        %v8281 = vpack.c.b16 %v7433, %v7425
        %v8282 = vpack.c.b16 %v7434, %v7426
        %v8283 = vpack.c.b16 %v7435, %v7427
        %v8284 = vpack.c.b16 %v7436, %v7428
        %v8285 = vpack.c.b16 %v7445, %v7437
        %v8286 = vpack.c.b16 %v7446, %v7438
        %v8287 = vpack.c.b16 %v7447, %v7439
        %v8288 = vpack.c.b16 %v7448, %v7440
        %v8289 = vpack.c.b16 %v7449, %v7441
        %v8290 = vpack.c.b16 %v7450, %v7442
        %v8291 = vpack.c.b16 %v7451, %v7443
        %v8292 = vpack.c.b16 %v7452, %v7444
        %v8293 = vpack.c.b16 %v7461, %v7453
        %v8294 = vpack.c.b16 %v7462, %v7454
        %v8295 = vpack.c.b16 %v7463, %v7455
        %v8296 = vpack.c.b16 %v7464, %v7456
        %v8297 = vpack.c.b16 %v7465, %v7457
        %v8298 = vpack.c.b16 %v7466, %v7458
        %v8299 = vpack.c.b16 %v7467, %v7459
        %v8300 = vpack.c.b16 %v7468, %v7460
        %v8301 = vpack.c.b16 %v7477, %v7469
        %v8302 = vpack.c.b16 %v7478, %v7470
        %v8303 = vpack.c.b16 %v7479, %v7471
        %v8304 = vpack.c.b16 %v7480, %v7472
        %v8305 = vpack.c.b16 %v7481, %v7473
        %v8306 = vpack.c.b16 %v7482, %v7474
        %v8307 = vpack.c.b16 %v7483, %v7475
        %v8308 = vpack.c.b16 %v7484, %v7476
        %v8309 = vpack.c.b16 %v7493, %v7485
        %v8310 = vpack.c.b16 %v7494, %v7486
        %v8311 = vpack.c.b16 %v7495, %v7487
        %v8312 = vpack.c.b16 %v7496, %v7488
        %v8313 = vpack.c.b16 %v7497, %v7489
        %v8314 = vpack.c.b16 %v7498, %v7490
        %v8315 = vpack.c.b16 %v7499, %v7491
        %v8316 = vpack.c.b16 %v7500, %v7492
        %v8317 = vpack.c.b16 %v7509, %v7501
        %v8318 = vpack.c.b16 %v7510, %v7502
        %v8319 = vpack.c.b16 %v7511, %v7503
        %v8320 = vpack.c.b16 %v7512, %v7504
        %v8321 = vpack.c.b16 %v7513, %v7505
        %v8322 = vpack.c.b16 %v7514, %v7506
        %v8323 = vpack.c.b16 %v7515, %v7507
        %v8324 = vpack.c.b16 %v7516, %v7508
        %v8325 = vpack.c.b16 %v7525, %v7517
        %v8326 = vpack.c.b16 %v7526, %v7518
        %v8327 = vpack.c.b16 %v7527, %v7519
        %v8328 = vpack.c.b16 %v7528, %v7520
        %v8329 = vpack.c.b16 %v7529, %v7521
        %v8330 = vpack.c.b16 %v7530, %v7522
        %v8331 = vpack.c.b16 %v7531, %v7523
        %v8332 = vpack.c.b16 %v7532, %v7524
        %v8333 = vpack.c.b16 %v7541, %v7533
        %v8334 = vpack.c.b16 %v7542, %v7534
        %v8335 = vpack.c.b16 %v7543, %v7535
        %v8336 = vpack.c.b16 %v7544, %v7536
        %v8337 = vpack.c.b16 %v7545, %v7537
        %v8338 = vpack.c.b16 %v7546, %v7538
        %v8339 = vpack.c.b16 %v7547, %v7539
        %v8340 = vpack.c.b16 %v7548, %v7540
        %v8341 = vpack.c.b16 %v7557, %v7549
        %v8342 = vpack.c.b16 %v7558, %v7550
        %v8343 = vpack.c.b16 %v7559, %v7551
        %v8344 = vpack.c.b16 %v7560, %v7552
        %v8345 = vpack.c.b16 %v7561, %v7553
        %v8346 = vpack.c.b16 %v7562, %v7554
        %v8347 = vpack.c.b16 %v7563, %v7555
        %v8348 = vpack.c.b16 %v7564, %v7556
        %v8349 = vpack.c.b16 %v7573, %v7565
        %v8350 = vpack.c.b16 %v7574, %v7566
        %v8351 = vpack.c.b16 %v7575, %v7567
        %v8352 = vpack.c.b16 %v7576, %v7568
        %v8353 = vpack.c.b16 %v7577, %v7569
        %v8354 = vpack.c.b16 %v7578, %v7570
        %v8355 = vpack.c.b16 %v7579, %v7571
        %v8356 = vpack.c.b16 %v7580, %v7572
        %v8357 = vpack.c.b16 %v7589, %v7581
        %v8358 = vpack.c.b16 %v7590, %v7582
        %v8359 = vpack.c.b16 %v7591, %v7583
        %v8360 = vpack.c.b16 %v7592, %v7584
        %v8361 = vpack.c.b16 %v7593, %v7585
        %v8362 = vpack.c.b16 %v7594, %v7586
        %v8363 = vpack.c.b16 %v7595, %v7587
        %v8364 = vpack.c.b16 %v7596, %v7588
        %v8365 = vpack.c.b16 %v7605, %v7597
        %v8366 = vpack.c.b16 %v7606, %v7598
        %v8367 = vpack.c.b16 %v7607, %v7599
        %v8368 = vpack.c.b16 %v7608, %v7600
        %v8369 = vpack.c.b16 %v7609, %v7601
        %v8370 = vpack.c.b16 %v7610, %v7602
        %v8371 = vpack.c.b16 %v7611, %v7603
        %v8372 = vpack.c.b16 %v7612, %v7604
        %v8373 = vpack.c.b16 %v7621, %v7613
        %v8374 = vpack.c.b16 %v7622, %v7614
        %v8375 = vpack.c.b16 %v7623, %v7615
        %v8376 = vpack.c.b16 %v7624, %v7616
        %v8377 = vpack.c.b16 %v7625, %v7617
        %v8378 = vpack.c.b16 %v7626, %v7618
        %v8379 = vpack.c.b16 %v7627, %v7619
        %v8380 = vpack.c.b16 %v7628, %v7620
        %v8381 = vpack.c.b16 %v7637, %v7629
        %v8382 = vpack.c.b16 %v7638, %v7630
        %v8383 = vpack.c.b16 %v7639, %v7631
        %v8384 = vpack.c.b16 %v7640, %v7632
        %v8385 = vpack.c.b16 %v7641, %v7633
        %v8386 = vpack.c.b16 %v7642, %v7634
        %v8387 = vpack.c.b16 %v7643, %v7635
        %v8388 = vpack.c.b16 %v7644, %v7636
        %v8389 = vpack.c.b16 %v7653, %v7645
        %v8390 = vpack.c.b16 %v7654, %v7646
        %v8391 = vpack.c.b16 %v7655, %v7647
        %v8392 = vpack.c.b16 %v7656, %v7648
        %v8393 = vpack.c.b16 %v7657, %v7649
        %v8394 = vpack.c.b16 %v7658, %v7650
        %v8395 = vpack.c.b16 %v7659, %v7651
        %v8396 = vpack.c.b16 %v7660, %v7652
        %v8397 = vpack.c.b16 %v7669, %v7661
        %v8398 = vpack.c.b16 %v7670, %v7662
        %v8399 = vpack.c.b16 %v7671, %v7663
        %v8400 = vpack.c.b16 %v7672, %v7664
        %v8401 = vpack.c.b16 %v7673, %v7665
        %v8402 = vpack.c.b16 %v7674, %v7666
        %v8403 = vpack.c.b16 %v7675, %v7667
        %v8404 = vpack.c.b16 %v7676, %v7668
        %v8405 = vpack.c.b16 %v7685, %v7677
        %v8406 = vpack.c.b16 %v7686, %v7678
        %v8407 = vpack.c.b16 %v7687, %v7679
        %v8408 = vpack.c.b16 %v7688, %v7680
        %v8409 = vpack.c.b16 %v7689, %v7681
        %v8410 = vpack.c.b16 %v7690, %v7682
        %v8411 = vpack.c.b16 %v7691, %v7683
        %v8412 = vpack.c.b16 %v7692, %v7684
        %v8413 = vpack.c.b16 %v7701, %v7693
        %v8414 = vpack.c.b16 %v7702, %v7694
        %v8415 = vpack.c.b16 %v7703, %v7695
        %v8416 = vpack.c.b16 %v7704, %v7696
        %v8417 = vpack.c.b16 %v7705, %v7697
        %v8418 = vpack.c.b16 %v7706, %v7698
        %v8419 = vpack.c.b16 %v7707, %v7699
        %v8420 = vpack.c.b16 %v7708, %v7700
        %v8421 = vpack.c.b16 %v7717, %v7709
        %v8422 = vpack.c.b16 %v7718, %v7710
        %v8423 = vpack.c.b16 %v7719, %v7711
        %v8424 = vpack.c.b16 %v7720, %v7712
        %v8425 = vpack.c.b16 %v7721, %v7713
        %v8426 = vpack.c.b16 %v7722, %v7714
        %v8427 = vpack.c.b16 %v7723, %v7715
        %v8428 = vpack.c.b16 %v7724, %v7716
        %v8429 = vpack.c.b16 %v7733, %v7725
        %v8430 = vpack.c.b16 %v7734, %v7726
        %v8431 = vpack.c.b16 %v7735, %v7727
        %v8432 = vpack.c.b16 %v7736, %v7728
        %v8433 = vpack.c.b16 %v7737, %v7729
        %v8434 = vpack.c.b16 %v7738, %v7730
        %v8435 = vpack.c.b16 %v7739, %v7731
        %v8436 = vpack.c.b16 %v7740, %v7732
        %v8437 = vpack.c.b16 %v7749, %v7741
        %v8438 = vpack.c.b16 %v7750, %v7742
        %v8439 = vpack.c.b16 %v7751, %v7743
        %v8440 = vpack.c.b16 %v7752, %v7744
        %v8441 = vpack.c.b16 %v7753, %v7745
        %v8442 = vpack.c.b16 %v7754, %v7746
        %v8443 = vpack.c.b16 %v7755, %v7747
        %v8444 = vpack.c.b16 %v7756, %v7748
        %v8445 = vpack.c.b16 %v7765, %v7757
        %v8446 = vpack.c.b16 %v7766, %v7758
        %v8447 = vpack.c.b16 %v7767, %v7759
        %v8448 = vpack.c.b16 %v7768, %v7760
        %v8449 = vpack.c.b16 %v7769, %v7761
        %v8450 = vpack.c.b16 %v7770, %v7762
        %v8451 = vpack.c.b16 %v7771, %v7763
        %v8452 = vpack.c.b16 %v7772, %v7764
        %v8453 = vpack.c.b16 %v7781, %v7773
        %v8454 = vpack.c.b16 %v7782, %v7774
        %v8455 = vpack.c.b16 %v7783, %v7775
        %v8456 = vpack.c.b16 %v7784, %v7776
        %v8457 = vpack.c.b16 %v7785, %v7777
        %v8458 = vpack.c.b16 %v7786, %v7778
        %v8459 = vpack.c.b16 %v7787, %v7779
        %v8460 = vpack.c.b16 %v7788, %v7780
        %v8461 = vpack.c.b16 %v7797, %v7789
        %v8462 = vpack.c.b16 %v7798, %v7790
        %v8463 = vpack.c.b16 %v7799, %v7791
        %v8464 = vpack.c.b16 %v7800, %v7792
        %v8465 = vpack.c.b16 %v7801, %v7793
        %v8466 = vpack.c.b16 %v7802, %v7794
        %v8467 = vpack.c.b16 %v7803, %v7795
        %v8468 = vpack.c.b16 %v7804, %v7796
        %v8469 = vpack.c.b16 %v7813, %v7805
        %v8470 = vpack.c.b16 %v7814, %v7806
        %v8471 = vpack.c.b16 %v7815, %v7807
        %v8472 = vpack.c.b16 %v7816, %v7808
        %v8473 = vpack.c.b16 %v7817, %v7809
        %v8474 = vpack.c.b16 %v7818, %v7810
        %v8475 = vpack.c.b16 %v7819, %v7811
        %v8476 = vpack.c.b16 %v7820, %v7812
        %v8477 = vpack.c.b16 %v7829, %v7821
        %v8478 = vpack.c.b16 %v7830, %v7822
        %v8479 = vpack.c.b16 %v7831, %v7823
        %v8480 = vpack.c.b16 %v7832, %v7824
        %v8481 = vpack.c.b16 %v7833, %v7825
        %v8482 = vpack.c.b16 %v7834, %v7826
        %v8483 = vpack.c.b16 %v7835, %v7827
        %v8484 = vpack.c.b16 %v7836, %v7828
        %v8485 = vpack.c.b16 %v7845, %v7837
        %v8486 = vpack.c.b16 %v7846, %v7838
        %v8487 = vpack.c.b16 %v7847, %v7839
        %v8488 = vpack.c.b16 %v7848, %v7840
        %v8489 = vpack.c.b16 %v7849, %v7841
        %v8490 = vpack.c.b16 %v7850, %v7842
        %v8491 = vpack.c.b16 %v7851, %v7843
        %v8492 = vpack.c.b16 %v7852, %v7844
        %v8493 = vpack.c.b16 %v7861, %v7853
        %v8494 = vpack.c.b16 %v7862, %v7854
        %v8495 = vpack.c.b16 %v7863, %v7855
        %v8496 = vpack.c.b16 %v7864, %v7856
        %v8497 = vpack.c.b16 %v7865, %v7857
        %v8498 = vpack.c.b16 %v7866, %v7858
        %v8499 = vpack.c.b16 %v7867, %v7859
        %v8500 = vpack.c.b16 %v7868, %v7860
        %v8501 = vpack.c.b16 %v7877, %v7869
        %v8502 = vpack.c.b16 %v7878, %v7870
        %v8503 = vpack.c.b16 %v7879, %v7871
        %v8504 = vpack.c.b16 %v7880, %v7872
        %v8505 = vpack.c.b16 %v7881, %v7873
        %v8506 = vpack.c.b16 %v7882, %v7874
        %v8507 = vpack.c.b16 %v7883, %v7875
        %v8508 = vpack.c.b16 %v7884, %v7876
        %v8509 = vpack.c.b16 %v7893, %v7885
        %v8510 = vpack.c.b16 %v7894, %v7886
        %v8511 = vpack.c.b16 %v7895, %v7887
        %v8512 = vpack.c.b16 %v7896, %v7888
        %v8513 = vpack.c.b16 %v7897, %v7889
        %v8514 = vpack.c.b16 %v7898, %v7890
        %v8515 = vpack.c.b16 %v7899, %v7891
        %v8516 = vpack.c.b16 %v7900, %v7892
        %v8517 = vpack.c.b16 %v7909, %v7901
        %v8518 = vpack.c.b16 %v7910, %v7902
        %v8519 = vpack.c.b16 %v7911, %v7903
        %v8520 = vpack.c.b16 %v7912, %v7904
        %v8521 = vpack.c.b16 %v7913, %v7905
        %v8522 = vpack.c.b16 %v7914, %v7906
        %v8523 = vpack.c.b16 %v7915, %v7907
        %v8524 = vpack.c.b16 %v7916, %v7908
        %v8525 = vpack.c.b16 %v7925, %v7917
        %v8526 = vpack.c.b16 %v7926, %v7918
        %v8527 = vpack.c.b16 %v7927, %v7919
        %v8528 = vpack.c.b16 %v7928, %v7920
        %v8529 = vpack.c.b16 %v7929, %v7921
        %v8530 = vpack.c.b16 %v7930, %v7922
        %v8531 = vpack.c.b16 %v7931, %v7923
        %v8532 = vpack.c.b16 %v7932, %v7924
        %v8533 = vpack.c.b16 %v7941, %v7933
        %v8534 = vpack.c.b16 %v7942, %v7934
        %v8535 = vpack.c.b16 %v7943, %v7935
        %v8536 = vpack.c.b16 %v7944, %v7936
        %v8537 = vpack.c.b16 %v7945, %v7937
        %v8538 = vpack.c.b16 %v7946, %v7938
        %v8539 = vpack.c.b16 %v7947, %v7939
        %v8540 = vpack.c.b16 %v7948, %v7940
        %v8541 = vpack.c.b16 %v7957, %v7949
        %v8542 = vpack.c.b16 %v7958, %v7950
        %v8543 = vpack.c.b16 %v7959, %v7951
        %v8544 = vpack.c.b16 %v7960, %v7952
        %v8545 = vpack.c.b16 %v7961, %v7953
        %v8546 = vpack.c.b16 %v7962, %v7954
        %v8547 = vpack.c.b16 %v7963, %v7955
        %v8548 = vpack.c.b16 %v7964, %v7956
        %v8549 = vpack.c.b16 %v7973, %v7965
        %v8550 = vpack.c.b16 %v7974, %v7966
        %v8551 = vpack.c.b16 %v7975, %v7967
        %v8552 = vpack.c.b16 %v7976, %v7968
        %v8553 = vpack.c.b16 %v7977, %v7969
        %v8554 = vpack.c.b16 %v7978, %v7970
        %v8555 = vpack.c.b16 %v7979, %v7971
        %v8556 = vpack.c.b16 %v7980, %v7972
        %v8557 = vpack.c.b16 %v7989, %v7981
        %v8558 = vpack.c.b16 %v7990, %v7982
        %v8559 = vpack.c.b16 %v7991, %v7983
        %v8560 = vpack.c.b16 %v7992, %v7984
        %v8561 = vpack.c.b16 %v7993, %v7985
        %v8562 = vpack.c.b16 %v7994, %v7986
        %v8563 = vpack.c.b16 %v7995, %v7987
        %v8564 = vpack.c.b16 %v7996, %v7988
        %v8565 = vpack.c.b16 %v8005, %v7997
        %v8566 = vpack.c.b16 %v8006, %v7998
        %v8567 = vpack.c.b16 %v8007, %v7999
        %v8568 = vpack.c.b16 %v8008, %v8000
        %v8569 = vpack.c.b16 %v8009, %v8001
        %v8570 = vpack.c.b16 %v8010, %v8002
        %v8571 = vpack.c.b16 %v8011, %v8003
        %v8572 = vpack.c.b16 %v8012, %v8004
        %v8573 = vpack.c.b16 %v8021, %v8013
        %v8574 = vpack.c.b16 %v8022, %v8014
        %v8575 = vpack.c.b16 %v8023, %v8015
        %v8576 = vpack.c.b16 %v8024, %v8016
        %v8577 = vpack.c.b16 %v8025, %v8017
        %v8578 = vpack.c.b16 %v8026, %v8018
        %v8579 = vpack.c.b16 %v8027, %v8019
        %v8580 = vpack.c.b16 %v8028, %v8020
        %v8581 = vpack.c.b16 %v8037, %v8029
        %v8582 = vpack.c.b16 %v8038, %v8030
        %v8583 = vpack.c.b16 %v8039, %v8031
        %v8584 = vpack.c.b16 %v8040, %v8032
        %v8585 = vpack.c.b16 %v8041, %v8033
        %v8586 = vpack.c.b16 %v8042, %v8034
        %v8587 = vpack.c.b16 %v8043, %v8035
        %v8588 = vpack.c.b16 %v8044, %v8036
        %v8589 = vpack.c.b16 %v8053, %v8045
        %v8590 = vpack.c.b16 %v8054, %v8046
        %v8591 = vpack.c.b16 %v8055, %v8047
        %v8592 = vpack.c.b16 %v8056, %v8048
        %v8593 = vpack.c.b16 %v8057, %v8049
        %v8594 = vpack.c.b16 %v8058, %v8050
        %v8595 = vpack.c.b16 %v8059, %v8051
        %v8596 = vpack.c.b16 %v8060, %v8052
        %v8597 = vpack.c.b16 %v8069, %v8061
        %v8598 = vpack.c.b16 %v8070, %v8062
        %v8599 = vpack.c.b16 %v8071, %v8063
        %v8600 = vpack.c.b16 %v8072, %v8064
        %v8601 = vpack.c.b16 %v8073, %v8065
        %v8602 = vpack.c.b16 %v8074, %v8066
        %v8603 = vpack.c.b16 %v8075, %v8067
        %v8604 = vpack.c.b16 %v8076, %v8068
        %v8605 = vpack.c.b16 %v8085, %v8077
        %v8606 = vpack.c.b16 %v8086, %v8078
        %v8607 = vpack.c.b16 %v8087, %v8079
        %v8608 = vpack.c.b16 %v8088, %v8080
        %v8609 = vpack.c.b16 %v8089, %v8081
        %v8610 = vpack.c.b16 %v8090, %v8082
        %v8611 = vpack.c.b16 %v8091, %v8083
        %v8612 = vpack.c.b16 %v8092, %v8084
        %v8613 = vpack.c.b16 %v8101, %v8093
        %v8614 = vpack.c.b16 %v8102, %v8094
        %v8615 = vpack.c.b16 %v8103, %v8095
        %v8616 = vpack.c.b16 %v8104, %v8096
        %v8617 = vpack.c.b16 %v8105, %v8097
        %v8618 = vpack.c.b16 %v8106, %v8098
        %v8619 = vpack.c.b16 %v8107, %v8099
        %v8620 = vpack.c.b16 %v8108, %v8100
        %9133 = vmatprep.subr.bf16.mxu0 %v8110
        %9134 = vmatpush1.bf16.msra.mxu0 %v8109
        %9135 = vmatprep.subr.bf16.mxu0 %v8118
        %9136 = vmatpush1.bf16.msra.mxu0 %v8117
        %9137 = vmatprep.subr.bf16.mxu0 %v8126
        %9138 = vmatpush1.bf16.msra.mxu0 %v8125
        %9139 = vmatprep.subr.bf16.mxu0 %v8134
        %9140 = vmatpush1.bf16.msra.mxu0 %v8133
        %9141 = vmatprep.subr.bf16.mxu0 %v8142
        %9142 = vmatpush1.bf16.msra.mxu0 %v8141
        %9143 = vmatprep.subr.bf16.mxu0 %v8150
        %9144 = vmatpush1.bf16.msra.mxu0 %v8149
        %9145 = vmatprep.subr.bf16.mxu0 %v8158
        %9146 = vmatpush1.bf16.msra.mxu0 %v8157
        %9147 = vmatprep.subr.bf16.mxu0 %v8166
        %9148 = vmatpush1.bf16.msra.mxu0 %v8165
        %9149 = vmatprep.subr.bf16.mxu0 %v8174
        %9150 = vmatpush1.bf16.msra.mxu0 %v8173
        %9151 = vmatprep.subr.bf16.mxu0 %v8182
        %9152 = vmatpush1.bf16.msra.mxu0 %v8181
        %9153 = vmatprep.subr.bf16.mxu0 %v8190
        %9154 = vmatpush1.bf16.msra.mxu0 %v8189
        %9155 = vmatprep.subr.bf16.mxu0 %v8198
        %9156 = vmatpush1.bf16.msra.mxu0 %v8197
        %9157 = vmatprep.subr.bf16.mxu0 %v8206
        %9158 = vmatpush1.bf16.msra.mxu0 %v8205
        %9159 = vmatprep.subr.bf16.mxu0 %v8214
        %9160 = vmatpush1.bf16.msra.mxu0 %v8213
        %9161 = vmatprep.subr.bf16.mxu0 %v8222
        %9162 = vmatpush1.bf16.msra.mxu0 %v8221
        %9163 = vmatprep.subr.bf16.mxu0 %v8230
        %9164 = vmatpush1.bf16.msra.mxu0 %v8229
        %9165 = vmatprep.mubr.bf16.mxu0 %v5956
        %9166 = vmatmul.mubr.bf16.gmra.mrb[0].mxu0 %v5955
        %v9167 = vpop.f32.mrb[0].mxu0
        %v9168 = vadd.f32 %v6536, %v9167
        %v9169 = vpop.f32.mrb[0].mxu0
        %v9170 = vadd.f32 %v6540, %v9169
        %v9171 = vpop.f32.mrb[0].mxu0
        %v9172 = vadd.f32 %v6536, %v9171
        %v9173 = vpop.f32.mrb[0].mxu0
        %v9174 = vadd.f32 %v6540, %v9173
        %9175 = vmatprep.mubr.bf16.mxu0 %v5964
        %9176 = vmatmul.mubr.bf16.gmra.mrb[0].mxu0 %v5963
        %v9177 = vpop.f32.mrb[0].mxu0
        %v9178 = vadd.f32 %v6536, %v9177
        %v9179 = vpop.f32.mrb[0].mxu0
        %v9180 = vadd.f32 %v6540, %v9179
        %v9181 = vpop.f32.mrb[0].mxu0
        %v9182 = vadd.f32 %v6536, %v9181
        %v9183 = vpop.f32.mrb[0].mxu0
        %v9184 = vadd.f32 %v6540, %v9183
        %9185 = vmatprep.mubr.bf16.mxu0 %v5972
        %9186 = vmatmul.mubr.bf16.gmra.mrb[0].mxu0 %v5971
        %v9187 = vpop.f32.mrb[0].mxu0
        %v9188 = vadd.f32 %v6536, %v9187
        %v9189 = vpop.f32.mrb[0].mxu0
        %v9190 = vadd.f32 %v6540, %v9189
        %v9191 = vpop.f32.mrb[0].mxu0
        %v9192 = vadd.f32 %v6536, %v9191
        %v9193 = vpop.f32.mrb[0].mxu0
        %v9194 = vadd.f32 %v6540, %v9193
        %9195 = vmatprep.mubr.bf16.mxu0 %v5980
        %9196 = vmatmul.mubr.bf16.gmra.mrb[0].mxu0 %v5979
        %v9197 = vpop.f32.mrb[0].mxu0
        %v9198 = vadd.f32 %v6536, %v9197
        %v9199 = vpop.f32.mrb[0].mxu0
        %v9200 = vadd.f32 %v6540, %v9199
        %v9201 = vpop.f32.mrb[0].mxu0
        %v9202 = vadd.f32 %v6536, %v9201
        %v9203 = vpop.f32.mrb[0].mxu0
        %v9204 = vadd.f32 %v6540, %v9203
        %9205 = vmatprep.mubr.bf16.mxu0 %v5988
        %9206 = vmatmul.mubr.bf16.gmra.mrb[0].mxu0 %v5987
        %v9207 = vpop.f32.mrb[0].mxu0
        %v9208 = vadd.f32 %v6536, %v9207
        %v9209 = vpop.f32.mrb[0].mxu0
        %v9210 = vadd.f32 %v6540, %v9209
        %v9211 = vpop.f32.mrb[0].mxu0
        %v9212 = vadd.f32 %v6536, %v9211
        %v9213 = vpop.f32.mrb[0].mxu0
        %v9214 = vadd.f32 %v6540, %v9213
        %9215 = vmatprep.mubr.bf16.mxu0 %v5996
        %9216 = vmatmul.mubr.bf16.gmra.mrb[0].mxu0 %v5995
        %v9217 = vpop.f32.mrb[0].mxu0
        %v9218 = vadd.f32 %v6536, %v9217
        %v9219 = vpop.f32.mrb[0].mxu0
        %v9220 = vadd.f32 %v6540, %v9219
        %v9221 = vpop.f32.mrb[0].mxu0
        %v9222 = vadd.f32 %v6536, %v9221
        %v9223 = vpop.f32.mrb[0].mxu0
        %v9224 = vadd.f32 %v6540, %v9223
        %9225 = vmatprep.mubr.bf16.mxu0 %v6004
        %9226 = vmatmul.mubr.bf16.gmra.mrb[0].mxu0 %v6003
        %v9227 = vpop.f32.mrb[0].mxu0
        %v9228 = vadd.f32 %v6536, %v9227
        %v9229 = vpop.f32.mrb[0].mxu0
        %v9230 = vadd.f32 %v6540, %v9229
        %v9231 = vpop.f32.mrb[0].mxu0
        %v9232 = vadd.f32 %v6536, %v9231
        %v9233 = vpop.f32.mrb[0].mxu0
        %v9234 = vadd.f32 %v6540, %v9233
        %9235 = vmatprep.mubr.bf16.mxu0 %v6012
        %9236 = vmatmul.mubr.bf16.gmra.mrb[0].mxu0 %v6011
        %v9237 = vpop.f32.mrb[0].mxu0
        %v9238 = vadd.f32 %v6536, %v9237
        %v9239 = vpop.f32.mrb[0].mxu0
        %v9240 = vadd.f32 %v6540, %v9239
        %v9241 = vpop.f32.mrb[0].mxu0
        %v9242 = vadd.f32 %v6536, %v9241
        %v9243 = vpop.f32.mrb[0].mxu0
        %v9244 = vadd.f32 %v6540, %v9243
        %9245 = vdwg.mxu0
        %9246 = vmatprep.subr.bf16.mxu0 %v8238
        %9247 = vmatpush1.bf16.msra.mxu0 %v8237
        %9248 = vmatprep.subr.bf16.mxu0 %v8246
        %9249 = vmatpush1.bf16.msra.mxu0 %v8245
        %9250 = vmatprep.subr.bf16.mxu0 %v8254
        %9251 = vmatpush1.bf16.msra.mxu0 %v8253
        %9252 = vmatprep.subr.bf16.mxu0 %v8262
        %9253 = vmatpush1.bf16.msra.mxu0 %v8261
        %9254 = vmatprep.subr.bf16.mxu0 %v8270
        %9255 = vmatpush1.bf16.msra.mxu0 %v8269
        %9256 = vmatprep.subr.bf16.mxu0 %v8278
        %9257 = vmatpush1.bf16.msra.mxu0 %v8277
        %9258 = vmatprep.subr.bf16.mxu0 %v8286
        %9259 = vmatpush1.bf16.msra.mxu0 %v8285
        %9260 = vmatprep.subr.bf16.mxu0 %v8294
        %9261 = vmatpush1.bf16.msra.mxu0 %v8293
        %9262 = vmatprep.subr.bf16.mxu0 %v8302
        %9263 = vmatpush1.bf16.msra.mxu0 %v8301
        %9264 = vmatprep.subr.bf16.mxu0 %v8310
        %9265 = vmatpush1.bf16.msra.mxu0 %v8309
        %9266 = vmatprep.subr.bf16.mxu0 %v8318
        %9267 = vmatpush1.bf16.msra.mxu0 %v8317
        %9268 = vmatprep.subr.bf16.mxu0 %v8326
        %9269 = vmatpush1.bf16.msra.mxu0 %v8325
        %9270 = vmatprep.subr.bf16.mxu0 %v8334
        %9271 = vmatpush1.bf16.msra.mxu0 %v8333
        %9272 = vmatprep.subr.bf16.mxu0 %v8342
        %9273 = vmatpush1.bf16.msra.mxu0 %v8341
        %9274 = vmatprep.subr.bf16.mxu0 %v8350
        %9275 = vmatpush1.bf16.msra.mxu0 %v8349
        %9276 = vmatprep.subr.bf16.mxu0 %v8358
        %9277 = vmatpush1.bf16.msra.mxu0 %v8357
        %9278 = vmatprep.mubr.bf16.mxu0 %v5958
        %9279 = vmatmul.mubr.bf16.gmra.mrb[0].mxu0 %v5957
        %v9280 = vpop.f32.mrb[0].mxu0
        %v9281 = vadd.f32 %v9168, %v9280
        %v9282 = vpop.f32.mrb[0].mxu0
        %v9283 = vadd.f32 %v9170, %v9282
        %v9284 = vpop.f32.mrb[0].mxu0
        %v9285 = vadd.f32 %v9172, %v9284
        %v9286 = vpop.f32.mrb[0].mxu0
        %v9287 = vadd.f32 %v9174, %v9286
        %9288 = vmatprep.mubr.bf16.mxu0 %v5966
        %9289 = vmatmul.mubr.bf16.gmra.mrb[0].mxu0 %v5965
        %v9290 = vpop.f32.mrb[0].mxu0
        %v9291 = vadd.f32 %v9178, %v9290
        %v9292 = vpop.f32.mrb[0].mxu0
        %v9293 = vadd.f32 %v9180, %v9292
        %v9294 = vpop.f32.mrb[0].mxu0
        %v9295 = vadd.f32 %v9182, %v9294
        %v9296 = vpop.f32.mrb[0].mxu0
        %v9297 = vadd.f32 %v9184, %v9296
        %9298 = vmatprep.mubr.bf16.mxu0 %v5974
        %9299 = vmatmul.mubr.bf16.gmra.mrb[0].mxu0 %v5973
        %v9300 = vpop.f32.mrb[0].mxu0
        %v9301 = vadd.f32 %v9188, %v9300
        %v9302 = vpop.f32.mrb[0].mxu0
        %v9303 = vadd.f32 %v9190, %v9302
        %v9304 = vpop.f32.mrb[0].mxu0
        %v9305 = vadd.f32 %v9192, %v9304
        %v9306 = vpop.f32.mrb[0].mxu0
        %v9307 = vadd.f32 %v9194, %v9306
        %9308 = vmatprep.mubr.bf16.mxu0 %v5982
        %9309 = vmatmul.mubr.bf16.gmra.mrb[0].mxu0 %v5981
        %v9310 = vpop.f32.mrb[0].mxu0
        %v9311 = vadd.f32 %v9198, %v9310
        %v9312 = vpop.f32.mrb[0].mxu0
        %v9313 = vadd.f32 %v9200, %v9312
        %v9314 = vpop.f32.mrb[0].mxu0
        %v9315 = vadd.f32 %v9202, %v9314
        %v9316 = vpop.f32.mrb[0].mxu0
        %v9317 = vadd.f32 %v9204, %v9316
        %9318 = vmatprep.mubr.bf16.mxu0 %v5990
        %9319 = vmatmul.mubr.bf16.gmra.mrb[0].mxu0 %v5989
        %v9320 = vpop.f32.mrb[0].mxu0
        %v9321 = vadd.f32 %v9208, %v9320
        %v9322 = vpop.f32.mrb[0].mxu0
        %v9323 = vadd.f32 %v9210, %v9322
        %v9324 = vpop.f32.mrb[0].mxu0
        %v9325 = vadd.f32 %v9212, %v9324
        %v9326 = vpop.f32.mrb[0].mxu0
        %v9327 = vadd.f32 %v9214, %v9326
        %9328 = vmatprep.mubr.bf16.mxu0 %v5998
        %9329 = vmatmul.mubr.bf16.gmra.mrb[0].mxu0 %v5997
        %v9330 = vpop.f32.mrb[0].mxu0
        %v9331 = vadd.f32 %v9218, %v9330
        %v9332 = vpop.f32.mrb[0].mxu0
        %v9333 = vadd.f32 %v9220, %v9332
        %v9334 = vpop.f32.mrb[0].mxu0
        %v9335 = vadd.f32 %v9222, %v9334
        %v9336 = vpop.f32.mrb[0].mxu0
        %v9337 = vadd.f32 %v9224, %v9336
        %9338 = vmatprep.mubr.bf16.mxu0 %v6006
        %9339 = vmatmul.mubr.bf16.gmra.mrb[0].mxu0 %v6005
        %v9340 = vpop.f32.mrb[0].mxu0
        %v9341 = vadd.f32 %v9228, %v9340
        %v9342 = vpop.f32.mrb[0].mxu0
        %v9343 = vadd.f32 %v9230, %v9342
        %v9344 = vpop.f32.mrb[0].mxu0
        %v9345 = vadd.f32 %v9232, %v9344
        %v9346 = vpop.f32.mrb[0].mxu0
        %v9347 = vadd.f32 %v9234, %v9346
        %9348 = vmatprep.mubr.bf16.mxu0 %v6014
        %9349 = vmatmul.mubr.bf16.gmra.mrb[0].mxu0 %v6013
        %v9350 = vpop.f32.mrb[0].mxu0
        %v9351 = vadd.f32 %v9238, %v9350
        %v9352 = vpop.f32.mrb[0].mxu0
        %v9353 = vadd.f32 %v9240, %v9352
        %v9354 = vpop.f32.mrb[0].mxu0
        %v9355 = vadd.f32 %v9242, %v9354
        %v9356 = vpop.f32.mrb[0].mxu0
        %v9357 = vadd.f32 %v9244, %v9356
        %9358 = vdwg.mxu0
        %9359 = vmatprep.subr.bf16.mxu0 %v8366
        %9360 = vmatpush1.bf16.msra.mxu0 %v8365
        %9361 = vmatprep.subr.bf16.mxu0 %v8374
        %9362 = vmatpush1.bf16.msra.mxu0 %v8373
        %9363 = vmatprep.subr.bf16.mxu0 %v8382
        %9364 = vmatpush1.bf16.msra.mxu0 %v8381
        %9365 = vmatprep.subr.bf16.mxu0 %v8390
        %9366 = vmatpush1.bf16.msra.mxu0 %v8389
        %9367 = vmatprep.subr.bf16.mxu0 %v8398
        %9368 = vmatpush1.bf16.msra.mxu0 %v8397
        %9369 = vmatprep.subr.bf16.mxu0 %v8406
        %9370 = vmatpush1.bf16.msra.mxu0 %v8405
        %9371 = vmatprep.subr.bf16.mxu0 %v8414
        %9372 = vmatpush1.bf16.msra.mxu0 %v8413
        %9373 = vmatprep.subr.bf16.mxu0 %v8422
        %9374 = vmatpush1.bf16.msra.mxu0 %v8421
        %9375 = vmatprep.subr.bf16.mxu0 %v8430
        %9376 = vmatpush1.bf16.msra.mxu0 %v8429
        %9377 = vmatprep.subr.bf16.mxu0 %v8438
        %9378 = vmatpush1.bf16.msra.mxu0 %v8437
        %9379 = vmatprep.subr.bf16.mxu0 %v8446
        %9380 = vmatpush1.bf16.msra.mxu0 %v8445
        %9381 = vmatprep.subr.bf16.mxu0 %v8454
        %9382 = vmatpush1.bf16.msra.mxu0 %v8453
        %9383 = vmatprep.subr.bf16.mxu0 %v8462
        %9384 = vmatpush1.bf16.msra.mxu0 %v8461
        %9385 = vmatprep.subr.bf16.mxu0 %v8470
        %9386 = vmatpush1.bf16.msra.mxu0 %v8469
        %9387 = vmatprep.subr.bf16.mxu0 %v8478
        %9388 = vmatpush1.bf16.msra.mxu0 %v8477
        %9389 = vmatprep.subr.bf16.mxu0 %v8486
        %9390 = vmatpush1.bf16.msra.mxu0 %v8485
        %9391 = vmatprep.mubr.bf16.mxu0 %v5960
        %9392 = vmatmul.mubr.bf16.gmra.mrb[0].mxu0 %v5959
        %v9393 = vpop.f32.mrb[0].mxu0
        %v9394 = vadd.f32 %v9281, %v9393
        %v9395 = vpop.f32.mrb[0].mxu0
        %v9396 = vadd.f32 %v9283, %v9395
        %v9397 = vpop.f32.mrb[0].mxu0
        %v9398 = vadd.f32 %v9285, %v9397
        %v9399 = vpop.f32.mrb[0].mxu0
        %v9400 = vadd.f32 %v9287, %v9399
        %9401 = vmatprep.mubr.bf16.mxu0 %v5968
        %9402 = vmatmul.mubr.bf16.gmra.mrb[0].mxu0 %v5967
        %v9403 = vpop.f32.mrb[0].mxu0
        %v9404 = vadd.f32 %v9291, %v9403
        %v9405 = vpop.f32.mrb[0].mxu0
        %v9406 = vadd.f32 %v9293, %v9405
        %v9407 = vpop.f32.mrb[0].mxu0
        %v9408 = vadd.f32 %v9295, %v9407
        %v9409 = vpop.f32.mrb[0].mxu0
        %v9410 = vadd.f32 %v9297, %v9409
        %9411 = vmatprep.mubr.bf16.mxu0 %v5976
        %9412 = vmatmul.mubr.bf16.gmra.mrb[0].mxu0 %v5975
        %v9413 = vpop.f32.mrb[0].mxu0
        %v9414 = vadd.f32 %v9301, %v9413
        %v9415 = vpop.f32.mrb[0].mxu0
        %v9416 = vadd.f32 %v9303, %v9415
        %v9417 = vpop.f32.mrb[0].mxu0
        %v9418 = vadd.f32 %v9305, %v9417
        %v9419 = vpop.f32.mrb[0].mxu0
        %v9420 = vadd.f32 %v9307, %v9419
        %9421 = vmatprep.mubr.bf16.mxu0 %v5984
        %9422 = vmatmul.mubr.bf16.gmra.mrb[0].mxu0 %v5983
        %v9423 = vpop.f32.mrb[0].mxu0
        %v9424 = vadd.f32 %v9311, %v9423
        %v9425 = vpop.f32.mrb[0].mxu0
        %v9426 = vadd.f32 %v9313, %v9425
        %v9427 = vpop.f32.mrb[0].mxu0
        %v9428 = vadd.f32 %v9315, %v9427
        %v9429 = vpop.f32.mrb[0].mxu0
        %v9430 = vadd.f32 %v9317, %v9429
        %9431 = vmatprep.mubr.bf16.mxu0 %v5992
        %9432 = vmatmul.mubr.bf16.gmra.mrb[0].mxu0 %v5991
        %v9433 = vpop.f32.mrb[0].mxu0
        %v9434 = vadd.f32 %v9321, %v9433
        %v9435 = vpop.f32.mrb[0].mxu0
        %v9436 = vadd.f32 %v9323, %v9435
        %v9437 = vpop.f32.mrb[0].mxu0
        %v9438 = vadd.f32 %v9325, %v9437
        %v9439 = vpop.f32.mrb[0].mxu0
        %v9440 = vadd.f32 %v9327, %v9439
        %9441 = vmatprep.mubr.bf16.mxu0 %v6000
        %9442 = vmatmul.mubr.bf16.gmra.mrb[0].mxu0 %v5999
        %v9443 = vpop.f32.mrb[0].mxu0
        %v9444 = vadd.f32 %v9331, %v9443
        %v9445 = vpop.f32.mrb[0].mxu0
        %v9446 = vadd.f32 %v9333, %v9445
        %v9447 = vpop.f32.mrb[0].mxu0
        %v9448 = vadd.f32 %v9335, %v9447
        %v9449 = vpop.f32.mrb[0].mxu0
        %v9450 = vadd.f32 %v9337, %v9449
        %9451 = vmatprep.mubr.bf16.mxu0 %v6008
        %9452 = vmatmul.mubr.bf16.gmra.mrb[0].mxu0 %v6007
        %v9453 = vpop.f32.mrb[0].mxu0
        %v9454 = vadd.f32 %v9341, %v9453
        %v9455 = vpop.f32.mrb[0].mxu0
        %v9456 = vadd.f32 %v9343, %v9455
        %v9457 = vpop.f32.mrb[0].mxu0
        %v9458 = vadd.f32 %v9345, %v9457
        %v9459 = vpop.f32.mrb[0].mxu0
        %v9460 = vadd.f32 %v9347, %v9459
        %9461 = vmatprep.mubr.bf16.mxu0 %v6016
        %9462 = vmatmul.mubr.bf16.gmra.mrb[0].mxu0 %v6015
        %v9463 = vpop.f32.mrb[0].mxu0
        %v9464 = vadd.f32 %v9351, %v9463
        %v9465 = vpop.f32.mrb[0].mxu0
        %v9466 = vadd.f32 %v9353, %v9465
        %v9467 = vpop.f32.mrb[0].mxu0
        %v9468 = vadd.f32 %v9355, %v9467
        %v9469 = vpop.f32.mrb[0].mxu0
        %v9470 = vadd.f32 %v9357, %v9469
        %9471 = vdwg.mxu0
        %9472 = vmatprep.subr.bf16.mxu0 %v8494
        %9473 = vmatpush1.bf16.msra.mxu0 %v8493
        %9474 = vmatprep.subr.bf16.mxu0 %v8502
        %9475 = vmatpush1.bf16.msra.mxu0 %v8501
        %9476 = vmatprep.subr.bf16.mxu0 %v8510
        %9477 = vmatpush1.bf16.msra.mxu0 %v8509
        %9478 = vmatprep.subr.bf16.mxu0 %v8518
        %9479 = vmatpush1.bf16.msra.mxu0 %v8517
        %9480 = vmatprep.subr.bf16.mxu0 %v8526
        %9481 = vmatpush1.bf16.msra.mxu0 %v8525
        %9482 = vmatprep.subr.bf16.mxu0 %v8534
        %9483 = vmatpush1.bf16.msra.mxu0 %v8533
        %9484 = vmatprep.subr.bf16.mxu0 %v8542
        %9485 = vmatpush1.bf16.msra.mxu0 %v8541
        %9486 = vmatprep.subr.bf16.mxu0 %v8550
        %9487 = vmatpush1.bf16.msra.mxu0 %v8549
        %9488 = vmatprep.subr.bf16.mxu0 %v8558
        %9489 = vmatpush1.bf16.msra.mxu0 %v8557
        %9490 = vmatprep.subr.bf16.mxu0 %v8566
        %9491 = vmatpush1.bf16.msra.mxu0 %v8565
        %9492 = vmatprep.subr.bf16.mxu0 %v8574
        %9493 = vmatpush1.bf16.msra.mxu0 %v8573
        %9494 = vmatprep.subr.bf16.mxu0 %v8582
        %9495 = vmatpush1.bf16.msra.mxu0 %v8581
        %9496 = vmatprep.subr.bf16.mxu0 %v8590
        %9497 = vmatpush1.bf16.msra.mxu0 %v8589
        %9498 = vmatprep.subr.bf16.mxu0 %v8598
        %9499 = vmatpush1.bf16.msra.mxu0 %v8597
        %9500 = vmatprep.subr.bf16.mxu0 %v8606
        %9501 = vmatpush1.bf16.msra.mxu0 %v8605
        %9502 = vmatprep.subr.bf16.mxu0 %v8614
        %9503 = vmatpush1.bf16.msra.mxu0 %v8613
        %9504 = vmatprep.mubr.bf16.mxu0 %v5962
        %9505 = vmatmul.mubr.bf16.gmra.mrb[0].mxu0 %v5961
        %v9506 = vpop.f32.mrb[0].mxu0
        %v9507 = vadd.f32 %v9394, %v9506
        %v9508 = vpop.f32.mrb[0].mxu0
        %v9509 = vadd.f32 %v9396, %v9508
        %v9510 = vpop.f32.mrb[0].mxu0
        %v9511 = vadd.f32 %v9398, %v9510
        %v9512 = vpop.f32.mrb[0].mxu0
        %v9513 = vadd.f32 %v9400, %v9512
        %9514 = vmatprep.mubr.bf16.mxu0 %v5970
        %9515 = vmatmul.mubr.bf16.gmra.mrb[0].mxu0 %v5969
        %v9516 = vpop.f32.mrb[0].mxu0
        %v9517 = vadd.f32 %v9404, %v9516
        %v9518 = vpop.f32.mrb[0].mxu0
        %v9519 = vadd.f32 %v9406, %v9518
        %v9520 = vpop.f32.mrb[0].mxu0
        %v9521 = vadd.f32 %v9408, %v9520
        %v9522 = vpop.f32.mrb[0].mxu0
        %v9523 = vadd.f32 %v9410, %v9522
        %9524 = vmatprep.mubr.bf16.mxu0 %v5978
        %9525 = vmatmul.mubr.bf16.gmra.mrb[0].mxu0 %v5977
        %v9526 = vpop.f32.mrb[0].mxu0
        %v9527 = vadd.f32 %v9414, %v9526
        %v9528 = vpop.f32.mrb[0].mxu0
        %v9529 = vadd.f32 %v9416, %v9528
        %v9530 = vpop.f32.mrb[0].mxu0
        %v9531 = vadd.f32 %v9418, %v9530
        %v9532 = vpop.f32.mrb[0].mxu0
        %v9533 = vadd.f32 %v9420, %v9532
        %9534 = vmatprep.mubr.bf16.mxu0 %v5986
        %9535 = vmatmul.mubr.bf16.gmra.mrb[0].mxu0 %v5985
        %v9536 = vpop.f32.mrb[0].mxu0
        %v9537 = vadd.f32 %v9424, %v9536
        %v9538 = vpop.f32.mrb[0].mxu0
        %v9539 = vadd.f32 %v9426, %v9538
        %v9540 = vpop.f32.mrb[0].mxu0
        %v9541 = vadd.f32 %v9428, %v9540
        %v9542 = vpop.f32.mrb[0].mxu0
        %v9543 = vadd.f32 %v9430, %v9542
        %9544 = vmatprep.mubr.bf16.mxu0 %v5994
        %9545 = vmatmul.mubr.bf16.gmra.mrb[0].mxu0 %v5993
        %v9546 = vpop.f32.mrb[0].mxu0
        %v9547 = vadd.f32 %v9434, %v9546
        %v9548 = vpop.f32.mrb[0].mxu0
        %v9549 = vadd.f32 %v9436, %v9548
        %v9550 = vpop.f32.mrb[0].mxu0
        %v9551 = vadd.f32 %v9438, %v9550
        %v9552 = vpop.f32.mrb[0].mxu0
        %v9553 = vadd.f32 %v9440, %v9552
        %9554 = vmatprep.mubr.bf16.mxu0 %v6002
        %9555 = vmatmul.mubr.bf16.gmra.mrb[0].mxu0 %v6001
        %v9556 = vpop.f32.mrb[0].mxu0
        %v9557 = vadd.f32 %v9444, %v9556
        %v9558 = vpop.f32.mrb[0].mxu0
        %v9559 = vadd.f32 %v9446, %v9558
        %v9560 = vpop.f32.mrb[0].mxu0
        %v9561 = vadd.f32 %v9448, %v9560
        %v9562 = vpop.f32.mrb[0].mxu0
        %v9563 = vadd.f32 %v9450, %v9562
        %9564 = vmatprep.mubr.bf16.mxu0 %v6010
        %9565 = vmatmul.mubr.bf16.gmra.mrb[0].mxu0 %v6009
        %v9566 = vpop.f32.mrb[0].mxu0
        %v9567 = vadd.f32 %v9454, %v9566
        %v9568 = vpop.f32.mrb[0].mxu0
        %v9569 = vadd.f32 %v9456, %v9568
        %v9570 = vpop.f32.mrb[0].mxu0
        %v9571 = vadd.f32 %v9458, %v9570
        %v9572 = vpop.f32.mrb[0].mxu0
        %v9573 = vadd.f32 %v9460, %v9572
        %9574 = vmatprep.mubr.bf16.mxu0 %v6018
        %9575 = vmatmul.mubr.bf16.gmra.mrb[0].mxu0 %v6017
        %v9576 = vpop.f32.mrb[0].mxu0
        %v9577 = vadd.f32 %v9464, %v9576
        %v9578 = vpop.f32.mrb[0].mxu0
        %v9579 = vadd.f32 %v9466, %v9578
        %v9580 = vpop.f32.mrb[0].mxu0
        %v9581 = vadd.f32 %v9468, %v9580
        %v9582 = vpop.f32.mrb[0].mxu0
        %v9583 = vadd.f32 %v9470, %v9582
        %9584 = vdwg.mxu0
        %9585 = vmatprep.subr.bf16.mxu0 %v8112
        %9586 = vmatpush1.bf16.msra.mxu0 %v8111
        %9587 = vmatprep.subr.bf16.mxu0 %v8120
        %9588 = vmatpush1.bf16.msra.mxu0 %v8119
        %9589 = vmatprep.subr.bf16.mxu0 %v8128
        %9590 = vmatpush1.bf16.msra.mxu0 %v8127
        %9591 = vmatprep.subr.bf16.mxu0 %v8136
        %9592 = vmatpush1.bf16.msra.mxu0 %v8135
        %9593 = vmatprep.subr.bf16.mxu0 %v8144
        %9594 = vmatpush1.bf16.msra.mxu0 %v8143
        %9595 = vmatprep.subr.bf16.mxu0 %v8152
        %9596 = vmatpush1.bf16.msra.mxu0 %v8151
        %9597 = vmatprep.subr.bf16.mxu0 %v8160
        %9598 = vmatpush1.bf16.msra.mxu0 %v8159
        %9599 = vmatprep.subr.bf16.mxu0 %v8168
        %9600 = vmatpush1.bf16.msra.mxu0 %v8167
        %9601 = vmatprep.subr.bf16.mxu0 %v8176
        %9602 = vmatpush1.bf16.msra.mxu0 %v8175
        %9603 = vmatprep.subr.bf16.mxu0 %v8184
        %9604 = vmatpush1.bf16.msra.mxu0 %v8183
        %9605 = vmatprep.subr.bf16.mxu0 %v8192
        %9606 = vmatpush1.bf16.msra.mxu0 %v8191
        %9607 = vmatprep.subr.bf16.mxu0 %v8200
        %9608 = vmatpush1.bf16.msra.mxu0 %v8199
        %9609 = vmatprep.subr.bf16.mxu0 %v8208
        %9610 = vmatpush1.bf16.msra.mxu0 %v8207
        %9611 = vmatprep.subr.bf16.mxu0 %v8216
        %9612 = vmatpush1.bf16.msra.mxu0 %v8215
        %9613 = vmatprep.subr.bf16.mxu0 %v8224
        %9614 = vmatpush1.bf16.msra.mxu0 %v8223
        %9615 = vmatprep.subr.bf16.mxu0 %v8232
        %9616 = vmatpush1.bf16.msra.mxu0 %v8231
        %9617 = vmatprep.mubr.bf16.mxu0 %v5956
        %9618 = vmatmul.mubr.bf16.gmra.mrb[0].mxu0 %v5955
        %v9619 = vpop.f32.mrb[0].mxu0
        %v9620 = vadd.f32 %v6544, %v9619
        %v9621 = vpop.f32.mrb[0].mxu0
        %v9622 = vadd.f32 %v6548, %v9621
        %v9623 = vpop.f32.mrb[0].mxu0
        %v9624 = vadd.f32 %v6544, %v9623
        %v9625 = vpop.f32.mrb[0].mxu0
        %v9626 = vadd.f32 %v6548, %v9625
        %9627 = vmatprep.mubr.bf16.mxu0 %v5964
        %9628 = vmatmul.mubr.bf16.gmra.mrb[0].mxu0 %v5963
        %v9629 = vpop.f32.mrb[0].mxu0
        %v9630 = vadd.f32 %v6544, %v9629
        %v9631 = vpop.f32.mrb[0].mxu0
        %v9632 = vadd.f32 %v6548, %v9631
        %v9633 = vpop.f32.mrb[0].mxu0
        %v9634 = vadd.f32 %v6544, %v9633
        %v9635 = vpop.f32.mrb[0].mxu0
        %v9636 = vadd.f32 %v6548, %v9635
        %9637 = vmatprep.mubr.bf16.mxu0 %v5972
        %9638 = vmatmul.mubr.bf16.gmra.mrb[0].mxu0 %v5971
        %v9639 = vpop.f32.mrb[0].mxu0
        %v9640 = vadd.f32 %v6544, %v9639
        %v9641 = vpop.f32.mrb[0].mxu0
        %v9642 = vadd.f32 %v6548, %v9641
        %v9643 = vpop.f32.mrb[0].mxu0
        %v9644 = vadd.f32 %v6544, %v9643
        %v9645 = vpop.f32.mrb[0].mxu0
        %v9646 = vadd.f32 %v6548, %v9645
        %9647 = vmatprep.mubr.bf16.mxu0 %v5980
        %9648 = vmatmul.mubr.bf16.gmra.mrb[0].mxu0 %v5979
        %v9649 = vpop.f32.mrb[0].mxu0
        %v9650 = vadd.f32 %v6544, %v9649
        %v9651 = vpop.f32.mrb[0].mxu0
        %v9652 = vadd.f32 %v6548, %v9651
        %v9653 = vpop.f32.mrb[0].mxu0
        %v9654 = vadd.f32 %v6544, %v9653
        %v9655 = vpop.f32.mrb[0].mxu0
        %v9656 = vadd.f32 %v6548, %v9655
        %9657 = vmatprep.mubr.bf16.mxu0 %v5988
        %9658 = vmatmul.mubr.bf16.gmra.mrb[0].mxu0 %v5987
        %v9659 = vpop.f32.mrb[0].mxu0
        %v9660 = vadd.f32 %v6544, %v9659
        %v9661 = vpop.f32.mrb[0].mxu0
        %v9662 = vadd.f32 %v6548, %v9661
        %v9663 = vpop.f32.mrb[0].mxu0
        %v9664 = vadd.f32 %v6544, %v9663
        %v9665 = vpop.f32.mrb[0].mxu0
        %v9666 = vadd.f32 %v6548, %v9665
        %9667 = vmatprep.mubr.bf16.mxu0 %v5996
        %9668 = vmatmul.mubr.bf16.gmra.mrb[0].mxu0 %v5995
        %v9669 = vpop.f32.mrb[0].mxu0
        %v9670 = vadd.f32 %v6544, %v9669
        %v9671 = vpop.f32.mrb[0].mxu0
        %v9672 = vadd.f32 %v6548, %v9671
        %v9673 = vpop.f32.mrb[0].mxu0
        %v9674 = vadd.f32 %v6544, %v9673
        %v9675 = vpop.f32.mrb[0].mxu0
        %v9676 = vadd.f32 %v6548, %v9675
        %9677 = vmatprep.mubr.bf16.mxu0 %v6004
        %9678 = vmatmul.mubr.bf16.gmra.mrb[0].mxu0 %v6003
        %v9679 = vpop.f32.mrb[0].mxu0
        %v9680 = vadd.f32 %v6544, %v9679
        %v9681 = vpop.f32.mrb[0].mxu0
        %v9682 = vadd.f32 %v6548, %v9681
        %v9683 = vpop.f32.mrb[0].mxu0
        %v9684 = vadd.f32 %v6544, %v9683
        %v9685 = vpop.f32.mrb[0].mxu0
        %v9686 = vadd.f32 %v6548, %v9685
        %9687 = vmatprep.mubr.bf16.mxu0 %v6012
        %9688 = vmatmul.mubr.bf16.gmra.mrb[0].mxu0 %v6011
        %v9689 = vpop.f32.mrb[0].mxu0
        %v9690 = vadd.f32 %v6544, %v9689
        %v9691 = vpop.f32.mrb[0].mxu0
        %v9692 = vadd.f32 %v6548, %v9691
        %v9693 = vpop.f32.mrb[0].mxu0
        %v9694 = vadd.f32 %v6544, %v9693
        %v9695 = vpop.f32.mrb[0].mxu0
        %v9696 = vadd.f32 %v6548, %v9695
        %9697 = vdwg.mxu0
        %9698 = vmatprep.subr.bf16.mxu0 %v8240
        %9699 = vmatpush1.bf16.msra.mxu0 %v8239
        %9700 = vmatprep.subr.bf16.mxu0 %v8248
        %9701 = vmatpush1.bf16.msra.mxu0 %v8247
        %9702 = vmatprep.subr.bf16.mxu0 %v8256
        %9703 = vmatpush1.bf16.msra.mxu0 %v8255
        %9704 = vmatprep.subr.bf16.mxu0 %v8264
        %9705 = vmatpush1.bf16.msra.mxu0 %v8263
        %9706 = vmatprep.subr.bf16.mxu0 %v8272
        %9707 = vmatpush1.bf16.msra.mxu0 %v8271
        %9708 = vmatprep.subr.bf16.mxu0 %v8280
        %9709 = vmatpush1.bf16.msra.mxu0 %v8279
        %9710 = vmatprep.subr.bf16.mxu0 %v8288
        %9711 = vmatpush1.bf16.msra.mxu0 %v8287
        %9712 = vmatprep.subr.bf16.mxu0 %v8296
        %9713 = vmatpush1.bf16.msra.mxu0 %v8295
        %9714 = vmatprep.subr.bf16.mxu0 %v8304
        %9715 = vmatpush1.bf16.msra.mxu0 %v8303
        %9716 = vmatprep.subr.bf16.mxu0 %v8312
        %9717 = vmatpush1.bf16.msra.mxu0 %v8311
        %9718 = vmatprep.subr.bf16.mxu0 %v8320
        %9719 = vmatpush1.bf16.msra.mxu0 %v8319
        %9720 = vmatprep.subr.bf16.mxu0 %v8328
        %9721 = vmatpush1.bf16.msra.mxu0 %v8327
        %9722 = vmatprep.subr.bf16.mxu0 %v8336
        %9723 = vmatpush1.bf16.msra.mxu0 %v8335
        %9724 = vmatprep.subr.bf16.mxu0 %v8344
        %9725 = vmatpush1.bf16.msra.mxu0 %v8343
        %9726 = vmatprep.subr.bf16.mxu0 %v8352
        %9727 = vmatpush1.bf16.msra.mxu0 %v8351
        %9728 = vmatprep.subr.bf16.mxu0 %v8360
        %9729 = vmatpush1.bf16.msra.mxu0 %v8359
        %9730 = vmatprep.mubr.bf16.mxu0 %v5958
        %9731 = vmatmul.mubr.bf16.gmra.mrb[0].mxu0 %v5957
        %v9732 = vpop.f32.mrb[0].mxu0
        %v9733 = vadd.f32 %v9620, %v9732
        %v9734 = vpop.f32.mrb[0].mxu0
        %v9735 = vadd.f32 %v9622, %v9734
        %v9736 = vpop.f32.mrb[0].mxu0
        %v9737 = vadd.f32 %v9624, %v9736
        %v9738 = vpop.f32.mrb[0].mxu0
        %v9739 = vadd.f32 %v9626, %v9738
        %9740 = vmatprep.mubr.bf16.mxu0 %v5966
        %9741 = vmatmul.mubr.bf16.gmra.mrb[0].mxu0 %v5965
        %v9742 = vpop.f32.mrb[0].mxu0
        %v9743 = vadd.f32 %v9630, %v9742
        %v9744 = vpop.f32.mrb[0].mxu0
        %v9745 = vadd.f32 %v9632, %v9744
        %v9746 = vpop.f32.mrb[0].mxu0
        %v9747 = vadd.f32 %v9634, %v9746
        %v9748 = vpop.f32.mrb[0].mxu0
        %v9749 = vadd.f32 %v9636, %v9748
        %9750 = vmatprep.mubr.bf16.mxu0 %v5974
        %9751 = vmatmul.mubr.bf16.gmra.mrb[0].mxu0 %v5973
        %v9752 = vpop.f32.mrb[0].mxu0
        %v9753 = vadd.f32 %v9640, %v9752
        %v9754 = vpop.f32.mrb[0].mxu0
        %v9755 = vadd.f32 %v9642, %v9754
        %v9756 = vpop.f32.mrb[0].mxu0
        %v9757 = vadd.f32 %v9644, %v9756
        %v9758 = vpop.f32.mrb[0].mxu0
        %v9759 = vadd.f32 %v9646, %v9758
        %9760 = vmatprep.mubr.bf16.mxu0 %v5982
        %9761 = vmatmul.mubr.bf16.gmra.mrb[0].mxu0 %v5981
        %v9762 = vpop.f32.mrb[0].mxu0
        %v9763 = vadd.f32 %v9650, %v9762
        %v9764 = vpop.f32.mrb[0].mxu0
        %v9765 = vadd.f32 %v9652, %v9764
        %v9766 = vpop.f32.mrb[0].mxu0
        %v9767 = vadd.f32 %v9654, %v9766
        %v9768 = vpop.f32.mrb[0].mxu0
        %v9769 = vadd.f32 %v9656, %v9768
        %9770 = vmatprep.mubr.bf16.mxu0 %v5990
        %9771 = vmatmul.mubr.bf16.gmra.mrb[0].mxu0 %v5989
        %v9772 = vpop.f32.mrb[0].mxu0
        %v9773 = vadd.f32 %v9660, %v9772
        %v9774 = vpop.f32.mrb[0].mxu0
        %v9775 = vadd.f32 %v9662, %v9774
        %v9776 = vpop.f32.mrb[0].mxu0
        %v9777 = vadd.f32 %v9664, %v9776
        %v9778 = vpop.f32.mrb[0].mxu0
        %v9779 = vadd.f32 %v9666, %v9778
        %9780 = vmatprep.mubr.bf16.mxu0 %v5998
        %9781 = vmatmul.mubr.bf16.gmra.mrb[0].mxu0 %v5997
        %v9782 = vpop.f32.mrb[0].mxu0
        %v9783 = vadd.f32 %v9670, %v9782
        %v9784 = vpop.f32.mrb[0].mxu0
        %v9785 = vadd.f32 %v9672, %v9784
        %v9786 = vpop.f32.mrb[0].mxu0
        %v9787 = vadd.f32 %v9674, %v9786
        %v9788 = vpop.f32.mrb[0].mxu0
        %v9789 = vadd.f32 %v9676, %v9788
        %9790 = vmatprep.mubr.bf16.mxu0 %v6006
        %9791 = vmatmul.mubr.bf16.gmra.mrb[0].mxu0 %v6005
        %v9792 = vpop.f32.mrb[0].mxu0
        %v9793 = vadd.f32 %v9680, %v9792
        %v9794 = vpop.f32.mrb[0].mxu0
        %v9795 = vadd.f32 %v9682, %v9794
        %v9796 = vpop.f32.mrb[0].mxu0
        %v9797 = vadd.f32 %v9684, %v9796
        %v9798 = vpop.f32.mrb[0].mxu0
        %v9799 = vadd.f32 %v9686, %v9798
        %9800 = vmatprep.mubr.bf16.mxu0 %v6014
        %9801 = vmatmul.mubr.bf16.gmra.mrb[0].mxu0 %v6013
        %v9802 = vpop.f32.mrb[0].mxu0
        %v9803 = vadd.f32 %v9690, %v9802
        %v9804 = vpop.f32.mrb[0].mxu0
        %v9805 = vadd.f32 %v9692, %v9804
        %v9806 = vpop.f32.mrb[0].mxu0
        %v9807 = vadd.f32 %v9694, %v9806
        %v9808 = vpop.f32.mrb[0].mxu0
        %v9809 = vadd.f32 %v9696, %v9808
        %9810 = vdwg.mxu0
        %9811 = vmatprep.subr.bf16.mxu0 %v8368
        %9812 = vmatpush1.bf16.msra.mxu0 %v8367
        %9813 = vmatprep.subr.bf16.mxu0 %v8376
        %9814 = vmatpush1.bf16.msra.mxu0 %v8375
        %9815 = vmatprep.subr.bf16.mxu0 %v8384
        %9816 = vmatpush1.bf16.msra.mxu0 %v8383
        %9817 = vmatprep.subr.bf16.mxu0 %v8392
        %9818 = vmatpush1.bf16.msra.mxu0 %v8391
        %9819 = vmatprep.subr.bf16.mxu0 %v8400
        %9820 = vmatpush1.bf16.msra.mxu0 %v8399
        %9821 = vmatprep.subr.bf16.mxu0 %v8408
        %9822 = vmatpush1.bf16.msra.mxu0 %v8407
        %9823 = vmatprep.subr.bf16.mxu0 %v8416
        %9824 = vmatpush1.bf16.msra.mxu0 %v8415
        %9825 = vmatprep.subr.bf16.mxu0 %v8424
        %9826 = vmatpush1.bf16.msra.mxu0 %v8423
        %9827 = vmatprep.subr.bf16.mxu0 %v8432
        %9828 = vmatpush1.bf16.msra.mxu0 %v8431
        %9829 = vmatprep.subr.bf16.mxu0 %v8440
        %9830 = vmatpush1.bf16.msra.mxu0 %v8439
        %9831 = vmatprep.subr.bf16.mxu0 %v8448
        %9832 = vmatpush1.bf16.msra.mxu0 %v8447
        %9833 = vmatprep.subr.bf16.mxu0 %v8456
        %9834 = vmatpush1.bf16.msra.mxu0 %v8455
        %9835 = vmatprep.subr.bf16.mxu0 %v8464
        %9836 = vmatpush1.bf16.msra.mxu0 %v8463
        %9837 = vmatprep.subr.bf16.mxu0 %v8472
        %9838 = vmatpush1.bf16.msra.mxu0 %v8471
        %9839 = vmatprep.subr.bf16.mxu0 %v8480
        %9840 = vmatpush1.bf16.msra.mxu0 %v8479
        %9841 = vmatprep.subr.bf16.mxu0 %v8488
        %9842 = vmatpush1.bf16.msra.mxu0 %v8487
        %9843 = vmatprep.mubr.bf16.mxu0 %v5960
        %9844 = vmatmul.mubr.bf16.gmra.mrb[0].mxu0 %v5959
        %v9845 = vpop.f32.mrb[0].mxu0
        %v9846 = vadd.f32 %v9733, %v9845
        %v9847 = vpop.f32.mrb[0].mxu0
        %v9848 = vadd.f32 %v9735, %v9847
        %v9849 = vpop.f32.mrb[0].mxu0
        %v9850 = vadd.f32 %v9737, %v9849
        %v9851 = vpop.f32.mrb[0].mxu0
        %v9852 = vadd.f32 %v9739, %v9851
        %9853 = vmatprep.mubr.bf16.mxu0 %v5968
        %9854 = vmatmul.mubr.bf16.gmra.mrb[0].mxu0 %v5967
        %v9855 = vpop.f32.mrb[0].mxu0
        %v9856 = vadd.f32 %v9743, %v9855
        %v9857 = vpop.f32.mrb[0].mxu0
        %v9858 = vadd.f32 %v9745, %v9857
        %v9859 = vpop.f32.mrb[0].mxu0
        %v9860 = vadd.f32 %v9747, %v9859
        %v9861 = vpop.f32.mrb[0].mxu0
        %v9862 = vadd.f32 %v9749, %v9861
        %9863 = vmatprep.mubr.bf16.mxu0 %v5976
        %9864 = vmatmul.mubr.bf16.gmra.mrb[0].mxu0 %v5975
        %v9865 = vpop.f32.mrb[0].mxu0
        %v9866 = vadd.f32 %v9753, %v9865
        %v9867 = vpop.f32.mrb[0].mxu0
        %v9868 = vadd.f32 %v9755, %v9867
        %v9869 = vpop.f32.mrb[0].mxu0
        %v9870 = vadd.f32 %v9757, %v9869
        %v9871 = vpop.f32.mrb[0].mxu0
        %v9872 = vadd.f32 %v9759, %v9871
        %9873 = vmatprep.mubr.bf16.mxu0 %v5984
        %9874 = vmatmul.mubr.bf16.gmra.mrb[0].mxu0 %v5983
        %v9875 = vpop.f32.mrb[0].mxu0
        %v9876 = vadd.f32 %v9763, %v9875
        %v9877 = vpop.f32.mrb[0].mxu0
        %v9878 = vadd.f32 %v9765, %v9877
        %v9879 = vpop.f32.mrb[0].mxu0
        %v9880 = vadd.f32 %v9767, %v9879
        %v9881 = vpop.f32.mrb[0].mxu0
        %v9882 = vadd.f32 %v9769, %v9881
        %9883 = vmatprep.mubr.bf16.mxu0 %v5992
        %9884 = vmatmul.mubr.bf16.gmra.mrb[0].mxu0 %v5991
        %v9885 = vpop.f32.mrb[0].mxu0
        %v9886 = vadd.f32 %v9773, %v9885
        %v9887 = vpop.f32.mrb[0].mxu0
        %v9888 = vadd.f32 %v9775, %v9887
        %v9889 = vpop.f32.mrb[0].mxu0
        %v9890 = vadd.f32 %v9777, %v9889
        %v9891 = vpop.f32.mrb[0].mxu0
        %v9892 = vadd.f32 %v9779, %v9891
        %9893 = vmatprep.mubr.bf16.mxu0 %v6000
        %9894 = vmatmul.mubr.bf16.gmra.mrb[0].mxu0 %v5999
        %v9895 = vpop.f32.mrb[0].mxu0
        %v9896 = vadd.f32 %v9783, %v9895
        %v9897 = vpop.f32.mrb[0].mxu0
        %v9898 = vadd.f32 %v9785, %v9897
        %v9899 = vpop.f32.mrb[0].mxu0
        %v9900 = vadd.f32 %v9787, %v9899
        %v9901 = vpop.f32.mrb[0].mxu0
        %v9902 = vadd.f32 %v9789, %v9901
        %9903 = vmatprep.mubr.bf16.mxu0 %v6008
        %9904 = vmatmul.mubr.bf16.gmra.mrb[0].mxu0 %v6007
        %v9905 = vpop.f32.mrb[0].mxu0
        %v9906 = vadd.f32 %v9793, %v9905
        %v9907 = vpop.f32.mrb[0].mxu0
        %v9908 = vadd.f32 %v9795, %v9907
        %v9909 = vpop.f32.mrb[0].mxu0
        %v9910 = vadd.f32 %v9797, %v9909
        %v9911 = vpop.f32.mrb[0].mxu0
        %v9912 = vadd.f32 %v9799, %v9911
        %9913 = vmatprep.mubr.bf16.mxu0 %v6016
        %9914 = vmatmul.mubr.bf16.gmra.mrb[0].mxu0 %v6015
        %v9915 = vpop.f32.mrb[0].mxu0
        %v9916 = vadd.f32 %v9803, %v9915
        %v9917 = vpop.f32.mrb[0].mxu0
        %v9918 = vadd.f32 %v9805, %v9917
        %v9919 = vpop.f32.mrb[0].mxu0
        %v9920 = vadd.f32 %v9807, %v9919
        %v9921 = vpop.f32.mrb[0].mxu0
        %v9922 = vadd.f32 %v9809, %v9921
        %9923 = vdwg.mxu0
        %9924 = vmatprep.subr.bf16.mxu0 %v8496
        %9925 = vmatpush1.bf16.msra.mxu0 %v8495
        %9926 = vmatprep.subr.bf16.mxu0 %v8504
        %9927 = vmatpush1.bf16.msra.mxu0 %v8503
        %9928 = vmatprep.subr.bf16.mxu0 %v8512
        %9929 = vmatpush1.bf16.msra.mxu0 %v8511
        %9930 = vmatprep.subr.bf16.mxu0 %v8520
        %9931 = vmatpush1.bf16.msra.mxu0 %v8519
        %9932 = vmatprep.subr.bf16.mxu0 %v8528
        %9933 = vmatpush1.bf16.msra.mxu0 %v8527
        %9934 = vmatprep.subr.bf16.mxu0 %v8536
        %9935 = vmatpush1.bf16.msra.mxu0 %v8535
        %9936 = vmatprep.subr.bf16.mxu0 %v8544
        %9937 = vmatpush1.bf16.msra.mxu0 %v8543
        %9938 = vmatprep.subr.bf16.mxu0 %v8552
        %9939 = vmatpush1.bf16.msra.mxu0 %v8551
        %9940 = vmatprep.subr.bf16.mxu0 %v8560
        %9941 = vmatpush1.bf16.msra.mxu0 %v8559
        %9942 = vmatprep.subr.bf16.mxu0 %v8568
        %9943 = vmatpush1.bf16.msra.mxu0 %v8567
        %9944 = vmatprep.subr.bf16.mxu0 %v8576
        %9945 = vmatpush1.bf16.msra.mxu0 %v8575
        %9946 = vmatprep.subr.bf16.mxu0 %v8584
        %9947 = vmatpush1.bf16.msra.mxu0 %v8583
        %9948 = vmatprep.subr.bf16.mxu0 %v8592
        %9949 = vmatpush1.bf16.msra.mxu0 %v8591
        %9950 = vmatprep.subr.bf16.mxu0 %v8600
        %9951 = vmatpush1.bf16.msra.mxu0 %v8599
        %9952 = vmatprep.subr.bf16.mxu0 %v8608
        %9953 = vmatpush1.bf16.msra.mxu0 %v8607
        %9954 = vmatprep.subr.bf16.mxu0 %v8616
        %9955 = vmatpush1.bf16.msra.mxu0 %v8615
        %9956 = vmatprep.mubr.bf16.mxu0 %v5962
        %9957 = vmatmul.mubr.bf16.gmra.mrb[0].mxu0 %v5961
        %v9958 = vpop.f32.mrb[0].mxu0
        %v9959 = vadd.f32 %v9846, %v9958
        %v9960 = vpop.f32.mrb[0].mxu0
        %v9961 = vadd.f32 %v9848, %v9960
        %v9962 = vpop.f32.mrb[0].mxu0
        %v9963 = vadd.f32 %v9850, %v9962
        %v9964 = vpop.f32.mrb[0].mxu0
        %v9965 = vadd.f32 %v9852, %v9964
        %9966 = vmatprep.mubr.bf16.mxu0 %v5970
        %9967 = vmatmul.mubr.bf16.gmra.mrb[0].mxu0 %v5969
        %v9968 = vpop.f32.mrb[0].mxu0
        %v9969 = vadd.f32 %v9856, %v9968
        %v9970 = vpop.f32.mrb[0].mxu0
        %v9971 = vadd.f32 %v9858, %v9970
        %v9972 = vpop.f32.mrb[0].mxu0
        %v9973 = vadd.f32 %v9860, %v9972
        %v9974 = vpop.f32.mrb[0].mxu0
        %v9975 = vadd.f32 %v9862, %v9974
        %9976 = vmatprep.mubr.bf16.mxu0 %v5978
        %9977 = vmatmul.mubr.bf16.gmra.mrb[0].mxu0 %v5977
        %v9978 = vpop.f32.mrb[0].mxu0
        %v9979 = vadd.f32 %v9866, %v9978
        %v9980 = vpop.f32.mrb[0].mxu0
        %v9981 = vadd.f32 %v9868, %v9980
        %v9982 = vpop.f32.mrb[0].mxu0
        %v9983 = vadd.f32 %v9870, %v9982
        %v9984 = vpop.f32.mrb[0].mxu0
        %v9985 = vadd.f32 %v9872, %v9984
        %9986 = vmatprep.mubr.bf16.mxu0 %v5986
        %9987 = vmatmul.mubr.bf16.gmra.mrb[0].mxu0 %v5985
        %v9988 = vpop.f32.mrb[0].mxu0
        %v9989 = vadd.f32 %v9876, %v9988
        %v9990 = vpop.f32.mrb[0].mxu0
        %v9991 = vadd.f32 %v9878, %v9990
        %v9992 = vpop.f32.mrb[0].mxu0
        %v9993 = vadd.f32 %v9880, %v9992
        %v9994 = vpop.f32.mrb[0].mxu0
        %v9995 = vadd.f32 %v9882, %v9994
        %9996 = vmatprep.mubr.bf16.mxu0 %v5994
        %9997 = vmatmul.mubr.bf16.gmra.mrb[0].mxu0 %v5993
        %v9998 = vpop.f32.mrb[0].mxu0
        %v9999 = vadd.f32 %v9886, %v9998
        %v10000 = vpop.f32.mrb[0].mxu0
        %v10001 = vadd.f32 %v9888, %v10000
        %v10002 = vpop.f32.mrb[0].mxu0
        %v10003 = vadd.f32 %v9890, %v10002
        %v10004 = vpop.f32.mrb[0].mxu0
        %v10005 = vadd.f32 %v9892, %v10004
        %10006 = vmatprep.mubr.bf16.mxu0 %v6002
        %10007 = vmatmul.mubr.bf16.gmra.mrb[0].mxu0 %v6001
        %v10008 = vpop.f32.mrb[0].mxu0
        %v10009 = vadd.f32 %v9896, %v10008
        %v10010 = vpop.f32.mrb[0].mxu0
        %v10011 = vadd.f32 %v9898, %v10010
        %v10012 = vpop.f32.mrb[0].mxu0
        %v10013 = vadd.f32 %v9900, %v10012
        %v10014 = vpop.f32.mrb[0].mxu0
        %v10015 = vadd.f32 %v9902, %v10014
        %10016 = vmatprep.mubr.bf16.mxu0 %v6010
        %10017 = vmatmul.mubr.bf16.gmra.mrb[0].mxu0 %v6009
        %v10018 = vpop.f32.mrb[0].mxu0
        %v10019 = vadd.f32 %v9906, %v10018
        %v10020 = vpop.f32.mrb[0].mxu0
        %v10021 = vadd.f32 %v9908, %v10020
        %v10022 = vpop.f32.mrb[0].mxu0
        %v10023 = vadd.f32 %v9910, %v10022
        %v10024 = vpop.f32.mrb[0].mxu0
        %v10025 = vadd.f32 %v9912, %v10024
        %10026 = vmatprep.mubr.bf16.mxu0 %v6018
        %10027 = vmatmul.mubr.bf16.gmra.mrb[0].mxu0 %v6017
        %v10028 = vpop.f32.mrb[0].mxu0
        %v10029 = vadd.f32 %v9916, %v10028
        %v10030 = vpop.f32.mrb[0].mxu0
        %v10031 = vadd.f32 %v9918, %v10030
        %v10032 = vpop.f32.mrb[0].mxu0
        %v10033 = vadd.f32 %v9920, %v10032
        %v10034 = vpop.f32.mrb[0].mxu0
        %v10035 = vadd.f32 %v9922, %v10034
        %10036 = vdwg.mxu0
        %10037 = vmatprep.subr.bf16.mxu0 %v8114
        %10038 = vmatpush1.bf16.msra.mxu0 %v8113
        %10039 = vmatprep.subr.bf16.mxu0 %v8122
        %10040 = vmatpush1.bf16.msra.mxu0 %v8121
        %10041 = vmatprep.subr.bf16.mxu0 %v8130
        %10042 = vmatpush1.bf16.msra.mxu0 %v8129
        %10043 = vmatprep.subr.bf16.mxu0 %v8138
        %10044 = vmatpush1.bf16.msra.mxu0 %v8137
        %10045 = vmatprep.subr.bf16.mxu0 %v8146
        %10046 = vmatpush1.bf16.msra.mxu0 %v8145
        %10047 = vmatprep.subr.bf16.mxu0 %v8154
        %10048 = vmatpush1.bf16.msra.mxu0 %v8153
        %10049 = vmatprep.subr.bf16.mxu0 %v8162
        %10050 = vmatpush1.bf16.msra.mxu0 %v8161
        %10051 = vmatprep.subr.bf16.mxu0 %v8170
        %10052 = vmatpush1.bf16.msra.mxu0 %v8169
        %10053 = vmatprep.subr.bf16.mxu0 %v8178
        %10054 = vmatpush1.bf16.msra.mxu0 %v8177
        %10055 = vmatprep.subr.bf16.mxu0 %v8186
        %10056 = vmatpush1.bf16.msra.mxu0 %v8185
        %10057 = vmatprep.subr.bf16.mxu0 %v8194
        %10058 = vmatpush1.bf16.msra.mxu0 %v8193
        %10059 = vmatprep.subr.bf16.mxu0 %v8202
        %10060 = vmatpush1.bf16.msra.mxu0 %v8201
        %10061 = vmatprep.subr.bf16.mxu0 %v8210
        %10062 = vmatpush1.bf16.msra.mxu0 %v8209
        %10063 = vmatprep.subr.bf16.mxu0 %v8218
        %10064 = vmatpush1.bf16.msra.mxu0 %v8217
        %10065 = vmatprep.subr.bf16.mxu0 %v8226
        %10066 = vmatpush1.bf16.msra.mxu0 %v8225
        %10067 = vmatprep.subr.bf16.mxu0 %v8234
        %10068 = vmatpush1.bf16.msra.mxu0 %v8233
        %10069 = vmatprep.mubr.bf16.mxu0 %v5956
        %10070 = vmatmul.mubr.bf16.gmra.mrb[0].mxu0 %v5955
        %v10071 = vpop.f32.mrb[0].mxu0
        %v10072 = vadd.f32 %v6552, %v10071
        %v10073 = vpop.f32.mrb[0].mxu0
        %v10074 = vadd.f32 %v6556, %v10073
        %v10075 = vpop.f32.mrb[0].mxu0
        %v10076 = vadd.f32 %v6552, %v10075
        %v10077 = vpop.f32.mrb[0].mxu0
        %v10078 = vadd.f32 %v6556, %v10077
        %10079 = vmatprep.mubr.bf16.mxu0 %v5964
        %10080 = vmatmul.mubr.bf16.gmra.mrb[0].mxu0 %v5963
        %v10081 = vpop.f32.mrb[0].mxu0
        %v10082 = vadd.f32 %v6552, %v10081
        %v10083 = vpop.f32.mrb[0].mxu0
        %v10084 = vadd.f32 %v6556, %v10083
        %v10085 = vpop.f32.mrb[0].mxu0
        %v10086 = vadd.f32 %v6552, %v10085
        %v10087 = vpop.f32.mrb[0].mxu0
        %v10088 = vadd.f32 %v6556, %v10087
        %10089 = vmatprep.mubr.bf16.mxu0 %v5972
        %10090 = vmatmul.mubr.bf16.gmra.mrb[0].mxu0 %v5971
        %v10091 = vpop.f32.mrb[0].mxu0
        %v10092 = vadd.f32 %v6552, %v10091
        %v10093 = vpop.f32.mrb[0].mxu0
        %v10094 = vadd.f32 %v6556, %v10093
        %v10095 = vpop.f32.mrb[0].mxu0
        %v10096 = vadd.f32 %v6552, %v10095
        %v10097 = vpop.f32.mrb[0].mxu0
        %v10098 = vadd.f32 %v6556, %v10097
        %10099 = vmatprep.mubr.bf16.mxu0 %v5980
        %10100 = vmatmul.mubr.bf16.gmra.mrb[0].mxu0 %v5979
        %v10101 = vpop.f32.mrb[0].mxu0
        %v10102 = vadd.f32 %v6552, %v10101
        %v10103 = vpop.f32.mrb[0].mxu0
        %v10104 = vadd.f32 %v6556, %v10103
        %v10105 = vpop.f32.mrb[0].mxu0
        %v10106 = vadd.f32 %v6552, %v10105
        %v10107 = vpop.f32.mrb[0].mxu0
        %v10108 = vadd.f32 %v6556, %v10107
        %10109 = vmatprep.mubr.bf16.mxu0 %v5988
        %10110 = vmatmul.mubr.bf16.gmra.mrb[0].mxu0 %v5987
        %v10111 = vpop.f32.mrb[0].mxu0
        %v10112 = vadd.f32 %v6552, %v10111
        %v10113 = vpop.f32.mrb[0].mxu0
        %v10114 = vadd.f32 %v6556, %v10113
        %v10115 = vpop.f32.mrb[0].mxu0
        %v10116 = vadd.f32 %v6552, %v10115
        %v10117 = vpop.f32.mrb[0].mxu0
        %v10118 = vadd.f32 %v6556, %v10117
        %10119 = vmatprep.mubr.bf16.mxu0 %v5996
        %10120 = vmatmul.mubr.bf16.gmra.mrb[0].mxu0 %v5995
        %v10121 = vpop.f32.mrb[0].mxu0
        %v10122 = vadd.f32 %v6552, %v10121
        %v10123 = vpop.f32.mrb[0].mxu0
        %v10124 = vadd.f32 %v6556, %v10123
        %v10125 = vpop.f32.mrb[0].mxu0
        %v10126 = vadd.f32 %v6552, %v10125
        %v10127 = vpop.f32.mrb[0].mxu0
        %v10128 = vadd.f32 %v6556, %v10127
        %10129 = vmatprep.mubr.bf16.mxu0 %v6004
        %10130 = vmatmul.mubr.bf16.gmra.mrb[0].mxu0 %v6003
        %v10131 = vpop.f32.mrb[0].mxu0
        %v10132 = vadd.f32 %v6552, %v10131
        %v10133 = vpop.f32.mrb[0].mxu0
        %v10134 = vadd.f32 %v6556, %v10133
        %v10135 = vpop.f32.mrb[0].mxu0
        %v10136 = vadd.f32 %v6552, %v10135
        %v10137 = vpop.f32.mrb[0].mxu0
        %v10138 = vadd.f32 %v6556, %v10137
        %10139 = vmatprep.mubr.bf16.mxu0 %v6012
        %10140 = vmatmul.mubr.bf16.gmra.mrb[0].mxu0 %v6011
        %v10141 = vpop.f32.mrb[0].mxu0
        %v10142 = vadd.f32 %v6552, %v10141
        %v10143 = vpop.f32.mrb[0].mxu0
        %v10144 = vadd.f32 %v6556, %v10143
        %v10145 = vpop.f32.mrb[0].mxu0
        %v10146 = vadd.f32 %v6552, %v10145
        %v10147 = vpop.f32.mrb[0].mxu0
        %v10148 = vadd.f32 %v6556, %v10147
        %10149 = vdwg.mxu0
        %10150 = vmatprep.subr.bf16.mxu0 %v8242
        %10151 = vmatpush1.bf16.msra.mxu0 %v8241
        %10152 = vmatprep.subr.bf16.mxu0 %v8250
        %10153 = vmatpush1.bf16.msra.mxu0 %v8249
        %10154 = vmatprep.subr.bf16.mxu0 %v8258
        %10155 = vmatpush1.bf16.msra.mxu0 %v8257
        %10156 = vmatprep.subr.bf16.mxu0 %v8266
        %10157 = vmatpush1.bf16.msra.mxu0 %v8265
        %10158 = vmatprep.subr.bf16.mxu0 %v8274
        %10159 = vmatpush1.bf16.msra.mxu0 %v8273
        %10160 = vmatprep.subr.bf16.mxu0 %v8282
        %10161 = vmatpush1.bf16.msra.mxu0 %v8281
        %10162 = vmatprep.subr.bf16.mxu0 %v8290
        %10163 = vmatpush1.bf16.msra.mxu0 %v8289
        %10164 = vmatprep.subr.bf16.mxu0 %v8298
        %10165 = vmatpush1.bf16.msra.mxu0 %v8297
        %10166 = vmatprep.subr.bf16.mxu0 %v8306
        %10167 = vmatpush1.bf16.msra.mxu0 %v8305
        %10168 = vmatprep.subr.bf16.mxu0 %v8314
        %10169 = vmatpush1.bf16.msra.mxu0 %v8313
        %10170 = vmatprep.subr.bf16.mxu0 %v8322
        %10171 = vmatpush1.bf16.msra.mxu0 %v8321
        %10172 = vmatprep.subr.bf16.mxu0 %v8330
        %10173 = vmatpush1.bf16.msra.mxu0 %v8329
        %10174 = vmatprep.subr.bf16.mxu0 %v8338
        %10175 = vmatpush1.bf16.msra.mxu0 %v8337
        %10176 = vmatprep.subr.bf16.mxu0 %v8346
        %10177 = vmatpush1.bf16.msra.mxu0 %v8345
        %10178 = vmatprep.subr.bf16.mxu0 %v8354
        %10179 = vmatpush1.bf16.msra.mxu0 %v8353
        %10180 = vmatprep.subr.bf16.mxu0 %v8362
        %10181 = vmatpush1.bf16.msra.mxu0 %v8361
        %10182 = vmatprep.mubr.bf16.mxu0 %v5958
        %10183 = vmatmul.mubr.bf16.gmra.mrb[0].mxu0 %v5957
        %v10184 = vpop.f32.mrb[0].mxu0
        %v10185 = vadd.f32 %v10072, %v10184
        %v10186 = vpop.f32.mrb[0].mxu0
        %v10187 = vadd.f32 %v10074, %v10186
        %v10188 = vpop.f32.mrb[0].mxu0
        %v10189 = vadd.f32 %v10076, %v10188
        %v10190 = vpop.f32.mrb[0].mxu0
        %v10191 = vadd.f32 %v10078, %v10190
        %10192 = vmatprep.mubr.bf16.mxu0 %v5966
        %10193 = vmatmul.mubr.bf16.gmra.mrb[0].mxu0 %v5965
        %v10194 = vpop.f32.mrb[0].mxu0
        %v10195 = vadd.f32 %v10082, %v10194
        %v10196 = vpop.f32.mrb[0].mxu0
        %v10197 = vadd.f32 %v10084, %v10196
        %v10198 = vpop.f32.mrb[0].mxu0
        %v10199 = vadd.f32 %v10086, %v10198
        %v10200 = vpop.f32.mrb[0].mxu0
        %v10201 = vadd.f32 %v10088, %v10200
        %10202 = vmatprep.mubr.bf16.mxu0 %v5974
        %10203 = vmatmul.mubr.bf16.gmra.mrb[0].mxu0 %v5973
        %v10204 = vpop.f32.mrb[0].mxu0
        %v10205 = vadd.f32 %v10092, %v10204
        %v10206 = vpop.f32.mrb[0].mxu0
        %v10207 = vadd.f32 %v10094, %v10206
        %v10208 = vpop.f32.mrb[0].mxu0
        %v10209 = vadd.f32 %v10096, %v10208
        %v10210 = vpop.f32.mrb[0].mxu0
        %v10211 = vadd.f32 %v10098, %v10210
        %10212 = vmatprep.mubr.bf16.mxu0 %v5982
        %10213 = vmatmul.mubr.bf16.gmra.mrb[0].mxu0 %v5981
        %v10214 = vpop.f32.mrb[0].mxu0
        %v10215 = vadd.f32 %v10102, %v10214
        %v10216 = vpop.f32.mrb[0].mxu0
        %v10217 = vadd.f32 %v10104, %v10216
        %v10218 = vpop.f32.mrb[0].mxu0
        %v10219 = vadd.f32 %v10106, %v10218
        %v10220 = vpop.f32.mrb[0].mxu0
        %v10221 = vadd.f32 %v10108, %v10220
        %10222 = vmatprep.mubr.bf16.mxu0 %v5990
        %10223 = vmatmul.mubr.bf16.gmra.mrb[0].mxu0 %v5989
        %v10224 = vpop.f32.mrb[0].mxu0
        %v10225 = vadd.f32 %v10112, %v10224
        %v10226 = vpop.f32.mrb[0].mxu0
        %v10227 = vadd.f32 %v10114, %v10226
        %v10228 = vpop.f32.mrb[0].mxu0
        %v10229 = vadd.f32 %v10116, %v10228
        %v10230 = vpop.f32.mrb[0].mxu0
        %v10231 = vadd.f32 %v10118, %v10230
        %10232 = vmatprep.mubr.bf16.mxu0 %v5998
        %10233 = vmatmul.mubr.bf16.gmra.mrb[0].mxu0 %v5997
        %v10234 = vpop.f32.mrb[0].mxu0
        %v10235 = vadd.f32 %v10122, %v10234
        %v10236 = vpop.f32.mrb[0].mxu0
        %v10237 = vadd.f32 %v10124, %v10236
        %v10238 = vpop.f32.mrb[0].mxu0
        %v10239 = vadd.f32 %v10126, %v10238
        %v10240 = vpop.f32.mrb[0].mxu0
        %v10241 = vadd.f32 %v10128, %v10240
        %10242 = vmatprep.mubr.bf16.mxu0 %v6006
        %10243 = vmatmul.mubr.bf16.gmra.mrb[0].mxu0 %v6005
        %v10244 = vpop.f32.mrb[0].mxu0
        %v10245 = vadd.f32 %v10132, %v10244
        %v10246 = vpop.f32.mrb[0].mxu0
        %v10247 = vadd.f32 %v10134, %v10246
        %v10248 = vpop.f32.mrb[0].mxu0
        %v10249 = vadd.f32 %v10136, %v10248
        %v10250 = vpop.f32.mrb[0].mxu0
        %v10251 = vadd.f32 %v10138, %v10250
        %10252 = vmatprep.mubr.bf16.mxu0 %v6014
        %10253 = vmatmul.mubr.bf16.gmra.mrb[0].mxu0 %v6013
        %v10254 = vpop.f32.mrb[0].mxu0
        %v10255 = vadd.f32 %v10142, %v10254
        %v10256 = vpop.f32.mrb[0].mxu0
        %v10257 = vadd.f32 %v10144, %v10256
        %v10258 = vpop.f32.mrb[0].mxu0
        %v10259 = vadd.f32 %v10146, %v10258
        %v10260 = vpop.f32.mrb[0].mxu0
        %v10261 = vadd.f32 %v10148, %v10260
        %10262 = vdwg.mxu0
        %10263 = vmatprep.subr.bf16.mxu0 %v8370
        %10264 = vmatpush1.bf16.msra.mxu0 %v8369
        %10265 = vmatprep.subr.bf16.mxu0 %v8378
        %10266 = vmatpush1.bf16.msra.mxu0 %v8377
        %10267 = vmatprep.subr.bf16.mxu0 %v8386
        %10268 = vmatpush1.bf16.msra.mxu0 %v8385
        %10269 = vmatprep.subr.bf16.mxu0 %v8394
        %10270 = vmatpush1.bf16.msra.mxu0 %v8393
        %10271 = vmatprep.subr.bf16.mxu0 %v8402
        %10272 = vmatpush1.bf16.msra.mxu0 %v8401
        %10273 = vmatprep.subr.bf16.mxu0 %v8410
        %10274 = vmatpush1.bf16.msra.mxu0 %v8409
        %10275 = vmatprep.subr.bf16.mxu0 %v8418
        %10276 = vmatpush1.bf16.msra.mxu0 %v8417
        %10277 = vmatprep.subr.bf16.mxu0 %v8426
        %10278 = vmatpush1.bf16.msra.mxu0 %v8425
        %10279 = vmatprep.subr.bf16.mxu0 %v8434
        %10280 = vmatpush1.bf16.msra.mxu0 %v8433
        %10281 = vmatprep.subr.bf16.mxu0 %v8442
        %10282 = vmatpush1.bf16.msra.mxu0 %v8441
        %10283 = vmatprep.subr.bf16.mxu0 %v8450
        %10284 = vmatpush1.bf16.msra.mxu0 %v8449
        %10285 = vmatprep.subr.bf16.mxu0 %v8458
        %10286 = vmatpush1.bf16.msra.mxu0 %v8457
        %10287 = vmatprep.subr.bf16.mxu0 %v8466
        %10288 = vmatpush1.bf16.msra.mxu0 %v8465
        %10289 = vmatprep.subr.bf16.mxu0 %v8474
        %10290 = vmatpush1.bf16.msra.mxu0 %v8473
        %10291 = vmatprep.subr.bf16.mxu0 %v8482
        %10292 = vmatpush1.bf16.msra.mxu0 %v8481
        %10293 = vmatprep.subr.bf16.mxu0 %v8490
        %10294 = vmatpush1.bf16.msra.mxu0 %v8489
        %10295 = vmatprep.mubr.bf16.mxu0 %v5960
        %10296 = vmatmul.mubr.bf16.gmra.mrb[0].mxu0 %v5959
        %v10297 = vpop.f32.mrb[0].mxu0
        %v10298 = vadd.f32 %v10185, %v10297
        %v10299 = vpop.f32.mrb[0].mxu0
        %v10300 = vadd.f32 %v10187, %v10299
        %v10301 = vpop.f32.mrb[0].mxu0
        %v10302 = vadd.f32 %v10189, %v10301
        %v10303 = vpop.f32.mrb[0].mxu0
        %v10304 = vadd.f32 %v10191, %v10303
        %10305 = vmatprep.mubr.bf16.mxu0 %v5968
        %10306 = vmatmul.mubr.bf16.gmra.mrb[0].mxu0 %v5967
        %v10307 = vpop.f32.mrb[0].mxu0
        %v10308 = vadd.f32 %v10195, %v10307
        %v10309 = vpop.f32.mrb[0].mxu0
        %v10310 = vadd.f32 %v10197, %v10309
        %v10311 = vpop.f32.mrb[0].mxu0
        %v10312 = vadd.f32 %v10199, %v10311
        %v10313 = vpop.f32.mrb[0].mxu0
        %v10314 = vadd.f32 %v10201, %v10313
        %10315 = vmatprep.mubr.bf16.mxu0 %v5976
        %10316 = vmatmul.mubr.bf16.gmra.mrb[0].mxu0 %v5975
        %v10317 = vpop.f32.mrb[0].mxu0
        %v10318 = vadd.f32 %v10205, %v10317
        %v10319 = vpop.f32.mrb[0].mxu0
        %v10320 = vadd.f32 %v10207, %v10319
        %v10321 = vpop.f32.mrb[0].mxu0
        %v10322 = vadd.f32 %v10209, %v10321
        %v10323 = vpop.f32.mrb[0].mxu0
        %v10324 = vadd.f32 %v10211, %v10323
        %10325 = vmatprep.mubr.bf16.mxu0 %v5984
        %10326 = vmatmul.mubr.bf16.gmra.mrb[0].mxu0 %v5983
        %v10327 = vpop.f32.mrb[0].mxu0
        %v10328 = vadd.f32 %v10215, %v10327
        %v10329 = vpop.f32.mrb[0].mxu0
        %v10330 = vadd.f32 %v10217, %v10329
        %v10331 = vpop.f32.mrb[0].mxu0
        %v10332 = vadd.f32 %v10219, %v10331
        %v10333 = vpop.f32.mrb[0].mxu0
        %v10334 = vadd.f32 %v10221, %v10333
        %10335 = vmatprep.mubr.bf16.mxu0 %v5992
        %10336 = vmatmul.mubr.bf16.gmra.mrb[0].mxu0 %v5991
        %v10337 = vpop.f32.mrb[0].mxu0
        %v10338 = vadd.f32 %v10225, %v10337
        %v10339 = vpop.f32.mrb[0].mxu0
        %v10340 = vadd.f32 %v10227, %v10339
        %v10341 = vpop.f32.mrb[0].mxu0
        %v10342 = vadd.f32 %v10229, %v10341
        %v10343 = vpop.f32.mrb[0].mxu0
        %v10344 = vadd.f32 %v10231, %v10343
        %10345 = vmatprep.mubr.bf16.mxu0 %v6000
        %10346 = vmatmul.mubr.bf16.gmra.mrb[0].mxu0 %v5999
        %v10347 = vpop.f32.mrb[0].mxu0
        %v10348 = vadd.f32 %v10235, %v10347
        %v10349 = vpop.f32.mrb[0].mxu0
        %v10350 = vadd.f32 %v10237, %v10349
        %v10351 = vpop.f32.mrb[0].mxu0
        %v10352 = vadd.f32 %v10239, %v10351
        %v10353 = vpop.f32.mrb[0].mxu0
        %v10354 = vadd.f32 %v10241, %v10353
        %10355 = vmatprep.mubr.bf16.mxu0 %v6008
        %10356 = vmatmul.mubr.bf16.gmra.mrb[0].mxu0 %v6007
        %v10357 = vpop.f32.mrb[0].mxu0
        %v10358 = vadd.f32 %v10245, %v10357
        %v10359 = vpop.f32.mrb[0].mxu0
        %v10360 = vadd.f32 %v10247, %v10359
        %v10361 = vpop.f32.mrb[0].mxu0
        %v10362 = vadd.f32 %v10249, %v10361
        %v10363 = vpop.f32.mrb[0].mxu0
        %v10364 = vadd.f32 %v10251, %v10363
        %10365 = vmatprep.mubr.bf16.mxu0 %v6016
        %10366 = vmatmul.mubr.bf16.gmra.mrb[0].mxu0 %v6015
        %v10367 = vpop.f32.mrb[0].mxu0
        %v10368 = vadd.f32 %v10255, %v10367
        %v10369 = vpop.f32.mrb[0].mxu0
        %v10370 = vadd.f32 %v10257, %v10369
        %v10371 = vpop.f32.mrb[0].mxu0
        %v10372 = vadd.f32 %v10259, %v10371
        %v10373 = vpop.f32.mrb[0].mxu0
        %v10374 = vadd.f32 %v10261, %v10373
        %10375 = vdwg.mxu0
        %10376 = vmatprep.subr.bf16.mxu0 %v8498
        %10377 = vmatpush1.bf16.msra.mxu0 %v8497
        %10378 = vmatprep.subr.bf16.mxu0 %v8506
        %10379 = vmatpush1.bf16.msra.mxu0 %v8505
        %10380 = vmatprep.subr.bf16.mxu0 %v8514
        %10381 = vmatpush1.bf16.msra.mxu0 %v8513
        %10382 = vmatprep.subr.bf16.mxu0 %v8522
        %10383 = vmatpush1.bf16.msra.mxu0 %v8521
        %10384 = vmatprep.subr.bf16.mxu0 %v8530
        %10385 = vmatpush1.bf16.msra.mxu0 %v8529
        %10386 = vmatprep.subr.bf16.mxu0 %v8538
        %10387 = vmatpush1.bf16.msra.mxu0 %v8537
        %10388 = vmatprep.subr.bf16.mxu0 %v8546
        %10389 = vmatpush1.bf16.msra.mxu0 %v8545
        %10390 = vmatprep.subr.bf16.mxu0 %v8554
        %10391 = vmatpush1.bf16.msra.mxu0 %v8553
        %10392 = vmatprep.subr.bf16.mxu0 %v8562
        %10393 = vmatpush1.bf16.msra.mxu0 %v8561
        %10394 = vmatprep.subr.bf16.mxu0 %v8570
        %10395 = vmatpush1.bf16.msra.mxu0 %v8569
        %10396 = vmatprep.subr.bf16.mxu0 %v8578
        %10397 = vmatpush1.bf16.msra.mxu0 %v8577
        %10398 = vmatprep.subr.bf16.mxu0 %v8586
        %10399 = vmatpush1.bf16.msra.mxu0 %v8585
        %10400 = vmatprep.subr.bf16.mxu0 %v8594
        %10401 = vmatpush1.bf16.msra.mxu0 %v8593
        %10402 = vmatprep.subr.bf16.mxu0 %v8602
        %10403 = vmatpush1.bf16.msra.mxu0 %v8601
        %10404 = vmatprep.subr.bf16.mxu0 %v8610
        %10405 = vmatpush1.bf16.msra.mxu0 %v8609
        %10406 = vmatprep.subr.bf16.mxu0 %v8618
        %10407 = vmatpush1.bf16.msra.mxu0 %v8617
        %10408 = vmatprep.mubr.bf16.mxu0 %v5962
        %10409 = vmatmul.mubr.bf16.gmra.mrb[0].mxu0 %v5961
        %v10410 = vpop.f32.mrb[0].mxu0
        %v10411 = vadd.f32 %v10298, %v10410
        %v10412 = vpop.f32.mrb[0].mxu0
        %v10413 = vadd.f32 %v10300, %v10412
        %v10414 = vpop.f32.mrb[0].mxu0
        %v10415 = vadd.f32 %v10302, %v10414
        %v10416 = vpop.f32.mrb[0].mxu0
        %v10417 = vadd.f32 %v10304, %v10416
        %10418 = vmatprep.mubr.bf16.mxu0 %v5970
        %10419 = vmatmul.mubr.bf16.gmra.mrb[0].mxu0 %v5969
        %v10420 = vpop.f32.mrb[0].mxu0
        %v10421 = vadd.f32 %v10308, %v10420
        %v10422 = vpop.f32.mrb[0].mxu0
        %v10423 = vadd.f32 %v10310, %v10422
        %v10424 = vpop.f32.mrb[0].mxu0
        %v10425 = vadd.f32 %v10312, %v10424
        %v10426 = vpop.f32.mrb[0].mxu0
        %v10427 = vadd.f32 %v10314, %v10426
        %10428 = vmatprep.mubr.bf16.mxu0 %v5978
        %10429 = vmatmul.mubr.bf16.gmra.mrb[0].mxu0 %v5977
        %v10430 = vpop.f32.mrb[0].mxu0
        %v10431 = vadd.f32 %v10318, %v10430
        %v10432 = vpop.f32.mrb[0].mxu0
        %v10433 = vadd.f32 %v10320, %v10432
        %v10434 = vpop.f32.mrb[0].mxu0
        %v10435 = vadd.f32 %v10322, %v10434
        %v10436 = vpop.f32.mrb[0].mxu0
        %v10437 = vadd.f32 %v10324, %v10436
        %10438 = vmatprep.mubr.bf16.mxu0 %v5986
        %10439 = vmatmul.mubr.bf16.gmra.mrb[0].mxu0 %v5985
        %v10440 = vpop.f32.mrb[0].mxu0
        %v10441 = vadd.f32 %v10328, %v10440
        %v10442 = vpop.f32.mrb[0].mxu0
        %v10443 = vadd.f32 %v10330, %v10442
        %v10444 = vpop.f32.mrb[0].mxu0
        %v10445 = vadd.f32 %v10332, %v10444
        %v10446 = vpop.f32.mrb[0].mxu0
        %v10447 = vadd.f32 %v10334, %v10446
        %10448 = vmatprep.mubr.bf16.mxu0 %v5994
        %10449 = vmatmul.mubr.bf16.gmra.mrb[0].mxu0 %v5993
        %v10450 = vpop.f32.mrb[0].mxu0
        %v10451 = vadd.f32 %v10338, %v10450
        %v10452 = vpop.f32.mrb[0].mxu0
        %v10453 = vadd.f32 %v10340, %v10452
        %v10454 = vpop.f32.mrb[0].mxu0
        %v10455 = vadd.f32 %v10342, %v10454
        %v10456 = vpop.f32.mrb[0].mxu0
        %v10457 = vadd.f32 %v10344, %v10456
        %10458 = vmatprep.mubr.bf16.mxu0 %v6002
        %10459 = vmatmul.mubr.bf16.gmra.mrb[0].mxu0 %v6001
        %v10460 = vpop.f32.mrb[0].mxu0
        %v10461 = vadd.f32 %v10348, %v10460
        %v10462 = vpop.f32.mrb[0].mxu0
        %v10463 = vadd.f32 %v10350, %v10462
        %v10464 = vpop.f32.mrb[0].mxu0
        %v10465 = vadd.f32 %v10352, %v10464
        %v10466 = vpop.f32.mrb[0].mxu0
        %v10467 = vadd.f32 %v10354, %v10466
        %10468 = vmatprep.mubr.bf16.mxu0 %v6010
        %10469 = vmatmul.mubr.bf16.gmra.mrb[0].mxu0 %v6009
        %v10470 = vpop.f32.mrb[0].mxu0
        %v10471 = vadd.f32 %v10358, %v10470
        %v10472 = vpop.f32.mrb[0].mxu0
        %v10473 = vadd.f32 %v10360, %v10472
        %v10474 = vpop.f32.mrb[0].mxu0
        %v10475 = vadd.f32 %v10362, %v10474
        %v10476 = vpop.f32.mrb[0].mxu0
        %v10477 = vadd.f32 %v10364, %v10476
        %10478 = vmatprep.mubr.bf16.mxu0 %v6018
        %10479 = vmatmul.mubr.bf16.gmra.mrb[0].mxu0 %v6017
        %v10480 = vpop.f32.mrb[0].mxu0
        %v10481 = vadd.f32 %v10368, %v10480
        %v10482 = vpop.f32.mrb[0].mxu0
        %v10483 = vadd.f32 %v10370, %v10482
        %v10484 = vpop.f32.mrb[0].mxu0
        %v10485 = vadd.f32 %v10372, %v10484
        %v10486 = vpop.f32.mrb[0].mxu0
        %v10487 = vadd.f32 %v10374, %v10486
        %10488 = vdwg.mxu0
        %10489 = vmatprep.subr.bf16.mxu0 %v8116
        %10490 = vmatpush1.bf16.msra.mxu0 %v8115
        %10491 = vmatprep.subr.bf16.mxu0 %v8124
        %10492 = vmatpush1.bf16.msra.mxu0 %v8123
        %10493 = vmatprep.subr.bf16.mxu0 %v8132
        %10494 = vmatpush1.bf16.msra.mxu0 %v8131
        %10495 = vmatprep.subr.bf16.mxu0 %v8140
        %10496 = vmatpush1.bf16.msra.mxu0 %v8139
        %10497 = vmatprep.subr.bf16.mxu0 %v8148
        %10498 = vmatpush1.bf16.msra.mxu0 %v8147
        %10499 = vmatprep.subr.bf16.mxu0 %v8156
        %10500 = vmatpush1.bf16.msra.mxu0 %v8155
        %10501 = vmatprep.subr.bf16.mxu0 %v8164
        %10502 = vmatpush1.bf16.msra.mxu0 %v8163
        %10503 = vmatprep.subr.bf16.mxu0 %v8172
        %10504 = vmatpush1.bf16.msra.mxu0 %v8171
        %10505 = vmatprep.subr.bf16.mxu0 %v8180
        %10506 = vmatpush1.bf16.msra.mxu0 %v8179
        %10507 = vmatprep.subr.bf16.mxu0 %v8188
        %10508 = vmatpush1.bf16.msra.mxu0 %v8187
        %10509 = vmatprep.subr.bf16.mxu0 %v8196
        %10510 = vmatpush1.bf16.msra.mxu0 %v8195
        %10511 = vmatprep.subr.bf16.mxu0 %v8204
        %10512 = vmatpush1.bf16.msra.mxu0 %v8203
        %10513 = vmatprep.subr.bf16.mxu0 %v8212
        %10514 = vmatpush1.bf16.msra.mxu0 %v8211
        %10515 = vmatprep.subr.bf16.mxu0 %v8220
        %10516 = vmatpush1.bf16.msra.mxu0 %v8219
        %10517 = vmatprep.subr.bf16.mxu0 %v8228
        %10518 = vmatpush1.bf16.msra.mxu0 %v8227
        %10519 = vmatprep.subr.bf16.mxu0 %v8236
        %10520 = vmatpush1.bf16.msra.mxu0 %v8235
        %10521 = vmatprep.mubr.bf16.mxu0 %v5956
        %10522 = vmatmul.mubr.bf16.gmra.mrb[0].mxu0 %v5955
        %v10523 = vpop.f32.mrb[0].mxu0
        %v10524 = vadd.f32 %v6560, %v10523
        %v10525 = vpop.f32.mrb[0].mxu0
        %v10526 = vadd.f32 %v6564, %v10525
        %v10527 = vpop.f32.mrb[0].mxu0
        %v10528 = vadd.f32 %v6560, %v10527
        %v10529 = vpop.f32.mrb[0].mxu0
        %v10530 = vadd.f32 %v6564, %v10529
        %10531 = vmatprep.mubr.bf16.mxu0 %v5964
        %10532 = vmatmul.mubr.bf16.gmra.mrb[0].mxu0 %v5963
        %v10533 = vpop.f32.mrb[0].mxu0
        %v10534 = vadd.f32 %v6560, %v10533
        %v10535 = vpop.f32.mrb[0].mxu0
        %v10536 = vadd.f32 %v6564, %v10535
        %v10537 = vpop.f32.mrb[0].mxu0
        %v10538 = vadd.f32 %v6560, %v10537
        %v10539 = vpop.f32.mrb[0].mxu0
        %v10540 = vadd.f32 %v6564, %v10539
        %10541 = vmatprep.mubr.bf16.mxu0 %v5972
        %10542 = vmatmul.mubr.bf16.gmra.mrb[0].mxu0 %v5971
        %v10543 = vpop.f32.mrb[0].mxu0
        %v10544 = vadd.f32 %v6560, %v10543
        %v10545 = vpop.f32.mrb[0].mxu0
        %v10546 = vadd.f32 %v6564, %v10545
        %v10547 = vpop.f32.mrb[0].mxu0
        %v10548 = vadd.f32 %v6560, %v10547
        %v10549 = vpop.f32.mrb[0].mxu0
        %v10550 = vadd.f32 %v6564, %v10549
        %10551 = vmatprep.mubr.bf16.mxu0 %v5980
        %10552 = vmatmul.mubr.bf16.gmra.mrb[0].mxu0 %v5979
        %v10553 = vpop.f32.mrb[0].mxu0
        %v10554 = vadd.f32 %v6560, %v10553
        %v10555 = vpop.f32.mrb[0].mxu0
        %v10556 = vadd.f32 %v6564, %v10555
        %v10557 = vpop.f32.mrb[0].mxu0
        %v10558 = vadd.f32 %v6560, %v10557
        %v10559 = vpop.f32.mrb[0].mxu0
        %v10560 = vadd.f32 %v6564, %v10559
        %10561 = vmatprep.mubr.bf16.mxu0 %v5988
        %10562 = vmatmul.mubr.bf16.gmra.mrb[0].mxu0 %v5987
        %v10563 = vpop.f32.mrb[0].mxu0
        %v10564 = vadd.f32 %v6560, %v10563
        %v10565 = vpop.f32.mrb[0].mxu0
        %v10566 = vadd.f32 %v6564, %v10565
        %v10567 = vpop.f32.mrb[0].mxu0
        %v10568 = vadd.f32 %v6560, %v10567
        %v10569 = vpop.f32.mrb[0].mxu0
        %v10570 = vadd.f32 %v6564, %v10569
        %10571 = vmatprep.mubr.bf16.mxu0 %v5996
        %10572 = vmatmul.mubr.bf16.gmra.mrb[0].mxu0 %v5995
        %v10573 = vpop.f32.mrb[0].mxu0
        %v10574 = vadd.f32 %v6560, %v10573
        %v10575 = vpop.f32.mrb[0].mxu0
        %v10576 = vadd.f32 %v6564, %v10575
        %v10577 = vpop.f32.mrb[0].mxu0
        %v10578 = vadd.f32 %v6560, %v10577
        %v10579 = vpop.f32.mrb[0].mxu0
        %v10580 = vadd.f32 %v6564, %v10579
        %10581 = vmatprep.mubr.bf16.mxu0 %v6004
        %10582 = vmatmul.mubr.bf16.gmra.mrb[0].mxu0 %v6003
        %v10583 = vpop.f32.mrb[0].mxu0
        %v10584 = vadd.f32 %v6560, %v10583
        %v10585 = vpop.f32.mrb[0].mxu0
        %v10586 = vadd.f32 %v6564, %v10585
        %v10587 = vpop.f32.mrb[0].mxu0
        %v10588 = vadd.f32 %v6560, %v10587
        %v10589 = vpop.f32.mrb[0].mxu0
        %v10590 = vadd.f32 %v6564, %v10589
        %10591 = vmatprep.mubr.bf16.mxu0 %v6012
        %10592 = vmatmul.mubr.bf16.gmra.mrb[0].mxu0 %v6011
        %v10593 = vpop.f32.mrb[0].mxu0
        %v10594 = vadd.f32 %v6560, %v10593
        %v10595 = vpop.f32.mrb[0].mxu0
        %v10596 = vadd.f32 %v6564, %v10595
        %v10597 = vpop.f32.mrb[0].mxu0
        %v10598 = vadd.f32 %v6560, %v10597
        %v10599 = vpop.f32.mrb[0].mxu0
        %v10600 = vadd.f32 %v6564, %v10599
        %10601 = vdwg.mxu0
        %10602 = vmatprep.subr.bf16.mxu0 %v8244
        %10603 = vmatpush1.bf16.msra.mxu0 %v8243
        %10604 = vmatprep.subr.bf16.mxu0 %v8252
        %10605 = vmatpush1.bf16.msra.mxu0 %v8251
        %10606 = vmatprep.subr.bf16.mxu0 %v8260
        %10607 = vmatpush1.bf16.msra.mxu0 %v8259
        %10608 = vmatprep.subr.bf16.mxu0 %v8268
        %10609 = vmatpush1.bf16.msra.mxu0 %v8267
        %10610 = vmatprep.subr.bf16.mxu0 %v8276
        %10611 = vmatpush1.bf16.msra.mxu0 %v8275
        %10612 = vmatprep.subr.bf16.mxu0 %v8284
        %10613 = vmatpush1.bf16.msra.mxu0 %v8283
        %10614 = vmatprep.subr.bf16.mxu0 %v8292
        %10615 = vmatpush1.bf16.msra.mxu0 %v8291
        %10616 = vmatprep.subr.bf16.mxu0 %v8300
        %10617 = vmatpush1.bf16.msra.mxu0 %v8299
        %10618 = vmatprep.subr.bf16.mxu0 %v8308
        %10619 = vmatpush1.bf16.msra.mxu0 %v8307
        %10620 = vmatprep.subr.bf16.mxu0 %v8316
        %10621 = vmatpush1.bf16.msra.mxu0 %v8315
        %10622 = vmatprep.subr.bf16.mxu0 %v8324
        %10623 = vmatpush1.bf16.msra.mxu0 %v8323
        %10624 = vmatprep.subr.bf16.mxu0 %v8332
        %10625 = vmatpush1.bf16.msra.mxu0 %v8331
        %10626 = vmatprep.subr.bf16.mxu0 %v8340
        %10627 = vmatpush1.bf16.msra.mxu0 %v8339
        %10628 = vmatprep.subr.bf16.mxu0 %v8348
        %10629 = vmatpush1.bf16.msra.mxu0 %v8347
        %10630 = vmatprep.subr.bf16.mxu0 %v8356
        %10631 = vmatpush1.bf16.msra.mxu0 %v8355
        %10632 = vmatprep.subr.bf16.mxu0 %v8364
        %10633 = vmatpush1.bf16.msra.mxu0 %v8363
        %10634 = vmatprep.mubr.bf16.mxu0 %v5958
        %10635 = vmatmul.mubr.bf16.gmra.mrb[0].mxu0 %v5957
        %v10636 = vpop.f32.mrb[0].mxu0
        %v10637 = vadd.f32 %v10524, %v10636
        %v10638 = vpop.f32.mrb[0].mxu0
        %v10639 = vadd.f32 %v10526, %v10638
        %v10640 = vpop.f32.mrb[0].mxu0
        %v10641 = vadd.f32 %v10528, %v10640
        %v10642 = vpop.f32.mrb[0].mxu0
        %v10643 = vadd.f32 %v10530, %v10642
        %10644 = vmatprep.mubr.bf16.mxu0 %v5966
        %10645 = vmatmul.mubr.bf16.gmra.mrb[0].mxu0 %v5965
        %v10646 = vpop.f32.mrb[0].mxu0
        %v10647 = vadd.f32 %v10534, %v10646
        %v10648 = vpop.f32.mrb[0].mxu0
        %v10649 = vadd.f32 %v10536, %v10648
        %v10650 = vpop.f32.mrb[0].mxu0
        %v10651 = vadd.f32 %v10538, %v10650
        %v10652 = vpop.f32.mrb[0].mxu0
        %v10653 = vadd.f32 %v10540, %v10652
        %10654 = vmatprep.mubr.bf16.mxu0 %v5974
        %10655 = vmatmul.mubr.bf16.gmra.mrb[0].mxu0 %v5973
        %v10656 = vpop.f32.mrb[0].mxu0
        %v10657 = vadd.f32 %v10544, %v10656
        %v10658 = vpop.f32.mrb[0].mxu0
        %v10659 = vadd.f32 %v10546, %v10658
        %v10660 = vpop.f32.mrb[0].mxu0
        %v10661 = vadd.f32 %v10548, %v10660
        %v10662 = vpop.f32.mrb[0].mxu0
        %v10663 = vadd.f32 %v10550, %v10662
        %10664 = vmatprep.mubr.bf16.mxu0 %v5982
        %10665 = vmatmul.mubr.bf16.gmra.mrb[0].mxu0 %v5981
        %v10666 = vpop.f32.mrb[0].mxu0
        %v10667 = vadd.f32 %v10554, %v10666
        %v10668 = vpop.f32.mrb[0].mxu0
        %v10669 = vadd.f32 %v10556, %v10668
        %v10670 = vpop.f32.mrb[0].mxu0
        %v10671 = vadd.f32 %v10558, %v10670
        %v10672 = vpop.f32.mrb[0].mxu0
        %v10673 = vadd.f32 %v10560, %v10672
        %10674 = vmatprep.mubr.bf16.mxu0 %v5990
        %10675 = vmatmul.mubr.bf16.gmra.mrb[0].mxu0 %v5989
        %v10676 = vpop.f32.mrb[0].mxu0
        %v10677 = vadd.f32 %v10564, %v10676
        %v10678 = vpop.f32.mrb[0].mxu0
        %v10679 = vadd.f32 %v10566, %v10678
        %v10680 = vpop.f32.mrb[0].mxu0
        %v10681 = vadd.f32 %v10568, %v10680
        %v10682 = vpop.f32.mrb[0].mxu0
        %v10683 = vadd.f32 %v10570, %v10682
        %10684 = vmatprep.mubr.bf16.mxu0 %v5998
        %10685 = vmatmul.mubr.bf16.gmra.mrb[0].mxu0 %v5997
        %v10686 = vpop.f32.mrb[0].mxu0
        %v10687 = vadd.f32 %v10574, %v10686
        %v10688 = vpop.f32.mrb[0].mxu0
        %v10689 = vadd.f32 %v10576, %v10688
        %v10690 = vpop.f32.mrb[0].mxu0
        %v10691 = vadd.f32 %v10578, %v10690
        %v10692 = vpop.f32.mrb[0].mxu0
        %v10693 = vadd.f32 %v10580, %v10692
        %10694 = vmatprep.mubr.bf16.mxu0 %v6006
        %10695 = vmatmul.mubr.bf16.gmra.mrb[0].mxu0 %v6005
        %v10696 = vpop.f32.mrb[0].mxu0
        %v10697 = vadd.f32 %v10584, %v10696
        %v10698 = vpop.f32.mrb[0].mxu0
        %v10699 = vadd.f32 %v10586, %v10698
        %v10700 = vpop.f32.mrb[0].mxu0
        %v10701 = vadd.f32 %v10588, %v10700
        %v10702 = vpop.f32.mrb[0].mxu0
        %v10703 = vadd.f32 %v10590, %v10702
        %10704 = vmatprep.mubr.bf16.mxu0 %v6014
        %10705 = vmatmul.mubr.bf16.gmra.mrb[0].mxu0 %v6013
        %v10706 = vpop.f32.mrb[0].mxu0
        %v10707 = vadd.f32 %v10594, %v10706
        %v10708 = vpop.f32.mrb[0].mxu0
        %v10709 = vadd.f32 %v10596, %v10708
        %v10710 = vpop.f32.mrb[0].mxu0
        %v10711 = vadd.f32 %v10598, %v10710
        %v10712 = vpop.f32.mrb[0].mxu0
        %v10713 = vadd.f32 %v10600, %v10712
        %10714 = vdwg.mxu0
        %10715 = vmatprep.subr.bf16.mxu0 %v8372
        %10716 = vmatpush1.bf16.msra.mxu0 %v8371
        %10717 = vmatprep.subr.bf16.mxu0 %v8380
        %10718 = vmatpush1.bf16.msra.mxu0 %v8379
        %10719 = vmatprep.subr.bf16.mxu0 %v8388
        %10720 = vmatpush1.bf16.msra.mxu0 %v8387
        %10721 = vmatprep.subr.bf16.mxu0 %v8396
        %10722 = vmatpush1.bf16.msra.mxu0 %v8395
        %10723 = vmatprep.subr.bf16.mxu0 %v8404
        %10724 = vmatpush1.bf16.msra.mxu0 %v8403
        %10725 = vmatprep.subr.bf16.mxu0 %v8412
        %10726 = vmatpush1.bf16.msra.mxu0 %v8411
        %10727 = vmatprep.subr.bf16.mxu0 %v8420
        %10728 = vmatpush1.bf16.msra.mxu0 %v8419
        %10729 = vmatprep.subr.bf16.mxu0 %v8428
        %10730 = vmatpush1.bf16.msra.mxu0 %v8427
        %10731 = vmatprep.subr.bf16.mxu0 %v8436
        %10732 = vmatpush1.bf16.msra.mxu0 %v8435
        %10733 = vmatprep.subr.bf16.mxu0 %v8444
        %10734 = vmatpush1.bf16.msra.mxu0 %v8443
        %10735 = vmatprep.subr.bf16.mxu0 %v8452
        %10736 = vmatpush1.bf16.msra.mxu0 %v8451
        %10737 = vmatprep.subr.bf16.mxu0 %v8460
        %10738 = vmatpush1.bf16.msra.mxu0 %v8459
        %10739 = vmatprep.subr.bf16.mxu0 %v8468
        %10740 = vmatpush1.bf16.msra.mxu0 %v8467
        %10741 = vmatprep.subr.bf16.mxu0 %v8476
        %10742 = vmatpush1.bf16.msra.mxu0 %v8475
        %10743 = vmatprep.subr.bf16.mxu0 %v8484
        %10744 = vmatpush1.bf16.msra.mxu0 %v8483
        %10745 = vmatprep.subr.bf16.mxu0 %v8492
        %10746 = vmatpush1.bf16.msra.mxu0 %v8491
        %10747 = vmatprep.mubr.bf16.mxu0 %v5960
        %10748 = vmatmul.mubr.bf16.gmra.mrb[0].mxu0 %v5959
        %v10749 = vpop.f32.mrb[0].mxu0
        %v10750 = vadd.f32 %v10637, %v10749
        %v10751 = vpop.f32.mrb[0].mxu0
        %v10752 = vadd.f32 %v10639, %v10751
        %v10753 = vpop.f32.mrb[0].mxu0
        %v10754 = vadd.f32 %v10641, %v10753
        %v10755 = vpop.f32.mrb[0].mxu0
        %v10756 = vadd.f32 %v10643, %v10755
        %10757 = vmatprep.mubr.bf16.mxu0 %v5968
        %10758 = vmatmul.mubr.bf16.gmra.mrb[0].mxu0 %v5967
        %v10759 = vpop.f32.mrb[0].mxu0
        %v10760 = vadd.f32 %v10647, %v10759
        %v10761 = vpop.f32.mrb[0].mxu0
        %v10762 = vadd.f32 %v10649, %v10761
        %v10763 = vpop.f32.mrb[0].mxu0
        %v10764 = vadd.f32 %v10651, %v10763
        %v10765 = vpop.f32.mrb[0].mxu0
        %v10766 = vadd.f32 %v10653, %v10765
        %10767 = vmatprep.mubr.bf16.mxu0 %v5976
        %10768 = vmatmul.mubr.bf16.gmra.mrb[0].mxu0 %v5975
        %v10769 = vpop.f32.mrb[0].mxu0
        %v10770 = vadd.f32 %v10657, %v10769
        %v10771 = vpop.f32.mrb[0].mxu0
        %v10772 = vadd.f32 %v10659, %v10771
        %v10773 = vpop.f32.mrb[0].mxu0
        %v10774 = vadd.f32 %v10661, %v10773
        %v10775 = vpop.f32.mrb[0].mxu0
        %v10776 = vadd.f32 %v10663, %v10775
        %10777 = vmatprep.mubr.bf16.mxu0 %v5984
        %10778 = vmatmul.mubr.bf16.gmra.mrb[0].mxu0 %v5983
        %v10779 = vpop.f32.mrb[0].mxu0
        %v10780 = vadd.f32 %v10667, %v10779
        %v10781 = vpop.f32.mrb[0].mxu0
        %v10782 = vadd.f32 %v10669, %v10781
        %v10783 = vpop.f32.mrb[0].mxu0
        %v10784 = vadd.f32 %v10671, %v10783
        %v10785 = vpop.f32.mrb[0].mxu0
        %v10786 = vadd.f32 %v10673, %v10785
        %10787 = vmatprep.mubr.bf16.mxu0 %v5992
        %10788 = vmatmul.mubr.bf16.gmra.mrb[0].mxu0 %v5991
        %v10789 = vpop.f32.mrb[0].mxu0
        %v10790 = vadd.f32 %v10677, %v10789
        %v10791 = vpop.f32.mrb[0].mxu0
        %v10792 = vadd.f32 %v10679, %v10791
        %v10793 = vpop.f32.mrb[0].mxu0
        %v10794 = vadd.f32 %v10681, %v10793
        %v10795 = vpop.f32.mrb[0].mxu0
        %v10796 = vadd.f32 %v10683, %v10795
        %10797 = vmatprep.mubr.bf16.mxu0 %v6000
        %10798 = vmatmul.mubr.bf16.gmra.mrb[0].mxu0 %v5999
        %v10799 = vpop.f32.mrb[0].mxu0
        %v10800 = vadd.f32 %v10687, %v10799
        %v10801 = vpop.f32.mrb[0].mxu0
        %v10802 = vadd.f32 %v10689, %v10801
        %v10803 = vpop.f32.mrb[0].mxu0
        %v10804 = vadd.f32 %v10691, %v10803
        %v10805 = vpop.f32.mrb[0].mxu0
        %v10806 = vadd.f32 %v10693, %v10805
        %10807 = vmatprep.mubr.bf16.mxu0 %v6008
        %10808 = vmatmul.mubr.bf16.gmra.mrb[0].mxu0 %v6007
        %v10809 = vpop.f32.mrb[0].mxu0
        %v10810 = vadd.f32 %v10697, %v10809
        %v10811 = vpop.f32.mrb[0].mxu0
        %v10812 = vadd.f32 %v10699, %v10811
        %v10813 = vpop.f32.mrb[0].mxu0
        %v10814 = vadd.f32 %v10701, %v10813
        %v10815 = vpop.f32.mrb[0].mxu0
        %v10816 = vadd.f32 %v10703, %v10815
        %10817 = vmatprep.mubr.bf16.mxu0 %v6016
        %10818 = vmatmul.mubr.bf16.gmra.mrb[0].mxu0 %v6015
        %v10819 = vpop.f32.mrb[0].mxu0
        %v10820 = vadd.f32 %v10707, %v10819
        %v10821 = vpop.f32.mrb[0].mxu0
        %v10822 = vadd.f32 %v10709, %v10821
        %v10823 = vpop.f32.mrb[0].mxu0
        %v10824 = vadd.f32 %v10711, %v10823
        %v10825 = vpop.f32.mrb[0].mxu0
        %v10826 = vadd.f32 %v10713, %v10825
        %10827 = vdwg.mxu0
        %10828 = vmatprep.subr.bf16.mxu0 %v8500
        %10829 = vmatpush1.bf16.msra.mxu0 %v8499
        %10830 = vmatprep.subr.bf16.mxu0 %v8508
        %10831 = vmatpush1.bf16.msra.mxu0 %v8507
        %10832 = vmatprep.subr.bf16.mxu0 %v8516
        %10833 = vmatpush1.bf16.msra.mxu0 %v8515
        %10834 = vmatprep.subr.bf16.mxu0 %v8524
        %10835 = vmatpush1.bf16.msra.mxu0 %v8523
        %10836 = vmatprep.subr.bf16.mxu0 %v8532
        %10837 = vmatpush1.bf16.msra.mxu0 %v8531
        %10838 = vmatprep.subr.bf16.mxu0 %v8540
        %10839 = vmatpush1.bf16.msra.mxu0 %v8539
        %10840 = vmatprep.subr.bf16.mxu0 %v8548
        %10841 = vmatpush1.bf16.msra.mxu0 %v8547
        %10842 = vmatprep.subr.bf16.mxu0 %v8556
        %10843 = vmatpush1.bf16.msra.mxu0 %v8555
        %10844 = vmatprep.subr.bf16.mxu0 %v8564
        %10845 = vmatpush1.bf16.msra.mxu0 %v8563
        %10846 = vmatprep.subr.bf16.mxu0 %v8572
        %10847 = vmatpush1.bf16.msra.mxu0 %v8571
        %10848 = vmatprep.subr.bf16.mxu0 %v8580
        %10849 = vmatpush1.bf16.msra.mxu0 %v8579
        %10850 = vmatprep.subr.bf16.mxu0 %v8588
        %10851 = vmatpush1.bf16.msra.mxu0 %v8587
        %10852 = vmatprep.subr.bf16.mxu0 %v8596
        %10853 = vmatpush1.bf16.msra.mxu0 %v8595
        %10854 = vmatprep.subr.bf16.mxu0 %v8604
        %10855 = vmatpush1.bf16.msra.mxu0 %v8603
        %10856 = vmatprep.subr.bf16.mxu0 %v8612
        %10857 = vmatpush1.bf16.msra.mxu0 %v8611
        %10858 = vmatprep.subr.bf16.mxu0 %v8620
        %10859 = vmatpush1.bf16.msra.mxu0 %v8619
        %10860 = vmatprep.mubr.bf16.mxu0 %v5962
        %10861 = vmatmul.mubr.bf16.gmra.mrb[0].mxu0 %v5961
        %v10862 = vpop.f32.mrb[0].mxu0
        %v10863 = vadd.f32 %v10750, %v10862
        %v10864 = vpop.f32.mrb[0].mxu0
        %v10865 = vadd.f32 %v10752, %v10864
        %v10866 = vpop.f32.mrb[0].mxu0
        %v10867 = vadd.f32 %v10754, %v10866
        %v10868 = vpop.f32.mrb[0].mxu0
        %v10869 = vadd.f32 %v10756, %v10868
        %10870 = vmatprep.mubr.bf16.mxu0 %v5970
        %10871 = vmatmul.mubr.bf16.gmra.mrb[0].mxu0 %v5969
        %v10872 = vpop.f32.mrb[0].mxu0
        %v10873 = vadd.f32 %v10760, %v10872
        %v10874 = vpop.f32.mrb[0].mxu0
        %v10875 = vadd.f32 %v10762, %v10874
        %v10876 = vpop.f32.mrb[0].mxu0
        %v10877 = vadd.f32 %v10764, %v10876
        %v10878 = vpop.f32.mrb[0].mxu0
        %v10879 = vadd.f32 %v10766, %v10878
        %10880 = vmatprep.mubr.bf16.mxu0 %v5978
        %10881 = vmatmul.mubr.bf16.gmra.mrb[0].mxu0 %v5977
        %v10882 = vpop.f32.mrb[0].mxu0
        %v10883 = vadd.f32 %v10770, %v10882
        %v10884 = vpop.f32.mrb[0].mxu0
        %v10885 = vadd.f32 %v10772, %v10884
        %v10886 = vpop.f32.mrb[0].mxu0
        %v10887 = vadd.f32 %v10774, %v10886
        %v10888 = vpop.f32.mrb[0].mxu0
        %v10889 = vadd.f32 %v10776, %v10888
        %10890 = vmatprep.mubr.bf16.mxu0 %v5986
        %10891 = vmatmul.mubr.bf16.gmra.mrb[0].mxu0 %v5985
        %v10892 = vpop.f32.mrb[0].mxu0
        %v10893 = vadd.f32 %v10780, %v10892
        %v10894 = vpop.f32.mrb[0].mxu0
        %v10895 = vadd.f32 %v10782, %v10894
        %v10896 = vpop.f32.mrb[0].mxu0
        %v10897 = vadd.f32 %v10784, %v10896
        %v10898 = vpop.f32.mrb[0].mxu0
        %v10899 = vadd.f32 %v10786, %v10898
        %10900 = vmatprep.mubr.bf16.mxu0 %v5994
        %10901 = vmatmul.mubr.bf16.gmra.mrb[0].mxu0 %v5993
        %v10902 = vpop.f32.mrb[0].mxu0
        %v10903 = vadd.f32 %v10790, %v10902
        %v10904 = vpop.f32.mrb[0].mxu0
        %v10905 = vadd.f32 %v10792, %v10904
        %v10906 = vpop.f32.mrb[0].mxu0
        %v10907 = vadd.f32 %v10794, %v10906
        %v10908 = vpop.f32.mrb[0].mxu0
        %v10909 = vadd.f32 %v10796, %v10908
        %10910 = vmatprep.mubr.bf16.mxu0 %v6002
        %10911 = vmatmul.mubr.bf16.gmra.mrb[0].mxu0 %v6001
        %v10912 = vpop.f32.mrb[0].mxu0
        %v10913 = vadd.f32 %v10800, %v10912
        %v10914 = vpop.f32.mrb[0].mxu0
        %v10915 = vadd.f32 %v10802, %v10914
        %v10916 = vpop.f32.mrb[0].mxu0
        %v10917 = vadd.f32 %v10804, %v10916
        %v10918 = vpop.f32.mrb[0].mxu0
        %v10919 = vadd.f32 %v10806, %v10918
        %10920 = vmatprep.mubr.bf16.mxu0 %v6010
        %10921 = vmatmul.mubr.bf16.gmra.mrb[0].mxu0 %v6009
        %v10922 = vpop.f32.mrb[0].mxu0
        %v10923 = vadd.f32 %v10810, %v10922
        %v10924 = vpop.f32.mrb[0].mxu0
        %v10925 = vadd.f32 %v10812, %v10924
        %v10926 = vpop.f32.mrb[0].mxu0
        %v10927 = vadd.f32 %v10814, %v10926
        %v10928 = vpop.f32.mrb[0].mxu0
        %v10929 = vadd.f32 %v10816, %v10928
        %10930 = vmatprep.mubr.bf16.mxu0 %v6018
        %10931 = vmatmul.mubr.bf16.gmra.mrb[0].mxu0 %v6017
        %v10932 = vpop.f32.mrb[0].mxu0
        %v10933 = vadd.f32 %v10820, %v10932
        %v10934 = vpop.f32.mrb[0].mxu0
        %v10935 = vadd.f32 %v10822, %v10934
        %v10936 = vpop.f32.mrb[0].mxu0
        %v10937 = vadd.f32 %v10824, %v10936
        %v10938 = vpop.f32.mrb[0].mxu0
        %v10939 = vadd.f32 %v10826, %v10938
        %10940 = vdwg.mxu0
        %v10941 = vmax.f32 %v9507, 0.0
        %v10942 = vmax.f32 %v9509, 0.0
        %v10943 = vmax.f32 %v9959, 0.0
        %v10944 = vmax.f32 %v9961, 0.0
        %v10945 = vmax.f32 %v10411, 0.0
        %v10946 = vmax.f32 %v10413, 0.0
        %v10947 = vmax.f32 %v10863, 0.0
        %v10948 = vmax.f32 %v10865, 0.0
        %v10949 = vmax.f32 %v9511, 0.0
        %v10950 = vmax.f32 %v9513, 0.0
        %v10951 = vmax.f32 %v9963, 0.0
        %v10952 = vmax.f32 %v9965, 0.0
        %v10953 = vmax.f32 %v10415, 0.0
        %v10954 = vmax.f32 %v10417, 0.0
        %v10955 = vmax.f32 %v10867, 0.0
        %v10956 = vmax.f32 %v10869, 0.0
        %v10957 = vmax.f32 %v9517, 0.0
        %v10958 = vmax.f32 %v9519, 0.0
        %v10959 = vmax.f32 %v9969, 0.0
        %v10960 = vmax.f32 %v9971, 0.0
        %v10961 = vmax.f32 %v10421, 0.0
        %v10962 = vmax.f32 %v10423, 0.0
        %v10963 = vmax.f32 %v10873, 0.0
        %v10964 = vmax.f32 %v10875, 0.0
        %v10965 = vmax.f32 %v9521, 0.0
        %v10966 = vmax.f32 %v9523, 0.0
        %v10967 = vmax.f32 %v9973, 0.0
        %v10968 = vmax.f32 %v9975, 0.0
        %v10969 = vmax.f32 %v10425, 0.0
        %v10970 = vmax.f32 %v10427, 0.0
        %v10971 = vmax.f32 %v10877, 0.0
        %v10972 = vmax.f32 %v10879, 0.0
        %v10973 = vmax.f32 %v9527, 0.0
        %v10974 = vmax.f32 %v9529, 0.0
        %v10975 = vmax.f32 %v9979, 0.0
        %v10976 = vmax.f32 %v9981, 0.0
        %v10977 = vmax.f32 %v10431, 0.0
        %v10978 = vmax.f32 %v10433, 0.0
        %v10979 = vmax.f32 %v10883, 0.0
        %v10980 = vmax.f32 %v10885, 0.0
        %v10981 = vmax.f32 %v9531, 0.0
        %v10982 = vmax.f32 %v9533, 0.0
        %v10983 = vmax.f32 %v9983, 0.0
        %v10984 = vmax.f32 %v9985, 0.0
        %v10985 = vmax.f32 %v10435, 0.0
        %v10986 = vmax.f32 %v10437, 0.0
        %v10987 = vmax.f32 %v10887, 0.0
        %v10988 = vmax.f32 %v10889, 0.0
        %v10989 = vmax.f32 %v9537, 0.0
        %v10990 = vmax.f32 %v9539, 0.0
        %v10991 = vmax.f32 %v9989, 0.0
        %v10992 = vmax.f32 %v9991, 0.0
        %v10993 = vmax.f32 %v10441, 0.0
        %v10994 = vmax.f32 %v10443, 0.0
        %v10995 = vmax.f32 %v10893, 0.0
        %v10996 = vmax.f32 %v10895, 0.0
        %v10997 = vmax.f32 %v9541, 0.0
        %v10998 = vmax.f32 %v9543, 0.0
        %v10999 = vmax.f32 %v9993, 0.0
        %v11000 = vmax.f32 %v9995, 0.0
        %v11001 = vmax.f32 %v10445, 0.0
        %v11002 = vmax.f32 %v10447, 0.0
        %v11003 = vmax.f32 %v10897, 0.0
        %v11004 = vmax.f32 %v10899, 0.0
        %v11005 = vmax.f32 %v9547, 0.0
        %v11006 = vmax.f32 %v9549, 0.0
        %v11007 = vmax.f32 %v9999, 0.0
        %v11008 = vmax.f32 %v10001, 0.0
        %v11009 = vmax.f32 %v10451, 0.0
        %v11010 = vmax.f32 %v10453, 0.0
        %v11011 = vmax.f32 %v10903, 0.0
        %v11012 = vmax.f32 %v10905, 0.0
        %v11013 = vmax.f32 %v9551, 0.0
        %v11014 = vmax.f32 %v9553, 0.0
        %v11015 = vmax.f32 %v10003, 0.0
        %v11016 = vmax.f32 %v10005, 0.0
        %v11017 = vmax.f32 %v10455, 0.0
        %v11018 = vmax.f32 %v10457, 0.0
        %v11019 = vmax.f32 %v10907, 0.0
        %v11020 = vmax.f32 %v10909, 0.0
        %v11021 = vmax.f32 %v9557, 0.0
        %v11022 = vmax.f32 %v9559, 0.0
        %v11023 = vmax.f32 %v10009, 0.0
        %v11024 = vmax.f32 %v10011, 0.0
        %v11025 = vmax.f32 %v10461, 0.0
        %v11026 = vmax.f32 %v10463, 0.0
        %v11027 = vmax.f32 %v10913, 0.0
        %v11028 = vmax.f32 %v10915, 0.0
        %v11029 = vmax.f32 %v9561, 0.0
        %v11030 = vmax.f32 %v9563, 0.0
        %v11031 = vmax.f32 %v10013, 0.0
        %v11032 = vmax.f32 %v10015, 0.0
        %v11033 = vmax.f32 %v10465, 0.0
        %v11034 = vmax.f32 %v10467, 0.0
        %v11035 = vmax.f32 %v10917, 0.0
        %v11036 = vmax.f32 %v10919, 0.0
        %v11037 = vmax.f32 %v9567, 0.0
        %v11038 = vmax.f32 %v9569, 0.0
        %v11039 = vmax.f32 %v10019, 0.0
        %v11040 = vmax.f32 %v10021, 0.0
        %v11041 = vmax.f32 %v10471, 0.0
        %v11042 = vmax.f32 %v10473, 0.0
        %v11043 = vmax.f32 %v10923, 0.0
        %v11044 = vmax.f32 %v10925, 0.0
        %v11045 = vmax.f32 %v9571, 0.0
        %v11046 = vmax.f32 %v9573, 0.0
        %v11047 = vmax.f32 %v10023, 0.0
        %v11048 = vmax.f32 %v10025, 0.0
        %v11049 = vmax.f32 %v10475, 0.0
        %v11050 = vmax.f32 %v10477, 0.0
        %v11051 = vmax.f32 %v10927, 0.0
        %v11052 = vmax.f32 %v10929, 0.0
        %v11053 = vmax.f32 %v9577, 0.0
        %v11054 = vmax.f32 %v9579, 0.0
        %v11055 = vmax.f32 %v10029, 0.0
        %v11056 = vmax.f32 %v10031, 0.0
        %v11057 = vmax.f32 %v10481, 0.0
        %v11058 = vmax.f32 %v10483, 0.0
        %v11059 = vmax.f32 %v10933, 0.0
        %v11060 = vmax.f32 %v10935, 0.0
        %v11061 = vmax.f32 %v9581, 0.0
        %v11062 = vmax.f32 %v9583, 0.0
        %v11063 = vmax.f32 %v10033, 0.0
        %v11064 = vmax.f32 %v10035, 0.0
        %v11065 = vmax.f32 %v10485, 0.0
        %v11066 = vmax.f32 %v10487, 0.0
        %v11067 = vmax.f32 %v10937, 0.0
        %v11068 = vmax.f32 %v10939, 0.0
        %v11069 = vpack.c.bf16 %v10949, %v10941
        %v11070 = vpack.c.bf16 %v10950, %v10942
        %v11071 = vpack.c.bf16 %v10951, %v10943
        %v11072 = vpack.c.bf16 %v10952, %v10944
        %v11073 = vpack.c.bf16 %v10953, %v10945
        %v11074 = vpack.c.bf16 %v10954, %v10946
        %v11075 = vpack.c.bf16 %v10955, %v10947
        %v11076 = vpack.c.bf16 %v10956, %v10948
        %v11077 = vpack.c.bf16 %v10965, %v10957
        %v11078 = vpack.c.bf16 %v10966, %v10958
        %v11079 = vpack.c.bf16 %v10967, %v10959
        %v11080 = vpack.c.bf16 %v10968, %v10960
        %v11081 = vpack.c.bf16 %v10969, %v10961
        %v11082 = vpack.c.bf16 %v10970, %v10962
        %v11083 = vpack.c.bf16 %v10971, %v10963
        %v11084 = vpack.c.bf16 %v10972, %v10964
        %v11085 = vpack.c.bf16 %v10981, %v10973
        %v11086 = vpack.c.bf16 %v10982, %v10974
        %v11087 = vpack.c.bf16 %v10983, %v10975
        %v11088 = vpack.c.bf16 %v10984, %v10976
        %v11089 = vpack.c.bf16 %v10985, %v10977
        %v11090 = vpack.c.bf16 %v10986, %v10978
        %v11091 = vpack.c.bf16 %v10987, %v10979
        %v11092 = vpack.c.bf16 %v10988, %v10980
        %v11093 = vpack.c.bf16 %v10997, %v10989
        %v11094 = vpack.c.bf16 %v10998, %v10990
        %v11095 = vpack.c.bf16 %v10999, %v10991
        %v11096 = vpack.c.bf16 %v11000, %v10992
        %v11097 = vpack.c.bf16 %v11001, %v10993
        %v11098 = vpack.c.bf16 %v11002, %v10994
        %v11099 = vpack.c.bf16 %v11003, %v10995
        %v11100 = vpack.c.bf16 %v11004, %v10996
        %v11101 = vpack.c.bf16 %v11013, %v11005
        %v11102 = vpack.c.bf16 %v11014, %v11006
        %v11103 = vpack.c.bf16 %v11015, %v11007
        %v11104 = vpack.c.bf16 %v11016, %v11008
        %v11105 = vpack.c.bf16 %v11017, %v11009
        %v11106 = vpack.c.bf16 %v11018, %v11010
        %v11107 = vpack.c.bf16 %v11019, %v11011
        %v11108 = vpack.c.bf16 %v11020, %v11012
        %v11109 = vpack.c.bf16 %v11029, %v11021
        %v11110 = vpack.c.bf16 %v11030, %v11022
        %v11111 = vpack.c.bf16 %v11031, %v11023
        %v11112 = vpack.c.bf16 %v11032, %v11024
        %v11113 = vpack.c.bf16 %v11033, %v11025
        %v11114 = vpack.c.bf16 %v11034, %v11026
        %v11115 = vpack.c.bf16 %v11035, %v11027
        %v11116 = vpack.c.bf16 %v11036, %v11028
        %v11117 = vpack.c.bf16 %v11045, %v11037
        %v11118 = vpack.c.bf16 %v11046, %v11038
        %v11119 = vpack.c.bf16 %v11047, %v11039
        %v11120 = vpack.c.bf16 %v11048, %v11040
        %v11121 = vpack.c.bf16 %v11049, %v11041
        %v11122 = vpack.c.bf16 %v11050, %v11042
        %v11123 = vpack.c.bf16 %v11051, %v11043
        %v11124 = vpack.c.bf16 %v11052, %v11044
        %v11125 = vpack.c.bf16 %v11061, %v11053
        %v11126 = vpack.c.bf16 %v11062, %v11054
        %v11127 = vpack.c.bf16 %v11063, %v11055
        %v11128 = vpack.c.bf16 %v11064, %v11056
        %v11129 = vpack.c.bf16 %v11065, %v11057
        %v11130 = vpack.c.bf16 %v11066, %v11058
        %v11131 = vpack.c.bf16 %v11067, %v11059
        %v11132 = vpack.c.bf16 %v11068, %v11060
        %v11133 = vld [vmem:[#allocation18] sm:$0xf]
        %v11134 = vld [vmem:[#allocation18 + $0x4] sm:$0xf]
        %v11135 = vld [vmem:[#allocation18 + $0x8] sm:$0xf]
        %v11136 = vld [vmem:[#allocation18 + $0xc] sm:$0xf]
        %v11137 = vld [vmem:[#allocation18 + $0x10] sm:$0xf]
        %v11138 = vld [vmem:[#allocation18 + $0x14] sm:$0xf]
        %v11139 = vld [vmem:[#allocation18 + $0x18] sm:$0xf]
        %v11140 = vld [vmem:[#allocation18 + $0x1c] sm:$0xf]
        %v11141 = vld [vmem:[#allocation18 + $0x20] sm:$0xf]
        %v11142 = vld [vmem:[#allocation18 + $0x24] sm:$0xf]
        %v11143 = vld [vmem:[#allocation18 + $0x28] sm:$0xf]
        %v11144 = vld [vmem:[#allocation18 + $0x2c] sm:$0xf]
        %v11145 = vld [vmem:[#allocation18 + $0x30] sm:$0xf]
        %v11146 = vld [vmem:[#allocation18 + $0x34] sm:$0xf]
        %v11147 = vld [vmem:[#allocation18 + $0x38] sm:$0xf]
        %v11148 = vld [vmem:[#allocation18 + $0x3c] sm:$0xf]
        %v11149 = vld [vmem:[#allocation18 + $0x40] sm:$0xf]
        %v11150 = vld [vmem:[#allocation18 + $0x44] sm:$0xf]
        %v11151 = vld [vmem:[#allocation18 + $0x48] sm:$0xf]
        %v11152 = vld [vmem:[#allocation18 + $0x4c] sm:$0xf]
        %v11153 = vld [vmem:[#allocation18 + $0x50] sm:$0xf]
        %v11154 = vld [vmem:[#allocation18 + $0x54] sm:$0xf]
        %v11155 = vld [vmem:[#allocation18 + $0x58] sm:$0xf]
        %v11156 = vld [vmem:[#allocation18 + $0x5c] sm:$0xf]
        %v11157 = vld [vmem:[#allocation18 + $0x60] sm:$0xf]
        %v11158 = vld [vmem:[#allocation18 + $0x64] sm:$0xf]
        %v11159 = vld [vmem:[#allocation18 + $0x68] sm:$0xf]
        %v11160 = vld [vmem:[#allocation18 + $0x6c] sm:$0xf]
        %v11161 = vld [vmem:[#allocation18 + $0x70] sm:$0xf]
        %v11162 = vld [vmem:[#allocation18 + $0x74] sm:$0xf]
        %v11163 = vld [vmem:[#allocation18 + $0x78] sm:$0xf]
        %v11164 = vld [vmem:[#allocation18 + $0x7c] sm:$0xf]
        %v11165 = vld [vmem:[#allocation18 + $0x80] sm:$0xf]
        %v11166 = vld [vmem:[#allocation18 + $0x84] sm:$0xf]
        %v11167 = vld [vmem:[#allocation18 + $0x88] sm:$0xf]
        %v11168 = vld [vmem:[#allocation18 + $0x8c] sm:$0xf]
        %v11169 = vld [vmem:[#allocation18 + $0x90] sm:$0xf]
        %v11170 = vld [vmem:[#allocation18 + $0x94] sm:$0xf]
        %v11171 = vld [vmem:[#allocation18 + $0x98] sm:$0xf]
        %v11172 = vld [vmem:[#allocation18 + $0x9c] sm:$0xf]
        %v11173 = vld [vmem:[#allocation18 + $0xa0] sm:$0xf]
        %v11174 = vld [vmem:[#allocation18 + $0xa4] sm:$0xf]
        %v11175 = vld [vmem:[#allocation18 + $0xa8] sm:$0xf]
        %v11176 = vld [vmem:[#allocation18 + $0xac] sm:$0xf]
        %v11177 = vld [vmem:[#allocation18 + $0xb0] sm:$0xf]
        %v11178 = vld [vmem:[#allocation18 + $0xb4] sm:$0xf]
        %v11179 = vld [vmem:[#allocation18 + $0xb8] sm:$0xf]
        %v11180 = vld [vmem:[#allocation18 + $0xbc] sm:$0xf]
        %v11181 = vld [vmem:[#allocation18 + $0xc0] sm:$0xf]
        %v11182 = vld [vmem:[#allocation18 + $0xc4] sm:$0xf]
        %v11183 = vld [vmem:[#allocation18 + $0xc8] sm:$0xf]
        %v11184 = vld [vmem:[#allocation18 + $0xcc] sm:$0xf]
        %v11185 = vld [vmem:[#allocation18 + $0xd0] sm:$0xf]
        %v11186 = vld [vmem:[#allocation18 + $0xd4] sm:$0xf]
        %v11187 = vld [vmem:[#allocation18 + $0xd8] sm:$0xf]
        %v11188 = vld [vmem:[#allocation18 + $0xdc] sm:$0xf]
        %v11189 = vld [vmem:[#allocation18 + $0xe0] sm:$0xf]
        %v11190 = vld [vmem:[#allocation18 + $0xe4] sm:$0xf]
        %v11191 = vld [vmem:[#allocation18 + $0xe8] sm:$0xf]
        %v11192 = vld [vmem:[#allocation18 + $0xec] sm:$0xf]
        %v11193 = vld [vmem:[#allocation18 + $0xf0] sm:$0xf]
        %v11194 = vld [vmem:[#allocation18 + $0xf4] sm:$0xf]
        %v11195 = vld [vmem:[#allocation18 + $0xf8] sm:$0xf]
        %v11196 = vld [vmem:[#allocation18 + $0xfc] sm:$0xf]
        %v11197 = vld [vmem:[#allocation18 + $0x100] sm:$0xf]
        %v11198 = vld [vmem:[#allocation18 + $0x104] sm:$0xf]
        %v11199 = vld [vmem:[#allocation18 + $0x108] sm:$0xf]
        %v11200 = vld [vmem:[#allocation18 + $0x10c] sm:$0xf]
        %v11201 = vld [vmem:[#allocation18 + $0x110] sm:$0xf]
        %v11202 = vld [vmem:[#allocation18 + $0x114] sm:$0xf]
        %v11203 = vld [vmem:[#allocation18 + $0x118] sm:$0xf]
        %v11204 = vld [vmem:[#allocation18 + $0x11c] sm:$0xf]
        %v11205 = vld [vmem:[#allocation18 + $0x120] sm:$0xf]
        %v11206 = vld [vmem:[#allocation18 + $0x124] sm:$0xf]
        %v11207 = vld [vmem:[#allocation18 + $0x128] sm:$0xf]
        %v11208 = vld [vmem:[#allocation18 + $0x12c] sm:$0xf]
        %v11209 = vld [vmem:[#allocation18 + $0x130] sm:$0xf]
        %v11210 = vld [vmem:[#allocation18 + $0x134] sm:$0xf]
        %v11211 = vld [vmem:[#allocation18 + $0x138] sm:$0xf]
        %v11212 = vld [vmem:[#allocation18 + $0x13c] sm:$0xf]
        %v11213 = vld [vmem:[#allocation18 + $0x140] sm:$0xf]
        %v11214 = vld [vmem:[#allocation18 + $0x144] sm:$0xf]
        %v11215 = vld [vmem:[#allocation18 + $0x148] sm:$0xf]
        %v11216 = vld [vmem:[#allocation18 + $0x14c] sm:$0xf]
        %v11217 = vld [vmem:[#allocation18 + $0x150] sm:$0xf]
        %v11218 = vld [vmem:[#allocation18 + $0x154] sm:$0xf]
        %v11219 = vld [vmem:[#allocation18 + $0x158] sm:$0xf]
        %v11220 = vld [vmem:[#allocation18 + $0x15c] sm:$0xf]
        %v11221 = vld [vmem:[#allocation18 + $0x160] sm:$0xf]
        %v11222 = vld [vmem:[#allocation18 + $0x164] sm:$0xf]
        %v11223 = vld [vmem:[#allocation18 + $0x168] sm:$0xf]
        %v11224 = vld [vmem:[#allocation18 + $0x16c] sm:$0xf]
        %v11225 = vld [vmem:[#allocation18 + $0x170] sm:$0xf]
        %v11226 = vld [vmem:[#allocation18 + $0x174] sm:$0xf]
        %v11227 = vld [vmem:[#allocation18 + $0x178] sm:$0xf]
        %v11228 = vld [vmem:[#allocation18 + $0x17c] sm:$0xf]
        %v11229 = vld [vmem:[#allocation18 + $0x180] sm:$0xf]
        %v11230 = vld [vmem:[#allocation18 + $0x184] sm:$0xf]
        %v11231 = vld [vmem:[#allocation18 + $0x188] sm:$0xf]
        %v11232 = vld [vmem:[#allocation18 + $0x18c] sm:$0xf]
        %v11233 = vld [vmem:[#allocation18 + $0x190] sm:$0xf]
        %v11234 = vld [vmem:[#allocation18 + $0x194] sm:$0xf]
        %v11235 = vld [vmem:[#allocation18 + $0x198] sm:$0xf]
        %v11236 = vld [vmem:[#allocation18 + $0x19c] sm:$0xf]
        %v11237 = vld [vmem:[#allocation18 + $0x1a0] sm:$0xf]
        %v11238 = vld [vmem:[#allocation18 + $0x1a4] sm:$0xf]
        %v11239 = vld [vmem:[#allocation18 + $0x1a8] sm:$0xf]
        %v11240 = vld [vmem:[#allocation18 + $0x1ac] sm:$0xf]
        %v11241 = vld [vmem:[#allocation18 + $0x1b0] sm:$0xf]
        %v11242 = vld [vmem:[#allocation18 + $0x1b4] sm:$0xf]
        %v11243 = vld [vmem:[#allocation18 + $0x1b8] sm:$0xf]
        %v11244 = vld [vmem:[#allocation18 + $0x1bc] sm:$0xf]
        %v11245 = vld [vmem:[#allocation18 + $0x1c0] sm:$0xf]
        %v11246 = vld [vmem:[#allocation18 + $0x1c4] sm:$0xf]
        %v11247 = vld [vmem:[#allocation18 + $0x1c8] sm:$0xf]
        %v11248 = vld [vmem:[#allocation18 + $0x1cc] sm:$0xf]
        %v11249 = vld [vmem:[#allocation18 + $0x1d0] sm:$0xf]
        %v11250 = vld [vmem:[#allocation18 + $0x1d4] sm:$0xf]
        %v11251 = vld [vmem:[#allocation18 + $0x1d8] sm:$0xf]
        %v11252 = vld [vmem:[#allocation18 + $0x1dc] sm:$0xf]
        %v11253 = vld [vmem:[#allocation18 + $0x1e0] sm:$0xf]
        %v11254 = vld [vmem:[#allocation18 + $0x1e4] sm:$0xf]
        %v11255 = vld [vmem:[#allocation18 + $0x1e8] sm:$0xf]
        %v11256 = vld [vmem:[#allocation18 + $0x1ec] sm:$0xf]
        %v11257 = vld [vmem:[#allocation18 + $0x1f0] sm:$0xf]
        %v11258 = vld [vmem:[#allocation18 + $0x1f4] sm:$0xf]
        %v11259 = vld [vmem:[#allocation18 + $0x1f8] sm:$0xf]
        %v11260 = vld [vmem:[#allocation18 + $0x1fc] sm:$0xf]
        %v11261 = vld [vmem:[#allocation19] sm:$0x1]
        %v11263 = vlaneseq
        %v11264 = vshrl.u32 %v11263, 7
        %v11265 = vsub.s32 0, %v11264
        %v11266 = vrot.slane %v11261, %v11265
        %v11396 = vunpack.c.l.b16 %v11133
        %v11397 = vunpack.c.l.b16 %v11134
        %v11398 = vunpack.c.l.b16 %v11135
        %v11399 = vunpack.c.l.b16 %v11136
        %v11400 = vunpack.c.l.b16 %v11137
        %v11401 = vunpack.c.l.b16 %v11138
        %v11402 = vunpack.c.l.b16 %v11139
        %v11403 = vunpack.c.l.b16 %v11140
        %v11404 = vunpack.c.l.b16 %v11141
        %v11405 = vunpack.c.l.b16 %v11142
        %v11406 = vunpack.c.l.b16 %v11143
        %v11407 = vunpack.c.l.b16 %v11144
        %v11408 = vunpack.c.l.b16 %v11145
        %v11409 = vunpack.c.l.b16 %v11146
        %v11410 = vunpack.c.l.b16 %v11147
        %v11411 = vunpack.c.l.b16 %v11148
        %v11412 = vunpack.c.l.b16 %v11149
        %v11413 = vunpack.c.l.b16 %v11150
        %v11414 = vunpack.c.l.b16 %v11151
        %v11415 = vunpack.c.l.b16 %v11152
        %v11416 = vunpack.c.l.b16 %v11153
        %v11417 = vunpack.c.l.b16 %v11154
        %v11418 = vunpack.c.l.b16 %v11155
        %v11419 = vunpack.c.l.b16 %v11156
        %v11420 = vunpack.c.l.b16 %v11157
        %v11421 = vunpack.c.l.b16 %v11158
        %v11422 = vunpack.c.l.b16 %v11159
        %v11423 = vunpack.c.l.b16 %v11160
        %v11424 = vunpack.c.l.b16 %v11161
        %v11425 = vunpack.c.l.b16 %v11162
        %v11426 = vunpack.c.l.b16 %v11163
        %v11427 = vunpack.c.l.b16 %v11164
        %v11428 = vunpack.c.l.b16 %v11165
        %v11429 = vunpack.c.l.b16 %v11166
        %v11430 = vunpack.c.l.b16 %v11167
        %v11431 = vunpack.c.l.b16 %v11168
        %v11432 = vunpack.c.l.b16 %v11169
        %v11433 = vunpack.c.l.b16 %v11170
        %v11434 = vunpack.c.l.b16 %v11171
        %v11435 = vunpack.c.l.b16 %v11172
        %v11436 = vunpack.c.l.b16 %v11173
        %v11437 = vunpack.c.l.b16 %v11174
        %v11438 = vunpack.c.l.b16 %v11175
        %v11439 = vunpack.c.l.b16 %v11176
        %v11440 = vunpack.c.l.b16 %v11177
        %v11441 = vunpack.c.l.b16 %v11178
        %v11442 = vunpack.c.l.b16 %v11179
        %v11443 = vunpack.c.l.b16 %v11180
        %v11444 = vunpack.c.l.b16 %v11181
        %v11445 = vunpack.c.l.b16 %v11182
        %v11446 = vunpack.c.l.b16 %v11183
        %v11447 = vunpack.c.l.b16 %v11184
        %v11448 = vunpack.c.l.b16 %v11185
        %v11449 = vunpack.c.l.b16 %v11186
        %v11450 = vunpack.c.l.b16 %v11187
        %v11451 = vunpack.c.l.b16 %v11188
        %v11452 = vunpack.c.l.b16 %v11189
        %v11453 = vunpack.c.l.b16 %v11190
        %v11454 = vunpack.c.l.b16 %v11191
        %v11455 = vunpack.c.l.b16 %v11192
        %v11456 = vunpack.c.l.b16 %v11193
        %v11457 = vunpack.c.l.b16 %v11194
        %v11458 = vunpack.c.l.b16 %v11195
        %v11459 = vunpack.c.l.b16 %v11196
        %v11460 = vunpack.c.l.b16 %v11197
        %v11461 = vunpack.c.l.b16 %v11198
        %v11462 = vunpack.c.l.b16 %v11199
        %v11463 = vunpack.c.l.b16 %v11200
        %v11464 = vunpack.c.l.b16 %v11201
        %v11465 = vunpack.c.l.b16 %v11202
        %v11466 = vunpack.c.l.b16 %v11203
        %v11467 = vunpack.c.l.b16 %v11204
        %v11468 = vunpack.c.l.b16 %v11205
        %v11469 = vunpack.c.l.b16 %v11206
        %v11470 = vunpack.c.l.b16 %v11207
        %v11471 = vunpack.c.l.b16 %v11208
        %v11472 = vunpack.c.l.b16 %v11209
        %v11473 = vunpack.c.l.b16 %v11210
        %v11474 = vunpack.c.l.b16 %v11211
        %v11475 = vunpack.c.l.b16 %v11212
        %v11476 = vunpack.c.l.b16 %v11213
        %v11477 = vunpack.c.l.b16 %v11214
        %v11478 = vunpack.c.l.b16 %v11215
        %v11479 = vunpack.c.l.b16 %v11216
        %v11480 = vunpack.c.l.b16 %v11217
        %v11481 = vunpack.c.l.b16 %v11218
        %v11482 = vunpack.c.l.b16 %v11219
        %v11483 = vunpack.c.l.b16 %v11220
        %v11484 = vunpack.c.l.b16 %v11221
        %v11485 = vunpack.c.l.b16 %v11222
        %v11486 = vunpack.c.l.b16 %v11223
        %v11487 = vunpack.c.l.b16 %v11224
        %v11488 = vunpack.c.l.b16 %v11225
        %v11489 = vunpack.c.l.b16 %v11226
        %v11490 = vunpack.c.l.b16 %v11227
        %v11491 = vunpack.c.l.b16 %v11228
        %v11492 = vunpack.c.l.b16 %v11229
        %v11493 = vunpack.c.l.b16 %v11230
        %v11494 = vunpack.c.l.b16 %v11231
        %v11495 = vunpack.c.l.b16 %v11232
        %v11496 = vunpack.c.l.b16 %v11233
        %v11497 = vunpack.c.l.b16 %v11234
        %v11498 = vunpack.c.l.b16 %v11235
        %v11499 = vunpack.c.l.b16 %v11236
        %v11500 = vunpack.c.l.b16 %v11237
        %v11501 = vunpack.c.l.b16 %v11238
        %v11502 = vunpack.c.l.b16 %v11239
        %v11503 = vunpack.c.l.b16 %v11240
        %v11504 = vunpack.c.l.b16 %v11241
        %v11505 = vunpack.c.l.b16 %v11242
        %v11506 = vunpack.c.l.b16 %v11243
        %v11507 = vunpack.c.l.b16 %v11244
        %v11508 = vunpack.c.l.b16 %v11245
        %v11509 = vunpack.c.l.b16 %v11246
        %v11510 = vunpack.c.l.b16 %v11247
        %v11511 = vunpack.c.l.b16 %v11248
        %v11512 = vunpack.c.l.b16 %v11249
        %v11513 = vunpack.c.l.b16 %v11250
        %v11514 = vunpack.c.l.b16 %v11251
        %v11515 = vunpack.c.l.b16 %v11252
        %v11516 = vunpack.c.l.b16 %v11253
        %v11517 = vunpack.c.l.b16 %v11254
        %v11518 = vunpack.c.l.b16 %v11255
        %v11519 = vunpack.c.l.b16 %v11256
        %v11520 = vunpack.c.l.b16 %v11257
        %v11521 = vunpack.c.l.b16 %v11258
        %v11522 = vunpack.c.l.b16 %v11259
        %v11523 = vunpack.c.l.b16 %v11260
        %v11524 = vpack.c.b16 %v11397, %v11396
        %v11525 = vpack.c.b16 %v11399, %v11398
        %v11526 = vpack.c.b16 %v11401, %v11400
        %v11527 = vpack.c.b16 %v11403, %v11402
        %v11528 = vpack.c.b16 %v11405, %v11404
        %v11529 = vpack.c.b16 %v11407, %v11406
        %v11530 = vpack.c.b16 %v11409, %v11408
        %v11531 = vpack.c.b16 %v11411, %v11410
        %v11532 = vpack.c.b16 %v11413, %v11412
        %v11533 = vpack.c.b16 %v11415, %v11414
        %v11534 = vpack.c.b16 %v11417, %v11416
        %v11535 = vpack.c.b16 %v11419, %v11418
        %v11536 = vpack.c.b16 %v11421, %v11420
        %v11537 = vpack.c.b16 %v11423, %v11422
        %v11538 = vpack.c.b16 %v11425, %v11424
        %v11539 = vpack.c.b16 %v11427, %v11426
        %v11540 = vpack.c.b16 %v11429, %v11428
        %v11541 = vpack.c.b16 %v11431, %v11430
        %v11542 = vpack.c.b16 %v11433, %v11432
        %v11543 = vpack.c.b16 %v11435, %v11434
        %v11544 = vpack.c.b16 %v11437, %v11436
        %v11545 = vpack.c.b16 %v11439, %v11438
        %v11546 = vpack.c.b16 %v11441, %v11440
        %v11547 = vpack.c.b16 %v11443, %v11442
        %v11548 = vpack.c.b16 %v11445, %v11444
        %v11549 = vpack.c.b16 %v11447, %v11446
        %v11550 = vpack.c.b16 %v11449, %v11448
        %v11551 = vpack.c.b16 %v11451, %v11450
        %v11552 = vpack.c.b16 %v11453, %v11452
        %v11553 = vpack.c.b16 %v11455, %v11454
        %v11554 = vpack.c.b16 %v11457, %v11456
        %v11555 = vpack.c.b16 %v11459, %v11458
        %v11556 = vpack.c.b16 %v11461, %v11460
        %v11557 = vpack.c.b16 %v11463, %v11462
        %v11558 = vpack.c.b16 %v11465, %v11464
        %v11559 = vpack.c.b16 %v11467, %v11466
        %v11560 = vpack.c.b16 %v11469, %v11468
        %v11561 = vpack.c.b16 %v11471, %v11470
        %v11562 = vpack.c.b16 %v11473, %v11472
        %v11563 = vpack.c.b16 %v11475, %v11474
        %v11564 = vpack.c.b16 %v11477, %v11476
        %v11565 = vpack.c.b16 %v11479, %v11478
        %v11566 = vpack.c.b16 %v11481, %v11480
        %v11567 = vpack.c.b16 %v11483, %v11482
        %v11568 = vpack.c.b16 %v11485, %v11484
        %v11569 = vpack.c.b16 %v11487, %v11486
        %v11570 = vpack.c.b16 %v11489, %v11488
        %v11571 = vpack.c.b16 %v11491, %v11490
        %v11572 = vpack.c.b16 %v11493, %v11492
        %v11573 = vpack.c.b16 %v11495, %v11494
        %v11574 = vpack.c.b16 %v11497, %v11496
        %v11575 = vpack.c.b16 %v11499, %v11498
        %v11576 = vpack.c.b16 %v11501, %v11500
        %v11577 = vpack.c.b16 %v11503, %v11502
        %v11578 = vpack.c.b16 %v11505, %v11504
        %v11579 = vpack.c.b16 %v11507, %v11506
        %v11580 = vpack.c.b16 %v11509, %v11508
        %v11581 = vpack.c.b16 %v11511, %v11510
        %v11582 = vpack.c.b16 %v11513, %v11512
        %v11583 = vpack.c.b16 %v11515, %v11514
        %v11584 = vpack.c.b16 %v11517, %v11516
        %v11585 = vpack.c.b16 %v11519, %v11518
        %v11586 = vpack.c.b16 %v11521, %v11520
        %v11587 = vpack.c.b16 %v11523, %v11522
        %11652 = vmatprep.subr.bf16.mxu0 0
        %11653 = vmatpush1.bf16.msra.mxu0 %v11524
        %11654 = vmatprep.subr.bf16.mxu0 0
        %11655 = vmatpush1.bf16.msra.mxu0 %v11525
        %11656 = vmatprep.subr.bf16.mxu0 0
        %11657 = vmatpush1.bf16.msra.mxu0 %v11526
        %11658 = vmatprep.subr.bf16.mxu0 0
        %11659 = vmatpush1.bf16.msra.mxu0 %v11527
        %11660 = vmatprep.subr.bf16.mxu0 0
        %11661 = vmatpush1.bf16.msra.mxu0 %v11528
        %11662 = vmatprep.subr.bf16.mxu0 0
        %11663 = vmatpush1.bf16.msra.mxu0 %v11529
        %11664 = vmatprep.subr.bf16.mxu0 0
        %11665 = vmatpush1.bf16.msra.mxu0 %v11530
        %11666 = vmatprep.subr.bf16.mxu0 0
        %11667 = vmatpush1.bf16.msra.mxu0 %v11531
        %11668 = vmatprep.subr.bf16.mxu0 0
        %11669 = vmatpush1.bf16.msra.mxu0 %v11532
        %11670 = vmatprep.subr.bf16.mxu0 0
        %11671 = vmatpush1.bf16.msra.mxu0 %v11533
        %11672 = vmatprep.subr.bf16.mxu0 0
        %11673 = vmatpush1.bf16.msra.mxu0 %v11534
        %11674 = vmatprep.subr.bf16.mxu0 0
        %11675 = vmatpush1.bf16.msra.mxu0 %v11535
        %11676 = vmatprep.subr.bf16.mxu0 0
        %11677 = vmatpush1.bf16.msra.mxu0 %v11536
        %11678 = vmatprep.subr.bf16.mxu0 0
        %11679 = vmatpush1.bf16.msra.mxu0 %v11537
        %11680 = vmatprep.subr.bf16.mxu0 0
        %11681 = vmatpush1.bf16.msra.mxu0 %v11538
        %11682 = vmatprep.subr.bf16.mxu0 0
        %11683 = vmatpush1.bf16.msra.mxu0 %v11539
        %11684 = vmatprep.mubr.bf16.mxu0 %v11070
        %11685 = vmatmul.mubr.bf16.gmra.mrb[0].mxu0 %v11069
        %v11686 = vpop.f32.mrb[0].mxu0
        %v11687 = vadd.f32 %v11266, %v11686
        %v11688 = vpop.f32.mrb[0].mxu0
        %v11689 = vpop.f32.mrb[0].mxu0
        %v11690 = vadd.f32 %v11266, %v11689
        %v11691 = vpop.f32.mrb[0].mxu0
        %11692 = vmatprep.mubr.bf16.mxu0 %v11078
        %11693 = vmatmul.mubr.bf16.gmra.mrb[0].mxu0 %v11077
        %v11694 = vpop.f32.mrb[0].mxu0
        %v11695 = vadd.f32 %v11266, %v11694
        %v11696 = vpop.f32.mrb[0].mxu0
        %v11697 = vpop.f32.mrb[0].mxu0
        %v11698 = vadd.f32 %v11266, %v11697
        %v11699 = vpop.f32.mrb[0].mxu0
        %11700 = vmatprep.mubr.bf16.mxu0 %v11086
        %11701 = vmatmul.mubr.bf16.gmra.mrb[0].mxu0 %v11085
        %v11702 = vpop.f32.mrb[0].mxu0
        %v11703 = vadd.f32 %v11266, %v11702
        %v11704 = vpop.f32.mrb[0].mxu0
        %v11705 = vpop.f32.mrb[0].mxu0
        %v11706 = vadd.f32 %v11266, %v11705
        %v11707 = vpop.f32.mrb[0].mxu0
        %11708 = vmatprep.mubr.bf16.mxu0 %v11094
        %11709 = vmatmul.mubr.bf16.gmra.mrb[0].mxu0 %v11093
        %v11710 = vpop.f32.mrb[0].mxu0
        %v11711 = vadd.f32 %v11266, %v11710
        %v11712 = vpop.f32.mrb[0].mxu0
        %v11713 = vpop.f32.mrb[0].mxu0
        %v11714 = vadd.f32 %v11266, %v11713
        %v11715 = vpop.f32.mrb[0].mxu0
        %11716 = vmatprep.mubr.bf16.mxu0 %v11102
        %11717 = vmatmul.mubr.bf16.gmra.mrb[0].mxu0 %v11101
        %v11718 = vpop.f32.mrb[0].mxu0
        %v11719 = vadd.f32 %v11266, %v11718
        %v11720 = vpop.f32.mrb[0].mxu0
        %v11721 = vpop.f32.mrb[0].mxu0
        %v11722 = vadd.f32 %v11266, %v11721
        %v11723 = vpop.f32.mrb[0].mxu0
        %11724 = vmatprep.mubr.bf16.mxu0 %v11110
        %11725 = vmatmul.mubr.bf16.gmra.mrb[0].mxu0 %v11109
        %v11726 = vpop.f32.mrb[0].mxu0
        %v11727 = vadd.f32 %v11266, %v11726
        %v11728 = vpop.f32.mrb[0].mxu0
        %v11729 = vpop.f32.mrb[0].mxu0
        %v11730 = vadd.f32 %v11266, %v11729
        %v11731 = vpop.f32.mrb[0].mxu0
        %11732 = vmatprep.mubr.bf16.mxu0 %v11118
        %11733 = vmatmul.mubr.bf16.gmra.mrb[0].mxu0 %v11117
        %v11734 = vpop.f32.mrb[0].mxu0
        %v11735 = vadd.f32 %v11266, %v11734
        %v11736 = vpop.f32.mrb[0].mxu0
        %v11737 = vpop.f32.mrb[0].mxu0
        %v11738 = vadd.f32 %v11266, %v11737
        %v11739 = vpop.f32.mrb[0].mxu0
        %11740 = vmatprep.mubr.bf16.mxu0 %v11126
        %11741 = vmatmul.mubr.bf16.gmra.mrb[0].mxu0 %v11125
        %v11742 = vpop.f32.mrb[0].mxu0
        %v11743 = vadd.f32 %v11266, %v11742
        %v11744 = vpop.f32.mrb[0].mxu0
        %v11745 = vpop.f32.mrb[0].mxu0
        %v11746 = vadd.f32 %v11266, %v11745
        %v11747 = vpop.f32.mrb[0].mxu0
        %11748 = vdwg.mxu0
        %11749 = vmatprep.subr.bf16.mxu0 0
        %11750 = vmatpush1.bf16.msra.mxu0 %v11540
        %11751 = vmatprep.subr.bf16.mxu0 0
        %11752 = vmatpush1.bf16.msra.mxu0 %v11541
        %11753 = vmatprep.subr.bf16.mxu0 0
        %11754 = vmatpush1.bf16.msra.mxu0 %v11542
        %11755 = vmatprep.subr.bf16.mxu0 0
        %11756 = vmatpush1.bf16.msra.mxu0 %v11543
        %11757 = vmatprep.subr.bf16.mxu0 0
        %11758 = vmatpush1.bf16.msra.mxu0 %v11544
        %11759 = vmatprep.subr.bf16.mxu0 0
        %11760 = vmatpush1.bf16.msra.mxu0 %v11545
        %11761 = vmatprep.subr.bf16.mxu0 0
        %11762 = vmatpush1.bf16.msra.mxu0 %v11546
        %11763 = vmatprep.subr.bf16.mxu0 0
        %11764 = vmatpush1.bf16.msra.mxu0 %v11547
        %11765 = vmatprep.subr.bf16.mxu0 0
        %11766 = vmatpush1.bf16.msra.mxu0 %v11548
        %11767 = vmatprep.subr.bf16.mxu0 0
        %11768 = vmatpush1.bf16.msra.mxu0 %v11549
        %11769 = vmatprep.subr.bf16.mxu0 0
        %11770 = vmatpush1.bf16.msra.mxu0 %v11550
        %11771 = vmatprep.subr.bf16.mxu0 0
        %11772 = vmatpush1.bf16.msra.mxu0 %v11551
        %11773 = vmatprep.subr.bf16.mxu0 0
        %11774 = vmatpush1.bf16.msra.mxu0 %v11552
        %11775 = vmatprep.subr.bf16.mxu0 0
        %11776 = vmatpush1.bf16.msra.mxu0 %v11553
        %11777 = vmatprep.subr.bf16.mxu0 0
        %11778 = vmatpush1.bf16.msra.mxu0 %v11554
        %11779 = vmatprep.subr.bf16.mxu0 0
        %11780 = vmatpush1.bf16.msra.mxu0 %v11555
        %11781 = vmatprep.mubr.bf16.mxu0 %v11072
        %11782 = vmatmul.mubr.bf16.gmra.mrb[0].mxu0 %v11071
        %v11783 = vpop.f32.mrb[0].mxu0
        %v11784 = vadd.f32 %v11687, %v11783
        %v11785 = vpop.f32.mrb[0].mxu0
        %v11786 = vpop.f32.mrb[0].mxu0
        %v11787 = vadd.f32 %v11690, %v11786
        %v11788 = vpop.f32.mrb[0].mxu0
        %11789 = vmatprep.mubr.bf16.mxu0 %v11080
        %11790 = vmatmul.mubr.bf16.gmra.mrb[0].mxu0 %v11079
        %v11791 = vpop.f32.mrb[0].mxu0
        %v11792 = vadd.f32 %v11695, %v11791
        %v11793 = vpop.f32.mrb[0].mxu0
        %v11794 = vpop.f32.mrb[0].mxu0
        %v11795 = vadd.f32 %v11698, %v11794
        %v11796 = vpop.f32.mrb[0].mxu0
        %11797 = vmatprep.mubr.bf16.mxu0 %v11088
        %11798 = vmatmul.mubr.bf16.gmra.mrb[0].mxu0 %v11087
        %v11799 = vpop.f32.mrb[0].mxu0
        %v11800 = vadd.f32 %v11703, %v11799
        %v11801 = vpop.f32.mrb[0].mxu0
        %v11802 = vpop.f32.mrb[0].mxu0
        %v11803 = vadd.f32 %v11706, %v11802
        %v11804 = vpop.f32.mrb[0].mxu0
        %11805 = vmatprep.mubr.bf16.mxu0 %v11096
        %11806 = vmatmul.mubr.bf16.gmra.mrb[0].mxu0 %v11095
        %v11807 = vpop.f32.mrb[0].mxu0
        %v11808 = vadd.f32 %v11711, %v11807
        %v11809 = vpop.f32.mrb[0].mxu0
        %v11810 = vpop.f32.mrb[0].mxu0
        %v11811 = vadd.f32 %v11714, %v11810
        %v11812 = vpop.f32.mrb[0].mxu0
        %11813 = vmatprep.mubr.bf16.mxu0 %v11104
        %11814 = vmatmul.mubr.bf16.gmra.mrb[0].mxu0 %v11103
        %v11815 = vpop.f32.mrb[0].mxu0
        %v11816 = vadd.f32 %v11719, %v11815
        %v11817 = vpop.f32.mrb[0].mxu0
        %v11818 = vpop.f32.mrb[0].mxu0
        %v11819 = vadd.f32 %v11722, %v11818
        %v11820 = vpop.f32.mrb[0].mxu0
        %11821 = vmatprep.mubr.bf16.mxu0 %v11112
        %11822 = vmatmul.mubr.bf16.gmra.mrb[0].mxu0 %v11111
        %v11823 = vpop.f32.mrb[0].mxu0
        %v11824 = vadd.f32 %v11727, %v11823
        %v11825 = vpop.f32.mrb[0].mxu0
        %v11826 = vpop.f32.mrb[0].mxu0
        %v11827 = vadd.f32 %v11730, %v11826
        %v11828 = vpop.f32.mrb[0].mxu0
        %11829 = vmatprep.mubr.bf16.mxu0 %v11120
        %11830 = vmatmul.mubr.bf16.gmra.mrb[0].mxu0 %v11119
        %v11831 = vpop.f32.mrb[0].mxu0
        %v11832 = vadd.f32 %v11735, %v11831
        %v11833 = vpop.f32.mrb[0].mxu0
        %v11834 = vpop.f32.mrb[0].mxu0
        %v11835 = vadd.f32 %v11738, %v11834
        %v11836 = vpop.f32.mrb[0].mxu0
        %11837 = vmatprep.mubr.bf16.mxu0 %v11128
        %11838 = vmatmul.mubr.bf16.gmra.mrb[0].mxu0 %v11127
        %v11839 = vpop.f32.mrb[0].mxu0
        %v11840 = vadd.f32 %v11743, %v11839
        %v11841 = vpop.f32.mrb[0].mxu0
        %v11842 = vpop.f32.mrb[0].mxu0
        %v11843 = vadd.f32 %v11746, %v11842
        %v11844 = vpop.f32.mrb[0].mxu0
        %11845 = vdwg.mxu0
        %11846 = vmatprep.subr.bf16.mxu0 0
        %11847 = vmatpush1.bf16.msra.mxu0 %v11556
        %11848 = vmatprep.subr.bf16.mxu0 0
        %11849 = vmatpush1.bf16.msra.mxu0 %v11557
        %11850 = vmatprep.subr.bf16.mxu0 0
        %11851 = vmatpush1.bf16.msra.mxu0 %v11558
        %11852 = vmatprep.subr.bf16.mxu0 0
        %11853 = vmatpush1.bf16.msra.mxu0 %v11559
        %11854 = vmatprep.subr.bf16.mxu0 0
        %11855 = vmatpush1.bf16.msra.mxu0 %v11560
        %11856 = vmatprep.subr.bf16.mxu0 0
        %11857 = vmatpush1.bf16.msra.mxu0 %v11561
        %11858 = vmatprep.subr.bf16.mxu0 0
        %11859 = vmatpush1.bf16.msra.mxu0 %v11562
        %11860 = vmatprep.subr.bf16.mxu0 0
        %11861 = vmatpush1.bf16.msra.mxu0 %v11563
        %11862 = vmatprep.subr.bf16.mxu0 0
        %11863 = vmatpush1.bf16.msra.mxu0 %v11564
        %11864 = vmatprep.subr.bf16.mxu0 0
        %11865 = vmatpush1.bf16.msra.mxu0 %v11565
        %11866 = vmatprep.subr.bf16.mxu0 0
        %11867 = vmatpush1.bf16.msra.mxu0 %v11566
        %11868 = vmatprep.subr.bf16.mxu0 0
        %11869 = vmatpush1.bf16.msra.mxu0 %v11567
        %11870 = vmatprep.subr.bf16.mxu0 0
        %11871 = vmatpush1.bf16.msra.mxu0 %v11568
        %11872 = vmatprep.subr.bf16.mxu0 0
        %11873 = vmatpush1.bf16.msra.mxu0 %v11569
        %11874 = vmatprep.subr.bf16.mxu0 0
        %11875 = vmatpush1.bf16.msra.mxu0 %v11570
        %11876 = vmatprep.subr.bf16.mxu0 0
        %11877 = vmatpush1.bf16.msra.mxu0 %v11571
        %11878 = vmatprep.mubr.bf16.mxu0 %v11074
        %11879 = vmatmul.mubr.bf16.gmra.mrb[0].mxu0 %v11073
        %v11880 = vpop.f32.mrb[0].mxu0
        %v11881 = vadd.f32 %v11784, %v11880
        %v11882 = vpop.f32.mrb[0].mxu0
        %v11883 = vpop.f32.mrb[0].mxu0
        %v11884 = vadd.f32 %v11787, %v11883
        %v11885 = vpop.f32.mrb[0].mxu0
        %11886 = vmatprep.mubr.bf16.mxu0 %v11082
        %11887 = vmatmul.mubr.bf16.gmra.mrb[0].mxu0 %v11081
        %v11888 = vpop.f32.mrb[0].mxu0
        %v11889 = vadd.f32 %v11792, %v11888
        %v11890 = vpop.f32.mrb[0].mxu0
        %v11891 = vpop.f32.mrb[0].mxu0
        %v11892 = vadd.f32 %v11795, %v11891
        %v11893 = vpop.f32.mrb[0].mxu0
        %11894 = vmatprep.mubr.bf16.mxu0 %v11090
        %11895 = vmatmul.mubr.bf16.gmra.mrb[0].mxu0 %v11089
        %v11896 = vpop.f32.mrb[0].mxu0
        %v11897 = vadd.f32 %v11800, %v11896
        %v11898 = vpop.f32.mrb[0].mxu0
        %v11899 = vpop.f32.mrb[0].mxu0
        %v11900 = vadd.f32 %v11803, %v11899
        %v11901 = vpop.f32.mrb[0].mxu0
        %11902 = vmatprep.mubr.bf16.mxu0 %v11098
        %11903 = vmatmul.mubr.bf16.gmra.mrb[0].mxu0 %v11097
        %v11904 = vpop.f32.mrb[0].mxu0
        %v11905 = vadd.f32 %v11808, %v11904
        %v11906 = vpop.f32.mrb[0].mxu0
        %v11907 = vpop.f32.mrb[0].mxu0
        %v11908 = vadd.f32 %v11811, %v11907
        %v11909 = vpop.f32.mrb[0].mxu0
        %11910 = vmatprep.mubr.bf16.mxu0 %v11106
        %11911 = vmatmul.mubr.bf16.gmra.mrb[0].mxu0 %v11105
        %v11912 = vpop.f32.mrb[0].mxu0
        %v11913 = vadd.f32 %v11816, %v11912
        %v11914 = vpop.f32.mrb[0].mxu0
        %v11915 = vpop.f32.mrb[0].mxu0
        %v11916 = vadd.f32 %v11819, %v11915
        %v11917 = vpop.f32.mrb[0].mxu0
        %11918 = vmatprep.mubr.bf16.mxu0 %v11114
        %11919 = vmatmul.mubr.bf16.gmra.mrb[0].mxu0 %v11113
        %v11920 = vpop.f32.mrb[0].mxu0
        %v11921 = vadd.f32 %v11824, %v11920
        %v11922 = vpop.f32.mrb[0].mxu0
        %v11923 = vpop.f32.mrb[0].mxu0
        %v11924 = vadd.f32 %v11827, %v11923
        %v11925 = vpop.f32.mrb[0].mxu0
        %11926 = vmatprep.mubr.bf16.mxu0 %v11122
        %11927 = vmatmul.mubr.bf16.gmra.mrb[0].mxu0 %v11121
        %v11928 = vpop.f32.mrb[0].mxu0
        %v11929 = vadd.f32 %v11832, %v11928
        %v11930 = vpop.f32.mrb[0].mxu0
        %v11931 = vpop.f32.mrb[0].mxu0
        %v11932 = vadd.f32 %v11835, %v11931
        %v11933 = vpop.f32.mrb[0].mxu0
        %11934 = vmatprep.mubr.bf16.mxu0 %v11130
        %11935 = vmatmul.mubr.bf16.gmra.mrb[0].mxu0 %v11129
        %v11936 = vpop.f32.mrb[0].mxu0
        %v11937 = vadd.f32 %v11840, %v11936
        %v11938 = vpop.f32.mrb[0].mxu0
        %v11939 = vpop.f32.mrb[0].mxu0
        %v11940 = vadd.f32 %v11843, %v11939
        %v11941 = vpop.f32.mrb[0].mxu0
        %11942 = vdwg.mxu0
        %11943 = vmatprep.subr.bf16.mxu0 0
        %11944 = vmatpush1.bf16.msra.mxu0 %v11572
        %11945 = vmatprep.subr.bf16.mxu0 0
        %11946 = vmatpush1.bf16.msra.mxu0 %v11573
        %11947 = vmatprep.subr.bf16.mxu0 0
        %11948 = vmatpush1.bf16.msra.mxu0 %v11574
        %11949 = vmatprep.subr.bf16.mxu0 0
        %11950 = vmatpush1.bf16.msra.mxu0 %v11575
        %11951 = vmatprep.subr.bf16.mxu0 0
        %11952 = vmatpush1.bf16.msra.mxu0 %v11576
        %11953 = vmatprep.subr.bf16.mxu0 0
        %11954 = vmatpush1.bf16.msra.mxu0 %v11577
        %11955 = vmatprep.subr.bf16.mxu0 0
        %11956 = vmatpush1.bf16.msra.mxu0 %v11578
        %11957 = vmatprep.subr.bf16.mxu0 0
        %11958 = vmatpush1.bf16.msra.mxu0 %v11579
        %11959 = vmatprep.subr.bf16.mxu0 0
        %11960 = vmatpush1.bf16.msra.mxu0 %v11580
        %11961 = vmatprep.subr.bf16.mxu0 0
        %11962 = vmatpush1.bf16.msra.mxu0 %v11581
        %11963 = vmatprep.subr.bf16.mxu0 0
        %11964 = vmatpush1.bf16.msra.mxu0 %v11582
        %11965 = vmatprep.subr.bf16.mxu0 0
        %11966 = vmatpush1.bf16.msra.mxu0 %v11583
        %11967 = vmatprep.subr.bf16.mxu0 0
        %11968 = vmatpush1.bf16.msra.mxu0 %v11584
        %11969 = vmatprep.subr.bf16.mxu0 0
        %11970 = vmatpush1.bf16.msra.mxu0 %v11585
        %11971 = vmatprep.subr.bf16.mxu0 0
        %11972 = vmatpush1.bf16.msra.mxu0 %v11586
        %11973 = vmatprep.subr.bf16.mxu0 0
        %11974 = vmatpush1.bf16.msra.mxu0 %v11587
        %11975 = vmatprep.mubr.bf16.mxu0 %v11076
        %11976 = vmatmul.mubr.bf16.gmra.mrb[0].mxu0 %v11075
        %v11977 = vpop.f32.mrb[0].mxu0
        %v11978 = vadd.f32 %v11881, %v11977
        %v11979 = vpop.f32.mrb[0].mxu0
        %v11980 = vpop.f32.mrb[0].mxu0
        %v11981 = vadd.f32 %v11884, %v11980
        %v11982 = vpop.f32.mrb[0].mxu0
        %11983 = vmatprep.mubr.bf16.mxu0 %v11084
        %11984 = vmatmul.mubr.bf16.gmra.mrb[0].mxu0 %v11083
        %v11985 = vpop.f32.mrb[0].mxu0
        %v11986 = vadd.f32 %v11889, %v11985
        %v11987 = vpop.f32.mrb[0].mxu0
        %v11988 = vpop.f32.mrb[0].mxu0
        %v11989 = vadd.f32 %v11892, %v11988
        %v11990 = vpop.f32.mrb[0].mxu0
        %11991 = vmatprep.mubr.bf16.mxu0 %v11092
        %11992 = vmatmul.mubr.bf16.gmra.mrb[0].mxu0 %v11091
        %v11993 = vpop.f32.mrb[0].mxu0
        %v11994 = vadd.f32 %v11897, %v11993
        %v11995 = vpop.f32.mrb[0].mxu0
        %v11996 = vpop.f32.mrb[0].mxu0
        %v11997 = vadd.f32 %v11900, %v11996
        %v11998 = vpop.f32.mrb[0].mxu0
        %11999 = vmatprep.mubr.bf16.mxu0 %v11100
        %12000 = vmatmul.mubr.bf16.gmra.mrb[0].mxu0 %v11099
        %v12001 = vpop.f32.mrb[0].mxu0
        %v12002 = vadd.f32 %v11905, %v12001
        %v12003 = vpop.f32.mrb[0].mxu0
        %v12004 = vpop.f32.mrb[0].mxu0
        %v12005 = vadd.f32 %v11908, %v12004
        %v12006 = vpop.f32.mrb[0].mxu0
        %12007 = vmatprep.mubr.bf16.mxu0 %v11108
        %12008 = vmatmul.mubr.bf16.gmra.mrb[0].mxu0 %v11107
        %v12009 = vpop.f32.mrb[0].mxu0
        %v12010 = vadd.f32 %v11913, %v12009
        %v12011 = vpop.f32.mrb[0].mxu0
        %v12012 = vpop.f32.mrb[0].mxu0
        %v12013 = vadd.f32 %v11916, %v12012
        %v12014 = vpop.f32.mrb[0].mxu0
        %12015 = vmatprep.mubr.bf16.mxu0 %v11116
        %12016 = vmatmul.mubr.bf16.gmra.mrb[0].mxu0 %v11115
        %v12017 = vpop.f32.mrb[0].mxu0
        %v12018 = vadd.f32 %v11921, %v12017
        %v12019 = vpop.f32.mrb[0].mxu0
        %v12020 = vpop.f32.mrb[0].mxu0
        %v12021 = vadd.f32 %v11924, %v12020
        %v12022 = vpop.f32.mrb[0].mxu0
        %12023 = vmatprep.mubr.bf16.mxu0 %v11124
        %12024 = vmatmul.mubr.bf16.gmra.mrb[0].mxu0 %v11123
        %v12025 = vpop.f32.mrb[0].mxu0
        %v12026 = vadd.f32 %v11929, %v12025
        %v12027 = vpop.f32.mrb[0].mxu0
        %v12028 = vpop.f32.mrb[0].mxu0
        %v12029 = vadd.f32 %v11932, %v12028
        %v12030 = vpop.f32.mrb[0].mxu0
        %12031 = vmatprep.mubr.bf16.mxu0 %v11132
        %12032 = vmatmul.mubr.bf16.gmra.mrb[0].mxu0 %v11131
        %v12033 = vpop.f32.mrb[0].mxu0
        %v12034 = vadd.f32 %v11937, %v12033
        %v12035 = vpop.f32.mrb[0].mxu0
        %v12036 = vpop.f32.mrb[0].mxu0
        %v12037 = vadd.f32 %v11940, %v12036
        %v12038 = vpop.f32.mrb[0].mxu0
        %12039 = vdwg.mxu0
        %12040 = vst [vmem:[%s605] sm:$0xff] %v11978
        %12041 = vst [vmem:[%s605 + $0x8] sm:$0xff] %v11981
        %12042 = vst [vmem:[%s605 + $0x10] sm:$0xff] %v11986
        %12043 = vst [vmem:[%s605 + $0x18] sm:$0xff] %v11989
        %12044 = vst [vmem:[%s605 + $0x20] sm:$0xff] %v11994
        %12045 = vst [vmem:[%s605 + $0x28] sm:$0xff] %v11997
        %12046 = vst [vmem:[%s605 + $0x30] sm:$0xff] %v12002
        %12047 = vst [vmem:[%s605 + $0x38] sm:$0xff] %v12005
        %12048 = vst [vmem:[%s605 + $0x40] sm:$0xff] %v12010
        %12049 = vst [vmem:[%s605 + $0x48] sm:$0xff] %v12013
        %12050 = vst [vmem:[%s605 + $0x50] sm:$0xff] %v12018
        %12051 = vst [vmem:[%s605 + $0x58] sm:$0xff] %v12021
        %12052 = vst [vmem:[%s605 + $0x60] sm:$0xff] %v12026
        %12053 = vst [vmem:[%s605 + $0x68] sm:$0xff] %v12029
        %12054 = vst [vmem:[%s605 + $0x70] sm:$0xff] %v12034
        %12055 = vst [vmem:[%s605 + $0x78] sm:$0xff] %v12037
        %s12056 = smul.u32 16, %s31
        %p12057 = scmp.lt.s32.totalorder %s12056, 31
        %s12058 = scalar_select %p12057, %s12056, 31
        %s12059 = smul.addr %s12058, 8
        %s12060 = scalar_lea.vmem %s13, %s12059
        // Predicated region
        $region121: #{cnn_forward.1} parent=71 // pred_check
          %p12061 = pneg %p327
        $region122: #{cnn_forward.1} parent=71 // pred_check_branch
          %12063 = sbr.rel (%p12061) target = $region124
        $region123: #{cnn_forward.1} parent=71 // pred_region
          %s12064 = smul.u32 16, %s31
        $region124: #{cnn_forward.1} parent=71 // pred_fallthru
          _
      $region72: #{cnn_forward.1} parent=5 // pred_fallthru
        _
      %p12065 = scmp.le.s32.totalorder 2, %s26
      // Predicated region
      $region125: #{cnn_forward.1} parent=5 // pred_check
        %p12066 = pneg %p12065
      $region126: #{cnn_forward.1} parent=5 // pred_check_branch
        %12068 = sbr.rel (%p12066) target = $region128
      $region127: #{cnn_forward.1} parent=5 // pred_region
        %s12069 = ssub.s32 %s26, 2
        // Predicated region
        $region129: #{cnn_forward.1} parent=127 // pred_check
          %p12070 = pneg %p333
        $region130: #{cnn_forward.1} parent=127 // pred_check_branch
          %12072 = sbr.rel (%p12070) target = $region132
        $region131: #{cnn_forward.1} parent=127 // pred_region
          %s12073 = smul.u32 16, %s32
          %p12074 = scmp.lt.s32.totalorder %s12073, 31
          %s12075 = scalar_select %p12074, %s12073, 31
          %s12076 = smul.addr %s12075, 8
          %s12077 = scalar_lea.vmem %s13, %s12076
        $region132: #{cnn_forward.1} parent=127 // pred_fallthru
          _
      $region128: #{cnn_forward.1} parent=5 // pred_fallthru
        _
    $region6: #{cnn_forward.1} parent=1 // loop_footer
      %s30 = sadd.s32 1, %s26
    $region7: #{cnn_forward.1} parent=1 // loop_footer_branch
      %25 = sbr.rel target = $region3
    $region8: #{cnn_forward.1} parent=1 // loop_exit
      _
    %12078 = vsyncpa [#allocation3], 1
    %s12079 = scalar_lea.sflag [#allocation3], 1
    %12080 = vsyncpa %s12079, 1
    %12081 = vsyncpa [#allocation5], 1
    %12082 = vsyncpa [#allocation8], 1
    %12083 = vsyncpa [#allocation11], 1
    %12084 = vsyncpa [#allocation14], 1
    %12085 = vsyncpa [#allocation17], 1
    %12086 = vsyncpa [#allocation20], 1

</llo_original>
